<compile_context>
chip_gen: v6e
topology: v6e:2x2x1
jax: 0.10.0
libtpu: 0.0.40
codegen_flags: <defaults>
</compile_context>

<pallas_src>
import functools

import numpy as np
import jax
import jax.numpy as jnp
from jax import lax
from jax.experimental import pallas as pl
from jax.experimental.pallas import tpu as pltpu


# ---------------------------------------------------------------------------
# Fused kernel: per-view (pool -> 1x1 conv -> flatten) + shared projector
# (Linear -> BatchNorm1d(train) -> ReLU -> Linear) + full VICReg loss.
# ---------------------------------------------------------------------------
def _vicreg_fused_kernel(x_ref, y_ref, z_ref, k_ref, poolt_ref, cw_ref, cb_ref,
                         w1t_ref, b1_ref, g_ref, be_ref, w2t_ref, out_ref,
                         h3buf, hbuf, *, r, inv_num_features):
    B, C, HW = x_ref.shape
    SS = poolt_ref.shape[0]          # pooled spatial positions = size*size
    Co = cw_ref.shape[1]             # 1x1-conv output channels
    D = w1t_ref.shape[0]             # projector width = Co * SS
    f32 = jnp.float32

    # Pooling matrix broadcast once, reused by all four views.
    poolt_b = jnp.broadcast_to(poolt_ref[...], (B, SS, HW))

    # --- branch per view: adaptive avg-pool (matmul) -> 1x1 conv (matmul) ---
    # The (B, Co, SS) conv output is assembled into the lane-dense (4B, D)
    # slab with Co sub-tile stores — the only data movement the NCHW -> flat
    # feature layout genuinely needs.  The slab is written once, read once.
    views = (x_ref, y_ref, z_ref, k_ref)
    for v in range(4):
        pooled = jnp.einsum("bsh,bch->bsc", poolt_b, views[v][...],
                            preferred_element_type=f32)            # (B, SS, C)
        cwb = jnp.broadcast_to(cw_ref[v], (B, Co, C))
        h3buf[...] = (jnp.einsum("boc,bsc->bos", cwb, pooled,
                                 preferred_element_type=f32)
                      + cb_ref[v])                                  # (B, Co, SS)
        for o in range(Co):
            hbuf[v * B:(v + 1) * B, o * SS:(o + 1) * SS] = h3buf[:, o, :]

    # --- projector Linear1 (+bias) on all 4 views at once (M = 4B) ----------
    h1 = jnp.dot(hbuf[...], w1t_ref[...],
                 preferred_element_type=f32) + b1_ref[...]          # (4B, D)

    g = g_ref[...]
    be = be_ref[...]
    w2t = w2t_ref[...]

    def project_tail(hv):
        # BatchNorm1d (training-mode batch stats) + ReLU + Linear2, then center.
        mu = jnp.mean(hv, axis=0, keepdims=True)
        var = jnp.mean((hv - mu) ** 2, axis=0, keepdims=True)       # biased (train)
        hn = (hv - mu) * lax.rsqrt(var + 1e-5) * g + be
        pv = jnp.dot(jnp.maximum(hn, 0.0), w2t, preferred_element_type=f32)
        return pv - jnp.mean(pv, axis=0, keepdims=True)

    xc = project_tail(h1[0 * B:1 * B, :])
    yc = project_tail(h1[1 * B:2 * B, :])
    zc = project_tail(h1[2 * B:3 * B, :])
    kc = project_tail(h1[3 * B:4 * B, :])

    # --- std (variance) loss across the 4 views (unbiased, ddof=1) ----------
    mean_w = (xc + yc + zc + kc) * 0.25
    var_w = ((xc - mean_w) ** 2 + (yc - mean_w) ** 2
             + (zc - mean_w) ** 2 + (kc - mean_w) ** 2) * (1.0 / 3.0)
    std_w = jnp.sqrt(var_w + 1e-4)
    w_loss = jnp.mean(jnp.maximum(r - std_w, 0.0))

    # --- covariance loss via the Gram identity -------------------------------
    #   sum((a^T b)^2) == sum((a a^T) * (b b^T)); diagonal removed separately.
    gx = jnp.einsum("id,jd->ij", xc, xc, preferred_element_type=f32)  # (B, B)
    gy = jnp.einsum("id,jd->ij", yc, yc, preferred_element_type=f32)
    gz = jnp.einsum("id,jd->ij", zc, zc, preferred_element_type=f32)
    gk = jnp.einsum("id,jd->ij", kc, kc, preferred_element_type=f32)
    gram_part = (jnp.sum(gx * gx) + jnp.sum(gy * gy)
                 + jnp.sum(gz * gz) + jnp.sum(gy * gk))   # y.T @ k quirk kept

    dxx = jnp.sum(xc * xc, axis=0, keepdims=True)         # diag(a^T b), unscaled
    dyy = jnp.sum(yc * yc, axis=0, keepdims=True)
    dzz = jnp.sum(zc * zc, axis=0, keepdims=True)
    dyk = jnp.sum(yc * kc, axis=0, keepdims=True)
    diag_part = (jnp.sum(dxx * dxx) + jnp.sum(dyy * dyy)
                 + jnp.sum(dzz * dzz) + jnp.sum(dyk * dyk))

    inv_bm1 = 1.0 / (B - 1)
    cov_loss = (gram_part - diag_part) * (inv_bm1 * inv_bm1) * inv_num_features

    out_ref[0, 0] = w_loss + 0.02 * cov_loss


# ---------------------------------------------------------------------------
# Wrapper
# ---------------------------------------------------------------------------
def _pool_matrix_t(H, W, size):
    """(size*size, H*W) matrix P with P[s, hw] = 1/(kh*kw) iff pixel hw falls in
    pooled cell s — AdaptiveAvgPool2d((size, size)) for H, W divisible by size.
    Weight-independent, built once at trace time (4 KiB)."""
    kh, kw = H // size, W // size
    P = np.zeros((size * size, H * W), np.float32)
    for h in range(H):
        for w in range(W):
            P[(h // kh) * size + (w // kw), h * W + w] = 1.0 / (kh * kw)
    return P


@functools.partial(jax.jit, static_argnums=(5, 6))
def vicreg_w_forward(x, y, z, k, p, size, r):
    B, C, H, W = x.shape
    assert H % size == 0 and W % size == 0, "pool windows must tile the input"
    # TODO(synk): AdaptiveAvgPool2d with H/W not divisible by `size` (uneven
    # pooling windows) is not implemented.
    SS = size * size
    Co = C                            # 1x1 conv keeps the channel count
    D = Co * SS                       # projector width
    HW = H * W
    # Note: B is a multiple of 8 in the demo; other B stays correct but hits
    # masked partial-tile slices in the per-view row blocks.

    # Free, metadata-only reshapes — the four views go in as separate refs.
    xv = x.reshape(B, C, HW)
    yv = y.reshape(B, C, HW)
    zv = z.reshape(B, C, HW)
    kv = k.reshape(B, C, HW)

    # Small constants / weight-only prep (no folded conv⊗pool matrix, no
    # per-call einsum): pooling matrix, stacked raw conv weights & biases,
    # and weight-side transposes so the kernel issues plain (M,K)@(K,N).
    poolt = jnp.asarray(_pool_matrix_t(H, W, size))                 # (SS, HW)
    cw = jnp.stack([p["conv_x_w"], p["conv_y_w"],
                    p["conv_z_w"], p["conv_k_w"]])                  # (4, Co, C)
    cb = jnp.stack([p["conv_x_b"], p["conv_y_b"],
                    p["conv_z_b"], p["conv_k_b"]]).reshape(4, Co, 1)
    w1t = p["w1"].T                                                 # (D, D)
    w2t = p["w2"].T                                                 # (D, D)

    kern = functools.partial(_vicreg_fused_kernel, r=float(r),
                             inv_num_features=1.0 / float(D))
    out = pl.pallas_call(
        kern,
        out_shape=jax.ShapeDtypeStruct((1, 1), jnp.float32),
        grid=(1,),
        in_specs=[
            pl.BlockSpec((B, C, HW), lambda i: (0, 0, 0)),   # x view
            pl.BlockSpec((B, C, HW), lambda i: (0, 0, 0)),   # y view
            pl.BlockSpec((B, C, HW), lambda i: (0, 0, 0)),   # z view
            pl.BlockSpec((B, C, HW), lambda i: (0, 0, 0)),   # k view
            pl.BlockSpec((SS, HW), lambda i: (0, 0)),        # pooling matrix
            pl.BlockSpec((4, Co, C), lambda i: (0, 0, 0)),   # conv weights
            pl.BlockSpec((4, Co, 1), lambda i: (0, 0, 0)),   # conv biases
            pl.BlockSpec((D, D), lambda i: (0, 0)),          # w1^T
            pl.BlockSpec((1, D), lambda i: (0, 0)),          # b1
            pl.BlockSpec((1, D), lambda i: (0, 0)),          # gamma
            pl.BlockSpec((1, D), lambda i: (0, 0)),          # beta
            pl.BlockSpec((D, D), lambda i: (0, 0)),          # w2^T
        ],
        out_specs=pl.BlockSpec(memory_space=pltpu.MemorySpace.SMEM),
        scratch_shapes=[
            pltpu.VMEM((B, Co, SS), jnp.float32),   # per-view conv output staging
            pltpu.VMEM((4 * B, D), jnp.float32),    # lane-dense feature slab
        ],
    )(xv, yv, zv, kv, poolt, cw, cb, w1t,
      p["b1"].reshape(1, D), p["gamma"].reshape(1, D),
      p["beta"].reshape(1, D), w2t)
    return out[0, 0]


# ---------------------------------------------------------------------------
# Pure-JAX reference (mirrors the PyTorch forward) for a sanity check.
# ---------------------------------------------------------------------------
def adaptive_avg_pool_nchw(x_nchw, size):
    B, C, H, W = x_nchw.shape
    kh, kw = H // size, W // size
    return x_nchw.reshape(B, C, size, kh, size, kw).mean(axis=(3, 5))


def vicreg_w_reference(x, y, z, k, p, size, r):
    def conv(inp, w, b):
        return jnp.einsum("bchw,oc->bohw", inp, w) + b[None, :, None, None]

    def proj(v):
        h = v @ p["w1"].T + p["b1"]
        mu = h.mean(axis=0)
        var = jnp.mean((h - mu) ** 2, axis=0)
        hn = (h - mu) / jnp.sqrt(var + 1e-5) * p["gamma"] + p["beta"]
        return jnp.maximum(hn, 0.0) @ p["w2"].T

    def branch(inp, w, b):
        h = adaptive_avg_pool_nchw(conv(inp, w, b), size)
        return h.reshape(h.shape[0], -1)

    fx = proj(branch(x, p["conv_x_w"], p["conv_x_b"]))
    fy = proj(branch(y, p["conv_y_w"], p["conv_y_b"]))
    fz = proj(branch(z, p["conv_z_w"], p["conv_z_b"]))
    fk = proj(branch(k, p["conv_k_w"], p["conv_k_b"]))
    fx = fx - fx.mean(0); fy = fy - fy.mean(0)
    fz = fz - fz.mean(0); fk = fk - fk.mean(0)
    w_ = jnp.stack([fx, fy, fz, fk], axis=1)
    std_w = jnp.sqrt(jnp.var(w_, axis=1, ddof=1) + 1e-4)
    w_loss = jnp.mean(jnp.maximum(r - std_w, 0.0))
    B, D = fx.shape
    cov_x = fx.T @ fx / (B - 1)
    cov_y = fy.T @ fy / (B - 1)
    cov_z = fz.T @ fz / (B - 1)
    cov_k = fy.T @ fk / (B - 1)   # reproduces the y.T @ k in the original code

    def off(c):
        return jnp.sum(c ** 2) - jnp.sum(jnp.diag(c) ** 2)

    cov_loss = (off(cov_x) + off(cov_y) + off(cov_z) + off(cov_k)) / D
    return w_loss + 0.02 * cov_loss


if __name__ == "__main__":
    B, C, H, W, SIZE = 8, 8, 8, 8, 4
    D = C * SIZE * SIZE            # 128 — projector width
    R = 1.0

    key = jax.random.PRNGKey(0)
    ks = jax.random.split(key, 15)

    def uinit(kk, shape, fan_in):
        s = 1.0 / float(fan_in) ** 0.5
        return jax.random.uniform(kk, shape, jnp.float32, -s, s)

    params = {
        "conv_x_w": uinit(ks[0], (C, C), C), "conv_x_b": uinit(ks[1], (C,), C),
        "conv_y_w": uinit(ks[2], (C, C), C), "conv_y_b": uinit(ks[3], (C,), C),
        "conv_z_w": uinit(ks[4], (C, C), C), "conv_z_b": uinit(ks[5], (C,), C),
        "conv_k_w": uinit(ks[6], (C, C), C), "conv_k_b": uinit(ks[7], (C,), C),
        "w1": uinit(ks[8], (D, D), D), "b1": uinit(ks[9], (D,), D),
        "gamma": jnp.ones((D,), jnp.float32), "beta": jnp.zeros((D,), jnp.float32),
        "w2": uinit(ks[10], (D, D), D),
    }

    x = jax.random.normal(ks[11], (B, C, H, W), jnp.float32)
    y = jax.random.normal(ks[12], (B, C, H, W), jnp.float32)
    z = jax.random.normal(ks[13], (B, C, H, W), jnp.float32)
    k_in = jax.random.normal(ks[14], (B, C, H, W), jnp.float32)

    loss = vicreg_w_forward(x, y, z, k_in, params, SIZE, R)
    loss = jax.block_until_ready(loss)

    ref = vicreg_w_reference(x, y, z, k_in, params, SIZE, R)
    assert jnp.allclose(loss, ref, rtol=1e-4, atol=1e-5), (float(loss), float(ref))

    print("KERNEL_OK")
</pallas_src>

<mosaic_0001>
module attributes {stable_mosaic.version = 11 : i64} {
  func.func @_vicreg_fused_kernel(%arg0: i32, %arg1: memref<8x8x64xf32, #tpu.memory_space<vmem>>, %arg2: memref<8x8x64xf32, #tpu.memory_space<vmem>>, %arg3: memref<8x8x64xf32, #tpu.memory_space<vmem>>, %arg4: memref<8x8x64xf32, #tpu.memory_space<vmem>>, %arg5: memref<16x64xf32, #tpu.memory_space<vmem>>, %arg6: memref<4x8x8xf32, #tpu.memory_space<vmem>>, %arg7: memref<4x8x1xf32, #tpu.memory_space<vmem>>, %arg8: memref<128x128xf32, #tpu.memory_space<vmem>>, %arg9: memref<1x128xf32, #tpu.memory_space<vmem>>, %arg10: memref<1x128xf32, #tpu.memory_space<vmem>>, %arg11: memref<1x128xf32, #tpu.memory_space<vmem>>, %arg12: memref<128x128xf32, #tpu.memory_space<vmem>>, %arg13: memref<1x1xf32, #tpu.memory_space<smem>>, %arg14: memref<8x8x16xf32, #tpu.memory_space<vmem>>, %arg15: memref<32x128xf32, #tpu.memory_space<vmem>>) attributes {dimension_semantics = [#tpu.dimension_semantics<arbitrary>], iteration_bounds = array<i64: 1>, scalar_prefetch = 0 : i64, scratch_operands = 2 : i64, tpu.core_type = #tpu.core_type<tc>, window_params = [{pipeline_mode = #tpu.pipeline_mode<synchronous>, transform_indices = @transform_0, window_bounds = array<i64: 8, 8, 64>}, {pipeline_mode = #tpu.pipeline_mode<synchronous>, transform_indices = @transform_1, window_bounds = array<i64: 8, 8, 64>}, {pipeline_mode = #tpu.pipeline_mode<synchronous>, transform_indices = @transform_2, window_bounds = array<i64: 8, 8, 64>}, {pipeline_mode = #tpu.pipeline_mode<synchronous>, transform_indices = @transform_3, window_bounds = array<i64: 8, 8, 64>}, {pipeline_mode = #tpu.pipeline_mode<synchronous>, transform_indices = @transform_4, window_bounds = array<i64: 16, 64>}, {pipeline_mode = #tpu.pipeline_mode<synchronous>, transform_indices = @transform_5, window_bounds = array<i64: 4, 8, 8>}, {pipeline_mode = #tpu.pipeline_mode<synchronous>, transform_indices = @transform_6, window_bounds = array<i64: 4, 8, 1>}, {pipeline_mode = #tpu.pipeline_mode<synchronous>, transform_indices = @transform_7, window_bounds = array<i64: 128, 128>}, {pipeline_mode = #tpu.pipeline_mode<synchronous>, transform_indices = @transform_8, window_bounds = array<i64: 1, 128>}, {pipeline_mode = #tpu.pipeline_mode<synchronous>, transform_indices = @transform_9, window_bounds = array<i64: 1, 128>}, {pipeline_mode = #tpu.pipeline_mode<synchronous>, transform_indices = @transform_10, window_bounds = array<i64: 1, 128>}, {pipeline_mode = #tpu.pipeline_mode<synchronous>, transform_indices = @transform_11, window_bounds = array<i64: 128, 128>}, {transform_indices = @transform_12, window_bounds = array<i64: 1, 1>}]} {
    %c0 = arith.constant 0 : index
    %c0_0 = arith.constant 0 : index
    %0 = vector.load %arg5[%c0, %c0_0] : memref<16x64xf32, #tpu.memory_space<vmem>>, vector<16x64xf32>
    %1 = vector.shape_cast %0 : vector<16x64xf32> to vector<1x16x64xf32>
    %2 = vector.broadcast %1 : vector<1x16x64xf32> to vector<8x16x64xf32>
    %c0_1 = arith.constant 0 : index
    %c0_2 = arith.constant 0 : index
    %c0_3 = arith.constant 0 : index
    %3 = vector.load %arg1[%c0_1, %c0_2, %c0_3] : memref<8x8x64xf32, #tpu.memory_space<vmem>>, vector<8x8x64xf32>
    "tpu.trace_start"() <{level = 10 : i32, message = "bsh,bch->bsc"}> : () -> ()
    %cst = arith.constant dense<0.000000e+00> : vector<8x16x8xf32>
    %4 = tpu.matmul %2, %3, %cst {dimension_numbers = #tpu.dot_dimension_numbers<[2], [2], [1], [1], [0, 0, 0, 1, 1, 1], [0], [0]>} : vector<8x16x64xf32>, vector<8x8x64xf32>, vector<8x16x8xf32> -> vector<8x16x8xf32>
    "tpu.trace_stop"() : () -> ()
    %c0_4 = arith.constant 0 : index
    %c0_5 = arith.constant 0 : index
    %c0_6 = arith.constant 0 : index
    %5 = vector.load %arg6[%c0_4, %c0_5, %c0_6] : memref<4x8x8xf32, #tpu.memory_space<vmem>>, vector<1x8x8xf32>
    %6 = vector.shape_cast %5 : vector<1x8x8xf32> to vector<8x8xf32>
    %7 = vector.shape_cast %6 : vector<8x8xf32> to vector<1x8x8xf32>
    %8 = vector.broadcast %7 : vector<1x8x8xf32> to vector<8x8x8xf32>
    "tpu.trace_start"() <{level = 10 : i32, message = "boc,bsc->bos"}> : () -> ()
    %cst_7 = arith.constant dense<0.000000e+00> : vector<8x8x16xf32>
    %9 = tpu.matmul %8, %4, %cst_7 {dimension_numbers = #tpu.dot_dimension_numbers<[2], [2], [1], [1], [0, 0, 0, 1, 1, 1], [0], [0]>} : vector<8x8x8xf32>, vector<8x16x8xf32>, vector<8x8x16xf32> -> vector<8x8x16xf32>
    "tpu.trace_stop"() : () -> ()
    %c0_8 = arith.constant 0 : index
    %c0_9 = arith.constant 0 : index
    %c0_10 = arith.constant 0 : index
    %10 = vector.load %arg7[%c0_8, %c0_9, %c0_10] : memref<4x8x1xf32, #tpu.memory_space<vmem>>, vector<1x8x1xf32>
    %11 = vector.shape_cast %10 : vector<1x8x1xf32> to vector<8x1xf32>
    %12 = vector.shape_cast %11 : vector<8x1xf32> to vector<1x8x1xf32>
    %13 = vector.broadcast %12 : vector<1x8x1xf32> to vector<8x8x16xf32>
    %14 = arith.addf %9, %13 : vector<8x8x16xf32>
    %c0_11 = arith.constant 0 : index
    %c0_12 = arith.constant 0 : index
    %c0_13 = arith.constant 0 : index
    %15 = vector.load %arg14[%c0_11, %c0_12, %c0_13] : memref<8x8x16xf32, #tpu.memory_space<vmem>>, vector<8x8x16xf32>
    tpu.vector_store %arg14[%c0_11, %c0_12, %c0_13], %14 {strides = array<i32>} : memref<8x8x16xf32, #tpu.memory_space<vmem>>, vector<8x8x16xf32>,
    %c0_14 = arith.constant 0 : index
    %c0_15 = arith.constant 0 : index
    %c0_16 = arith.constant 0 : index
    %16 = vector.load %arg14[%c0_14, %c0_15, %c0_16] : memref<8x8x16xf32, #tpu.memory_space<vmem>>, vector<8x1x16xf32>
    %17 = vector.shape_cast %16 : vector<8x1x16xf32> to vector<8x16xf32>
    %c0_17 = arith.constant 0 : index
    %c0_18 = arith.constant 0 : index
    %18 = vector.load %arg15[%c0_17, %c0_18] : memref<32x128xf32, #tpu.memory_space<vmem>>, vector<8x16xf32>
    tpu.vector_store %arg15[%c0_17, %c0_18], %17 {strides = array<i32>} : memref<32x128xf32, #tpu.memory_space<vmem>>, vector<8x16xf32>,
    %c0_19 = arith.constant 0 : index
    %c1 = arith.constant 1 : index
    %c0_20 = arith.constant 0 : index
    %19 = vector.load %arg14[%c0_19, %c1, %c0_20] : memref<8x8x16xf32, #tpu.memory_space<vmem>>, vector<8x1x16xf32>
    %20 = vector.shape_cast %19 : vector<8x1x16xf32> to vector<8x16xf32>
    %c0_21 = arith.constant 0 : index
    %c16 = arith.constant 16 : index
    %21 = vector.load %arg15[%c0_21, %c16] : memref<32x128xf32, #tpu.memory_space<vmem>>, vector<8x16xf32>
    tpu.vector_store %arg15[%c0_21, %c16], %20 {strides = array<i32>} : memref<32x128xf32, #tpu.memory_space<vmem>>, vector<8x16xf32>,
    %c0_22 = arith.constant 0 : index
    %c2 = arith.constant 2 : index
    %c0_23 = arith.constant 0 : index
    %22 = vector.load %arg14[%c0_22, %c2, %c0_23] : memref<8x8x16xf32, #tpu.memory_space<vmem>>, vector<8x1x16xf32>
    %23 = vector.shape_cast %22 : vector<8x1x16xf32> to vector<8x16xf32>
    %c0_24 = arith.constant 0 : index
    %c32 = arith.constant 32 : index
    %24 = vector.load %arg15[%c0_24, %c32] : memref<32x128xf32, #tpu.memory_space<vmem>>, vector<8x16xf32>
    tpu.vector_store %arg15[%c0_24, %c32], %23 {strides = array<i32>} : memref<32x128xf32, #tpu.memory_space<vmem>>, vector<8x16xf32>,
    %c0_25 = arith.constant 0 : index
    %c3 = arith.constant 3 : index
    %c0_26 = arith.constant 0 : index
    %25 = vector.load %arg14[%c0_25, %c3, %c0_26] : memref<8x8x16xf32, #tpu.memory_space<vmem>>, vector<8x1x16xf32>
    %26 = vector.shape_cast %25 : vector<8x1x16xf32> to vector<8x16xf32>
    %c0_27 = arith.constant 0 : index
    %c48 = arith.constant 48 : index
    %27 = vector.load %arg15[%c0_27, %c48] : memref<32x128xf32, #tpu.memory_space<vmem>>, vector<8x16xf32>
    tpu.vector_store %arg15[%c0_27, %c48], %26 {strides = array<i32>} : memref<32x128xf32, #tpu.memory_space<vmem>>, vector<8x16xf32>,
    %c0_28 = arith.constant 0 : index
    %c4 = arith.constant 4 : index
    %c0_29 = arith.constant 0 : index
    %28 = vector.load %arg14[%c0_28, %c4, %c0_29] : memref<8x8x16xf32, #tpu.memory_space<vmem>>, vector<8x1x16xf32>
    %29 = vector.shape_cast %28 : vector<8x1x16xf32> to vector<8x16xf32>
    %c0_30 = arith.constant 0 : index
    %c64 = arith.constant 64 : index
    %30 = vector.load %arg15[%c0_30, %c64] : memref<32x128xf32, #tpu.memory_space<vmem>>, vector<8x16xf32>
    tpu.vector_store %arg15[%c0_30, %c64], %29 {strides = array<i32>} : memref<32x128xf32, #tpu.memory_space<vmem>>, vector<8x16xf32>,
    %c0_31 = arith.constant 0 : index
    %c5 = arith.constant 5 : index
    %c0_32 = arith.constant 0 : index
    %31 = vector.load %arg14[%c0_31, %c5, %c0_32] : memref<8x8x16xf32, #tpu.memory_space<vmem>>, vector<8x1x16xf32>
    %32 = vector.shape_cast %31 : vector<8x1x16xf32> to vector<8x16xf32>
    %c0_33 = arith.constant 0 : index
    %c80 = arith.constant 80 : index
    %33 = vector.load %arg15[%c0_33, %c80] : memref<32x128xf32, #tpu.memory_space<vmem>>, vector<8x16xf32>
    tpu.vector_store %arg15[%c0_33, %c80], %32 {strides = array<i32>} : memref<32x128xf32, #tpu.memory_space<vmem>>, vector<8x16xf32>,
    %c0_34 = arith.constant 0 : index
    %c6 = arith.constant 6 : index
    %c0_35 = arith.constant 0 : index
    %34 = vector.load %arg14[%c0_34, %c6, %c0_35] : memref<8x8x16xf32, #tpu.memory_space<vmem>>, vector<8x1x16xf32>
    %35 = vector.shape_cast %34 : vector<8x1x16xf32> to vector<8x16xf32>
    %c0_36 = arith.constant 0 : index
    %c96 = arith.constant 96 : index
    %36 = vector.load %arg15[%c0_36, %c96] : memref<32x128xf32, #tpu.memory_space<vmem>>, vector<8x16xf32>
    tpu.vector_store %arg15[%c0_36, %c96], %35 {strides = array<i32>} : memref<32x128xf32, #tpu.memory_space<vmem>>, vector<8x16xf32>,
    %c0_37 = arith.constant 0 : index
    %c7 = arith.constant 7 : index
    %c0_38 = arith.constant 0 : index
    %37 = vector.load %arg14[%c0_37, %c7, %c0_38] : memref<8x8x16xf32, #tpu.memory_space<vmem>>, vector<8x1x16xf32>
    %38 = vector.shape_cast %37 : vector<8x1x16xf32> to vector<8x16xf32>
    %c0_39 = arith.constant 0 : index
    %c112 = arith.constant 112 : index
    %39 = vector.load %arg15[%c0_39, %c112] : memref<32x128xf32, #tpu.memory_space<vmem>>, vector<8x16xf32>
    tpu.vector_store %arg15[%c0_39, %c112], %38 {strides = array<i32>} : memref<32x128xf32, #tpu.memory_space<vmem>>, vector<8x16xf32>,
    %c0_40 = arith.constant 0 : index
    %c0_41 = arith.constant 0 : index
    %c0_42 = arith.constant 0 : index
    %40 = vector.load %arg2[%c0_40, %c0_41, %c0_42] : memref<8x8x64xf32, #tpu.memory_space<vmem>>, vector<8x8x64xf32>
    "tpu.trace_start"() <{level = 10 : i32, message = "bsh,bch->bsc"}> : () -> ()
    %cst_43 = arith.constant dense<0.000000e+00> : vector<8x16x8xf32>
    %41 = tpu.matmul %2, %40, %cst_43 {dimension_numbers = #tpu.dot_dimension_numbers<[2], [2], [1], [1], [0, 0, 0, 1, 1, 1], [0], [0]>} : vector<8x16x64xf32>, vector<8x8x64xf32>, vector<8x16x8xf32> -> vector<8x16x8xf32>
    "tpu.trace_stop"() : () -> ()
    %c1_44 = arith.constant 1 : index
    %c0_45 = arith.constant 0 : index
    %c0_46 = arith.constant 0 : index
    %42 = vector.load %arg6[%c1_44, %c0_45, %c0_46] : memref<4x8x8xf32, #tpu.memory_space<vmem>>, vector<1x8x8xf32>
    %43 = vector.shape_cast %42 : vector<1x8x8xf32> to vector<8x8xf32>
    %44 = vector.shape_cast %43 : vector<8x8xf32> to vector<1x8x8xf32>
    %45 = vector.broadcast %44 : vector<1x8x8xf32> to vector<8x8x8xf32>
    "tpu.trace_start"() <{level = 10 : i32, message = "boc,bsc->bos"}> : () -> ()
    %cst_47 = arith.constant dense<0.000000e+00> : vector<8x8x16xf32>
    %46 = tpu.matmul %45, %41, %cst_47 {dimension_numbers = #tpu.dot_dimension_numbers<[2], [2], [1], [1], [0, 0, 0, 1, 1, 1], [0], [0]>} : vector<8x8x8xf32>, vector<8x16x8xf32>, vector<8x8x16xf32> -> vector<8x8x16xf32>
    "tpu.trace_stop"() : () -> ()
    %c1_48 = arith.constant 1 : index
    %c0_49 = arith.constant 0 : index
    %c0_50 = arith.constant 0 : index
    %47 = vector.load %arg7[%c1_48, %c0_49, %c0_50] : memref<4x8x1xf32, #tpu.memory_space<vmem>>, vector<1x8x1xf32>
    %48 = vector.shape_cast %47 : vector<1x8x1xf32> to vector<8x1xf32>
    %49 = vector.shape_cast %48 : vector<8x1xf32> to vector<1x8x1xf32>
    %50 = vector.broadcast %49 : vector<1x8x1xf32> to vector<8x8x16xf32>
    %51 = arith.addf %46, %50 : vector<8x8x16xf32>
    %c0_51 = arith.constant 0 : index
    %c0_52 = arith.constant 0 : index
    %c0_53 = arith.constant 0 : index
    %52 = vector.load %arg14[%c0_51, %c0_52, %c0_53] : memref<8x8x16xf32, #tpu.memory_space<vmem>>, vector<8x8x16xf32>
    tpu.vector_store %arg14[%c0_51, %c0_52, %c0_53], %51 {strides = array<i32>} : memref<8x8x16xf32, #tpu.memory_space<vmem>>, vector<8x8x16xf32>,
    %c0_54 = arith.constant 0 : index
    %c0_55 = arith.constant 0 : index
    %c0_56 = arith.constant 0 : index
    %53 = vector.load %arg14[%c0_54, %c0_55, %c0_56] : memref<8x8x16xf32, #tpu.memory_space<vmem>>, vector<8x1x16xf32>
    %54 = vector.shape_cast %53 : vector<8x1x16xf32> to vector<8x16xf32>
    %c8 = arith.constant 8 : index
    %c0_57 = arith.constant 0 : index
    %55 = vector.load %arg15[%c8, %c0_57] : memref<32x128xf32, #tpu.memory_space<vmem>>, vector<8x16xf32>
    tpu.vector_store %arg15[%c8, %c0_57], %54 {strides = array<i32>} : memref<32x128xf32, #tpu.memory_space<vmem>>, vector<8x16xf32>,
    %c0_58 = arith.constant 0 : index
    %c1_59 = arith.constant 1 : index
    %c0_60 = arith.constant 0 : index
    %56 = vector.load %arg14[%c0_58, %c1_59, %c0_60] : memref<8x8x16xf32, #tpu.memory_space<vmem>>, vector<8x1x16xf32>
    %57 = vector.shape_cast %56 : vector<8x1x16xf32> to vector<8x16xf32>
    %c8_61 = arith.constant 8 : index
    %c16_62 = arith.constant 16 : index
    %58 = vector.load %arg15[%c8_61, %c16_62] : memref<32x128xf32, #tpu.memory_space<vmem>>, vector<8x16xf32>
    tpu.vector_store %arg15[%c8_61, %c16_62], %57 {strides = array<i32>} : memref<32x128xf32, #tpu.memory_space<vmem>>, vector<8x16xf32>,
    %c0_63 = arith.constant 0 : index
    %c2_64 = arith.constant 2 : index
    %c0_65 = arith.constant 0 : index
    %59 = vector.load %arg14[%c0_63, %c2_64, %c0_65] : memref<8x8x16xf32, #tpu.memory_space<vmem>>, vector<8x1x16xf32>
    %60 = vector.shape_cast %59 : vector<8x1x16xf32> to vector<8x16xf32>
    %c8_66 = arith.constant 8 : index
    %c32_67 = arith.constant 32 : index
    %61 = vector.load %arg15[%c8_66, %c32_67] : memref<32x128xf32, #tpu.memory_space<vmem>>, vector<8x16xf32>
    tpu.vector_store %arg15[%c8_66, %c32_67], %60 {strides = array<i32>} : memref<32x128xf32, #tpu.memory_space<vmem>>, vector<8x16xf32>,
    %c0_68 = arith.constant 0 : index
    %c3_69 = arith.constant 3 : index
    %c0_70 = arith.constant 0 : index
    %62 = vector.load %arg14[%c0_68, %c3_69, %c0_70] : memref<8x8x16xf32, #tpu.memory_space<vmem>>, vector<8x1x16xf32>
    %63 = vector.shape_cast %62 : vector<8x1x16xf32> to vector<8x16xf32>
    %c8_71 = arith.constant 8 : index
    %c48_72 = arith.constant 48 : index
    %64 = vector.load %arg15[%c8_71, %c48_72] : memref<32x128xf32, #tpu.memory_space<vmem>>, vector<8x16xf32>
    tpu.vector_store %arg15[%c8_71, %c48_72], %63 {strides = array<i32>} : memref<32x128xf32, #tpu.memory_space<vmem>>, vector<8x16xf32>,
    %c0_73 = arith.constant 0 : index
    %c4_74 = arith.constant 4 : index
    %c0_75 = arith.constant 0 : index
    %65 = vector.load %arg14[%c0_73, %c4_74, %c0_75] : memref<8x8x16xf32, #tpu.memory_space<vmem>>, vector<8x1x16xf32>
    %66 = vector.shape_cast %65 : vector<8x1x16xf32> to vector<8x16xf32>
    %c8_76 = arith.constant 8 : index
    %c64_77 = arith.constant 64 : index
    %67 = vector.load %arg15[%c8_76, %c64_77] : memref<32x128xf32, #tpu.memory_space<vmem>>, vector<8x16xf32>
    tpu.vector_store %arg15[%c8_76, %c64_77], %66 {strides = array<i32>} : memref<32x128xf32, #tpu.memory_space<vmem>>, vector<8x16xf32>,
    %c0_78 = arith.constant 0 : index
    %c5_79 = arith.constant 5 : index
    %c0_80 = arith.constant 0 : index
    %68 = vector.load %arg14[%c0_78, %c5_79, %c0_80] : memref<8x8x16xf32, #tpu.memory_space<vmem>>, vector<8x1x16xf32>
    %69 = vector.shape_cast %68 : vector<8x1x16xf32> to vector<8x16xf32>
    %c8_81 = arith.constant 8 : index
    %c80_82 = arith.constant 80 : index
    %70 = vector.load %arg15[%c8_81, %c80_82] : memref<32x128xf32, #tpu.memory_space<vmem>>, vector<8x16xf32>
    tpu.vector_store %arg15[%c8_81, %c80_82], %69 {strides = array<i32>} : memref<32x128xf32, #tpu.memory_space<vmem>>, vector<8x16xf32>,
    %c0_83 = arith.constant 0 : index
    %c6_84 = arith.constant 6 : index
    %c0_85 = arith.constant 0 : index
    %71 = vector.load %arg14[%c0_83, %c6_84, %c0_85] : memref<8x8x16xf32, #tpu.memory_space<vmem>>, vector<8x1x16xf32>
    %72 = vector.shape_cast %71 : vector<8x1x16xf32> to vector<8x16xf32>
    %c8_86 = arith.constant 8 : index
    %c96_87 = arith.constant 96 : index
    %73 = vector.load %arg15[%c8_86, %c96_87] : memref<32x128xf32, #tpu.memory_space<vmem>>, vector<8x16xf32>
    tpu.vector_store %arg15[%c8_86, %c96_87], %72 {strides = array<i32>} : memref<32x128xf32, #tpu.memory_space<vmem>>, vector<8x16xf32>,
    %c0_88 = arith.constant 0 : index
    %c7_89 = arith.constant 7 : index
    %c0_90 = arith.constant 0 : index
    %74 = vector.load %arg14[%c0_88, %c7_89, %c0_90] : memref<8x8x16xf32, #tpu.memory_space<vmem>>, vector<8x1x16xf32>
    %75 = vector.shape_cast %74 : vector<8x1x16xf32> to vector<8x16xf32>
    %c8_91 = arith.constant 8 : index
    %c112_92 = arith.constant 112 : index
    %76 = vector.load %arg15[%c8_91, %c112_92] : memref<32x128xf32, #tpu.memory_space<vmem>>, vector<8x16xf32>
    tpu.vector_store %arg15[%c8_91, %c112_92], %75 {strides = array<i32>} : memref<32x128xf32, #tpu.memory_space<vmem>>, vector<8x16xf32>,
    %c0_93 = arith.constant 0 : index
    %c0_94 = arith.constant 0 : index
    %c0_95 = arith.constant 0 : index
    %77 = vector.load %arg3[%c0_93, %c0_94, %c0_95] : memref<8x8x64xf32, #tpu.memory_space<vmem>>, vector<8x8x64xf32>
    "tpu.trace_start"() <{level = 10 : i32, message = "bsh,bch->bsc"}> : () -> ()
    %cst_96 = arith.constant dense<0.000000e+00> : vector<8x16x8xf32>
    %78 = tpu.matmul %2, %77, %cst_96 {dimension_numbers = #tpu.dot_dimension_numbers<[2], [2], [1], [1], [0, 0, 0, 1, 1, 1], [0], [0]>} : vector<8x16x64xf32>, vector<8x8x64xf32>, vector<8x16x8xf32> -> vector<8x16x8xf32>
    "tpu.trace_stop"() : () -> ()
    %c2_97 = arith.constant 2 : index
    %c0_98 = arith.constant 0 : index
    %c0_99 = arith.constant 0 : index
    %79 = vector.load %arg6[%c2_97, %c0_98, %c0_99] : memref<4x8x8xf32, #tpu.memory_space<vmem>>, vector<1x8x8xf32>
    %80 = vector.shape_cast %79 : vector<1x8x8xf32> to vector<8x8xf32>
    %81 = vector.shape_cast %80 : vector<8x8xf32> to vector<1x8x8xf32>
    %82 = vector.broadcast %81 : vector<1x8x8xf32> to vector<8x8x8xf32>
    "tpu.trace_start"() <{level = 10 : i32, message = "boc,bsc->bos"}> : () -> ()
    %cst_100 = arith.constant dense<0.000000e+00> : vector<8x8x16xf32>
    %83 = tpu.matmul %82, %78, %cst_100 {dimension_numbers = #tpu.dot_dimension_numbers<[2], [2], [1], [1], [0, 0, 0, 1, 1, 1], [0], [0]>} : vector<8x8x8xf32>, vector<8x16x8xf32>, vector<8x8x16xf32> -> vector<8x8x16xf32>
    "tpu.trace_stop"() : () -> ()
    %c2_101 = arith.constant 2 : index
    %c0_102 = arith.constant 0 : index
    %c0_103 = arith.constant 0 : index
    %84 = vector.load %arg7[%c2_101, %c0_102, %c0_103] : memref<4x8x1xf32, #tpu.memory_space<vmem>>, vector<1x8x1xf32>
    %85 = vector.shape_cast %84 : vector<1x8x1xf32> to vector<8x1xf32>
    %86 = vector.shape_cast %85 : vector<8x1xf32> to vector<1x8x1xf32>
    %87 = vector.broadcast %86 : vector<1x8x1xf32> to vector<8x8x16xf32>
    %88 = arith.addf %83, %87 : vector<8x8x16xf32>
    %c0_104 = arith.constant 0 : index
    %c0_105 = arith.constant 0 : index
    %c0_106 = arith.constant 0 : index
    %89 = vector.load %arg14[%c0_104, %c0_105, %c0_106] : memref<8x8x16xf32, #tpu.memory_space<vmem>>, vector<8x8x16xf32>
    tpu.vector_store %arg14[%c0_104, %c0_105, %c0_106], %88 {strides = array<i32>} : memref<8x8x16xf32, #tpu.memory_space<vmem>>, vector<8x8x16xf32>,
    %c0_107 = arith.constant 0 : index
    %c0_108 = arith.constant 0 : index
    %c0_109 = arith.constant 0 : index
    %90 = vector.load %arg14[%c0_107, %c0_108, %c0_109] : memref<8x8x16xf32, #tpu.memory_space<vmem>>, vector<8x1x16xf32>
    %91 = vector.shape_cast %90 : vector<8x1x16xf32> to vector<8x16xf32>
    %c16_110 = arith.constant 16 : index
    %c0_111 = arith.constant 0 : index
    %92 = vector.load %arg15[%c16_110, %c0_111] : memref<32x128xf32, #tpu.memory_space<vmem>>, vector<8x16xf32>
    tpu.vector_store %arg15[%c16_110, %c0_111], %91 {strides = array<i32>} : memref<32x128xf32, #tpu.memory_space<vmem>>, vector<8x16xf32>,
    %c0_112 = arith.constant 0 : index
    %c1_113 = arith.constant 1 : index
    %c0_114 = arith.constant 0 : index
    %93 = vector.load %arg14[%c0_112, %c1_113, %c0_114] : memref<8x8x16xf32, #tpu.memory_space<vmem>>, vector<8x1x16xf32>
    %94 = vector.shape_cast %93 : vector<8x1x16xf32> to vector<8x16xf32>
    %c16_115 = arith.constant 16 : index
    %c16_116 = arith.constant 16 : index
    %95 = vector.load %arg15[%c16_115, %c16_116] : memref<32x128xf32, #tpu.memory_space<vmem>>, vector<8x16xf32>
    tpu.vector_store %arg15[%c16_115, %c16_116], %94 {strides = array<i32>} : memref<32x128xf32, #tpu.memory_space<vmem>>, vector<8x16xf32>,
    %c0_117 = arith.constant 0 : index
    %c2_118 = arith.constant 2 : index
    %c0_119 = arith.constant 0 : index
    %96 = vector.load %arg14[%c0_117, %c2_118, %c0_119] : memref<8x8x16xf32, #tpu.memory_space<vmem>>, vector<8x1x16xf32>
    %97 = vector.shape_cast %96 : vector<8x1x16xf32> to vector<8x16xf32>
    %c16_120 = arith.constant 16 : index
    %c32_121 = arith.constant 32 : index
    %98 = vector.load %arg15[%c16_120, %c32_121] : memref<32x128xf32, #tpu.memory_space<vmem>>, vector<8x16xf32>
    tpu.vector_store %arg15[%c16_120, %c32_121], %97 {strides = array<i32>} : memref<32x128xf32, #tpu.memory_space<vmem>>, vector<8x16xf32>,
    %c0_122 = arith.constant 0 : index
    %c3_123 = arith.constant 3 : index
    %c0_124 = arith.constant 0 : index
    %99 = vector.load %arg14[%c0_122, %c3_123, %c0_124] : memref<8x8x16xf32, #tpu.memory_space<vmem>>, vector<8x1x16xf32>
    %100 = vector.shape_cast %99 : vector<8x1x16xf32> to vector<8x16xf32>
    %c16_125 = arith.constant 16 : index
    %c48_126 = arith.constant 48 : index
    %101 = vector.load %arg15[%c16_125, %c48_126] : memref<32x128xf32, #tpu.memory_space<vmem>>, vector<8x16xf32>
    tpu.vector_store %arg15[%c16_125, %c48_126], %100 {strides = array<i32>} : memref<32x128xf32, #tpu.memory_space<vmem>>, vector<8x16xf32>,
    %c0_127 = arith.constant 0 : index
    %c4_128 = arith.constant 4 : index
    %c0_129 = arith.constant 0 : index
    %102 = vector.load %arg14[%c0_127, %c4_128, %c0_129] : memref<8x8x16xf32, #tpu.memory_space<vmem>>, vector<8x1x16xf32>
    %103 = vector.shape_cast %102 : vector<8x1x16xf32> to vector<8x16xf32>
    %c16_130 = arith.constant 16 : index
    %c64_131 = arith.constant 64 : index
    %104 = vector.load %arg15[%c16_130, %c64_131] : memref<32x128xf32, #tpu.memory_space<vmem>>, vector<8x16xf32>
    tpu.vector_store %arg15[%c16_130, %c64_131], %103 {strides = array<i32>} : memref<32x128xf32, #tpu.memory_space<vmem>>, vector<8x16xf32>,
    %c0_132 = arith.constant 0 : index
    %c5_133 = arith.constant 5 : index
    %c0_134 = arith.constant 0 : index
    %105 = vector.load %arg14[%c0_132, %c5_133, %c0_134] : memref<8x8x16xf32, #tpu.memory_space<vmem>>, vector<8x1x16xf32>
    %106 = vector.shape_cast %105 : vector<8x1x16xf32> to vector<8x16xf32>
    %c16_135 = arith.constant 16 : index
    %c80_136 = arith.constant 80 : index
    %107 = vector.load %arg15[%c16_135, %c80_136] : memref<32x128xf32, #tpu.memory_space<vmem>>, vector<8x16xf32>
    tpu.vector_store %arg15[%c16_135, %c80_136], %106 {strides = array<i32>} : memref<32x128xf32, #tpu.memory_space<vmem>>, vector<8x16xf32>,
    %c0_137 = arith.constant 0 : index
    %c6_138 = arith.constant 6 : index
    %c0_139 = arith.constant 0 : index
    %108 = vector.load %arg14[%c0_137, %c6_138, %c0_139] : memref<8x8x16xf32, #tpu.memory_space<vmem>>, vector<8x1x16xf32>
    %109 = vector.shape_cast %108 : vector<8x1x16xf32> to vector<8x16xf32>
    %c16_140 = arith.constant 16 : index
    %c96_141 = arith.constant 96 : index
    %110 = vector.load %arg15[%c16_140, %c96_141] : memref<32x128xf32, #tpu.memory_space<vmem>>, vector<8x16xf32>
    tpu.vector_store %arg15[%c16_140, %c96_141], %109 {strides = array<i32>} : memref<32x128xf32, #tpu.memory_space<vmem>>, vector<8x16xf32>,
    %c0_142 = arith.constant 0 : index
    %c7_143 = arith.constant 7 : index
    %c0_144 = arith.constant 0 : index
    %111 = vector.load %arg14[%c0_142, %c7_143, %c0_144] : memref<8x8x16xf32, #tpu.memory_space<vmem>>, vector<8x1x16xf32>
    %112 = vector.shape_cast %111 : vector<8x1x16xf32> to vector<8x16xf32>
    %c16_145 = arith.constant 16 : index
    %c112_146 = arith.constant 112 : index
    %113 = vector.load %arg15[%c16_145, %c112_146] : memref<32x128xf32, #tpu.memory_space<vmem>>, vector<8x16xf32>
    tpu.vector_store %arg15[%c16_145, %c112_146], %112 {strides = array<i32>} : memref<32x128xf32, #tpu.memory_space<vmem>>, vector<8x16xf32>,
    %c0_147 = arith.constant 0 : index
    %c0_148 = arith.constant 0 : index
    %c0_149 = arith.constant 0 : index
    %114 = vector.load %arg4[%c0_147, %c0_148, %c0_149] : memref<8x8x64xf32, #tpu.memory_space<vmem>>, vector<8x8x64xf32>
    "tpu.trace_start"() <{level = 10 : i32, message = "bsh,bch->bsc"}> : () -> ()
    %cst_150 = arith.constant dense<0.000000e+00> : vector<8x16x8xf32>
    %115 = tpu.matmul %2, %114, %cst_150 {dimension_numbers = #tpu.dot_dimension_numbers<[2], [2], [1], [1], [0, 0, 0, 1, 1, 1], [0], [0]>} : vector<8x16x64xf32>, vector<8x8x64xf32>, vector<8x16x8xf32> -> vector<8x16x8xf32>
    "tpu.trace_stop"() : () -> ()
    %c3_151 = arith.constant 3 : index
    %c0_152 = arith.constant 0 : index
    %c0_153 = arith.constant 0 : index
    %116 = vector.load %arg6[%c3_151, %c0_152, %c0_153] : memref<4x8x8xf32, #tpu.memory_space<vmem>>, vector<1x8x8xf32>
    %117 = vector.shape_cast %116 : vector<1x8x8xf32> to vector<8x8xf32>
    %118 = vector.shape_cast %117 : vector<8x8xf32> to vector<1x8x8xf32>
    %119 = vector.broadcast %118 : vector<1x8x8xf32> to vector<8x8x8xf32>
    "tpu.trace_start"() <{level = 10 : i32, message = "boc,bsc->bos"}> : () -> ()
    %cst_154 = arith.constant dense<0.000000e+00> : vector<8x8x16xf32>
    %120 = tpu.matmul %119, %115, %cst_154 {dimension_numbers = #tpu.dot_dimension_numbers<[2], [2], [1], [1], [0, 0, 0, 1, 1, 1], [0], [0]>} : vector<8x8x8xf32>, vector<8x16x8xf32>, vector<8x8x16xf32> -> vector<8x8x16xf32>
    "tpu.trace_stop"() : () -> ()
    %c3_155 = arith.constant 3 : index
    %c0_156 = arith.constant 0 : index
    %c0_157 = arith.constant 0 : index
    %121 = vector.load %arg7[%c3_155, %c0_156, %c0_157] : memref<4x8x1xf32, #tpu.memory_space<vmem>>, vector<1x8x1xf32>
    %122 = vector.shape_cast %121 : vector<1x8x1xf32> to vector<8x1xf32>
    %123 = vector.shape_cast %122 : vector<8x1xf32> to vector<1x8x1xf32>
    %124 = vector.broadcast %123 : vector<1x8x1xf32> to vector<8x8x16xf32>
    %125 = arith.addf %120, %124 : vector<8x8x16xf32>
    %c0_158 = arith.constant 0 : index
    %c0_159 = arith.constant 0 : index
    %c0_160 = arith.constant 0 : index
    %126 = vector.load %arg14[%c0_158, %c0_159, %c0_160] : memref<8x8x16xf32, #tpu.memory_space<vmem>>, vector<8x8x16xf32>
    tpu.vector_store %arg14[%c0_158, %c0_159, %c0_160], %125 {strides = array<i32>} : memref<8x8x16xf32, #tpu.memory_space<vmem>>, vector<8x8x16xf32>,
    %c0_161 = arith.constant 0 : index
    %c0_162 = arith.constant 0 : index
    %c0_163 = arith.constant 0 : index
    %127 = vector.load %arg14[%c0_161, %c0_162, %c0_163] : memref<8x8x16xf32, #tpu.memory_space<vmem>>, vector<8x1x16xf32>
    %128 = vector.shape_cast %127 : vector<8x1x16xf32> to vector<8x16xf32>
    %c24 = arith.constant 24 : index
    %c0_164 = arith.constant 0 : index
    %129 = vector.load %arg15[%c24, %c0_164] : memref<32x128xf32, #tpu.memory_space<vmem>>, vector<8x16xf32>
    tpu.vector_store %arg15[%c24, %c0_164], %128 {strides = array<i32>} : memref<32x128xf32, #tpu.memory_space<vmem>>, vector<8x16xf32>,
    %c0_165 = arith.constant 0 : index
    %c1_166 = arith.constant 1 : index
    %c0_167 = arith.constant 0 : index
    %130 = vector.load %arg14[%c0_165, %c1_166, %c0_167] : memref<8x8x16xf32, #tpu.memory_space<vmem>>, vector<8x1x16xf32>
    %131 = vector.shape_cast %130 : vector<8x1x16xf32> to vector<8x16xf32>
    %c24_168 = arith.constant 24 : index
    %c16_169 = arith.constant 16 : index
    %132 = vector.load %arg15[%c24_168, %c16_169] : memref<32x128xf32, #tpu.memory_space<vmem>>, vector<8x16xf32>
    tpu.vector_store %arg15[%c24_168, %c16_169], %131 {strides = array<i32>} : memref<32x128xf32, #tpu.memory_space<vmem>>, vector<8x16xf32>,
    %c0_170 = arith.constant 0 : index
    %c2_171 = arith.constant 2 : index
    %c0_172 = arith.constant 0 : index
    %133 = vector.load %arg14[%c0_170, %c2_171, %c0_172] : memref<8x8x16xf32, #tpu.memory_space<vmem>>, vector<8x1x16xf32>
    %134 = vector.shape_cast %133 : vector<8x1x16xf32> to vector<8x16xf32>
    %c24_173 = arith.constant 24 : index
    %c32_174 = arith.constant 32 : index
    %135 = vector.load %arg15[%c24_173, %c32_174] : memref<32x128xf32, #tpu.memory_space<vmem>>, vector<8x16xf32>
    tpu.vector_store %arg15[%c24_173, %c32_174], %134 {strides = array<i32>} : memref<32x128xf32, #tpu.memory_space<vmem>>, vector<8x16xf32>,
    %c0_175 = arith.constant 0 : index
    %c3_176 = arith.constant 3 : index
    %c0_177 = arith.constant 0 : index
    %136 = vector.load %arg14[%c0_175, %c3_176, %c0_177] : memref<8x8x16xf32, #tpu.memory_space<vmem>>, vector<8x1x16xf32>
    %137 = vector.shape_cast %136 : vector<8x1x16xf32> to vector<8x16xf32>
    %c24_178 = arith.constant 24 : index
    %c48_179 = arith.constant 48 : index
    %138 = vector.load %arg15[%c24_178, %c48_179] : memref<32x128xf32, #tpu.memory_space<vmem>>, vector<8x16xf32>
    tpu.vector_store %arg15[%c24_178, %c48_179], %137 {strides = array<i32>} : memref<32x128xf32, #tpu.memory_space<vmem>>, vector<8x16xf32>,
    %c0_180 = arith.constant 0 : index
    %c4_181 = arith.constant 4 : index
    %c0_182 = arith.constant 0 : index
    %139 = vector.load %arg14[%c0_180, %c4_181, %c0_182] : memref<8x8x16xf32, #tpu.memory_space<vmem>>, vector<8x1x16xf32>
    %140 = vector.shape_cast %139 : vector<8x1x16xf32> to vector<8x16xf32>
    %c24_183 = arith.constant 24 : index
    %c64_184 = arith.constant 64 : index
    %141 = vector.load %arg15[%c24_183, %c64_184] : memref<32x128xf32, #tpu.memory_space<vmem>>, vector<8x16xf32>
    tpu.vector_store %arg15[%c24_183, %c64_184], %140 {strides = array<i32>} : memref<32x128xf32, #tpu.memory_space<vmem>>, vector<8x16xf32>,
    %c0_185 = arith.constant 0 : index
    %c5_186 = arith.constant 5 : index
    %c0_187 = arith.constant 0 : index
    %142 = vector.load %arg14[%c0_185, %c5_186, %c0_187] : memref<8x8x16xf32, #tpu.memory_space<vmem>>, vector<8x1x16xf32>
    %143 = vector.shape_cast %142 : vector<8x1x16xf32> to vector<8x16xf32>
    %c24_188 = arith.constant 24 : index
    %c80_189 = arith.constant 80 : index
    %144 = vector.load %arg15[%c24_188, %c80_189] : memref<32x128xf32, #tpu.memory_space<vmem>>, vector<8x16xf32>
    tpu.vector_store %arg15[%c24_188, %c80_189], %143 {strides = array<i32>} : memref<32x128xf32, #tpu.memory_space<vmem>>, vector<8x16xf32>,
    %c0_190 = arith.constant 0 : index
    %c6_191 = arith.constant 6 : index
    %c0_192 = arith.constant 0 : index
    %145 = vector.load %arg14[%c0_190, %c6_191, %c0_192] : memref<8x8x16xf32, #tpu.memory_space<vmem>>, vector<8x1x16xf32>
    %146 = vector.shape_cast %145 : vector<8x1x16xf32> to vector<8x16xf32>
    %c24_193 = arith.constant 24 : index
    %c96_194 = arith.constant 96 : index
    %147 = vector.load %arg15[%c24_193, %c96_194] : memref<32x128xf32, #tpu.memory_space<vmem>>, vector<8x16xf32>
    tpu.vector_store %arg15[%c24_193, %c96_194], %146 {strides = array<i32>} : memref<32x128xf32, #tpu.memory_space<vmem>>, vector<8x16xf32>,
    %c0_195 = arith.constant 0 : index
    %c7_196 = arith.constant 7 : index
    %c0_197 = arith.constant 0 : index
    %148 = vector.load %arg14[%c0_195, %c7_196, %c0_197] : memref<8x8x16xf32, #tpu.memory_space<vmem>>, vector<8x1x16xf32>
    %149 = vector.shape_cast %148 : vector<8x1x16xf32> to vector<8x16xf32>
    %c24_198 = arith.constant 24 : index
    %c112_199 = arith.constant 112 : index
    %150 = vector.load %arg15[%c24_198, %c112_199] : memref<32x128xf32, #tpu.memory_space<vmem>>, vector<8x16xf32>
    tpu.vector_store %arg15[%c24_198, %c112_199], %149 {strides = array<i32>} : memref<32x128xf32, #tpu.memory_space<vmem>>, vector<8x16xf32>,
    %c0_200 = arith.constant 0 : index
    %c0_201 = arith.constant 0 : index
    %151 = vector.load %arg15[%c0_200, %c0_201] : memref<32x128xf32, #tpu.memory_space<vmem>>, vector<32x128xf32>
    %c0_202 = arith.constant 0 : index
    %c0_203 = arith.constant 0 : index
    %152 = vector.load %arg8[%c0_202, %c0_203] : memref<128x128xf32, #tpu.memory_space<vmem>>, vector<128x128xf32>
    %cst_204 = arith.constant dense<0.000000e+00> : vector<32x128xf32>
    %153 = tpu.matmul %151, %152, %cst_204 {dimension_numbers = #tpu.dot_dimension_numbers<[1], [0], [0], [1], [0, 0, 1, 1], [], []>} : vector<32x128xf32>, vector<128x128xf32>, vector<32x128xf32> -> vector<32x128xf32>
    %c0_205 = arith.constant 0 : index
    %c0_206 = arith.constant 0 : index
    %154 = vector.load %arg9[%c0_205, %c0_206] : memref<1x128xf32, #tpu.memory_space<vmem>>, vector<1x128xf32>
    %155 = vector.broadcast %154 : vector<1x128xf32> to vector<32x128xf32>
    %156 = arith.addf %153, %155 : vector<32x128xf32>
    %c0_207 = arith.constant 0 : index
    %c0_208 = arith.constant 0 : index
    %157 = vector.load %arg10[%c0_207, %c0_208] : memref<1x128xf32, #tpu.memory_space<vmem>>, vector<1x128xf32>
    %c0_209 = arith.constant 0 : index
    %c0_210 = arith.constant 0 : index
    %158 = vector.load %arg11[%c0_209, %c0_210] : memref<1x128xf32, #tpu.memory_space<vmem>>, vector<1x128xf32>
    %c0_211 = arith.constant 0 : index
    %c0_212 = arith.constant 0 : index
    %159 = vector.load %arg12[%c0_211, %c0_212] : memref<128x128xf32, #tpu.memory_space<vmem>>, vector<128x128xf32>
    %160 = vector.extract_strided_slice %156 {offsets = [0, 0], sizes = [8, 128], strides = [1, 1]} : vector<32x128xf32> to vector<8x128xf32>
    %cst_213 = arith.constant dense<0.000000e+00> : vector<128xf32>
    %161 = vector.multi_reduction <add>, %160, %cst_213 [0] : vector<8x128xf32> to vector<128xf32>
    %162 = vector.shape_cast %161 : vector<128xf32> to vector<1x128xf32>
    %cst_214 = arith.constant 8.000000e+00 : f32
    %163 = vector.broadcast %cst_214 : f32 to vector<1x128xf32>
    %164 = arith.divf %162, %163 : vector<1x128xf32>
    %165 = vector.broadcast %164 : vector<1x128xf32> to vector<8x128xf32>
    %166 = arith.subf %160, %165 : vector<8x128xf32>
    %167 = arith.mulf %166, %166 : vector<8x128xf32>
    %cst_215 = arith.constant dense<0.000000e+00> : vector<128xf32>
    %168 = vector.multi_reduction <add>, %167, %cst_215 [0] : vector<8x128xf32> to vector<128xf32>
    %169 = vector.shape_cast %168 : vector<128xf32> to vector<1x128xf32>
    %cst_216 = arith.constant 8.000000e+00 : f32
    %170 = vector.broadcast %cst_216 : f32 to vector<1x128xf32>
    %171 = arith.divf %169, %170 : vector<1x128xf32>
    %172 = vector.broadcast %164 : vector<1x128xf32> to vector<8x128xf32>
    %173 = arith.subf %160, %172 : vector<8x128xf32>
    %cst_217 = arith.constant 9.99999974E-6 : f32
    %174 = vector.broadcast %cst_217 : f32 to vector<1x128xf32>
    %175 = arith.addf %171, %174 : vector<1x128xf32>
    %176 = math.rsqrt %175 : vector<1x128xf32>
    %177 = vector.broadcast %176 : vector<1x128xf32> to vector<8x128xf32>
    %178 = arith.mulf %173, %177 : vector<8x128xf32>
    %179 = vector.broadcast %157 : vector<1x128xf32> to vector<8x128xf32>
    %180 = arith.mulf %178, %179 : vector<8x128xf32>
    %181 = vector.broadcast %158 : vector<1x128xf32> to vector<8x128xf32>
    %182 = arith.addf %180, %181 : vector<8x128xf32>
    %cst_218 = arith.constant 0.000000e+00 : f32
    %183 = vector.broadcast %cst_218 : f32 to vector<8x128xf32>
    %184 = arith.maximumf %182, %183 : vector<8x128xf32>
    %cst_219 = arith.constant dense<0.000000e+00> : vector<8x128xf32>
    %185 = tpu.matmul %184, %159, %cst_219 {dimension_numbers = #tpu.dot_dimension_numbers<[1], [0], [0], [1], [0, 0, 1, 1], [], []>} : vector<8x128xf32>, vector<128x128xf32>, vector<8x128xf32> -> vector<8x128xf32>
    %cst_220 = arith.constant dense<0.000000e+00> : vector<128xf32>
    %186 = vector.multi_reduction <add>, %185, %cst_220 [0] : vector<8x128xf32> to vector<128xf32>
    %187 = vector.shape_cast %186 : vector<128xf32> to vector<1x128xf32>
    %cst_221 = arith.constant 8.000000e+00 : f32
    %188 = vector.broadcast %cst_221 : f32 to vector<1x128xf32>
    %189 = arith.divf %187, %188 : vector<1x128xf32>
    %190 = vector.broadcast %189 : vector<1x128xf32> to vector<8x128xf32>
    %191 = arith.subf %185, %190 : vector<8x128xf32>
    %192 = vector.extract_strided_slice %156 {offsets = [8, 0], sizes = [8, 128], strides = [1, 1]} : vector<32x128xf32> to vector<8x128xf32>
    %cst_222 = arith.constant dense<0.000000e+00> : vector<128xf32>
    %193 = vector.multi_reduction <add>, %192, %cst_222 [0] : vector<8x128xf32> to vector<128xf32>
    %194 = vector.shape_cast %193 : vector<128xf32> to vector<1x128xf32>
    %cst_223 = arith.constant 8.000000e+00 : f32
    %195 = vector.broadcast %cst_223 : f32 to vector<1x128xf32>
    %196 = arith.divf %194, %195 : vector<1x128xf32>
    %197 = vector.broadcast %196 : vector<1x128xf32> to vector<8x128xf32>
    %198 = arith.subf %192, %197 : vector<8x128xf32>
    %199 = arith.mulf %198, %198 : vector<8x128xf32>
    %cst_224 = arith.constant dense<0.000000e+00> : vector<128xf32>
    %200 = vector.multi_reduction <add>, %199, %cst_224 [0] : vector<8x128xf32> to vector<128xf32>
    %201 = vector.shape_cast %200 : vector<128xf32> to vector<1x128xf32>
    %cst_225 = arith.constant 8.000000e+00 : f32
    %202 = vector.broadcast %cst_225 : f32 to vector<1x128xf32>
    %203 = arith.divf %201, %202 : vector<1x128xf32>
    %204 = vector.broadcast %196 : vector<1x128xf32> to vector<8x128xf32>
    %205 = arith.subf %192, %204 : vector<8x128xf32>
    %cst_226 = arith.constant 9.99999974E-6 : f32
    %206 = vector.broadcast %cst_226 : f32 to vector<1x128xf32>
    %207 = arith.addf %203, %206 : vector<1x128xf32>
    %208 = math.rsqrt %207 : vector<1x128xf32>
    %209 = vector.broadcast %208 : vector<1x128xf32> to vector<8x128xf32>
    %210 = arith.mulf %205, %209 : vector<8x128xf32>
    %211 = vector.broadcast %157 : vector<1x128xf32> to vector<8x128xf32>
    %212 = arith.mulf %210, %211 : vector<8x128xf32>
    %213 = vector.broadcast %158 : vector<1x128xf32> to vector<8x128xf32>
    %214 = arith.addf %212, %213 : vector<8x128xf32>
    %cst_227 = arith.constant 0.000000e+00 : f32
    %215 = vector.broadcast %cst_227 : f32 to vector<8x128xf32>
    %216 = arith.maximumf %214, %215 : vector<8x128xf32>
    %cst_228 = arith.constant dense<0.000000e+00> : vector<8x128xf32>
    %217 = tpu.matmul %216, %159, %cst_228 {dimension_numbers = #tpu.dot_dimension_numbers<[1], [0], [0], [1], [0, 0, 1, 1], [], []>} : vector<8x128xf32>, vector<128x128xf32>, vector<8x128xf32> -> vector<8x128xf32>
    %cst_229 = arith.constant dense<0.000000e+00> : vector<128xf32>
    %218 = vector.multi_reduction <add>, %217, %cst_229 [0] : vector<8x128xf32> to vector<128xf32>
    %219 = vector.shape_cast %218 : vector<128xf32> to vector<1x128xf32>
    %cst_230 = arith.constant 8.000000e+00 : f32
    %220 = vector.broadcast %cst_230 : f32 to vector<1x128xf32>
    %221 = arith.divf %219, %220 : vector<1x128xf32>
    %222 = vector.broadcast %221 : vector<1x128xf32> to vector<8x128xf32>
    %223 = arith.subf %217, %222 : vector<8x128xf32>
    %224 = vector.extract_strided_slice %156 {offsets = [16, 0], sizes = [8, 128], strides = [1, 1]} : vector<32x128xf32> to vector<8x128xf32>
    %cst_231 = arith.constant dense<0.000000e+00> : vector<128xf32>
    %225 = vector.multi_reduction <add>, %224, %cst_231 [0] : vector<8x128xf32> to vector<128xf32>
    %226 = vector.shape_cast %225 : vector<128xf32> to vector<1x128xf32>
    %cst_232 = arith.constant 8.000000e+00 : f32
    %227 = vector.broadcast %cst_232 : f32 to vector<1x128xf32>
    %228 = arith.divf %226, %227 : vector<1x128xf32>
    %229 = vector.broadcast %228 : vector<1x128xf32> to vector<8x128xf32>
    %230 = arith.subf %224, %229 : vector<8x128xf32>
    %231 = arith.mulf %230, %230 : vector<8x128xf32>
    %cst_233 = arith.constant dense<0.000000e+00> : vector<128xf32>
    %232 = vector.multi_reduction <add>, %231, %cst_233 [0] : vector<8x128xf32> to vector<128xf32>
    %233 = vector.shape_cast %232 : vector<128xf32> to vector<1x128xf32>
    %cst_234 = arith.constant 8.000000e+00 : f32
    %234 = vector.broadcast %cst_234 : f32 to vector<1x128xf32>
    %235 = arith.divf %233, %234 : vector<1x128xf32>
    %236 = vector.broadcast %228 : vector<1x128xf32> to vector<8x128xf32>
    %237 = arith.subf %224, %236 : vector<8x128xf32>
    %cst_235 = arith.constant 9.99999974E-6 : f32
    %238 = vector.broadcast %cst_235 : f32 to vector<1x128xf32>
    %239 = arith.addf %235, %238 : vector<1x128xf32>
    %240 = math.rsqrt %239 : vector<1x128xf32>
    %241 = vector.broadcast %240 : vector<1x128xf32> to vector<8x128xf32>
    %242 = arith.mulf %237, %241 : vector<8x128xf32>
    %243 = vector.broadcast %157 : vector<1x128xf32> to vector<8x128xf32>
    %244 = arith.mulf %242, %243 : vector<8x128xf32>
    %245 = vector.broadcast %158 : vector<1x128xf32> to vector<8x128xf32>
    %246 = arith.addf %244, %245 : vector<8x128xf32>
    %cst_236 = arith.constant 0.000000e+00 : f32
    %247 = vector.broadcast %cst_236 : f32 to vector<8x128xf32>
    %248 = arith.maximumf %246, %247 : vector<8x128xf32>
    %cst_237 = arith.constant dense<0.000000e+00> : vector<8x128xf32>
    %249 = tpu.matmul %248, %159, %cst_237 {dimension_numbers = #tpu.dot_dimension_numbers<[1], [0], [0], [1], [0, 0, 1, 1], [], []>} : vector<8x128xf32>, vector<128x128xf32>, vector<8x128xf32> -> vector<8x128xf32>
    %cst_238 = arith.constant dense<0.000000e+00> : vector<128xf32>
    %250 = vector.multi_reduction <add>, %249, %cst_238 [0] : vector<8x128xf32> to vector<128xf32>
    %251 = vector.shape_cast %250 : vector<128xf32> to vector<1x128xf32>
    %cst_239 = arith.constant 8.000000e+00 : f32
    %252 = vector.broadcast %cst_239 : f32 to vector<1x128xf32>
    %253 = arith.divf %251, %252 : vector<1x128xf32>
    %254 = vector.broadcast %253 : vector<1x128xf32> to vector<8x128xf32>
    %255 = arith.subf %249, %254 : vector<8x128xf32>
    %256 = vector.extract_strided_slice %156 {offsets = [24, 0], sizes = [8, 128], strides = [1, 1]} : vector<32x128xf32> to vector<8x128xf32>
    %cst_240 = arith.constant dense<0.000000e+00> : vector<128xf32>
    %257 = vector.multi_reduction <add>, %256, %cst_240 [0] : vector<8x128xf32> to vector<128xf32>
    %258 = vector.shape_cast %257 : vector<128xf32> to vector<1x128xf32>
    %cst_241 = arith.constant 8.000000e+00 : f32
    %259 = vector.broadcast %cst_241 : f32 to vector<1x128xf32>
    %260 = arith.divf %258, %259 : vector<1x128xf32>
    %261 = vector.broadcast %260 : vector<1x128xf32> to vector<8x128xf32>
    %262 = arith.subf %256, %261 : vector<8x128xf32>
    %263 = arith.mulf %262, %262 : vector<8x128xf32>
    %cst_242 = arith.constant dense<0.000000e+00> : vector<128xf32>
    %264 = vector.multi_reduction <add>, %263, %cst_242 [0] : vector<8x128xf32> to vector<128xf32>
    %265 = vector.shape_cast %264 : vector<128xf32> to vector<1x128xf32>
    %cst_243 = arith.constant 8.000000e+00 : f32
    %266 = vector.broadcast %cst_243 : f32 to vector<1x128xf32>
    %267 = arith.divf %265, %266 : vector<1x128xf32>
    %268 = vector.broadcast %260 : vector<1x128xf32> to vector<8x128xf32>
    %269 = arith.subf %256, %268 : vector<8x128xf32>
    %cst_244 = arith.constant 9.99999974E-6 : f32
    %270 = vector.broadcast %cst_244 : f32 to vector<1x128xf32>
    %271 = arith.addf %267, %270 : vector<1x128xf32>
    %272 = math.rsqrt %271 : vector<1x128xf32>
    %273 = vector.broadcast %272 : vector<1x128xf32> to vector<8x128xf32>
    %274 = arith.mulf %269, %273 : vector<8x128xf32>
    %275 = vector.broadcast %157 : vector<1x128xf32> to vector<8x128xf32>
    %276 = arith.mulf %274, %275 : vector<8x128xf32>
    %277 = vector.broadcast %158 : vector<1x128xf32> to vector<8x128xf32>
    %278 = arith.addf %276, %277 : vector<8x128xf32>
    %cst_245 = arith.constant 0.000000e+00 : f32
    %279 = vector.broadcast %cst_245 : f32 to vector<8x128xf32>
    %280 = arith.maximumf %278, %279 : vector<8x128xf32>
    %cst_246 = arith.constant dense<0.000000e+00> : vector<8x128xf32>
    %281 = tpu.matmul %280, %159, %cst_246 {dimension_numbers = #tpu.dot_dimension_numbers<[1], [0], [0], [1], [0, 0, 1, 1], [], []>} : vector<8x128xf32>, vector<128x128xf32>, vector<8x128xf32> -> vector<8x128xf32>
    %cst_247 = arith.constant dense<0.000000e+00> : vector<128xf32>
    %282 = vector.multi_reduction <add>, %281, %cst_247 [0] : vector<8x128xf32> to vector<128xf32>
    %283 = vector.shape_cast %282 : vector<128xf32> to vector<1x128xf32>
    %cst_248 = arith.constant 8.000000e+00 : f32
    %284 = vector.broadcast %cst_248 : f32 to vector<1x128xf32>
    %285 = arith.divf %283, %284 : vector<1x128xf32>
    %286 = vector.broadcast %285 : vector<1x128xf32> to vector<8x128xf32>
    %287 = arith.subf %281, %286 : vector<8x128xf32>
    %288 = arith.addf %191, %223 : vector<8x128xf32>
    %289 = arith.addf %288, %255 : vector<8x128xf32>
    %290 = arith.addf %289, %287 : vector<8x128xf32>
    %cst_249 = arith.constant 2.500000e-01 : f32
    %291 = vector.broadcast %cst_249 : f32 to vector<8x128xf32>
    %292 = arith.mulf %290, %291 : vector<8x128xf32>
    %293 = arith.subf %191, %292 : vector<8x128xf32>
    %294 = arith.mulf %293, %293 : vector<8x128xf32>
    %295 = arith.subf %223, %292 : vector<8x128xf32>
    %296 = arith.mulf %295, %295 : vector<8x128xf32>
    %297 = arith.addf %294, %296 : vector<8x128xf32>
    %298 = arith.subf %255, %292 : vector<8x128xf32>
    %299 = arith.mulf %298, %298 : vector<8x128xf32>
    %300 = arith.addf %297, %299 : vector<8x128xf32>
    %301 = arith.subf %287, %292 : vector<8x128xf32>
    %302 = arith.mulf %301, %301 : vector<8x128xf32>
    %303 = arith.addf %300, %302 : vector<8x128xf32>
    %cst_250 = arith.constant 0.333333343 : f32
    %304 = vector.broadcast %cst_250 : f32 to vector<8x128xf32>
    %305 = arith.mulf %303, %304 : vector<8x128xf32>
    %cst_251 = arith.constant 9.99999974E-5 : f32
    %306 = vector.broadcast %cst_251 : f32 to vector<8x128xf32>
    %307 = arith.addf %305, %306 : vector<8x128xf32>
    %308 = math.sqrt %307 : vector<8x128xf32>
    %cst_252 = arith.constant 1.000000e+00 : f32
    %309 = vector.broadcast %cst_252 : f32 to vector<8x128xf32>
    %310 = arith.subf %309, %308 : vector<8x128xf32>
    %cst_253 = arith.constant 0.000000e+00 : f32
    %311 = vector.broadcast %cst_253 : f32 to vector<8x128xf32>
    %312 = arith.maximumf %310, %311 : vector<8x128xf32>
    %313 = vector.shape_cast %312 : vector<8x128xf32> to vector<1x8x128xf32>
    %cst_254 = arith.constant dense<0.000000e+00> : vector<1xf32>
    %314 = vector.multi_reduction <add>, %313, %cst_254 [1, 2] : vector<1x8x128xf32> to vector<1xf32>
    %315 = vector.shape_cast %314 : vector<1xf32> to vector<1x1x1xf32>
    %316 = vector.extract %315[0, 0, 0] : f32 from vector<1x1x1xf32>
    %cst_255 = arith.constant 1.024000e+03 : f32
    %317 = arith.divf %316, %cst_255 : f32
    "tpu.trace_start"() <{level = 10 : i32, message = "id,jd->ij"}> : () -> ()
    %cst_256 = arith.constant dense<0.000000e+00> : vector<8x8xf32>
    %318 = tpu.matmul %191, %191, %cst_256 {dimension_numbers = #tpu.dot_dimension_numbers<[1], [1], [0], [0], [0, 0, 1, 0], [], []>} : vector<8x128xf32>, vector<8x128xf32>, vector<8x8xf32> -> vector<8x8xf32>
    %cst_257 = arith.constant dense<0.000000e+00> : vector<8x8xf32>
    %319 = tpu.matmul %223, %223, %cst_257 {dimension_numbers = #tpu.dot_dimension_numbers<[1], [1], [0], [0], [0, 0, 1, 0], [], []>} : vector<8x128xf32>, vector<8x128xf32>, vector<8x8xf32> -> vector<8x8xf32>
    %cst_258 = arith.constant dense<0.000000e+00> : vector<8x8xf32>
    %320 = tpu.matmul %255, %255, %cst_258 {dimension_numbers = #tpu.dot_dimension_numbers<[1], [1], [0], [0], [0, 0, 1, 0], [], []>} : vector<8x128xf32>, vector<8x128xf32>, vector<8x8xf32> -> vector<8x8xf32>
    %cst_259 = arith.constant dense<0.000000e+00> : vector<8x8xf32>
    %321 = tpu.matmul %287, %287, %cst_259 {dimension_numbers = #tpu.dot_dimension_numbers<[1], [1], [0], [0], [0, 0, 1, 0], [], []>} : vector<8x128xf32>, vector<8x128xf32>, vector<8x8xf32> -> vector<8x8xf32>
    "tpu.trace_stop"() : () -> ()
    %322 = arith.mulf %318, %318 : vector<8x8xf32>
    %323 = vector.shape_cast %322 : vector<8x8xf32> to vector<1x8x8xf32>
    %cst_260 = arith.constant dense<0.000000e+00> : vector<1xf32>
    %324 = vector.multi_reduction <add>, %323, %cst_260 [1, 2] : vector<1x8x8xf32> to vector<1xf32>
    %325 = vector.shape_cast %324 : vector<1xf32> to vector<1x1x1xf32>
    %326 = vector.extract %325[0, 0, 0] : f32 from vector<1x1x1xf32>
    %327 = arith.mulf %319, %319 : vector<8x8xf32>
    %328 = vector.shape_cast %327 : vector<8x8xf32> to vector<1x8x8xf32>
    %cst_261 = arith.constant dense<0.000000e+00> : vector<1xf32>
    %329 = vector.multi_reduction <add>, %328, %cst_261 [1, 2] : vector<1x8x8xf32> to vector<1xf32>
    %330 = vector.shape_cast %329 : vector<1xf32> to vector<1x1x1xf32>
    %331 = vector.extract %330[0, 0, 0] : f32 from vector<1x1x1xf32>
    %332 = arith.addf %326, %331 : f32
    %333 = arith.mulf %320, %320 : vector<8x8xf32>
    %334 = vector.shape_cast %333 : vector<8x8xf32> to vector<1x8x8xf32>
    %cst_262 = arith.constant dense<0.000000e+00> : vector<1xf32>
    %335 = vector.multi_reduction <add>, %334, %cst_262 [1, 2] : vector<1x8x8xf32> to vector<1xf32>
    %336 = vector.shape_cast %335 : vector<1xf32> to vector<1x1x1xf32>
    %337 = vector.extract %336[0, 0, 0] : f32 from vector<1x1x1xf32>
    %338 = arith.addf %332, %337 : f32
    %339 = arith.mulf %319, %321 : vector<8x8xf32>
    %340 = vector.shape_cast %339 : vector<8x8xf32> to vector<1x8x8xf32>
    %cst_263 = arith.constant dense<0.000000e+00> : vector<1xf32>
    %341 = vector.multi_reduction <add>, %340, %cst_263 [1, 2] : vector<1x8x8xf32> to vector<1xf32>
    %342 = vector.shape_cast %341 : vector<1xf32> to vector<1x1x1xf32>
    %343 = vector.extract %342[0, 0, 0] : f32 from vector<1x1x1xf32>
    %344 = arith.addf %338, %343 : f32
    %345 = arith.mulf %191, %191 : vector<8x128xf32>
    %cst_264 = arith.constant dense<0.000000e+00> : vector<128xf32>
    %346 = vector.multi_reduction <add>, %345, %cst_264 [0] : vector<8x128xf32> to vector<128xf32>
    %347 = vector.shape_cast %346 : vector<128xf32> to vector<1x128xf32>
    %348 = arith.mulf %223, %223 : vector<8x128xf32>
    %cst_265 = arith.constant dense<0.000000e+00> : vector<128xf32>
    %349 = vector.multi_reduction <add>, %348, %cst_265 [0] : vector<8x128xf32> to vector<128xf32>
    %350 = vector.shape_cast %349 : vector<128xf32> to vector<1x128xf32>
    %351 = arith.mulf %255, %255 : vector<8x128xf32>
    %cst_266 = arith.constant dense<0.000000e+00> : vector<128xf32>
    %352 = vector.multi_reduction <add>, %351, %cst_266 [0] : vector<8x128xf32> to vector<128xf32>
    %353 = vector.shape_cast %352 : vector<128xf32> to vector<1x128xf32>
    %354 = arith.mulf %223, %287 : vector<8x128xf32>
    %cst_267 = arith.constant dense<0.000000e+00> : vector<128xf32>
    %355 = vector.multi_reduction <add>, %354, %cst_267 [0] : vector<8x128xf32> to vector<128xf32>
    %356 = vector.shape_cast %355 : vector<128xf32> to vector<1x128xf32>
    %357 = arith.mulf %347, %347 : vector<1x128xf32>
    %358 = vector.shape_cast %357 : vector<1x128xf32> to vector<1x1x128xf32>
    %cst_268 = arith.constant dense<0.000000e+00> : vector<1xf32>
    %359 = vector.multi_reduction <add>, %358, %cst_268 [1, 2] : vector<1x1x128xf32> to vector<1xf32>
    %360 = vector.shape_cast %359 : vector<1xf32> to vector<1x1x1xf32>
    %361 = vector.extract %360[0, 0, 0] : f32 from vector<1x1x1xf32>
    %362 = arith.mulf %350, %350 : vector<1x128xf32>
    %363 = vector.shape_cast %362 : vector<1x128xf32> to vector<1x1x128xf32>
    %cst_269 = arith.constant dense<0.000000e+00> : vector<1xf32>
    %364 = vector.multi_reduction <add>, %363, %cst_269 [1, 2] : vector<1x1x128xf32> to vector<1xf32>
    %365 = vector.shape_cast %364 : vector<1xf32> to vector<1x1x1xf32>
    %366 = vector.extract %365[0, 0, 0] : f32 from vector<1x1x1xf32>
    %367 = arith.addf %361, %366 : f32
    %368 = arith.mulf %353, %353 : vector<1x128xf32>
    %369 = vector.shape_cast %368 : vector<1x128xf32> to vector<1x1x128xf32>
    %cst_270 = arith.constant dense<0.000000e+00> : vector<1xf32>
    %370 = vector.multi_reduction <add>, %369, %cst_270 [1, 2] : vector<1x1x128xf32> to vector<1xf32>
    %371 = vector.shape_cast %370 : vector<1xf32> to vector<1x1x1xf32>
    %372 = vector.extract %371[0, 0, 0] : f32 from vector<1x1x1xf32>
    %373 = arith.addf %367, %372 : f32
    %374 = arith.mulf %356, %356 : vector<1x128xf32>
    %375 = vector.shape_cast %374 : vector<1x128xf32> to vector<1x1x128xf32>
    %cst_271 = arith.constant dense<0.000000e+00> : vector<1xf32>
    %376 = vector.multi_reduction <add>, %375, %cst_271 [1, 2] : vector<1x1x128xf32> to vector<1xf32>
    %377 = vector.shape_cast %376 : vector<1xf32> to vector<1x1x1xf32>
    %378 = vector.extract %377[0, 0, 0] : f32 from vector<1x1x1xf32>
    %379 = arith.addf %373, %378 : f32
    %380 = arith.subf %344, %379 : f32
    %cst_272 = arith.constant 0.0204081628 : f32
    %381 = arith.mulf %380, %cst_272 : f32
    %cst_273 = arith.constant 7.812500e-03 : f32
    %382 = arith.mulf %381, %cst_273 : f32
    %cst_274 = arith.constant 2.000000e-02 : f32
    %383 = arith.mulf %cst_274, %382 : f32
    %384 = arith.addf %317, %383 : f32
    %c0_275 = arith.constant 0 : index
    %c0_276 = arith.constant 0 : index
    %385 = memref.load %arg13[%c0_275, %c0_276] : memref<1x1xf32, #tpu.memory_space<smem>>
    memref.store %384, %arg13[%c0_275, %c0_276] : memref<1x1xf32, #tpu.memory_space<smem>>
    return
  }
  func.func @transform_0(%arg0: i32) -> (i32, i32, i32) {
    %c0_i32 = arith.constant 0 : i32
    %c0_i32_0 = arith.constant 0 : i32
    %c0_i32_1 = arith.constant 0 : i32
    %c0_i32_2 = arith.constant 0 : i32
    return %c0_i32, %c0_i32_0, %c0_i32_1 : i32, i32, i32
  }
  func.func @transform_1(%arg0: i32) -> (i32, i32, i32) {
    %c0_i32 = arith.constant 0 : i32
    %c0_i32_0 = arith.constant 0 : i32
    %c0_i32_1 = arith.constant 0 : i32
    %c0_i32_2 = arith.constant 0 : i32
    return %c0_i32, %c0_i32_0, %c0_i32_1 : i32, i32, i32
  }
  func.func @transform_2(%arg0: i32) -> (i32, i32, i32) {
    %c0_i32 = arith.constant 0 : i32
    %c0_i32_0 = arith.constant 0 : i32
    %c0_i32_1 = arith.constant 0 : i32
    %c0_i32_2 = arith.constant 0 : i32
    return %c0_i32, %c0_i32_0, %c0_i32_1 : i32, i32, i32
  }
  func.func @transform_3(%arg0: i32) -> (i32, i32, i32) {
    %c0_i32 = arith.constant 0 : i32
    %c0_i32_0 = arith.constant 0 : i32
    %c0_i32_1 = arith.constant 0 : i32
    %c0_i32_2 = arith.constant 0 : i32
    return %c0_i32, %c0_i32_0, %c0_i32_1 : i32, i32, i32
  }
  func.func @transform_4(%arg0: i32) -> (i32, i32) {
    %c0_i32 = arith.constant 0 : i32
    %c0_i32_0 = arith.constant 0 : i32
    %c0_i32_1 = arith.constant 0 : i32
    return %c0_i32, %c0_i32_0 : i32, i32
  }
  func.func @transform_5(%arg0: i32) -> (i32, i32, i32) {
    %c0_i32 = arith.constant 0 : i32
    %c0_i32_0 = arith.constant 0 : i32
    %c0_i32_1 = arith.constant 0 : i32
    %c0_i32_2 = arith.constant 0 : i32
    return %c0_i32, %c0_i32_0, %c0_i32_1 : i32, i32, i32
  }
  func.func @transform_6(%arg0: i32) -> (i32, i32, i32) {
    %c0_i32 = arith.constant 0 : i32
    %c0_i32_0 = arith.constant 0 : i32
    %c0_i32_1 = arith.constant 0 : i32
    %c0_i32_2 = arith.constant 0 : i32
    return %c0_i32, %c0_i32_0, %c0_i32_1 : i32, i32, i32
  }
  func.func @transform_7(%arg0: i32) -> (i32, i32) {
    %c0_i32 = arith.constant 0 : i32
    %c0_i32_0 = arith.constant 0 : i32
    %c0_i32_1 = arith.constant 0 : i32
    return %c0_i32, %c0_i32_0 : i32, i32
  }
  func.func @transform_8(%arg0: i32) -> (i32, i32) {
    %c0_i32 = arith.constant 0 : i32
    %c0_i32_0 = arith.constant 0 : i32
    %c0_i32_1 = arith.constant 0 : i32
    return %c0_i32, %c0_i32_0 : i32, i32
  }
  func.func @transform_9(%arg0: i32) -> (i32, i32) {
    %c0_i32 = arith.constant 0 : i32
    %c0_i32_0 = arith.constant 0 : i32
    %c0_i32_1 = arith.constant 0 : i32
    return %c0_i32, %c0_i32_0 : i32, i32
  }
  func.func @transform_10(%arg0: i32) -> (i32, i32) {
    %c0_i32 = arith.constant 0 : i32
    %c0_i32_0 = arith.constant 0 : i32
    %c0_i32_1 = arith.constant 0 : i32
    return %c0_i32, %c0_i32_0 : i32, i32
  }
  func.func @transform_11(%arg0: i32) -> (i32, i32) {
    %c0_i32 = arith.constant 0 : i32
    %c0_i32_0 = arith.constant 0 : i32
    %c0_i32_1 = arith.constant 0 : i32
    return %c0_i32, %c0_i32_0 : i32, i32
  }
  func.func @transform_12(%arg0: i32) -> (i32, i32) {
    %c0_i32 = arith.constant 0 : i32
    %c0_i32_0 = arith.constant 0 : i32
    %c0_i32_1 = arith.constant 0 : i32
    return %c0_i32, %c0_i32_0 : i32, i32
  }
}

</mosaic_0001>

<llo_original>
// kernel: vicreg_w_forward.1
$region0: #{vicreg_w_forward.1}
  #allocation0 [shape = 'u32[]', space=smem, size = 0x4, offset = 0x4, fixed_abs, tag = 'smem constant byte address 0x4 - core index']
  #allocation1 [shape = 'u32[144,128]{1,0:T(1,128)}', space=vmem, size = 0x12000, scoped, tag = 'internal scratch']
  #allocation2 [shape = 'f32[8,8,16]{2,1,0:T(8,128)}', space=vmem, size = 0x8000, scoped, tag = 'scratch operand']
  #allocation3 [shape = 'f32[32,128]{1,0:T(8,128)}', space=vmem, size = 0x4000, scoped, tag = 'scratch operand']
  %s0 = inlined_call_operand.vmem [shape: f32[8,8,64], index: 0, kind: input, shape index: {}]
  %s1 = inlined_call_operand.vmem [shape: f32[8,8,64], index: 1, kind: input, shape index: {}]
  %s2 = inlined_call_operand.vmem [shape: f32[8,8,64], index: 2, kind: input, shape index: {}]
  %s3 = inlined_call_operand.vmem [shape: f32[8,8,64], index: 3, kind: input, shape index: {}]
  %s4 = inlined_call_operand.vmem [shape: f32[16,64], index: 4, kind: input, shape index: {}]
  %s5 = inlined_call_operand.vmem [shape: f32[4,8,8], index: 5, kind: input, shape index: {}]
  %s6 = inlined_call_operand.vmem [shape: f32[4,8,1], index: 6, kind: input, shape index: {}]
  %s7 = inlined_call_operand.vmem [shape: f32[128,128], index: 7, kind: input, shape index: {}]
  %s8 = inlined_call_operand.vmem [shape: f32[1,128], index: 8, kind: input, shape index: {}]
  %s9 = inlined_call_operand.vmem [shape: f32[1,128], index: 9, kind: input, shape index: {}]
  %s10 = inlined_call_operand.vmem [shape: f32[1,128], index: 10, kind: input, shape index: {}]
  %s11 = inlined_call_operand.vmem [shape: f32[128,128], index: 11, kind: input, shape index: {}]
  %s12 = inlined_call_operand.hbm [shape: f32[1,1], index: 12, kind: output, shape index: {}]
  %s13 = sld [smem:[#allocation0]]
  $region58: #{vicreg_w_forward.1} parent=0
    _
  %s15 = ssub.s32 1, %s13
  %s16 = scalar_select 0, %s15, %s13
  $region1: #{vicreg_w_forward.1} parent=0
    #allocation4 [shape = 'u8[512]{0}', space=smem, size = 0x200, scoped, tag = 'output window, operand 0, single buffered']
    #allocation5 [shape = 's32[1]{0}', space=sflag, size = 0x4, scoped, tag = 'scoped memory for vicreg_w_forward.1']
    %17 = vsyncpa [#allocation5], 0
    // Predicated region
    $region2: #{vicreg_w_forward.1} parent=1 // pred_check
      _
    $region3: #{vicreg_w_forward.1} parent=1 // pred_check_branch
      %19 = sbr.rel (0) target = $region5
    $region4: #{vicreg_w_forward.1} parent=1 // pred_region
      _
    $region5: #{vicreg_w_forward.1} parent=1 // pred_fallthru
      _
    // Predicated region
    $region6: #{vicreg_w_forward.1} parent=1 // pred_check
      _
    $region7: #{vicreg_w_forward.1} parent=1 // pred_check_branch
      %21 = sbr.rel (0) target = $region9
    $region8: #{vicreg_w_forward.1} parent=1 // pred_region
      _
    $region9: #{vicreg_w_forward.1} parent=1 // pred_fallthru
      _
    // Predicated region
    $region10: #{vicreg_w_forward.1} parent=1 // pred_check
      _
    $region11: #{vicreg_w_forward.1} parent=1 // pred_check_branch
      %23 = sbr.rel (0) target = $region13
    $region12: #{vicreg_w_forward.1} parent=1 // pred_region
      _
    $region13: #{vicreg_w_forward.1} parent=1 // pred_fallthru
      _
    // Predicated region
    $region14: #{vicreg_w_forward.1} parent=1 // pred_check
      _
    $region15: #{vicreg_w_forward.1} parent=1 // pred_check_branch
      %25 = sbr.rel (0) target = $region17
    $region16: #{vicreg_w_forward.1} parent=1 // pred_region
      _
    $region17: #{vicreg_w_forward.1} parent=1 // pred_fallthru
      _
    // Predicated region
    $region18: #{vicreg_w_forward.1} parent=1 // pred_check
      _
    $region19: #{vicreg_w_forward.1} parent=1 // pred_check_branch
      %27 = sbr.rel (0) target = $region21
    $region20: #{vicreg_w_forward.1} parent=1 // pred_region
      _
    $region21: #{vicreg_w_forward.1} parent=1 // pred_fallthru
      _
    // Predicated region
    $region22: #{vicreg_w_forward.1} parent=1 // pred_check
      _
    $region23: #{vicreg_w_forward.1} parent=1 // pred_check_branch
      %29 = sbr.rel (0) target = $region25
    $region24: #{vicreg_w_forward.1} parent=1 // pred_region
      _
    $region25: #{vicreg_w_forward.1} parent=1 // pred_fallthru
      _
    // Predicated region
    $region26: #{vicreg_w_forward.1} parent=1 // pred_check
      _
    $region27: #{vicreg_w_forward.1} parent=1 // pred_check_branch
      %31 = sbr.rel (0) target = $region29
    $region28: #{vicreg_w_forward.1} parent=1 // pred_region
      _
    $region29: #{vicreg_w_forward.1} parent=1 // pred_fallthru
      _
    // Predicated region
    $region30: #{vicreg_w_forward.1} parent=1 // pred_check
      _
    $region31: #{vicreg_w_forward.1} parent=1 // pred_check_branch
      %33 = sbr.rel (0) target = $region33
    $region32: #{vicreg_w_forward.1} parent=1 // pred_region
      _
    $region33: #{vicreg_w_forward.1} parent=1 // pred_fallthru
      _
    // Predicated region
    $region34: #{vicreg_w_forward.1} parent=1 // pred_check
      _
    $region35: #{vicreg_w_forward.1} parent=1 // pred_check_branch
      %35 = sbr.rel (0) target = $region37
    $region36: #{vicreg_w_forward.1} parent=1 // pred_region
      _
    $region37: #{vicreg_w_forward.1} parent=1 // pred_fallthru
      _
    // Predicated region
    $region38: #{vicreg_w_forward.1} parent=1 // pred_check
      _
    $region39: #{vicreg_w_forward.1} parent=1 // pred_check_branch
      %37 = sbr.rel (0) target = $region41
    $region40: #{vicreg_w_forward.1} parent=1 // pred_region
      _
    $region41: #{vicreg_w_forward.1} parent=1 // pred_fallthru
      _
    // Predicated region
    $region42: #{vicreg_w_forward.1} parent=1 // pred_check
      _
    $region43: #{vicreg_w_forward.1} parent=1 // pred_check_branch
      %39 = sbr.rel (0) target = $region45
    $region44: #{vicreg_w_forward.1} parent=1 // pred_region
      _
    $region45: #{vicreg_w_forward.1} parent=1 // pred_fallthru
      _
    // Predicated region
    $region46: #{vicreg_w_forward.1} parent=1 // pred_check
      _
    $region47: #{vicreg_w_forward.1} parent=1 // pred_check_branch
      %41 = sbr.rel (0) target = $region49
    $region48: #{vicreg_w_forward.1} parent=1 // pred_region
      _
    $region49: #{vicreg_w_forward.1} parent=1 // pred_fallthru
      _
    %v42 = vld [vmem:[%s4] sm:$0xff]
    %v43 = vld [vmem:[%s4 + $0x8] sm:$0xff]
    %v44 = vld [vmem:[%s0] sm:$0xff]
    %v45 = vld [vmem:[%s0 + $0x8] sm:$0xff]
    %v46 = vld [vmem:[%s0 + $0x10] sm:$0xff]
    %v47 = vld [vmem:[%s0 + $0x18] sm:$0xff]
    %v48 = vld [vmem:[%s0 + $0x20] sm:$0xff]
    %v49 = vld [vmem:[%s0 + $0x28] sm:$0xff]
    %v50 = vld [vmem:[%s0 + $0x30] sm:$0xff]
    %v51 = vld [vmem:[%s0 + $0x38] sm:$0xff]
    %vm52 = vcmask 523264
    %v54 = vsel %vm52, %v42, 0
    %v57 = vsel %vm52, %v43, 0
    %v60 = vsel %vm52, %v44, 0
    %62 = vmatprep.subr.mxu0 0.0
    %63 = vmatpush1.xpose.msra.mxu0 0.0
    %64 = vmatprep.subr.mxu0 0.0
    %65 = vmatpush1.xpose.msra.mxu0 0.0
    %66 = vmatprep.subr.mxu0 0.0
    %67 = vmatpush1.xpose.msra.mxu0 0.0
    %68 = vmatprep.subr.mxu0 0.0
    %69 = vmatpush1.xpose.msra.mxu0 0.0
    %70 = vmatprep.subr.mxu0 0.0
    %71 = vmatpush1.xpose.msra.mxu0 0.0
    %72 = vmatprep.subr.mxu0 0.0
    %73 = vmatpush1.xpose.msra.mxu0 0.0
    %74 = vmatprep.subr.mxu0 0.0
    %75 = vmatpush1.xpose.msra.mxu0 0.0
    %76 = vmatprep.subr.mxu0 0.0
    %77 = vmatpush1.xpose.msra.mxu0 0.0
    %78 = vmatprep.subr.mxu0 0.0
    %79 = vmatpush1.xpose.msra.mxu0 0.0
    %80 = vmatprep.subr.mxu0 0.0
    %81 = vmatpush1.xpose.msra.mxu0 0.0
    %82 = vmatprep.subr.mxu0 0.0
    %83 = vmatpush1.xpose.msra.mxu0 0.0
    %84 = vmatprep.subr.mxu0 0.0
    %85 = vmatpush1.xpose.msra.mxu0 0.0
    %86 = vmatprep.subr.mxu0 0.0
    %87 = vmatpush1.xpose.msra.mxu0 0.0
    %88 = vmatprep.subr.mxu0 0.0
    %89 = vmatpush1.xpose.msra.mxu0 0.0
    %90 = vmatprep.subr.mxu0 0.0
    %91 = vmatpush1.xpose.msra.mxu0 0.0
    %92 = vmatprep.subr.mxu0 0.0
    %93 = vmatpush1.xpose.msra.mxu0 %v60
    %94 = vmatprep.subr.mxu0 0.0
    %95 = vmatpush2.xpose.msra.mxu0 0.0
    %96 = vmatprep.subr.mxu0 0.0
    %97 = vmatpush2.xpose.msra.mxu0 0.0
    %98 = vmatprep.subr.mxu0 0.0
    %99 = vmatpush2.xpose.msra.mxu0 0.0
    %100 = vmatprep.subr.mxu0 0.0
    %101 = vmatpush2.xpose.msra.mxu0 0.0
    %102 = vmatprep.subr.mxu0 0.0
    %103 = vmatpush2.xpose.msra.mxu0 0.0
    %104 = vmatprep.subr.mxu0 0.0
    %105 = vmatpush2.xpose.msra.mxu0 0.0
    %106 = vmatprep.subr.mxu0 0.0
    %107 = vmatpush2.xpose.msra.mxu0 0.0
    %108 = vmatprep.subr.mxu0 0.0
    %109 = vmatpush2.xpose.msra.mxu0 0.0
    %110 = vmatprep.subr.mxu0 0.0
    %111 = vmatpush2.xpose.msra.mxu0 0.0
    %112 = vmatprep.subr.mxu0 0.0
    %113 = vmatpush2.xpose.msra.mxu0 0.0
    %114 = vmatprep.subr.mxu0 0.0
    %115 = vmatpush2.xpose.msra.mxu0 0.0
    %116 = vmatprep.subr.mxu0 0.0
    %117 = vmatpush2.xpose.msra.mxu0 0.0
    %118 = vmatprep.subr.mxu0 0.0
    %119 = vmatpush2.xpose.msra.mxu0 0.0
    %120 = vmatprep.subr.mxu0 0.0
    %121 = vmatpush2.xpose.msra.mxu0 0.0
    %122 = vmatprep.subr.mxu0 0.0
    %123 = vmatpush2.xpose.msra.mxu0 0.0
    %124 = vmatprep.subr.mxu0 0.0
    %125 = vmatpush2.xpose.msra.mxu0 0.0
    %126 = vmatprep.mubr.f32.mxu0 0.0
    %127 = vmatmul.mubr.f32.gmra.mxu0 %v54
    %v128 = vpop.f32.mrf.mxu0
    %v129 = vadd.f32 0.0, %v128
    %v130 = vpop.f32.mrf.mxu0
    %131 = vmatprep.mubr.f32.mxu0 0.0
    %132 = vmatmul.mubr.f32.gmra.mxu0 %v57
    %v133 = vpop.f32.mrf.mxu0
    %v134 = vadd.f32 0.0, %v133
    %v135 = vpop.f32.mrf.mxu0
    %136 = vdwg.mxu0
    %v138 = vsel %vm52, %v45, 0
    %140 = vmatprep.subr.mxu0 0.0
    %141 = vmatpush1.xpose.msra.mxu0 0.0
    %142 = vmatprep.subr.mxu0 0.0
    %143 = vmatpush1.xpose.msra.mxu0 0.0
    %144 = vmatprep.subr.mxu0 0.0
    %145 = vmatpush1.xpose.msra.mxu0 0.0
    %146 = vmatprep.subr.mxu0 0.0
    %147 = vmatpush1.xpose.msra.mxu0 0.0
    %148 = vmatprep.subr.mxu0 0.0
    %149 = vmatpush1.xpose.msra.mxu0 0.0
    %150 = vmatprep.subr.mxu0 0.0
    %151 = vmatpush1.xpose.msra.mxu0 0.0
    %152 = vmatprep.subr.mxu0 0.0
    %153 = vmatpush1.xpose.msra.mxu0 0.0
    %154 = vmatprep.subr.mxu0 0.0
    %155 = vmatpush1.xpose.msra.mxu0 0.0
    %156 = vmatprep.subr.mxu0 0.0
    %157 = vmatpush1.xpose.msra.mxu0 0.0
    %158 = vmatprep.subr.mxu0 0.0
    %159 = vmatpush1.xpose.msra.mxu0 0.0
    %160 = vmatprep.subr.mxu0 0.0
    %161 = vmatpush1.xpose.msra.mxu0 0.0
    %162 = vmatprep.subr.mxu0 0.0
    %163 = vmatpush1.xpose.msra.mxu0 0.0
    %164 = vmatprep.subr.mxu0 0.0
    %165 = vmatpush1.xpose.msra.mxu0 0.0
    %166 = vmatprep.subr.mxu0 0.0
    %167 = vmatpush1.xpose.msra.mxu0 0.0
    %168 = vmatprep.subr.mxu0 0.0
    %169 = vmatpush1.xpose.msra.mxu0 0.0
    %170 = vmatprep.subr.mxu0 0.0
    %171 = vmatpush1.xpose.msra.mxu0 %v138
    %172 = vmatprep.subr.mxu0 0.0
    %173 = vmatpush2.xpose.msra.mxu0 0.0
    %174 = vmatprep.subr.mxu0 0.0
    %175 = vmatpush2.xpose.msra.mxu0 0.0
    %176 = vmatprep.subr.mxu0 0.0
    %177 = vmatpush2.xpose.msra.mxu0 0.0
    %178 = vmatprep.subr.mxu0 0.0
    %179 = vmatpush2.xpose.msra.mxu0 0.0
    %180 = vmatprep.subr.mxu0 0.0
    %181 = vmatpush2.xpose.msra.mxu0 0.0
    %182 = vmatprep.subr.mxu0 0.0
    %183 = vmatpush2.xpose.msra.mxu0 0.0
    %184 = vmatprep.subr.mxu0 0.0
    %185 = vmatpush2.xpose.msra.mxu0 0.0
    %186 = vmatprep.subr.mxu0 0.0
    %187 = vmatpush2.xpose.msra.mxu0 0.0
    %188 = vmatprep.subr.mxu0 0.0
    %189 = vmatpush2.xpose.msra.mxu0 0.0
    %190 = vmatprep.subr.mxu0 0.0
    %191 = vmatpush2.xpose.msra.mxu0 0.0
    %192 = vmatprep.subr.mxu0 0.0
    %193 = vmatpush2.xpose.msra.mxu0 0.0
    %194 = vmatprep.subr.mxu0 0.0
    %195 = vmatpush2.xpose.msra.mxu0 0.0
    %196 = vmatprep.subr.mxu0 0.0
    %197 = vmatpush2.xpose.msra.mxu0 0.0
    %198 = vmatprep.subr.mxu0 0.0
    %199 = vmatpush2.xpose.msra.mxu0 0.0
    %200 = vmatprep.subr.mxu0 0.0
    %201 = vmatpush2.xpose.msra.mxu0 0.0
    %202 = vmatprep.subr.mxu0 0.0
    %203 = vmatpush2.xpose.msra.mxu0 0.0
    %204 = vmatprep.mubr.f32.mxu0 0.0
    %205 = vmatmul.mubr.f32.gmra.mxu0 %v54
    %v206 = vpop.f32.mrf.mxu0
    %v207 = vadd.f32 0.0, %v206
    %v208 = vpop.f32.mrf.mxu0
    %209 = vmatprep.mubr.f32.mxu0 0.0
    %210 = vmatmul.mubr.f32.gmra.mxu0 %v57
    %v211 = vpop.f32.mrf.mxu0
    %v212 = vadd.f32 0.0, %v211
    %v213 = vpop.f32.mrf.mxu0
    %214 = vdwg.mxu0
    %v216 = vsel %vm52, %v46, 0
    %218 = vmatprep.subr.mxu0 0.0
    %219 = vmatpush1.xpose.msra.mxu0 0.0
    %220 = vmatprep.subr.mxu0 0.0
    %221 = vmatpush1.xpose.msra.mxu0 0.0
    %222 = vmatprep.subr.mxu0 0.0
    %223 = vmatpush1.xpose.msra.mxu0 0.0
    %224 = vmatprep.subr.mxu0 0.0
    %225 = vmatpush1.xpose.msra.mxu0 0.0
    %226 = vmatprep.subr.mxu0 0.0
    %227 = vmatpush1.xpose.msra.mxu0 0.0
    %228 = vmatprep.subr.mxu0 0.0
    %229 = vmatpush1.xpose.msra.mxu0 0.0
    %230 = vmatprep.subr.mxu0 0.0
    %231 = vmatpush1.xpose.msra.mxu0 0.0
    %232 = vmatprep.subr.mxu0 0.0
    %233 = vmatpush1.xpose.msra.mxu0 0.0
    %234 = vmatprep.subr.mxu0 0.0
    %235 = vmatpush1.xpose.msra.mxu0 0.0
    %236 = vmatprep.subr.mxu0 0.0
    %237 = vmatpush1.xpose.msra.mxu0 0.0
    %238 = vmatprep.subr.mxu0 0.0
    %239 = vmatpush1.xpose.msra.mxu0 0.0
    %240 = vmatprep.subr.mxu0 0.0
    %241 = vmatpush1.xpose.msra.mxu0 0.0
    %242 = vmatprep.subr.mxu0 0.0
    %243 = vmatpush1.xpose.msra.mxu0 0.0
    %244 = vmatprep.subr.mxu0 0.0
    %245 = vmatpush1.xpose.msra.mxu0 0.0
    %246 = vmatprep.subr.mxu0 0.0
    %247 = vmatpush1.xpose.msra.mxu0 0.0
    %248 = vmatprep.subr.mxu0 0.0
    %249 = vmatpush1.xpose.msra.mxu0 %v216
    %250 = vmatprep.subr.mxu0 0.0
    %251 = vmatpush2.xpose.msra.mxu0 0.0
    %252 = vmatprep.subr.mxu0 0.0
    %253 = vmatpush2.xpose.msra.mxu0 0.0
    %254 = vmatprep.subr.mxu0 0.0
    %255 = vmatpush2.xpose.msra.mxu0 0.0
    %256 = vmatprep.subr.mxu0 0.0
    %257 = vmatpush2.xpose.msra.mxu0 0.0
    %258 = vmatprep.subr.mxu0 0.0
    %259 = vmatpush2.xpose.msra.mxu0 0.0
    %260 = vmatprep.subr.mxu0 0.0
    %261 = vmatpush2.xpose.msra.mxu0 0.0
    %262 = vmatprep.subr.mxu0 0.0
    %263 = vmatpush2.xpose.msra.mxu0 0.0
    %264 = vmatprep.subr.mxu0 0.0
    %265 = vmatpush2.xpose.msra.mxu0 0.0
    %266 = vmatprep.subr.mxu0 0.0
    %267 = vmatpush2.xpose.msra.mxu0 0.0
    %268 = vmatprep.subr.mxu0 0.0
    %269 = vmatpush2.xpose.msra.mxu0 0.0
    %270 = vmatprep.subr.mxu0 0.0
    %271 = vmatpush2.xpose.msra.mxu0 0.0
    %272 = vmatprep.subr.mxu0 0.0
    %273 = vmatpush2.xpose.msra.mxu0 0.0
    %274 = vmatprep.subr.mxu0 0.0
    %275 = vmatpush2.xpose.msra.mxu0 0.0
    %276 = vmatprep.subr.mxu0 0.0
    %277 = vmatpush2.xpose.msra.mxu0 0.0
    %278 = vmatprep.subr.mxu0 0.0
    %279 = vmatpush2.xpose.msra.mxu0 0.0
    %280 = vmatprep.subr.mxu0 0.0
    %281 = vmatpush2.xpose.msra.mxu0 0.0
    %282 = vmatprep.mubr.f32.mxu0 0.0
    %283 = vmatmul.mubr.f32.gmra.mxu0 %v54
    %v284 = vpop.f32.mrf.mxu0
    %v285 = vadd.f32 0.0, %v284
    %v286 = vpop.f32.mrf.mxu0
    %287 = vmatprep.mubr.f32.mxu0 0.0
    %288 = vmatmul.mubr.f32.gmra.mxu0 %v57
    %v289 = vpop.f32.mrf.mxu0
    %v290 = vadd.f32 0.0, %v289
    %v291 = vpop.f32.mrf.mxu0
    %292 = vdwg.mxu0
    %v294 = vsel %vm52, %v47, 0
    %296 = vmatprep.subr.mxu0 0.0
    %297 = vmatpush1.xpose.msra.mxu0 0.0
    %298 = vmatprep.subr.mxu0 0.0
    %299 = vmatpush1.xpose.msra.mxu0 0.0
    %300 = vmatprep.subr.mxu0 0.0
    %301 = vmatpush1.xpose.msra.mxu0 0.0
    %302 = vmatprep.subr.mxu0 0.0
    %303 = vmatpush1.xpose.msra.mxu0 0.0
    %304 = vmatprep.subr.mxu0 0.0
    %305 = vmatpush1.xpose.msra.mxu0 0.0
    %306 = vmatprep.subr.mxu0 0.0
    %307 = vmatpush1.xpose.msra.mxu0 0.0
    %308 = vmatprep.subr.mxu0 0.0
    %309 = vmatpush1.xpose.msra.mxu0 0.0
    %310 = vmatprep.subr.mxu0 0.0
    %311 = vmatpush1.xpose.msra.mxu0 0.0
    %312 = vmatprep.subr.mxu0 0.0
    %313 = vmatpush1.xpose.msra.mxu0 0.0
    %314 = vmatprep.subr.mxu0 0.0
    %315 = vmatpush1.xpose.msra.mxu0 0.0
    %316 = vmatprep.subr.mxu0 0.0
    %317 = vmatpush1.xpose.msra.mxu0 0.0
    %318 = vmatprep.subr.mxu0 0.0
    %319 = vmatpush1.xpose.msra.mxu0 0.0
    %320 = vmatprep.subr.mxu0 0.0
    %321 = vmatpush1.xpose.msra.mxu0 0.0
    %322 = vmatprep.subr.mxu0 0.0
    %323 = vmatpush1.xpose.msra.mxu0 0.0
    %324 = vmatprep.subr.mxu0 0.0
    %325 = vmatpush1.xpose.msra.mxu0 0.0
    %326 = vmatprep.subr.mxu0 0.0
    %327 = vmatpush1.xpose.msra.mxu0 %v294
    %328 = vmatprep.subr.mxu0 0.0
    %329 = vmatpush2.xpose.msra.mxu0 0.0
    %330 = vmatprep.subr.mxu0 0.0
    %331 = vmatpush2.xpose.msra.mxu0 0.0
    %332 = vmatprep.subr.mxu0 0.0
    %333 = vmatpush2.xpose.msra.mxu0 0.0
    %334 = vmatprep.subr.mxu0 0.0
    %335 = vmatpush2.xpose.msra.mxu0 0.0
    %336 = vmatprep.subr.mxu0 0.0
    %337 = vmatpush2.xpose.msra.mxu0 0.0
    %338 = vmatprep.subr.mxu0 0.0
    %339 = vmatpush2.xpose.msra.mxu0 0.0
    %340 = vmatprep.subr.mxu0 0.0
    %341 = vmatpush2.xpose.msra.mxu0 0.0
    %342 = vmatprep.subr.mxu0 0.0
    %343 = vmatpush2.xpose.msra.mxu0 0.0
    %344 = vmatprep.subr.mxu0 0.0
    %345 = vmatpush2.xpose.msra.mxu0 0.0
    %346 = vmatprep.subr.mxu0 0.0
    %347 = vmatpush2.xpose.msra.mxu0 0.0
    %348 = vmatprep.subr.mxu0 0.0
    %349 = vmatpush2.xpose.msra.mxu0 0.0
    %350 = vmatprep.subr.mxu0 0.0
    %351 = vmatpush2.xpose.msra.mxu0 0.0
    %352 = vmatprep.subr.mxu0 0.0
    %353 = vmatpush2.xpose.msra.mxu0 0.0
    %354 = vmatprep.subr.mxu0 0.0
    %355 = vmatpush2.xpose.msra.mxu0 0.0
    %356 = vmatprep.subr.mxu0 0.0
    %357 = vmatpush2.xpose.msra.mxu0 0.0
    %358 = vmatprep.subr.mxu0 0.0
    %359 = vmatpush2.xpose.msra.mxu0 0.0
    %360 = vmatprep.mubr.f32.mxu0 0.0
    %361 = vmatmul.mubr.f32.gmra.mxu0 %v54
    %v362 = vpop.f32.mrf.mxu0
    %v363 = vadd.f32 0.0, %v362
    %v364 = vpop.f32.mrf.mxu0
    %365 = vmatprep.mubr.f32.mxu0 0.0
    %366 = vmatmul.mubr.f32.gmra.mxu0 %v57
    %v367 = vpop.f32.mrf.mxu0
    %v368 = vadd.f32 0.0, %v367
    %v369 = vpop.f32.mrf.mxu0
    %370 = vdwg.mxu0
    %v372 = vsel %vm52, %v48, 0
    %374 = vmatprep.subr.mxu0 0.0
    %375 = vmatpush1.xpose.msra.mxu0 0.0
    %376 = vmatprep.subr.mxu0 0.0
    %377 = vmatpush1.xpose.msra.mxu0 0.0
    %378 = vmatprep.subr.mxu0 0.0
    %379 = vmatpush1.xpose.msra.mxu0 0.0
    %380 = vmatprep.subr.mxu0 0.0
    %381 = vmatpush1.xpose.msra.mxu0 0.0
    %382 = vmatprep.subr.mxu0 0.0
    %383 = vmatpush1.xpose.msra.mxu0 0.0
    %384 = vmatprep.subr.mxu0 0.0
    %385 = vmatpush1.xpose.msra.mxu0 0.0
    %386 = vmatprep.subr.mxu0 0.0
    %387 = vmatpush1.xpose.msra.mxu0 0.0
    %388 = vmatprep.subr.mxu0 0.0
    %389 = vmatpush1.xpose.msra.mxu0 0.0
    %390 = vmatprep.subr.mxu0 0.0
    %391 = vmatpush1.xpose.msra.mxu0 0.0
    %392 = vmatprep.subr.mxu0 0.0
    %393 = vmatpush1.xpose.msra.mxu0 0.0
    %394 = vmatprep.subr.mxu0 0.0
    %395 = vmatpush1.xpose.msra.mxu0 0.0
    %396 = vmatprep.subr.mxu0 0.0
    %397 = vmatpush1.xpose.msra.mxu0 0.0
    %398 = vmatprep.subr.mxu0 0.0
    %399 = vmatpush1.xpose.msra.mxu0 0.0
    %400 = vmatprep.subr.mxu0 0.0
    %401 = vmatpush1.xpose.msra.mxu0 0.0
    %402 = vmatprep.subr.mxu0 0.0
    %403 = vmatpush1.xpose.msra.mxu0 0.0
    %404 = vmatprep.subr.mxu0 0.0
    %405 = vmatpush1.xpose.msra.mxu0 %v372
    %406 = vmatprep.subr.mxu0 0.0
    %407 = vmatpush2.xpose.msra.mxu0 0.0
    %408 = vmatprep.subr.mxu0 0.0
    %409 = vmatpush2.xpose.msra.mxu0 0.0
    %410 = vmatprep.subr.mxu0 0.0
    %411 = vmatpush2.xpose.msra.mxu0 0.0
    %412 = vmatprep.subr.mxu0 0.0
    %413 = vmatpush2.xpose.msra.mxu0 0.0
    %414 = vmatprep.subr.mxu0 0.0
    %415 = vmatpush2.xpose.msra.mxu0 0.0
    %416 = vmatprep.subr.mxu0 0.0
    %417 = vmatpush2.xpose.msra.mxu0 0.0
    %418 = vmatprep.subr.mxu0 0.0
    %419 = vmatpush2.xpose.msra.mxu0 0.0
    %420 = vmatprep.subr.mxu0 0.0
    %421 = vmatpush2.xpose.msra.mxu0 0.0
    %422 = vmatprep.subr.mxu0 0.0
    %423 = vmatpush2.xpose.msra.mxu0 0.0
    %424 = vmatprep.subr.mxu0 0.0
    %425 = vmatpush2.xpose.msra.mxu0 0.0
    %426 = vmatprep.subr.mxu0 0.0
    %427 = vmatpush2.xpose.msra.mxu0 0.0
    %428 = vmatprep.subr.mxu0 0.0
    %429 = vmatpush2.xpose.msra.mxu0 0.0
    %430 = vmatprep.subr.mxu0 0.0
    %431 = vmatpush2.xpose.msra.mxu0 0.0
    %432 = vmatprep.subr.mxu0 0.0
    %433 = vmatpush2.xpose.msra.mxu0 0.0
    %434 = vmatprep.subr.mxu0 0.0
    %435 = vmatpush2.xpose.msra.mxu0 0.0
    %436 = vmatprep.subr.mxu0 0.0
    %437 = vmatpush2.xpose.msra.mxu0 0.0
    %438 = vmatprep.mubr.f32.mxu0 0.0
    %439 = vmatmul.mubr.f32.gmra.mxu0 %v54
    %v440 = vpop.f32.mrf.mxu0
    %v441 = vadd.f32 0.0, %v440
    %v442 = vpop.f32.mrf.mxu0
    %443 = vmatprep.mubr.f32.mxu0 0.0
    %444 = vmatmul.mubr.f32.gmra.mxu0 %v57
    %v445 = vpop.f32.mrf.mxu0
    %v446 = vadd.f32 0.0, %v445
    %v447 = vpop.f32.mrf.mxu0
    %448 = vdwg.mxu0
    %v450 = vsel %vm52, %v49, 0
    %452 = vmatprep.subr.mxu0 0.0
    %453 = vmatpush1.xpose.msra.mxu0 0.0
    %454 = vmatprep.subr.mxu0 0.0
    %455 = vmatpush1.xpose.msra.mxu0 0.0
    %456 = vmatprep.subr.mxu0 0.0
    %457 = vmatpush1.xpose.msra.mxu0 0.0
    %458 = vmatprep.subr.mxu0 0.0
    %459 = vmatpush1.xpose.msra.mxu0 0.0
    %460 = vmatprep.subr.mxu0 0.0
    %461 = vmatpush1.xpose.msra.mxu0 0.0
    %462 = vmatprep.subr.mxu0 0.0
    %463 = vmatpush1.xpose.msra.mxu0 0.0
    %464 = vmatprep.subr.mxu0 0.0
    %465 = vmatpush1.xpose.msra.mxu0 0.0
    %466 = vmatprep.subr.mxu0 0.0
    %467 = vmatpush1.xpose.msra.mxu0 0.0
    %468 = vmatprep.subr.mxu0 0.0
    %469 = vmatpush1.xpose.msra.mxu0 0.0
    %470 = vmatprep.subr.mxu0 0.0
    %471 = vmatpush1.xpose.msra.mxu0 0.0
    %472 = vmatprep.subr.mxu0 0.0
    %473 = vmatpush1.xpose.msra.mxu0 0.0
    %474 = vmatprep.subr.mxu0 0.0
    %475 = vmatpush1.xpose.msra.mxu0 0.0
    %476 = vmatprep.subr.mxu0 0.0
    %477 = vmatpush1.xpose.msra.mxu0 0.0
    %478 = vmatprep.subr.mxu0 0.0
    %479 = vmatpush1.xpose.msra.mxu0 0.0
    %480 = vmatprep.subr.mxu0 0.0
    %481 = vmatpush1.xpose.msra.mxu0 0.0
    %482 = vmatprep.subr.mxu0 0.0
    %483 = vmatpush1.xpose.msra.mxu0 %v450
    %484 = vmatprep.subr.mxu0 0.0
    %485 = vmatpush2.xpose.msra.mxu0 0.0
    %486 = vmatprep.subr.mxu0 0.0
    %487 = vmatpush2.xpose.msra.mxu0 0.0
    %488 = vmatprep.subr.mxu0 0.0
    %489 = vmatpush2.xpose.msra.mxu0 0.0
    %490 = vmatprep.subr.mxu0 0.0
    %491 = vmatpush2.xpose.msra.mxu0 0.0
    %492 = vmatprep.subr.mxu0 0.0
    %493 = vmatpush2.xpose.msra.mxu0 0.0
    %494 = vmatprep.subr.mxu0 0.0
    %495 = vmatpush2.xpose.msra.mxu0 0.0
    %496 = vmatprep.subr.mxu0 0.0
    %497 = vmatpush2.xpose.msra.mxu0 0.0
    %498 = vmatprep.subr.mxu0 0.0
    %499 = vmatpush2.xpose.msra.mxu0 0.0
    %500 = vmatprep.subr.mxu0 0.0
    %501 = vmatpush2.xpose.msra.mxu0 0.0
    %502 = vmatprep.subr.mxu0 0.0
    %503 = vmatpush2.xpose.msra.mxu0 0.0
    %504 = vmatprep.subr.mxu0 0.0
    %505 = vmatpush2.xpose.msra.mxu0 0.0
    %506 = vmatprep.subr.mxu0 0.0
    %507 = vmatpush2.xpose.msra.mxu0 0.0
    %508 = vmatprep.subr.mxu0 0.0
    %509 = vmatpush2.xpose.msra.mxu0 0.0
    %510 = vmatprep.subr.mxu0 0.0
    %511 = vmatpush2.xpose.msra.mxu0 0.0
    %512 = vmatprep.subr.mxu0 0.0
    %513 = vmatpush2.xpose.msra.mxu0 0.0
    %514 = vmatprep.subr.mxu0 0.0
    %515 = vmatpush2.xpose.msra.mxu0 0.0
    %516 = vmatprep.mubr.f32.mxu0 0.0
    %517 = vmatmul.mubr.f32.gmra.mxu0 %v54
    %v518 = vpop.f32.mrf.mxu0
    %v519 = vadd.f32 0.0, %v518
    %v520 = vpop.f32.mrf.mxu0
    %521 = vmatprep.mubr.f32.mxu0 0.0
    %522 = vmatmul.mubr.f32.gmra.mxu0 %v57
    %v523 = vpop.f32.mrf.mxu0
    %v524 = vadd.f32 0.0, %v523
    %v525 = vpop.f32.mrf.mxu0
    %526 = vdwg.mxu0
    %v528 = vsel %vm52, %v50, 0
    %530 = vmatprep.subr.mxu0 0.0
    %531 = vmatpush1.xpose.msra.mxu0 0.0
    %532 = vmatprep.subr.mxu0 0.0
    %533 = vmatpush1.xpose.msra.mxu0 0.0
    %534 = vmatprep.subr.mxu0 0.0
    %535 = vmatpush1.xpose.msra.mxu0 0.0
    %536 = vmatprep.subr.mxu0 0.0
    %537 = vmatpush1.xpose.msra.mxu0 0.0
    %538 = vmatprep.subr.mxu0 0.0
    %539 = vmatpush1.xpose.msra.mxu0 0.0
    %540 = vmatprep.subr.mxu0 0.0
    %541 = vmatpush1.xpose.msra.mxu0 0.0
    %542 = vmatprep.subr.mxu0 0.0
    %543 = vmatpush1.xpose.msra.mxu0 0.0
    %544 = vmatprep.subr.mxu0 0.0
    %545 = vmatpush1.xpose.msra.mxu0 0.0
    %546 = vmatprep.subr.mxu0 0.0
    %547 = vmatpush1.xpose.msra.mxu0 0.0
    %548 = vmatprep.subr.mxu0 0.0
    %549 = vmatpush1.xpose.msra.mxu0 0.0
    %550 = vmatprep.subr.mxu0 0.0
    %551 = vmatpush1.xpose.msra.mxu0 0.0
    %552 = vmatprep.subr.mxu0 0.0
    %553 = vmatpush1.xpose.msra.mxu0 0.0
    %554 = vmatprep.subr.mxu0 0.0
    %555 = vmatpush1.xpose.msra.mxu0 0.0
    %556 = vmatprep.subr.mxu0 0.0
    %557 = vmatpush1.xpose.msra.mxu0 0.0
    %558 = vmatprep.subr.mxu0 0.0
    %559 = vmatpush1.xpose.msra.mxu0 0.0
    %560 = vmatprep.subr.mxu0 0.0
    %561 = vmatpush1.xpose.msra.mxu0 %v528
    %562 = vmatprep.subr.mxu0 0.0
    %563 = vmatpush2.xpose.msra.mxu0 0.0
    %564 = vmatprep.subr.mxu0 0.0
    %565 = vmatpush2.xpose.msra.mxu0 0.0
    %566 = vmatprep.subr.mxu0 0.0
    %567 = vmatpush2.xpose.msra.mxu0 0.0
    %568 = vmatprep.subr.mxu0 0.0
    %569 = vmatpush2.xpose.msra.mxu0 0.0
    %570 = vmatprep.subr.mxu0 0.0
    %571 = vmatpush2.xpose.msra.mxu0 0.0
    %572 = vmatprep.subr.mxu0 0.0
    %573 = vmatpush2.xpose.msra.mxu0 0.0
    %574 = vmatprep.subr.mxu0 0.0
    %575 = vmatpush2.xpose.msra.mxu0 0.0
    %576 = vmatprep.subr.mxu0 0.0
    %577 = vmatpush2.xpose.msra.mxu0 0.0
    %578 = vmatprep.subr.mxu0 0.0
    %579 = vmatpush2.xpose.msra.mxu0 0.0
    %580 = vmatprep.subr.mxu0 0.0
    %581 = vmatpush2.xpose.msra.mxu0 0.0
    %582 = vmatprep.subr.mxu0 0.0
    %583 = vmatpush2.xpose.msra.mxu0 0.0
    %584 = vmatprep.subr.mxu0 0.0
    %585 = vmatpush2.xpose.msra.mxu0 0.0
    %586 = vmatprep.subr.mxu0 0.0
    %587 = vmatpush2.xpose.msra.mxu0 0.0
    %588 = vmatprep.subr.mxu0 0.0
    %589 = vmatpush2.xpose.msra.mxu0 0.0
    %590 = vmatprep.subr.mxu0 0.0
    %591 = vmatpush2.xpose.msra.mxu0 0.0
    %592 = vmatprep.subr.mxu0 0.0
    %593 = vmatpush2.xpose.msra.mxu0 0.0
    %594 = vmatprep.mubr.f32.mxu0 0.0
    %595 = vmatmul.mubr.f32.gmra.mxu0 %v54
    %v596 = vpop.f32.mrf.mxu0
    %v597 = vadd.f32 0.0, %v596
    %v598 = vpop.f32.mrf.mxu0
    %599 = vmatprep.mubr.f32.mxu0 0.0
    %600 = vmatmul.mubr.f32.gmra.mxu0 %v57
    %v601 = vpop.f32.mrf.mxu0
    %v602 = vadd.f32 0.0, %v601
    %v603 = vpop.f32.mrf.mxu0
    %604 = vdwg.mxu0
    %v606 = vsel %vm52, %v51, 0
    %608 = vmatprep.subr.mxu0 0.0
    %609 = vmatpush1.xpose.msra.mxu0 0.0
    %610 = vmatprep.subr.mxu0 0.0
    %611 = vmatpush1.xpose.msra.mxu0 0.0
    %612 = vmatprep.subr.mxu0 0.0
    %613 = vmatpush1.xpose.msra.mxu0 0.0
    %614 = vmatprep.subr.mxu0 0.0
    %615 = vmatpush1.xpose.msra.mxu0 0.0
    %616 = vmatprep.subr.mxu0 0.0
    %617 = vmatpush1.xpose.msra.mxu0 0.0
    %618 = vmatprep.subr.mxu0 0.0
    %619 = vmatpush1.xpose.msra.mxu0 0.0
    %620 = vmatprep.subr.mxu0 0.0
    %621 = vmatpush1.xpose.msra.mxu0 0.0
    %622 = vmatprep.subr.mxu0 0.0
    %623 = vmatpush1.xpose.msra.mxu0 0.0
    %624 = vmatprep.subr.mxu0 0.0
    %625 = vmatpush1.xpose.msra.mxu0 0.0
    %626 = vmatprep.subr.mxu0 0.0
    %627 = vmatpush1.xpose.msra.mxu0 0.0
    %628 = vmatprep.subr.mxu0 0.0
    %629 = vmatpush1.xpose.msra.mxu0 0.0
    %630 = vmatprep.subr.mxu0 0.0
    %631 = vmatpush1.xpose.msra.mxu0 0.0
    %632 = vmatprep.subr.mxu0 0.0
    %633 = vmatpush1.xpose.msra.mxu0 0.0
    %634 = vmatprep.subr.mxu0 0.0
    %635 = vmatpush1.xpose.msra.mxu0 0.0
    %636 = vmatprep.subr.mxu0 0.0
    %637 = vmatpush1.xpose.msra.mxu0 0.0
    %638 = vmatprep.subr.mxu0 0.0
    %639 = vmatpush1.xpose.msra.mxu0 %v606
    %640 = vmatprep.subr.mxu0 0.0
    %641 = vmatpush2.xpose.msra.mxu0 0.0
    %642 = vmatprep.subr.mxu0 0.0
    %643 = vmatpush2.xpose.msra.mxu0 0.0
    %644 = vmatprep.subr.mxu0 0.0
    %645 = vmatpush2.xpose.msra.mxu0 0.0
    %646 = vmatprep.subr.mxu0 0.0
    %647 = vmatpush2.xpose.msra.mxu0 0.0
    %648 = vmatprep.subr.mxu0 0.0
    %649 = vmatpush2.xpose.msra.mxu0 0.0
    %650 = vmatprep.subr.mxu0 0.0
    %651 = vmatpush2.xpose.msra.mxu0 0.0
    %652 = vmatprep.subr.mxu0 0.0
    %653 = vmatpush2.xpose.msra.mxu0 0.0
    %654 = vmatprep.subr.mxu0 0.0
    %655 = vmatpush2.xpose.msra.mxu0 0.0
    %656 = vmatprep.subr.mxu0 0.0
    %657 = vmatpush2.xpose.msra.mxu0 0.0
    %658 = vmatprep.subr.mxu0 0.0
    %659 = vmatpush2.xpose.msra.mxu0 0.0
    %660 = vmatprep.subr.mxu0 0.0
    %661 = vmatpush2.xpose.msra.mxu0 0.0
    %662 = vmatprep.subr.mxu0 0.0
    %663 = vmatpush2.xpose.msra.mxu0 0.0
    %664 = vmatprep.subr.mxu0 0.0
    %665 = vmatpush2.xpose.msra.mxu0 0.0
    %666 = vmatprep.subr.mxu0 0.0
    %667 = vmatpush2.xpose.msra.mxu0 0.0
    %668 = vmatprep.subr.mxu0 0.0
    %669 = vmatpush2.xpose.msra.mxu0 0.0
    %670 = vmatprep.subr.mxu0 0.0
    %671 = vmatpush2.xpose.msra.mxu0 0.0
    %672 = vmatprep.mubr.f32.mxu0 0.0
    %673 = vmatmul.mubr.f32.gmra.mxu0 %v54
    %v674 = vpop.f32.mrf.mxu0
    %v675 = vadd.f32 0.0, %v674
    %v676 = vpop.f32.mrf.mxu0
    %677 = vmatprep.mubr.f32.mxu0 0.0
    %678 = vmatmul.mubr.f32.gmra.mxu0 %v57
    %v679 = vpop.f32.mrf.mxu0
    %v680 = vadd.f32 0.0, %v679
    %v681 = vpop.f32.mrf.mxu0
    %682 = vdwg.mxu0
    %v683 = vld [vmem:[%s5] sm:$0xff]
    %v684 = vld [vmem:[%s6] sm:$0xff]
    %686 = vset.pattern.permute.xlu0 0
    %687 = vperm.xlu0 %686, %v684
    %v688 = vpop.permute.xlu0 %687
    %vm690 = vcmask 64512
    %v692 = vsel %vm690, %v683, 0
    %v695 = vsel %vm690, %v129, 0
    %v698 = vsel %vm690, %v134, 0
    %700 = vmatprep.subr.mxu0 0.0
    %701 = vmatpush1.xpose.msra.mxu0 0.0
    %702 = vmatprep.subr.mxu0 0.0
    %703 = vmatpush1.xpose.msra.mxu0 0.0
    %704 = vmatprep.subr.mxu0 0.0
    %705 = vmatpush1.xpose.msra.mxu0 0.0
    %706 = vmatprep.subr.mxu0 0.0
    %707 = vmatpush1.xpose.msra.mxu0 0.0
    %708 = vmatprep.subr.mxu0 0.0
    %709 = vmatpush1.xpose.msra.mxu0 0.0
    %710 = vmatprep.subr.mxu0 0.0
    %711 = vmatpush1.xpose.msra.mxu0 0.0
    %712 = vmatprep.subr.mxu0 0.0
    %713 = vmatpush1.xpose.msra.mxu0 0.0
    %714 = vmatprep.subr.mxu0 0.0
    %715 = vmatpush1.xpose.msra.mxu0 0.0
    %716 = vmatprep.subr.mxu0 0.0
    %717 = vmatpush1.xpose.msra.mxu0 0.0
    %718 = vmatprep.subr.mxu0 0.0
    %719 = vmatpush1.xpose.msra.mxu0 0.0
    %720 = vmatprep.subr.mxu0 0.0
    %721 = vmatpush1.xpose.msra.mxu0 0.0
    %722 = vmatprep.subr.mxu0 0.0
    %723 = vmatpush1.xpose.msra.mxu0 0.0
    %724 = vmatprep.subr.mxu0 0.0
    %725 = vmatpush1.xpose.msra.mxu0 0.0
    %726 = vmatprep.subr.mxu0 0.0
    %727 = vmatpush1.xpose.msra.mxu0 0.0
    %728 = vmatprep.subr.mxu0 0.0
    %729 = vmatpush1.xpose.msra.mxu0 %v698
    %730 = vmatprep.subr.mxu0 0.0
    %731 = vmatpush1.xpose.msra.mxu0 %v695
    %732 = vmatprep.subr.mxu0 0.0
    %733 = vmatpush2.xpose.msra.mxu0 0.0
    %734 = vmatprep.subr.mxu0 0.0
    %735 = vmatpush2.xpose.msra.mxu0 0.0
    %736 = vmatprep.subr.mxu0 0.0
    %737 = vmatpush2.xpose.msra.mxu0 0.0
    %738 = vmatprep.subr.mxu0 0.0
    %739 = vmatpush2.xpose.msra.mxu0 0.0
    %740 = vmatprep.subr.mxu0 0.0
    %741 = vmatpush2.xpose.msra.mxu0 0.0
    %742 = vmatprep.subr.mxu0 0.0
    %743 = vmatpush2.xpose.msra.mxu0 0.0
    %744 = vmatprep.subr.mxu0 0.0
    %745 = vmatpush2.xpose.msra.mxu0 0.0
    %746 = vmatprep.subr.mxu0 0.0
    %747 = vmatpush2.xpose.msra.mxu0 0.0
    %748 = vmatprep.subr.mxu0 0.0
    %749 = vmatpush2.xpose.msra.mxu0 0.0
    %750 = vmatprep.subr.mxu0 0.0
    %751 = vmatpush2.xpose.msra.mxu0 0.0
    %752 = vmatprep.subr.mxu0 0.0
    %753 = vmatpush2.xpose.msra.mxu0 0.0
    %754 = vmatprep.subr.mxu0 0.0
    %755 = vmatpush2.xpose.msra.mxu0 0.0
    %756 = vmatprep.subr.mxu0 0.0
    %757 = vmatpush2.xpose.msra.mxu0 0.0
    %758 = vmatprep.subr.mxu0 0.0
    %759 = vmatpush2.xpose.msra.mxu0 0.0
    %760 = vmatprep.subr.mxu0 0.0
    %761 = vmatpush2.xpose.msra.mxu0 0.0
    %762 = vmatprep.subr.mxu0 0.0
    %763 = vmatpush2.xpose.msra.mxu0 0.0
    %764 = vmatprep.mubr.f32.mxu0 0.0
    %765 = vmatmul.mubr.f32.gmra.mxu0 %v692
    %v766 = vpop.f32.mrf.mxu0
    %v767 = vadd.f32 %v688, %v766
    %v768 = vpop.f32.mrf.mxu0
    %769 = vdwg.mxu0
    %v771 = vsel %vm690, %v207, 0
    %v774 = vsel %vm690, %v212, 0
    %776 = vmatprep.subr.mxu0 0.0
    %777 = vmatpush1.xpose.msra.mxu0 0.0
    %778 = vmatprep.subr.mxu0 0.0
    %779 = vmatpush1.xpose.msra.mxu0 0.0
    %780 = vmatprep.subr.mxu0 0.0
    %781 = vmatpush1.xpose.msra.mxu0 0.0
    %782 = vmatprep.subr.mxu0 0.0
    %783 = vmatpush1.xpose.msra.mxu0 0.0
    %784 = vmatprep.subr.mxu0 0.0
    %785 = vmatpush1.xpose.msra.mxu0 0.0
    %786 = vmatprep.subr.mxu0 0.0
    %787 = vmatpush1.xpose.msra.mxu0 0.0
    %788 = vmatprep.subr.mxu0 0.0
    %789 = vmatpush1.xpose.msra.mxu0 0.0
    %790 = vmatprep.subr.mxu0 0.0
    %791 = vmatpush1.xpose.msra.mxu0 0.0
    %792 = vmatprep.subr.mxu0 0.0
    %793 = vmatpush1.xpose.msra.mxu0 0.0
    %794 = vmatprep.subr.mxu0 0.0
    %795 = vmatpush1.xpose.msra.mxu0 0.0
    %796 = vmatprep.subr.mxu0 0.0
    %797 = vmatpush1.xpose.msra.mxu0 0.0
    %798 = vmatprep.subr.mxu0 0.0
    %799 = vmatpush1.xpose.msra.mxu0 0.0
    %800 = vmatprep.subr.mxu0 0.0
    %801 = vmatpush1.xpose.msra.mxu0 0.0
    %802 = vmatprep.subr.mxu0 0.0
    %803 = vmatpush1.xpose.msra.mxu0 0.0
    %804 = vmatprep.subr.mxu0 0.0
    %805 = vmatpush1.xpose.msra.mxu0 %v774
    %806 = vmatprep.subr.mxu0 0.0
    %807 = vmatpush1.xpose.msra.mxu0 %v771
    %808 = vmatprep.subr.mxu0 0.0
    %809 = vmatpush2.xpose.msra.mxu0 0.0
    %810 = vmatprep.subr.mxu0 0.0
    %811 = vmatpush2.xpose.msra.mxu0 0.0
    %812 = vmatprep.subr.mxu0 0.0
    %813 = vmatpush2.xpose.msra.mxu0 0.0
    %814 = vmatprep.subr.mxu0 0.0
    %815 = vmatpush2.xpose.msra.mxu0 0.0
    %816 = vmatprep.subr.mxu0 0.0
    %817 = vmatpush2.xpose.msra.mxu0 0.0
    %818 = vmatprep.subr.mxu0 0.0
    %819 = vmatpush2.xpose.msra.mxu0 0.0
    %820 = vmatprep.subr.mxu0 0.0
    %821 = vmatpush2.xpose.msra.mxu0 0.0
    %822 = vmatprep.subr.mxu0 0.0
    %823 = vmatpush2.xpose.msra.mxu0 0.0
    %824 = vmatprep.subr.mxu0 0.0
    %825 = vmatpush2.xpose.msra.mxu0 0.0
    %826 = vmatprep.subr.mxu0 0.0
    %827 = vmatpush2.xpose.msra.mxu0 0.0
    %828 = vmatprep.subr.mxu0 0.0
    %829 = vmatpush2.xpose.msra.mxu0 0.0
    %830 = vmatprep.subr.mxu0 0.0
    %831 = vmatpush2.xpose.msra.mxu0 0.0
    %832 = vmatprep.subr.mxu0 0.0
    %833 = vmatpush2.xpose.msra.mxu0 0.0
    %834 = vmatprep.subr.mxu0 0.0
    %835 = vmatpush2.xpose.msra.mxu0 0.0
    %836 = vmatprep.subr.mxu0 0.0
    %837 = vmatpush2.xpose.msra.mxu0 0.0
    %838 = vmatprep.subr.mxu0 0.0
    %839 = vmatpush2.xpose.msra.mxu0 0.0
    %840 = vmatprep.mubr.f32.mxu0 0.0
    %841 = vmatmul.mubr.f32.gmra.mxu0 %v692
    %v842 = vpop.f32.mrf.mxu0
    %v843 = vadd.f32 %v688, %v842
    %v844 = vpop.f32.mrf.mxu0
    %845 = vdwg.mxu0
    %v847 = vsel %vm690, %v285, 0
    %v850 = vsel %vm690, %v290, 0
    %852 = vmatprep.subr.mxu0 0.0
    %853 = vmatpush1.xpose.msra.mxu0 0.0
    %854 = vmatprep.subr.mxu0 0.0
    %855 = vmatpush1.xpose.msra.mxu0 0.0
    %856 = vmatprep.subr.mxu0 0.0
    %857 = vmatpush1.xpose.msra.mxu0 0.0
    %858 = vmatprep.subr.mxu0 0.0
    %859 = vmatpush1.xpose.msra.mxu0 0.0
    %860 = vmatprep.subr.mxu0 0.0
    %861 = vmatpush1.xpose.msra.mxu0 0.0
    %862 = vmatprep.subr.mxu0 0.0
    %863 = vmatpush1.xpose.msra.mxu0 0.0
    %864 = vmatprep.subr.mxu0 0.0
    %865 = vmatpush1.xpose.msra.mxu0 0.0
    %866 = vmatprep.subr.mxu0 0.0
    %867 = vmatpush1.xpose.msra.mxu0 0.0
    %868 = vmatprep.subr.mxu0 0.0
    %869 = vmatpush1.xpose.msra.mxu0 0.0
    %870 = vmatprep.subr.mxu0 0.0
    %871 = vmatpush1.xpose.msra.mxu0 0.0
    %872 = vmatprep.subr.mxu0 0.0
    %873 = vmatpush1.xpose.msra.mxu0 0.0
    %874 = vmatprep.subr.mxu0 0.0
    %875 = vmatpush1.xpose.msra.mxu0 0.0
    %876 = vmatprep.subr.mxu0 0.0
    %877 = vmatpush1.xpose.msra.mxu0 0.0
    %878 = vmatprep.subr.mxu0 0.0
    %879 = vmatpush1.xpose.msra.mxu0 0.0
    %880 = vmatprep.subr.mxu0 0.0
    %881 = vmatpush1.xpose.msra.mxu0 %v850
    %882 = vmatprep.subr.mxu0 0.0
    %883 = vmatpush1.xpose.msra.mxu0 %v847
    %884 = vmatprep.subr.mxu0 0.0
    %885 = vmatpush2.xpose.msra.mxu0 0.0
    %886 = vmatprep.subr.mxu0 0.0
    %887 = vmatpush2.xpose.msra.mxu0 0.0
    %888 = vmatprep.subr.mxu0 0.0
    %889 = vmatpush2.xpose.msra.mxu0 0.0
    %890 = vmatprep.subr.mxu0 0.0
    %891 = vmatpush2.xpose.msra.mxu0 0.0
    %892 = vmatprep.subr.mxu0 0.0
    %893 = vmatpush2.xpose.msra.mxu0 0.0
    %894 = vmatprep.subr.mxu0 0.0
    %895 = vmatpush2.xpose.msra.mxu0 0.0
    %896 = vmatprep.subr.mxu0 0.0
    %897 = vmatpush2.xpose.msra.mxu0 0.0
    %898 = vmatprep.subr.mxu0 0.0
    %899 = vmatpush2.xpose.msra.mxu0 0.0
    %900 = vmatprep.subr.mxu0 0.0
    %901 = vmatpush2.xpose.msra.mxu0 0.0
    %902 = vmatprep.subr.mxu0 0.0
    %903 = vmatpush2.xpose.msra.mxu0 0.0
    %904 = vmatprep.subr.mxu0 0.0
    %905 = vmatpush2.xpose.msra.mxu0 0.0
    %906 = vmatprep.subr.mxu0 0.0
    %907 = vmatpush2.xpose.msra.mxu0 0.0
    %908 = vmatprep.subr.mxu0 0.0
    %909 = vmatpush2.xpose.msra.mxu0 0.0
    %910 = vmatprep.subr.mxu0 0.0
    %911 = vmatpush2.xpose.msra.mxu0 0.0
    %912 = vmatprep.subr.mxu0 0.0
    %913 = vmatpush2.xpose.msra.mxu0 0.0
    %914 = vmatprep.subr.mxu0 0.0
    %915 = vmatpush2.xpose.msra.mxu0 0.0
    %916 = vmatprep.mubr.f32.mxu0 0.0
    %917 = vmatmul.mubr.f32.gmra.mxu0 %v692
    %v918 = vpop.f32.mrf.mxu0
    %v919 = vadd.f32 %v688, %v918
    %v920 = vpop.f32.mrf.mxu0
    %921 = vdwg.mxu0
    %v923 = vsel %vm690, %v363, 0
    %v926 = vsel %vm690, %v368, 0
    %928 = vmatprep.subr.mxu0 0.0
    %929 = vmatpush1.xpose.msra.mxu0 0.0
    %930 = vmatprep.subr.mxu0 0.0
    %931 = vmatpush1.xpose.msra.mxu0 0.0
    %932 = vmatprep.subr.mxu0 0.0
    %933 = vmatpush1.xpose.msra.mxu0 0.0
    %934 = vmatprep.subr.mxu0 0.0
    %935 = vmatpush1.xpose.msra.mxu0 0.0
    %936 = vmatprep.subr.mxu0 0.0
    %937 = vmatpush1.xpose.msra.mxu0 0.0
    %938 = vmatprep.subr.mxu0 0.0
    %939 = vmatpush1.xpose.msra.mxu0 0.0
    %940 = vmatprep.subr.mxu0 0.0
    %941 = vmatpush1.xpose.msra.mxu0 0.0
    %942 = vmatprep.subr.mxu0 0.0
    %943 = vmatpush1.xpose.msra.mxu0 0.0
    %944 = vmatprep.subr.mxu0 0.0
    %945 = vmatpush1.xpose.msra.mxu0 0.0
    %946 = vmatprep.subr.mxu0 0.0
    %947 = vmatpush1.xpose.msra.mxu0 0.0
    %948 = vmatprep.subr.mxu0 0.0
    %949 = vmatpush1.xpose.msra.mxu0 0.0
    %950 = vmatprep.subr.mxu0 0.0
    %951 = vmatpush1.xpose.msra.mxu0 0.0
    %952 = vmatprep.subr.mxu0 0.0
    %953 = vmatpush1.xpose.msra.mxu0 0.0
    %954 = vmatprep.subr.mxu0 0.0
    %955 = vmatpush1.xpose.msra.mxu0 0.0
    %956 = vmatprep.subr.mxu0 0.0
    %957 = vmatpush1.xpose.msra.mxu0 %v926
    %958 = vmatprep.subr.mxu0 0.0
    %959 = vmatpush1.xpose.msra.mxu0 %v923
    %960 = vmatprep.subr.mxu0 0.0
    %961 = vmatpush2.xpose.msra.mxu0 0.0
    %962 = vmatprep.subr.mxu0 0.0
    %963 = vmatpush2.xpose.msra.mxu0 0.0
    %964 = vmatprep.subr.mxu0 0.0
    %965 = vmatpush2.xpose.msra.mxu0 0.0
    %966 = vmatprep.subr.mxu0 0.0
    %967 = vmatpush2.xpose.msra.mxu0 0.0
    %968 = vmatprep.subr.mxu0 0.0
    %969 = vmatpush2.xpose.msra.mxu0 0.0
    %970 = vmatprep.subr.mxu0 0.0
    %971 = vmatpush2.xpose.msra.mxu0 0.0
    %972 = vmatprep.subr.mxu0 0.0
    %973 = vmatpush2.xpose.msra.mxu0 0.0
    %974 = vmatprep.subr.mxu0 0.0
    %975 = vmatpush2.xpose.msra.mxu0 0.0
    %976 = vmatprep.subr.mxu0 0.0
    %977 = vmatpush2.xpose.msra.mxu0 0.0
    %978 = vmatprep.subr.mxu0 0.0
    %979 = vmatpush2.xpose.msra.mxu0 0.0
    %980 = vmatprep.subr.mxu0 0.0
    %981 = vmatpush2.xpose.msra.mxu0 0.0
    %982 = vmatprep.subr.mxu0 0.0
    %983 = vmatpush2.xpose.msra.mxu0 0.0
    %984 = vmatprep.subr.mxu0 0.0
    %985 = vmatpush2.xpose.msra.mxu0 0.0
    %986 = vmatprep.subr.mxu0 0.0
    %987 = vmatpush2.xpose.msra.mxu0 0.0
    %988 = vmatprep.subr.mxu0 0.0
    %989 = vmatpush2.xpose.msra.mxu0 0.0
    %990 = vmatprep.subr.mxu0 0.0
    %991 = vmatpush2.xpose.msra.mxu0 0.0
    %992 = vmatprep.mubr.f32.mxu0 0.0
    %993 = vmatmul.mubr.f32.gmra.mxu0 %v692
    %v994 = vpop.f32.mrf.mxu0
    %v995 = vadd.f32 %v688, %v994
    %v996 = vpop.f32.mrf.mxu0
    %997 = vdwg.mxu0
    %v999 = vsel %vm690, %v441, 0
    %v1002 = vsel %vm690, %v446, 0
    %1004 = vmatprep.subr.mxu0 0.0
    %1005 = vmatpush1.xpose.msra.mxu0 0.0
    %1006 = vmatprep.subr.mxu0 0.0
    %1007 = vmatpush1.xpose.msra.mxu0 0.0
    %1008 = vmatprep.subr.mxu0 0.0
    %1009 = vmatpush1.xpose.msra.mxu0 0.0
    %1010 = vmatprep.subr.mxu0 0.0
    %1011 = vmatpush1.xpose.msra.mxu0 0.0
    %1012 = vmatprep.subr.mxu0 0.0
    %1013 = vmatpush1.xpose.msra.mxu0 0.0
    %1014 = vmatprep.subr.mxu0 0.0
    %1015 = vmatpush1.xpose.msra.mxu0 0.0
    %1016 = vmatprep.subr.mxu0 0.0
    %1017 = vmatpush1.xpose.msra.mxu0 0.0
    %1018 = vmatprep.subr.mxu0 0.0
    %1019 = vmatpush1.xpose.msra.mxu0 0.0
    %1020 = vmatprep.subr.mxu0 0.0
    %1021 = vmatpush1.xpose.msra.mxu0 0.0
    %1022 = vmatprep.subr.mxu0 0.0
    %1023 = vmatpush1.xpose.msra.mxu0 0.0
    %1024 = vmatprep.subr.mxu0 0.0
    %1025 = vmatpush1.xpose.msra.mxu0 0.0
    %1026 = vmatprep.subr.mxu0 0.0
    %1027 = vmatpush1.xpose.msra.mxu0 0.0
    %1028 = vmatprep.subr.mxu0 0.0
    %1029 = vmatpush1.xpose.msra.mxu0 0.0
    %1030 = vmatprep.subr.mxu0 0.0
    %1031 = vmatpush1.xpose.msra.mxu0 0.0
    %1032 = vmatprep.subr.mxu0 0.0
    %1033 = vmatpush1.xpose.msra.mxu0 %v1002
    %1034 = vmatprep.subr.mxu0 0.0
    %1035 = vmatpush1.xpose.msra.mxu0 %v999
    %1036 = vmatprep.subr.mxu0 0.0
    %1037 = vmatpush2.xpose.msra.mxu0 0.0
    %1038 = vmatprep.subr.mxu0 0.0
    %1039 = vmatpush2.xpose.msra.mxu0 0.0
    %1040 = vmatprep.subr.mxu0 0.0
    %1041 = vmatpush2.xpose.msra.mxu0 0.0
    %1042 = vmatprep.subr.mxu0 0.0
    %1043 = vmatpush2.xpose.msra.mxu0 0.0
    %1044 = vmatprep.subr.mxu0 0.0
    %1045 = vmatpush2.xpose.msra.mxu0 0.0
    %1046 = vmatprep.subr.mxu0 0.0
    %1047 = vmatpush2.xpose.msra.mxu0 0.0
    %1048 = vmatprep.subr.mxu0 0.0
    %1049 = vmatpush2.xpose.msra.mxu0 0.0
    %1050 = vmatprep.subr.mxu0 0.0
    %1051 = vmatpush2.xpose.msra.mxu0 0.0
    %1052 = vmatprep.subr.mxu0 0.0
    %1053 = vmatpush2.xpose.msra.mxu0 0.0
    %1054 = vmatprep.subr.mxu0 0.0
    %1055 = vmatpush2.xpose.msra.mxu0 0.0
    %1056 = vmatprep.subr.mxu0 0.0
    %1057 = vmatpush2.xpose.msra.mxu0 0.0
    %1058 = vmatprep.subr.mxu0 0.0
    %1059 = vmatpush2.xpose.msra.mxu0 0.0
    %1060 = vmatprep.subr.mxu0 0.0
    %1061 = vmatpush2.xpose.msra.mxu0 0.0
    %1062 = vmatprep.subr.mxu0 0.0
    %1063 = vmatpush2.xpose.msra.mxu0 0.0
    %1064 = vmatprep.subr.mxu0 0.0
    %1065 = vmatpush2.xpose.msra.mxu0 0.0
    %1066 = vmatprep.subr.mxu0 0.0
    %1067 = vmatpush2.xpose.msra.mxu0 0.0
    %1068 = vmatprep.mubr.f32.mxu0 0.0
    %1069 = vmatmul.mubr.f32.gmra.mxu0 %v692
    %v1070 = vpop.f32.mrf.mxu0
    %v1071 = vadd.f32 %v688, %v1070
    %v1072 = vpop.f32.mrf.mxu0
    %1073 = vdwg.mxu0
    %v1075 = vsel %vm690, %v519, 0
    %v1078 = vsel %vm690, %v524, 0
    %1080 = vmatprep.subr.mxu0 0.0
    %1081 = vmatpush1.xpose.msra.mxu0 0.0
    %1082 = vmatprep.subr.mxu0 0.0
    %1083 = vmatpush1.xpose.msra.mxu0 0.0
    %1084 = vmatprep.subr.mxu0 0.0
    %1085 = vmatpush1.xpose.msra.mxu0 0.0
    %1086 = vmatprep.subr.mxu0 0.0
    %1087 = vmatpush1.xpose.msra.mxu0 0.0
    %1088 = vmatprep.subr.mxu0 0.0
    %1089 = vmatpush1.xpose.msra.mxu0 0.0
    %1090 = vmatprep.subr.mxu0 0.0
    %1091 = vmatpush1.xpose.msra.mxu0 0.0
    %1092 = vmatprep.subr.mxu0 0.0
    %1093 = vmatpush1.xpose.msra.mxu0 0.0
    %1094 = vmatprep.subr.mxu0 0.0
    %1095 = vmatpush1.xpose.msra.mxu0 0.0
    %1096 = vmatprep.subr.mxu0 0.0
    %1097 = vmatpush1.xpose.msra.mxu0 0.0
    %1098 = vmatprep.subr.mxu0 0.0
    %1099 = vmatpush1.xpose.msra.mxu0 0.0
    %1100 = vmatprep.subr.mxu0 0.0
    %1101 = vmatpush1.xpose.msra.mxu0 0.0
    %1102 = vmatprep.subr.mxu0 0.0
    %1103 = vmatpush1.xpose.msra.mxu0 0.0
    %1104 = vmatprep.subr.mxu0 0.0
    %1105 = vmatpush1.xpose.msra.mxu0 0.0
    %1106 = vmatprep.subr.mxu0 0.0
    %1107 = vmatpush1.xpose.msra.mxu0 0.0
    %1108 = vmatprep.subr.mxu0 0.0
    %1109 = vmatpush1.xpose.msra.mxu0 %v1078
    %1110 = vmatprep.subr.mxu0 0.0
    %1111 = vmatpush1.xpose.msra.mxu0 %v1075
    %1112 = vmatprep.subr.mxu0 0.0
    %1113 = vmatpush2.xpose.msra.mxu0 0.0
    %1114 = vmatprep.subr.mxu0 0.0
    %1115 = vmatpush2.xpose.msra.mxu0 0.0
    %1116 = vmatprep.subr.mxu0 0.0
    %1117 = vmatpush2.xpose.msra.mxu0 0.0
    %1118 = vmatprep.subr.mxu0 0.0
    %1119 = vmatpush2.xpose.msra.mxu0 0.0
    %1120 = vmatprep.subr.mxu0 0.0
    %1121 = vmatpush2.xpose.msra.mxu0 0.0
    %1122 = vmatprep.subr.mxu0 0.0
    %1123 = vmatpush2.xpose.msra.mxu0 0.0
    %1124 = vmatprep.subr.mxu0 0.0
    %1125 = vmatpush2.xpose.msra.mxu0 0.0
    %1126 = vmatprep.subr.mxu0 0.0
    %1127 = vmatpush2.xpose.msra.mxu0 0.0
    %1128 = vmatprep.subr.mxu0 0.0
    %1129 = vmatpush2.xpose.msra.mxu0 0.0
    %1130 = vmatprep.subr.mxu0 0.0
    %1131 = vmatpush2.xpose.msra.mxu0 0.0
    %1132 = vmatprep.subr.mxu0 0.0
    %1133 = vmatpush2.xpose.msra.mxu0 0.0
    %1134 = vmatprep.subr.mxu0 0.0
    %1135 = vmatpush2.xpose.msra.mxu0 0.0
    %1136 = vmatprep.subr.mxu0 0.0
    %1137 = vmatpush2.xpose.msra.mxu0 0.0
    %1138 = vmatprep.subr.mxu0 0.0
    %1139 = vmatpush2.xpose.msra.mxu0 0.0
    %1140 = vmatprep.subr.mxu0 0.0
    %1141 = vmatpush2.xpose.msra.mxu0 0.0
    %1142 = vmatprep.subr.mxu0 0.0
    %1143 = vmatpush2.xpose.msra.mxu0 0.0
    %1144 = vmatprep.mubr.f32.mxu0 0.0
    %1145 = vmatmul.mubr.f32.gmra.mxu0 %v692
    %v1146 = vpop.f32.mrf.mxu0
    %v1147 = vadd.f32 %v688, %v1146
    %v1148 = vpop.f32.mrf.mxu0
    %1149 = vdwg.mxu0
    %v1151 = vsel %vm690, %v597, 0
    %v1154 = vsel %vm690, %v602, 0
    %1156 = vmatprep.subr.mxu0 0.0
    %1157 = vmatpush1.xpose.msra.mxu0 0.0
    %1158 = vmatprep.subr.mxu0 0.0
    %1159 = vmatpush1.xpose.msra.mxu0 0.0
    %1160 = vmatprep.subr.mxu0 0.0
    %1161 = vmatpush1.xpose.msra.mxu0 0.0
    %1162 = vmatprep.subr.mxu0 0.0
    %1163 = vmatpush1.xpose.msra.mxu0 0.0
    %1164 = vmatprep.subr.mxu0 0.0
    %1165 = vmatpush1.xpose.msra.mxu0 0.0
    %1166 = vmatprep.subr.mxu0 0.0
    %1167 = vmatpush1.xpose.msra.mxu0 0.0
    %1168 = vmatprep.subr.mxu0 0.0
    %1169 = vmatpush1.xpose.msra.mxu0 0.0
    %1170 = vmatprep.subr.mxu0 0.0
    %1171 = vmatpush1.xpose.msra.mxu0 0.0
    %1172 = vmatprep.subr.mxu0 0.0
    %1173 = vmatpush1.xpose.msra.mxu0 0.0
    %1174 = vmatprep.subr.mxu0 0.0
    %1175 = vmatpush1.xpose.msra.mxu0 0.0
    %1176 = vmatprep.subr.mxu0 0.0
    %1177 = vmatpush1.xpose.msra.mxu0 0.0
    %1178 = vmatprep.subr.mxu0 0.0
    %1179 = vmatpush1.xpose.msra.mxu0 0.0
    %1180 = vmatprep.subr.mxu0 0.0
    %1181 = vmatpush1.xpose.msra.mxu0 0.0
    %1182 = vmatprep.subr.mxu0 0.0
    %1183 = vmatpush1.xpose.msra.mxu0 0.0
    %1184 = vmatprep.subr.mxu0 0.0
    %1185 = vmatpush1.xpose.msra.mxu0 %v1154
    %1186 = vmatprep.subr.mxu0 0.0
    %1187 = vmatpush1.xpose.msra.mxu0 %v1151
    %1188 = vmatprep.subr.mxu0 0.0
    %1189 = vmatpush2.xpose.msra.mxu0 0.0
    %1190 = vmatprep.subr.mxu0 0.0
    %1191 = vmatpush2.xpose.msra.mxu0 0.0
    %1192 = vmatprep.subr.mxu0 0.0
    %1193 = vmatpush2.xpose.msra.mxu0 0.0
    %1194 = vmatprep.subr.mxu0 0.0
    %1195 = vmatpush2.xpose.msra.mxu0 0.0
    %1196 = vmatprep.subr.mxu0 0.0
    %1197 = vmatpush2.xpose.msra.mxu0 0.0
    %1198 = vmatprep.subr.mxu0 0.0
    %1199 = vmatpush2.xpose.msra.mxu0 0.0
    %1200 = vmatprep.subr.mxu0 0.0
    %1201 = vmatpush2.xpose.msra.mxu0 0.0
    %1202 = vmatprep.subr.mxu0 0.0
    %1203 = vmatpush2.xpose.msra.mxu0 0.0
    %1204 = vmatprep.subr.mxu0 0.0
    %1205 = vmatpush2.xpose.msra.mxu0 0.0
    %1206 = vmatprep.subr.mxu0 0.0
    %1207 = vmatpush2.xpose.msra.mxu0 0.0
    %1208 = vmatprep.subr.mxu0 0.0
    %1209 = vmatpush2.xpose.msra.mxu0 0.0
    %1210 = vmatprep.subr.mxu0 0.0
    %1211 = vmatpush2.xpose.msra.mxu0 0.0
    %1212 = vmatprep.subr.mxu0 0.0
    %1213 = vmatpush2.xpose.msra.mxu0 0.0
    %1214 = vmatprep.subr.mxu0 0.0
    %1215 = vmatpush2.xpose.msra.mxu0 0.0
    %1216 = vmatprep.subr.mxu0 0.0
    %1217 = vmatpush2.xpose.msra.mxu0 0.0
    %1218 = vmatprep.subr.mxu0 0.0
    %1219 = vmatpush2.xpose.msra.mxu0 0.0
    %1220 = vmatprep.mubr.f32.mxu0 0.0
    %1221 = vmatmul.mubr.f32.gmra.mxu0 %v692
    %v1222 = vpop.f32.mrf.mxu0
    %v1223 = vadd.f32 %v688, %v1222
    %v1224 = vpop.f32.mrf.mxu0
    %1225 = vdwg.mxu0
    %v1227 = vsel %vm690, %v675, 0
    %v1230 = vsel %vm690, %v680, 0
    %1232 = vmatprep.subr.mxu0 0.0
    %1233 = vmatpush1.xpose.msra.mxu0 0.0
    %1234 = vmatprep.subr.mxu0 0.0
    %1235 = vmatpush1.xpose.msra.mxu0 0.0
    %1236 = vmatprep.subr.mxu0 0.0
    %1237 = vmatpush1.xpose.msra.mxu0 0.0
    %1238 = vmatprep.subr.mxu0 0.0
    %1239 = vmatpush1.xpose.msra.mxu0 0.0
    %1240 = vmatprep.subr.mxu0 0.0
    %1241 = vmatpush1.xpose.msra.mxu0 0.0
    %1242 = vmatprep.subr.mxu0 0.0
    %1243 = vmatpush1.xpose.msra.mxu0 0.0
    %1244 = vmatprep.subr.mxu0 0.0
    %1245 = vmatpush1.xpose.msra.mxu0 0.0
    %1246 = vmatprep.subr.mxu0 0.0
    %1247 = vmatpush1.xpose.msra.mxu0 0.0
    %1248 = vmatprep.subr.mxu0 0.0
    %1249 = vmatpush1.xpose.msra.mxu0 0.0
    %1250 = vmatprep.subr.mxu0 0.0
    %1251 = vmatpush1.xpose.msra.mxu0 0.0
    %1252 = vmatprep.subr.mxu0 0.0
    %1253 = vmatpush1.xpose.msra.mxu0 0.0
    %1254 = vmatprep.subr.mxu0 0.0
    %1255 = vmatpush1.xpose.msra.mxu0 0.0
    %1256 = vmatprep.subr.mxu0 0.0
    %1257 = vmatpush1.xpose.msra.mxu0 0.0
    %1258 = vmatprep.subr.mxu0 0.0
    %1259 = vmatpush1.xpose.msra.mxu0 0.0
    %1260 = vmatprep.subr.mxu0 0.0
    %1261 = vmatpush1.xpose.msra.mxu0 %v1230
    %1262 = vmatprep.subr.mxu0 0.0
    %1263 = vmatpush1.xpose.msra.mxu0 %v1227
    %1264 = vmatprep.subr.mxu0 0.0
    %1265 = vmatpush2.xpose.msra.mxu0 0.0
    %1266 = vmatprep.subr.mxu0 0.0
    %1267 = vmatpush2.xpose.msra.mxu0 0.0
    %1268 = vmatprep.subr.mxu0 0.0
    %1269 = vmatpush2.xpose.msra.mxu0 0.0
    %1270 = vmatprep.subr.mxu0 0.0
    %1271 = vmatpush2.xpose.msra.mxu0 0.0
    %1272 = vmatprep.subr.mxu0 0.0
    %1273 = vmatpush2.xpose.msra.mxu0 0.0
    %1274 = vmatprep.subr.mxu0 0.0
    %1275 = vmatpush2.xpose.msra.mxu0 0.0
    %1276 = vmatprep.subr.mxu0 0.0
    %1277 = vmatpush2.xpose.msra.mxu0 0.0
    %1278 = vmatprep.subr.mxu0 0.0
    %1279 = vmatpush2.xpose.msra.mxu0 0.0
    %1280 = vmatprep.subr.mxu0 0.0
    %1281 = vmatpush2.xpose.msra.mxu0 0.0
    %1282 = vmatprep.subr.mxu0 0.0
    %1283 = vmatpush2.xpose.msra.mxu0 0.0
    %1284 = vmatprep.subr.mxu0 0.0
    %1285 = vmatpush2.xpose.msra.mxu0 0.0
    %1286 = vmatprep.subr.mxu0 0.0
    %1287 = vmatpush2.xpose.msra.mxu0 0.0
    %1288 = vmatprep.subr.mxu0 0.0
    %1289 = vmatpush2.xpose.msra.mxu0 0.0
    %1290 = vmatprep.subr.mxu0 0.0
    %1291 = vmatpush2.xpose.msra.mxu0 0.0
    %1292 = vmatprep.subr.mxu0 0.0
    %1293 = vmatpush2.xpose.msra.mxu0 0.0
    %1294 = vmatprep.subr.mxu0 0.0
    %1295 = vmatpush2.xpose.msra.mxu0 0.0
    %1296 = vmatprep.mubr.f32.mxu0 0.0
    %1297 = vmatmul.mubr.f32.gmra.mxu0 %v692
    %v1298 = vpop.f32.mrf.mxu0
    %v1299 = vadd.f32 %v688, %v1298
    %v1300 = vpop.f32.mrf.mxu0
    %1301 = vdwg.mxu0
    %vm1302 = vcmask 130048
    %1303 = vst.msk [vmem:[#allocation2] sm:$0xff] %vm1302, %v767
    %1304 = vst.msk [vmem:[#allocation2 + $0x8] sm:$0xff] %vm1302, %v843
    %1305 = vst.msk [vmem:[#allocation2 + $0x10] sm:$0xff] %vm1302, %v919
    %1306 = vst.msk [vmem:[#allocation2 + $0x18] sm:$0xff] %vm1302, %v995
    %1307 = vst.msk [vmem:[#allocation2 + $0x20] sm:$0xff] %vm1302, %v1071
    %1308 = vst.msk [vmem:[#allocation2 + $0x28] sm:$0xff] %vm1302, %v1147
    %1309 = vst.msk [vmem:[#allocation2 + $0x30] sm:$0xff] %vm1302, %v1223
    %1310 = vst.msk [vmem:[#allocation2 + $0x38] sm:$0xff] %vm1302, %v1299
    %v1311 = vld [vmem:[#allocation2] sm:$0x1]
    %v1312 = vld [vmem:[#allocation2 + $0x8] sm:$0x1]
    %v1313 = vld [vmem:[#allocation2 + $0x10] sm:$0x1]
    %v1314 = vld [vmem:[#allocation2 + $0x18] sm:$0x1]
    %v1315 = vld [vmem:[#allocation2 + $0x20] sm:$0x1]
    %v1316 = vld [vmem:[#allocation2 + $0x28] sm:$0x1]
    %v1317 = vld [vmem:[#allocation2 + $0x30] sm:$0x1]
    %v1318 = vld [vmem:[#allocation2 + $0x38] sm:$0x1]
    %v1327 = vrot.slane %v1312, 7
    %vm1328 = vcmask 1041409
    %v1329 = vsel %vm1328, %v1327, %v1311
    %v1330 = vrot.slane %v1313, 6
    %vm1331 = vcmask 1042434
    %v1332 = vsel %vm1331, %v1330, %v1329
    %v1333 = vrot.slane %v1314, 5
    %vm1334 = vcmask 1043459
    %v1335 = vsel %vm1334, %v1333, %v1332
    %v1336 = vrot.slane %v1315, 4
    %vm1337 = vcmask 1044484
    %v1338 = vsel %vm1337, %v1336, %v1335
    %v1339 = vrot.slane %v1316, 3
    %vm1340 = vcmask 1045509
    %v1341 = vsel %vm1340, %v1339, %v1338
    %v1342 = vrot.slane %v1317, 2
    %vm1343 = vcmask 1046534
    %v1344 = vsel %vm1343, %v1342, %v1341
    %v1345 = vrot.slane %v1318, 1
    %vm1346 = vcmask 1047559
    %v1347 = vsel %vm1346, %v1345, %v1344
    %1349 = vst.msk [vmem:[#allocation3] sm:$0xff] %vm1302, %v1347
    %v1350 = vld [vmem:[#allocation2 + $0x1] sm:$0x1]
    %v1351 = vld [vmem:[#allocation2 + $0x9] sm:$0x1]
    %v1352 = vld [vmem:[#allocation2 + $0x11] sm:$0x1]
    %v1353 = vld [vmem:[#allocation2 + $0x19] sm:$0x1]
    %v1354 = vld [vmem:[#allocation2 + $0x21] sm:$0x1]
    %v1355 = vld [vmem:[#allocation2 + $0x29] sm:$0x1]
    %v1356 = vld [vmem:[#allocation2 + $0x31] sm:$0x1]
    %v1357 = vld [vmem:[#allocation2 + $0x39] sm:$0x1]
    %v1366 = vrot.slane %v1351, 7
    %v1367 = vsel %vm1328, %v1366, %v1350
    %v1368 = vrot.slane %v1352, 6
    %v1369 = vsel %vm1331, %v1368, %v1367
    %v1370 = vrot.slane %v1353, 5
    %v1371 = vsel %vm1334, %v1370, %v1369
    %v1372 = vrot.slane %v1354, 4
    %v1373 = vsel %vm1337, %v1372, %v1371
    %v1374 = vrot.slane %v1355, 3
    %v1375 = vsel %vm1340, %v1374, %v1373
    %v1376 = vrot.slane %v1356, 2
    %v1377 = vsel %vm1343, %v1376, %v1375
    %v1378 = vrot.slane %v1357, 1
    %v1379 = vsel %vm1346, %v1378, %v1377
    %1380 = vrot.lane.b32.xlu0 %v1379, 16
    %v1381 = vpop.permute.xlu0 %1380
    %vm1383 = vcmask 261248
    %1384 = vst.msk [vmem:[#allocation3] sm:$0xff] %vm1383, %v1381
    %v1385 = vld [vmem:[#allocation2 + $0x2] sm:$0x1]
    %v1386 = vld [vmem:[#allocation2 + $0xa] sm:$0x1]
    %v1387 = vld [vmem:[#allocation2 + $0x12] sm:$0x1]
    %v1388 = vld [vmem:[#allocation2 + $0x1a] sm:$0x1]
    %v1389 = vld [vmem:[#allocation2 + $0x22] sm:$0x1]
    %v1390 = vld [vmem:[#allocation2 + $0x2a] sm:$0x1]
    %v1391 = vld [vmem:[#allocation2 + $0x32] sm:$0x1]
    %v1392 = vld [vmem:[#allocation2 + $0x3a] sm:$0x1]
    %v1401 = vrot.slane %v1386, 7
    %v1402 = vsel %vm1328, %v1401, %v1385
    %v1403 = vrot.slane %v1387, 6
    %v1404 = vsel %vm1331, %v1403, %v1402
    %v1405 = vrot.slane %v1388, 5
    %v1406 = vsel %vm1334, %v1405, %v1404
    %v1407 = vrot.slane %v1389, 4
    %v1408 = vsel %vm1337, %v1407, %v1406
    %v1409 = vrot.slane %v1390, 3
    %v1410 = vsel %vm1340, %v1409, %v1408
    %v1411 = vrot.slane %v1391, 2
    %v1412 = vsel %vm1343, %v1411, %v1410
    %v1413 = vrot.slane %v1392, 1
    %v1414 = vsel %vm1346, %v1413, %v1412
    %1415 = vrot.lane.b32.xlu0 %v1414, 32
    %v1416 = vpop.permute.xlu0 %1415
    %vm1418 = vcmask 392448
    %1419 = vst.msk [vmem:[#allocation3] sm:$0xff] %vm1418, %v1416
    %v1420 = vld [vmem:[#allocation2 + $0x3] sm:$0x1]
    %v1421 = vld [vmem:[#allocation2 + $0xb] sm:$0x1]
    %v1422 = vld [vmem:[#allocation2 + $0x13] sm:$0x1]
    %v1423 = vld [vmem:[#allocation2 + $0x1b] sm:$0x1]
    %v1424 = vld [vmem:[#allocation2 + $0x23] sm:$0x1]
    %v1425 = vld [vmem:[#allocation2 + $0x2b] sm:$0x1]
    %v1426 = vld [vmem:[#allocation2 + $0x33] sm:$0x1]
    %v1427 = vld [vmem:[#allocation2 + $0x3b] sm:$0x1]
    %v1436 = vrot.slane %v1421, 7
    %v1437 = vsel %vm1328, %v1436, %v1420
    %v1438 = vrot.slane %v1422, 6
    %v1439 = vsel %vm1331, %v1438, %v1437
    %v1440 = vrot.slane %v1423, 5
    %v1441 = vsel %vm1334, %v1440, %v1439
    %v1442 = vrot.slane %v1424, 4
    %v1443 = vsel %vm1337, %v1442, %v1441
    %v1444 = vrot.slane %v1425, 3
    %v1445 = vsel %vm1340, %v1444, %v1443
    %v1446 = vrot.slane %v1426, 2
    %v1447 = vsel %vm1343, %v1446, %v1445
    %v1448 = vrot.slane %v1427, 1
    %v1449 = vsel %vm1346, %v1448, %v1447
    %1450 = vrot.lane.b32.xlu0 %v1449, 48
    %v1451 = vpop.permute.xlu0 %1450
    %vm1453 = vcmask 523648
    %1454 = vst.msk [vmem:[#allocation3] sm:$0xff] %vm1453, %v1451
    %v1455 = vld [vmem:[#allocation2 + $0x4] sm:$0x1]
    %v1456 = vld [vmem:[#allocation2 + $0xc] sm:$0x1]
    %v1457 = vld [vmem:[#allocation2 + $0x14] sm:$0x1]
    %v1458 = vld [vmem:[#allocation2 + $0x1c] sm:$0x1]
    %v1459 = vld [vmem:[#allocation2 + $0x24] sm:$0x1]
    %v1460 = vld [vmem:[#allocation2 + $0x2c] sm:$0x1]
    %v1461 = vld [vmem:[#allocation2 + $0x34] sm:$0x1]
    %v1462 = vld [vmem:[#allocation2 + $0x3c] sm:$0x1]
    %v1471 = vrot.slane %v1456, 7
    %v1472 = vsel %vm1328, %v1471, %v1455
    %v1473 = vrot.slane %v1457, 6
    %v1474 = vsel %vm1331, %v1473, %v1472
    %v1475 = vrot.slane %v1458, 5
    %v1476 = vsel %vm1334, %v1475, %v1474
    %v1477 = vrot.slane %v1459, 4
    %v1478 = vsel %vm1337, %v1477, %v1476
    %v1479 = vrot.slane %v1460, 3
    %v1480 = vsel %vm1340, %v1479, %v1478
    %v1481 = vrot.slane %v1461, 2
    %v1482 = vsel %vm1343, %v1481, %v1480
    %v1483 = vrot.slane %v1462, 1
    %v1484 = vsel %vm1346, %v1483, %v1482
    %1485 = vrot.lane.b32.xlu0 %v1484, 64
    %v1486 = vpop.permute.xlu0 %1485
    %vm1488 = vcmask 654848
    %1489 = vst.msk [vmem:[#allocation3] sm:$0xff] %vm1488, %v1486
    %v1490 = vld [vmem:[#allocation2 + $0x5] sm:$0x1]
    %v1491 = vld [vmem:[#allocation2 + $0xd] sm:$0x1]
    %v1492 = vld [vmem:[#allocation2 + $0x15] sm:$0x1]
    %v1493 = vld [vmem:[#allocation2 + $0x1d] sm:$0x1]
    %v1494 = vld [vmem:[#allocation2 + $0x25] sm:$0x1]
    %v1495 = vld [vmem:[#allocation2 + $0x2d] sm:$0x1]
    %v1496 = vld [vmem:[#allocation2 + $0x35] sm:$0x1]
    %v1497 = vld [vmem:[#allocation2 + $0x3d] sm:$0x1]
    %v1506 = vrot.slane %v1491, 7
    %v1507 = vsel %vm1328, %v1506, %v1490
    %v1508 = vrot.slane %v1492, 6
    %v1509 = vsel %vm1331, %v1508, %v1507
    %v1510 = vrot.slane %v1493, 5
    %v1511 = vsel %vm1334, %v1510, %v1509
    %v1512 = vrot.slane %v1494, 4
    %v1513 = vsel %vm1337, %v1512, %v1511
    %v1514 = vrot.slane %v1495, 3
    %v1515 = vsel %vm1340, %v1514, %v1513
    %v1516 = vrot.slane %v1496, 2
    %v1517 = vsel %vm1343, %v1516, %v1515
    %v1518 = vrot.slane %v1497, 1
    %v1519 = vsel %vm1346, %v1518, %v1517
    %1520 = vrot.lane.b32.xlu0 %v1519, 80
    %v1521 = vpop.permute.xlu0 %1520
    %vm1523 = vcmask 786048
    %1524 = vst.msk [vmem:[#allocation3] sm:$0xff] %vm1523, %v1521
    %v1525 = vld [vmem:[#allocation2 + $0x6] sm:$0x1]
    %v1526 = vld [vmem:[#allocation2 + $0xe] sm:$0x1]
    %v1527 = vld [vmem:[#allocation2 + $0x16] sm:$0x1]
    %v1528 = vld [vmem:[#allocation2 + $0x1e] sm:$0x1]
    %v1529 = vld [vmem:[#allocation2 + $0x26] sm:$0x1]
    %v1530 = vld [vmem:[#allocation2 + $0x2e] sm:$0x1]
    %v1531 = vld [vmem:[#allocation2 + $0x36] sm:$0x1]
    %v1532 = vld [vmem:[#allocation2 + $0x3e] sm:$0x1]
    %v1541 = vrot.slane %v1526, 7
    %v1542 = vsel %vm1328, %v1541, %v1525
    %v1543 = vrot.slane %v1527, 6
    %v1544 = vsel %vm1331, %v1543, %v1542
    %v1545 = vrot.slane %v1528, 5
    %v1546 = vsel %vm1334, %v1545, %v1544
    %v1547 = vrot.slane %v1529, 4
    %v1548 = vsel %vm1337, %v1547, %v1546
    %v1549 = vrot.slane %v1530, 3
    %v1550 = vsel %vm1340, %v1549, %v1548
    %v1551 = vrot.slane %v1531, 2
    %v1552 = vsel %vm1343, %v1551, %v1550
    %v1553 = vrot.slane %v1532, 1
    %v1554 = vsel %vm1346, %v1553, %v1552
    %1555 = vrot.lane.b32.xlu0 %v1554, 96
    %v1556 = vpop.permute.xlu0 %1555
    %vm1558 = vcmask 917248
    %1559 = vst.msk [vmem:[#allocation3] sm:$0xff] %vm1558, %v1556
    %v1560 = vld [vmem:[#allocation2 + $0x7] sm:$0x1]
    %v1561 = vld [vmem:[#allocation2 + $0xf] sm:$0x1]
    %v1562 = vld [vmem:[#allocation2 + $0x17] sm:$0x1]
    %v1563 = vld [vmem:[#allocation2 + $0x1f] sm:$0x1]
    %v1564 = vld [vmem:[#allocation2 + $0x27] sm:$0x1]
    %v1565 = vld [vmem:[#allocation2 + $0x2f] sm:$0x1]
    %v1566 = vld [vmem:[#allocation2 + $0x37] sm:$0x1]
    %v1567 = vld [vmem:[#allocation2 + $0x3f] sm:$0x1]
    %v1576 = vrot.slane %v1561, 7
    %v1577 = vsel %vm1328, %v1576, %v1560
    %v1578 = vrot.slane %v1562, 6
    %v1579 = vsel %vm1331, %v1578, %v1577
    %v1580 = vrot.slane %v1563, 5
    %v1581 = vsel %vm1334, %v1580, %v1579
    %v1582 = vrot.slane %v1564, 4
    %v1583 = vsel %vm1337, %v1582, %v1581
    %v1584 = vrot.slane %v1565, 3
    %v1585 = vsel %vm1340, %v1584, %v1583
    %v1586 = vrot.slane %v1566, 2
    %v1587 = vsel %vm1343, %v1586, %v1585
    %v1588 = vrot.slane %v1567, 1
    %v1589 = vsel %vm1346, %v1588, %v1587
    %1590 = vrot.lane.b32.xlu0 %v1589, 112
    %v1591 = vpop.permute.xlu0 %1590
    %vm1593 = vcmask 1048448
    %1594 = vst.msk [vmem:[#allocation3] sm:$0xff] %vm1593, %v1591
    %v1595 = vld [vmem:[%s1] sm:$0xff]
    %v1596 = vld [vmem:[%s1 + $0x8] sm:$0xff]
    %v1597 = vld [vmem:[%s1 + $0x10] sm:$0xff]
    %v1598 = vld [vmem:[%s1 + $0x18] sm:$0xff]
    %v1599 = vld [vmem:[%s1 + $0x20] sm:$0xff]
    %v1600 = vld [vmem:[%s1 + $0x28] sm:$0xff]
    %v1601 = vld [vmem:[%s1 + $0x30] sm:$0xff]
    %v1602 = vld [vmem:[%s1 + $0x38] sm:$0xff]
    %v1604 = vsel %vm52, %v1595, 0
    %1606 = vmatprep.subr.mxu0 0.0
    %1607 = vmatpush1.xpose.msra.mxu0 0.0
    %1608 = vmatprep.subr.mxu0 0.0
    %1609 = vmatpush1.xpose.msra.mxu0 0.0
    %1610 = vmatprep.subr.mxu0 0.0
    %1611 = vmatpush1.xpose.msra.mxu0 0.0
    %1612 = vmatprep.subr.mxu0 0.0
    %1613 = vmatpush1.xpose.msra.mxu0 0.0
    %1614 = vmatprep.subr.mxu0 0.0
    %1615 = vmatpush1.xpose.msra.mxu0 0.0
    %1616 = vmatprep.subr.mxu0 0.0
    %1617 = vmatpush1.xpose.msra.mxu0 0.0
    %1618 = vmatprep.subr.mxu0 0.0
    %1619 = vmatpush1.xpose.msra.mxu0 0.0
    %1620 = vmatprep.subr.mxu0 0.0
    %1621 = vmatpush1.xpose.msra.mxu0 0.0
    %1622 = vmatprep.subr.mxu0 0.0
    %1623 = vmatpush1.xpose.msra.mxu0 0.0
    %1624 = vmatprep.subr.mxu0 0.0
    %1625 = vmatpush1.xpose.msra.mxu0 0.0
    %1626 = vmatprep.subr.mxu0 0.0
    %1627 = vmatpush1.xpose.msra.mxu0 0.0
    %1628 = vmatprep.subr.mxu0 0.0
    %1629 = vmatpush1.xpose.msra.mxu0 0.0
    %1630 = vmatprep.subr.mxu0 0.0
    %1631 = vmatpush1.xpose.msra.mxu0 0.0
    %1632 = vmatprep.subr.mxu0 0.0
    %1633 = vmatpush1.xpose.msra.mxu0 0.0
    %1634 = vmatprep.subr.mxu0 0.0
    %1635 = vmatpush1.xpose.msra.mxu0 0.0
    %1636 = vmatprep.subr.mxu0 0.0
    %1637 = vmatpush1.xpose.msra.mxu0 %v1604
    %1638 = vmatprep.subr.mxu0 0.0
    %1639 = vmatpush2.xpose.msra.mxu0 0.0
    %1640 = vmatprep.subr.mxu0 0.0
    %1641 = vmatpush2.xpose.msra.mxu0 0.0
    %1642 = vmatprep.subr.mxu0 0.0
    %1643 = vmatpush2.xpose.msra.mxu0 0.0
    %1644 = vmatprep.subr.mxu0 0.0
    %1645 = vmatpush2.xpose.msra.mxu0 0.0
    %1646 = vmatprep.subr.mxu0 0.0
    %1647 = vmatpush2.xpose.msra.mxu0 0.0
    %1648 = vmatprep.subr.mxu0 0.0
    %1649 = vmatpush2.xpose.msra.mxu0 0.0
    %1650 = vmatprep.subr.mxu0 0.0
    %1651 = vmatpush2.xpose.msra.mxu0 0.0
    %1652 = vmatprep.subr.mxu0 0.0
    %1653 = vmatpush2.xpose.msra.mxu0 0.0
    %1654 = vmatprep.subr.mxu0 0.0
    %1655 = vmatpush2.xpose.msra.mxu0 0.0
    %1656 = vmatprep.subr.mxu0 0.0
    %1657 = vmatpush2.xpose.msra.mxu0 0.0
    %1658 = vmatprep.subr.mxu0 0.0
    %1659 = vmatpush2.xpose.msra.mxu0 0.0
    %1660 = vmatprep.subr.mxu0 0.0
    %1661 = vmatpush2.xpose.msra.mxu0 0.0
    %1662 = vmatprep.subr.mxu0 0.0
    %1663 = vmatpush2.xpose.msra.mxu0 0.0
    %1664 = vmatprep.subr.mxu0 0.0
    %1665 = vmatpush2.xpose.msra.mxu0 0.0
    %1666 = vmatprep.subr.mxu0 0.0
    %1667 = vmatpush2.xpose.msra.mxu0 0.0
    %1668 = vmatprep.subr.mxu0 0.0
    %1669 = vmatpush2.xpose.msra.mxu0 0.0
    %1670 = vmatprep.mubr.f32.mxu0 0.0
    %1671 = vmatmul.mubr.f32.gmra.mxu0 %v54
    %v1672 = vpop.f32.mrf.mxu0
    %v1673 = vadd.f32 0.0, %v1672
    %v1674 = vpop.f32.mrf.mxu0
    %1675 = vmatprep.mubr.f32.mxu0 0.0
    %1676 = vmatmul.mubr.f32.gmra.mxu0 %v57
    %v1677 = vpop.f32.mrf.mxu0
    %v1678 = vadd.f32 0.0, %v1677
    %v1679 = vpop.f32.mrf.mxu0
    %1680 = vdwg.mxu0
    %v1682 = vsel %vm52, %v1596, 0
    %1684 = vmatprep.subr.mxu0 0.0
    %1685 = vmatpush1.xpose.msra.mxu0 0.0
    %1686 = vmatprep.subr.mxu0 0.0
    %1687 = vmatpush1.xpose.msra.mxu0 0.0
    %1688 = vmatprep.subr.mxu0 0.0
    %1689 = vmatpush1.xpose.msra.mxu0 0.0
    %1690 = vmatprep.subr.mxu0 0.0
    %1691 = vmatpush1.xpose.msra.mxu0 0.0
    %1692 = vmatprep.subr.mxu0 0.0
    %1693 = vmatpush1.xpose.msra.mxu0 0.0
    %1694 = vmatprep.subr.mxu0 0.0
    %1695 = vmatpush1.xpose.msra.mxu0 0.0
    %1696 = vmatprep.subr.mxu0 0.0
    %1697 = vmatpush1.xpose.msra.mxu0 0.0
    %1698 = vmatprep.subr.mxu0 0.0
    %1699 = vmatpush1.xpose.msra.mxu0 0.0
    %1700 = vmatprep.subr.mxu0 0.0
    %1701 = vmatpush1.xpose.msra.mxu0 0.0
    %1702 = vmatprep.subr.mxu0 0.0
    %1703 = vmatpush1.xpose.msra.mxu0 0.0
    %1704 = vmatprep.subr.mxu0 0.0
    %1705 = vmatpush1.xpose.msra.mxu0 0.0
    %1706 = vmatprep.subr.mxu0 0.0
    %1707 = vmatpush1.xpose.msra.mxu0 0.0
    %1708 = vmatprep.subr.mxu0 0.0
    %1709 = vmatpush1.xpose.msra.mxu0 0.0
    %1710 = vmatprep.subr.mxu0 0.0
    %1711 = vmatpush1.xpose.msra.mxu0 0.0
    %1712 = vmatprep.subr.mxu0 0.0
    %1713 = vmatpush1.xpose.msra.mxu0 0.0
    %1714 = vmatprep.subr.mxu0 0.0
    %1715 = vmatpush1.xpose.msra.mxu0 %v1682
    %1716 = vmatprep.subr.mxu0 0.0
    %1717 = vmatpush2.xpose.msra.mxu0 0.0
    %1718 = vmatprep.subr.mxu0 0.0
    %1719 = vmatpush2.xpose.msra.mxu0 0.0
    %1720 = vmatprep.subr.mxu0 0.0
    %1721 = vmatpush2.xpose.msra.mxu0 0.0
    %1722 = vmatprep.subr.mxu0 0.0
    %1723 = vmatpush2.xpose.msra.mxu0 0.0
    %1724 = vmatprep.subr.mxu0 0.0
    %1725 = vmatpush2.xpose.msra.mxu0 0.0
    %1726 = vmatprep.subr.mxu0 0.0
    %1727 = vmatpush2.xpose.msra.mxu0 0.0
    %1728 = vmatprep.subr.mxu0 0.0
    %1729 = vmatpush2.xpose.msra.mxu0 0.0
    %1730 = vmatprep.subr.mxu0 0.0
    %1731 = vmatpush2.xpose.msra.mxu0 0.0
    %1732 = vmatprep.subr.mxu0 0.0
    %1733 = vmatpush2.xpose.msra.mxu0 0.0
    %1734 = vmatprep.subr.mxu0 0.0
    %1735 = vmatpush2.xpose.msra.mxu0 0.0
    %1736 = vmatprep.subr.mxu0 0.0
    %1737 = vmatpush2.xpose.msra.mxu0 0.0
    %1738 = vmatprep.subr.mxu0 0.0
    %1739 = vmatpush2.xpose.msra.mxu0 0.0
    %1740 = vmatprep.subr.mxu0 0.0
    %1741 = vmatpush2.xpose.msra.mxu0 0.0
    %1742 = vmatprep.subr.mxu0 0.0
    %1743 = vmatpush2.xpose.msra.mxu0 0.0
    %1744 = vmatprep.subr.mxu0 0.0
    %1745 = vmatpush2.xpose.msra.mxu0 0.0
    %1746 = vmatprep.subr.mxu0 0.0
    %1747 = vmatpush2.xpose.msra.mxu0 0.0
    %1748 = vmatprep.mubr.f32.mxu0 0.0
    %1749 = vmatmul.mubr.f32.gmra.mxu0 %v54
    %v1750 = vpop.f32.mrf.mxu0
    %v1751 = vadd.f32 0.0, %v1750
    %v1752 = vpop.f32.mrf.mxu0
    %1753 = vmatprep.mubr.f32.mxu0 0.0
    %1754 = vmatmul.mubr.f32.gmra.mxu0 %v57
    %v1755 = vpop.f32.mrf.mxu0
    %v1756 = vadd.f32 0.0, %v1755
    %v1757 = vpop.f32.mrf.mxu0
    %1758 = vdwg.mxu0
    %v1760 = vsel %vm52, %v1597, 0
    %1762 = vmatprep.subr.mxu0 0.0
    %1763 = vmatpush1.xpose.msra.mxu0 0.0
    %1764 = vmatprep.subr.mxu0 0.0
    %1765 = vmatpush1.xpose.msra.mxu0 0.0
    %1766 = vmatprep.subr.mxu0 0.0
    %1767 = vmatpush1.xpose.msra.mxu0 0.0
    %1768 = vmatprep.subr.mxu0 0.0
    %1769 = vmatpush1.xpose.msra.mxu0 0.0
    %1770 = vmatprep.subr.mxu0 0.0
    %1771 = vmatpush1.xpose.msra.mxu0 0.0
    %1772 = vmatprep.subr.mxu0 0.0
    %1773 = vmatpush1.xpose.msra.mxu0 0.0
    %1774 = vmatprep.subr.mxu0 0.0
    %1775 = vmatpush1.xpose.msra.mxu0 0.0
    %1776 = vmatprep.subr.mxu0 0.0
    %1777 = vmatpush1.xpose.msra.mxu0 0.0
    %1778 = vmatprep.subr.mxu0 0.0
    %1779 = vmatpush1.xpose.msra.mxu0 0.0
    %1780 = vmatprep.subr.mxu0 0.0
    %1781 = vmatpush1.xpose.msra.mxu0 0.0
    %1782 = vmatprep.subr.mxu0 0.0
    %1783 = vmatpush1.xpose.msra.mxu0 0.0
    %1784 = vmatprep.subr.mxu0 0.0
    %1785 = vmatpush1.xpose.msra.mxu0 0.0
    %1786 = vmatprep.subr.mxu0 0.0
    %1787 = vmatpush1.xpose.msra.mxu0 0.0
    %1788 = vmatprep.subr.mxu0 0.0
    %1789 = vmatpush1.xpose.msra.mxu0 0.0
    %1790 = vmatprep.subr.mxu0 0.0
    %1791 = vmatpush1.xpose.msra.mxu0 0.0
    %1792 = vmatprep.subr.mxu0 0.0
    %1793 = vmatpush1.xpose.msra.mxu0 %v1760
    %1794 = vmatprep.subr.mxu0 0.0
    %1795 = vmatpush2.xpose.msra.mxu0 0.0
    %1796 = vmatprep.subr.mxu0 0.0
    %1797 = vmatpush2.xpose.msra.mxu0 0.0
    %1798 = vmatprep.subr.mxu0 0.0
    %1799 = vmatpush2.xpose.msra.mxu0 0.0
    %1800 = vmatprep.subr.mxu0 0.0
    %1801 = vmatpush2.xpose.msra.mxu0 0.0
    %1802 = vmatprep.subr.mxu0 0.0
    %1803 = vmatpush2.xpose.msra.mxu0 0.0
    %1804 = vmatprep.subr.mxu0 0.0
    %1805 = vmatpush2.xpose.msra.mxu0 0.0
    %1806 = vmatprep.subr.mxu0 0.0
    %1807 = vmatpush2.xpose.msra.mxu0 0.0
    %1808 = vmatprep.subr.mxu0 0.0
    %1809 = vmatpush2.xpose.msra.mxu0 0.0
    %1810 = vmatprep.subr.mxu0 0.0
    %1811 = vmatpush2.xpose.msra.mxu0 0.0
    %1812 = vmatprep.subr.mxu0 0.0
    %1813 = vmatpush2.xpose.msra.mxu0 0.0
    %1814 = vmatprep.subr.mxu0 0.0
    %1815 = vmatpush2.xpose.msra.mxu0 0.0
    %1816 = vmatprep.subr.mxu0 0.0
    %1817 = vmatpush2.xpose.msra.mxu0 0.0
    %1818 = vmatprep.subr.mxu0 0.0
    %1819 = vmatpush2.xpose.msra.mxu0 0.0
    %1820 = vmatprep.subr.mxu0 0.0
    %1821 = vmatpush2.xpose.msra.mxu0 0.0
    %1822 = vmatprep.subr.mxu0 0.0
    %1823 = vmatpush2.xpose.msra.mxu0 0.0
    %1824 = vmatprep.subr.mxu0 0.0
    %1825 = vmatpush2.xpose.msra.mxu0 0.0
    %1826 = vmatprep.mubr.f32.mxu0 0.0
    %1827 = vmatmul.mubr.f32.gmra.mxu0 %v54
    %v1828 = vpop.f32.mrf.mxu0
    %v1829 = vadd.f32 0.0, %v1828
    %v1830 = vpop.f32.mrf.mxu0
    %1831 = vmatprep.mubr.f32.mxu0 0.0
    %1832 = vmatmul.mubr.f32.gmra.mxu0 %v57
    %v1833 = vpop.f32.mrf.mxu0
    %v1834 = vadd.f32 0.0, %v1833
    %v1835 = vpop.f32.mrf.mxu0
    %1836 = vdwg.mxu0
    %v1838 = vsel %vm52, %v1598, 0
    %1840 = vmatprep.subr.mxu0 0.0
    %1841 = vmatpush1.xpose.msra.mxu0 0.0
    %1842 = vmatprep.subr.mxu0 0.0
    %1843 = vmatpush1.xpose.msra.mxu0 0.0
    %1844 = vmatprep.subr.mxu0 0.0
    %1845 = vmatpush1.xpose.msra.mxu0 0.0
    %1846 = vmatprep.subr.mxu0 0.0
    %1847 = vmatpush1.xpose.msra.mxu0 0.0
    %1848 = vmatprep.subr.mxu0 0.0
    %1849 = vmatpush1.xpose.msra.mxu0 0.0
    %1850 = vmatprep.subr.mxu0 0.0
    %1851 = vmatpush1.xpose.msra.mxu0 0.0
    %1852 = vmatprep.subr.mxu0 0.0
    %1853 = vmatpush1.xpose.msra.mxu0 0.0
    %1854 = vmatprep.subr.mxu0 0.0
    %1855 = vmatpush1.xpose.msra.mxu0 0.0
    %1856 = vmatprep.subr.mxu0 0.0
    %1857 = vmatpush1.xpose.msra.mxu0 0.0
    %1858 = vmatprep.subr.mxu0 0.0
    %1859 = vmatpush1.xpose.msra.mxu0 0.0
    %1860 = vmatprep.subr.mxu0 0.0
    %1861 = vmatpush1.xpose.msra.mxu0 0.0
    %1862 = vmatprep.subr.mxu0 0.0
    %1863 = vmatpush1.xpose.msra.mxu0 0.0
    %1864 = vmatprep.subr.mxu0 0.0
    %1865 = vmatpush1.xpose.msra.mxu0 0.0
    %1866 = vmatprep.subr.mxu0 0.0
    %1867 = vmatpush1.xpose.msra.mxu0 0.0
    %1868 = vmatprep.subr.mxu0 0.0
    %1869 = vmatpush1.xpose.msra.mxu0 0.0
    %1870 = vmatprep.subr.mxu0 0.0
    %1871 = vmatpush1.xpose.msra.mxu0 %v1838
    %1872 = vmatprep.subr.mxu0 0.0
    %1873 = vmatpush2.xpose.msra.mxu0 0.0
    %1874 = vmatprep.subr.mxu0 0.0
    %1875 = vmatpush2.xpose.msra.mxu0 0.0
    %1876 = vmatprep.subr.mxu0 0.0
    %1877 = vmatpush2.xpose.msra.mxu0 0.0
    %1878 = vmatprep.subr.mxu0 0.0
    %1879 = vmatpush2.xpose.msra.mxu0 0.0
    %1880 = vmatprep.subr.mxu0 0.0
    %1881 = vmatpush2.xpose.msra.mxu0 0.0
    %1882 = vmatprep.subr.mxu0 0.0
    %1883 = vmatpush2.xpose.msra.mxu0 0.0
    %1884 = vmatprep.subr.mxu0 0.0
    %1885 = vmatpush2.xpose.msra.mxu0 0.0
    %1886 = vmatprep.subr.mxu0 0.0
    %1887 = vmatpush2.xpose.msra.mxu0 0.0
    %1888 = vmatprep.subr.mxu0 0.0
    %1889 = vmatpush2.xpose.msra.mxu0 0.0
    %1890 = vmatprep.subr.mxu0 0.0
    %1891 = vmatpush2.xpose.msra.mxu0 0.0
    %1892 = vmatprep.subr.mxu0 0.0
    %1893 = vmatpush2.xpose.msra.mxu0 0.0
    %1894 = vmatprep.subr.mxu0 0.0
    %1895 = vmatpush2.xpose.msra.mxu0 0.0
    %1896 = vmatprep.subr.mxu0 0.0
    %1897 = vmatpush2.xpose.msra.mxu0 0.0
    %1898 = vmatprep.subr.mxu0 0.0
    %1899 = vmatpush2.xpose.msra.mxu0 0.0
    %1900 = vmatprep.subr.mxu0 0.0
    %1901 = vmatpush2.xpose.msra.mxu0 0.0
    %1902 = vmatprep.subr.mxu0 0.0
    %1903 = vmatpush2.xpose.msra.mxu0 0.0
    %1904 = vmatprep.mubr.f32.mxu0 0.0
    %1905 = vmatmul.mubr.f32.gmra.mxu0 %v54
    %v1906 = vpop.f32.mrf.mxu0
    %v1907 = vadd.f32 0.0, %v1906
    %v1908 = vpop.f32.mrf.mxu0
    %1909 = vmatprep.mubr.f32.mxu0 0.0
    %1910 = vmatmul.mubr.f32.gmra.mxu0 %v57
    %v1911 = vpop.f32.mrf.mxu0
    %v1912 = vadd.f32 0.0, %v1911
    %v1913 = vpop.f32.mrf.mxu0
    %1914 = vdwg.mxu0
    %v1916 = vsel %vm52, %v1599, 0
    %1918 = vmatprep.subr.mxu0 0.0
    %1919 = vmatpush1.xpose.msra.mxu0 0.0
    %1920 = vmatprep.subr.mxu0 0.0
    %1921 = vmatpush1.xpose.msra.mxu0 0.0
    %1922 = vmatprep.subr.mxu0 0.0
    %1923 = vmatpush1.xpose.msra.mxu0 0.0
    %1924 = vmatprep.subr.mxu0 0.0
    %1925 = vmatpush1.xpose.msra.mxu0 0.0
    %1926 = vmatprep.subr.mxu0 0.0
    %1927 = vmatpush1.xpose.msra.mxu0 0.0
    %1928 = vmatprep.subr.mxu0 0.0
    %1929 = vmatpush1.xpose.msra.mxu0 0.0
    %1930 = vmatprep.subr.mxu0 0.0
    %1931 = vmatpush1.xpose.msra.mxu0 0.0
    %1932 = vmatprep.subr.mxu0 0.0
    %1933 = vmatpush1.xpose.msra.mxu0 0.0
    %1934 = vmatprep.subr.mxu0 0.0
    %1935 = vmatpush1.xpose.msra.mxu0 0.0
    %1936 = vmatprep.subr.mxu0 0.0
    %1937 = vmatpush1.xpose.msra.mxu0 0.0
    %1938 = vmatprep.subr.mxu0 0.0
    %1939 = vmatpush1.xpose.msra.mxu0 0.0
    %1940 = vmatprep.subr.mxu0 0.0
    %1941 = vmatpush1.xpose.msra.mxu0 0.0
    %1942 = vmatprep.subr.mxu0 0.0
    %1943 = vmatpush1.xpose.msra.mxu0 0.0
    %1944 = vmatprep.subr.mxu0 0.0
    %1945 = vmatpush1.xpose.msra.mxu0 0.0
    %1946 = vmatprep.subr.mxu0 0.0
    %1947 = vmatpush1.xpose.msra.mxu0 0.0
    %1948 = vmatprep.subr.mxu0 0.0
    %1949 = vmatpush1.xpose.msra.mxu0 %v1916
    %1950 = vmatprep.subr.mxu0 0.0
    %1951 = vmatpush2.xpose.msra.mxu0 0.0
    %1952 = vmatprep.subr.mxu0 0.0
    %1953 = vmatpush2.xpose.msra.mxu0 0.0
    %1954 = vmatprep.subr.mxu0 0.0
    %1955 = vmatpush2.xpose.msra.mxu0 0.0
    %1956 = vmatprep.subr.mxu0 0.0
    %1957 = vmatpush2.xpose.msra.mxu0 0.0
    %1958 = vmatprep.subr.mxu0 0.0
    %1959 = vmatpush2.xpose.msra.mxu0 0.0
    %1960 = vmatprep.subr.mxu0 0.0
    %1961 = vmatpush2.xpose.msra.mxu0 0.0
    %1962 = vmatprep.subr.mxu0 0.0
    %1963 = vmatpush2.xpose.msra.mxu0 0.0
    %1964 = vmatprep.subr.mxu0 0.0
    %1965 = vmatpush2.xpose.msra.mxu0 0.0
    %1966 = vmatprep.subr.mxu0 0.0
    %1967 = vmatpush2.xpose.msra.mxu0 0.0
    %1968 = vmatprep.subr.mxu0 0.0
    %1969 = vmatpush2.xpose.msra.mxu0 0.0
    %1970 = vmatprep.subr.mxu0 0.0
    %1971 = vmatpush2.xpose.msra.mxu0 0.0
    %1972 = vmatprep.subr.mxu0 0.0
    %1973 = vmatpush2.xpose.msra.mxu0 0.0
    %1974 = vmatprep.subr.mxu0 0.0
    %1975 = vmatpush2.xpose.msra.mxu0 0.0
    %1976 = vmatprep.subr.mxu0 0.0
    %1977 = vmatpush2.xpose.msra.mxu0 0.0
    %1978 = vmatprep.subr.mxu0 0.0
    %1979 = vmatpush2.xpose.msra.mxu0 0.0
    %1980 = vmatprep.subr.mxu0 0.0
    %1981 = vmatpush2.xpose.msra.mxu0 0.0
    %1982 = vmatprep.mubr.f32.mxu0 0.0
    %1983 = vmatmul.mubr.f32.gmra.mxu0 %v54
    %v1984 = vpop.f32.mrf.mxu0
    %v1985 = vadd.f32 0.0, %v1984
    %v1986 = vpop.f32.mrf.mxu0
    %1987 = vmatprep.mubr.f32.mxu0 0.0
    %1988 = vmatmul.mubr.f32.gmra.mxu0 %v57
    %v1989 = vpop.f32.mrf.mxu0
    %v1990 = vadd.f32 0.0, %v1989
    %v1991 = vpop.f32.mrf.mxu0
    %1992 = vdwg.mxu0
    %v1994 = vsel %vm52, %v1600, 0
    %1996 = vmatprep.subr.mxu0 0.0
    %1997 = vmatpush1.xpose.msra.mxu0 0.0
    %1998 = vmatprep.subr.mxu0 0.0
    %1999 = vmatpush1.xpose.msra.mxu0 0.0
    %2000 = vmatprep.subr.mxu0 0.0
    %2001 = vmatpush1.xpose.msra.mxu0 0.0
    %2002 = vmatprep.subr.mxu0 0.0
    %2003 = vmatpush1.xpose.msra.mxu0 0.0
    %2004 = vmatprep.subr.mxu0 0.0
    %2005 = vmatpush1.xpose.msra.mxu0 0.0
    %2006 = vmatprep.subr.mxu0 0.0
    %2007 = vmatpush1.xpose.msra.mxu0 0.0
    %2008 = vmatprep.subr.mxu0 0.0
    %2009 = vmatpush1.xpose.msra.mxu0 0.0
    %2010 = vmatprep.subr.mxu0 0.0
    %2011 = vmatpush1.xpose.msra.mxu0 0.0
    %2012 = vmatprep.subr.mxu0 0.0
    %2013 = vmatpush1.xpose.msra.mxu0 0.0
    %2014 = vmatprep.subr.mxu0 0.0
    %2015 = vmatpush1.xpose.msra.mxu0 0.0
    %2016 = vmatprep.subr.mxu0 0.0
    %2017 = vmatpush1.xpose.msra.mxu0 0.0
    %2018 = vmatprep.subr.mxu0 0.0
    %2019 = vmatpush1.xpose.msra.mxu0 0.0
    %2020 = vmatprep.subr.mxu0 0.0
    %2021 = vmatpush1.xpose.msra.mxu0 0.0
    %2022 = vmatprep.subr.mxu0 0.0
    %2023 = vmatpush1.xpose.msra.mxu0 0.0
    %2024 = vmatprep.subr.mxu0 0.0
    %2025 = vmatpush1.xpose.msra.mxu0 0.0
    %2026 = vmatprep.subr.mxu0 0.0
    %2027 = vmatpush1.xpose.msra.mxu0 %v1994
    %2028 = vmatprep.subr.mxu0 0.0
    %2029 = vmatpush2.xpose.msra.mxu0 0.0
    %2030 = vmatprep.subr.mxu0 0.0
    %2031 = vmatpush2.xpose.msra.mxu0 0.0
    %2032 = vmatprep.subr.mxu0 0.0
    %2033 = vmatpush2.xpose.msra.mxu0 0.0
    %2034 = vmatprep.subr.mxu0 0.0
    %2035 = vmatpush2.xpose.msra.mxu0 0.0
    %2036 = vmatprep.subr.mxu0 0.0
    %2037 = vmatpush2.xpose.msra.mxu0 0.0
    %2038 = vmatprep.subr.mxu0 0.0
    %2039 = vmatpush2.xpose.msra.mxu0 0.0
    %2040 = vmatprep.subr.mxu0 0.0
    %2041 = vmatpush2.xpose.msra.mxu0 0.0
    %2042 = vmatprep.subr.mxu0 0.0
    %2043 = vmatpush2.xpose.msra.mxu0 0.0
    %2044 = vmatprep.subr.mxu0 0.0
    %2045 = vmatpush2.xpose.msra.mxu0 0.0
    %2046 = vmatprep.subr.mxu0 0.0
    %2047 = vmatpush2.xpose.msra.mxu0 0.0
    %2048 = vmatprep.subr.mxu0 0.0
    %2049 = vmatpush2.xpose.msra.mxu0 0.0
    %2050 = vmatprep.subr.mxu0 0.0
    %2051 = vmatpush2.xpose.msra.mxu0 0.0
    %2052 = vmatprep.subr.mxu0 0.0
    %2053 = vmatpush2.xpose.msra.mxu0 0.0
    %2054 = vmatprep.subr.mxu0 0.0
    %2055 = vmatpush2.xpose.msra.mxu0 0.0
    %2056 = vmatprep.subr.mxu0 0.0
    %2057 = vmatpush2.xpose.msra.mxu0 0.0
    %2058 = vmatprep.subr.mxu0 0.0
    %2059 = vmatpush2.xpose.msra.mxu0 0.0
    %2060 = vmatprep.mubr.f32.mxu0 0.0
    %2061 = vmatmul.mubr.f32.gmra.mxu0 %v54
    %v2062 = vpop.f32.mrf.mxu0
    %v2063 = vadd.f32 0.0, %v2062
    %v2064 = vpop.f32.mrf.mxu0
    %2065 = vmatprep.mubr.f32.mxu0 0.0
    %2066 = vmatmul.mubr.f32.gmra.mxu0 %v57
    %v2067 = vpop.f32.mrf.mxu0
    %v2068 = vadd.f32 0.0, %v2067
    %v2069 = vpop.f32.mrf.mxu0
    %2070 = vdwg.mxu0
    %v2072 = vsel %vm52, %v1601, 0
    %2074 = vmatprep.subr.mxu0 0.0
    %2075 = vmatpush1.xpose.msra.mxu0 0.0
    %2076 = vmatprep.subr.mxu0 0.0
    %2077 = vmatpush1.xpose.msra.mxu0 0.0
    %2078 = vmatprep.subr.mxu0 0.0
    %2079 = vmatpush1.xpose.msra.mxu0 0.0
    %2080 = vmatprep.subr.mxu0 0.0
    %2081 = vmatpush1.xpose.msra.mxu0 0.0
    %2082 = vmatprep.subr.mxu0 0.0
    %2083 = vmatpush1.xpose.msra.mxu0 0.0
    %2084 = vmatprep.subr.mxu0 0.0
    %2085 = vmatpush1.xpose.msra.mxu0 0.0
    %2086 = vmatprep.subr.mxu0 0.0
    %2087 = vmatpush1.xpose.msra.mxu0 0.0
    %2088 = vmatprep.subr.mxu0 0.0
    %2089 = vmatpush1.xpose.msra.mxu0 0.0
    %2090 = vmatprep.subr.mxu0 0.0
    %2091 = vmatpush1.xpose.msra.mxu0 0.0
    %2092 = vmatprep.subr.mxu0 0.0
    %2093 = vmatpush1.xpose.msra.mxu0 0.0
    %2094 = vmatprep.subr.mxu0 0.0
    %2095 = vmatpush1.xpose.msra.mxu0 0.0
    %2096 = vmatprep.subr.mxu0 0.0
    %2097 = vmatpush1.xpose.msra.mxu0 0.0
    %2098 = vmatprep.subr.mxu0 0.0
    %2099 = vmatpush1.xpose.msra.mxu0 0.0
    %2100 = vmatprep.subr.mxu0 0.0
    %2101 = vmatpush1.xpose.msra.mxu0 0.0
    %2102 = vmatprep.subr.mxu0 0.0
    %2103 = vmatpush1.xpose.msra.mxu0 0.0
    %2104 = vmatprep.subr.mxu0 0.0
    %2105 = vmatpush1.xpose.msra.mxu0 %v2072
    %2106 = vmatprep.subr.mxu0 0.0
    %2107 = vmatpush2.xpose.msra.mxu0 0.0
    %2108 = vmatprep.subr.mxu0 0.0
    %2109 = vmatpush2.xpose.msra.mxu0 0.0
    %2110 = vmatprep.subr.mxu0 0.0
    %2111 = vmatpush2.xpose.msra.mxu0 0.0
    %2112 = vmatprep.subr.mxu0 0.0
    %2113 = vmatpush2.xpose.msra.mxu0 0.0
    %2114 = vmatprep.subr.mxu0 0.0
    %2115 = vmatpush2.xpose.msra.mxu0 0.0
    %2116 = vmatprep.subr.mxu0 0.0
    %2117 = vmatpush2.xpose.msra.mxu0 0.0
    %2118 = vmatprep.subr.mxu0 0.0
    %2119 = vmatpush2.xpose.msra.mxu0 0.0
    %2120 = vmatprep.subr.mxu0 0.0
    %2121 = vmatpush2.xpose.msra.mxu0 0.0
    %2122 = vmatprep.subr.mxu0 0.0
    %2123 = vmatpush2.xpose.msra.mxu0 0.0
    %2124 = vmatprep.subr.mxu0 0.0
    %2125 = vmatpush2.xpose.msra.mxu0 0.0
    %2126 = vmatprep.subr.mxu0 0.0
    %2127 = vmatpush2.xpose.msra.mxu0 0.0
    %2128 = vmatprep.subr.mxu0 0.0
    %2129 = vmatpush2.xpose.msra.mxu0 0.0
    %2130 = vmatprep.subr.mxu0 0.0
    %2131 = vmatpush2.xpose.msra.mxu0 0.0
    %2132 = vmatprep.subr.mxu0 0.0
    %2133 = vmatpush2.xpose.msra.mxu0 0.0
    %2134 = vmatprep.subr.mxu0 0.0
    %2135 = vmatpush2.xpose.msra.mxu0 0.0
    %2136 = vmatprep.subr.mxu0 0.0
    %2137 = vmatpush2.xpose.msra.mxu0 0.0
    %2138 = vmatprep.mubr.f32.mxu0 0.0
    %2139 = vmatmul.mubr.f32.gmra.mxu0 %v54
    %v2140 = vpop.f32.mrf.mxu0
    %v2141 = vadd.f32 0.0, %v2140
    %v2142 = vpop.f32.mrf.mxu0
    %2143 = vmatprep.mubr.f32.mxu0 0.0
    %2144 = vmatmul.mubr.f32.gmra.mxu0 %v57
    %v2145 = vpop.f32.mrf.mxu0
    %v2146 = vadd.f32 0.0, %v2145
    %v2147 = vpop.f32.mrf.mxu0
    %2148 = vdwg.mxu0
    %v2150 = vsel %vm52, %v1602, 0
    %2152 = vmatprep.subr.mxu0 0.0
    %2153 = vmatpush1.xpose.msra.mxu0 0.0
    %2154 = vmatprep.subr.mxu0 0.0
    %2155 = vmatpush1.xpose.msra.mxu0 0.0
    %2156 = vmatprep.subr.mxu0 0.0
    %2157 = vmatpush1.xpose.msra.mxu0 0.0
    %2158 = vmatprep.subr.mxu0 0.0
    %2159 = vmatpush1.xpose.msra.mxu0 0.0
    %2160 = vmatprep.subr.mxu0 0.0
    %2161 = vmatpush1.xpose.msra.mxu0 0.0
    %2162 = vmatprep.subr.mxu0 0.0
    %2163 = vmatpush1.xpose.msra.mxu0 0.0
    %2164 = vmatprep.subr.mxu0 0.0
    %2165 = vmatpush1.xpose.msra.mxu0 0.0
    %2166 = vmatprep.subr.mxu0 0.0
    %2167 = vmatpush1.xpose.msra.mxu0 0.0
    %2168 = vmatprep.subr.mxu0 0.0
    %2169 = vmatpush1.xpose.msra.mxu0 0.0
    %2170 = vmatprep.subr.mxu0 0.0
    %2171 = vmatpush1.xpose.msra.mxu0 0.0
    %2172 = vmatprep.subr.mxu0 0.0
    %2173 = vmatpush1.xpose.msra.mxu0 0.0
    %2174 = vmatprep.subr.mxu0 0.0
    %2175 = vmatpush1.xpose.msra.mxu0 0.0
    %2176 = vmatprep.subr.mxu0 0.0
    %2177 = vmatpush1.xpose.msra.mxu0 0.0
    %2178 = vmatprep.subr.mxu0 0.0
    %2179 = vmatpush1.xpose.msra.mxu0 0.0
    %2180 = vmatprep.subr.mxu0 0.0
    %2181 = vmatpush1.xpose.msra.mxu0 0.0
    %2182 = vmatprep.subr.mxu0 0.0
    %2183 = vmatpush1.xpose.msra.mxu0 %v2150
    %2184 = vmatprep.subr.mxu0 0.0
    %2185 = vmatpush2.xpose.msra.mxu0 0.0
    %2186 = vmatprep.subr.mxu0 0.0
    %2187 = vmatpush2.xpose.msra.mxu0 0.0
    %2188 = vmatprep.subr.mxu0 0.0
    %2189 = vmatpush2.xpose.msra.mxu0 0.0
    %2190 = vmatprep.subr.mxu0 0.0
    %2191 = vmatpush2.xpose.msra.mxu0 0.0
    %2192 = vmatprep.subr.mxu0 0.0
    %2193 = vmatpush2.xpose.msra.mxu0 0.0
    %2194 = vmatprep.subr.mxu0 0.0
    %2195 = vmatpush2.xpose.msra.mxu0 0.0
    %2196 = vmatprep.subr.mxu0 0.0
    %2197 = vmatpush2.xpose.msra.mxu0 0.0
    %2198 = vmatprep.subr.mxu0 0.0
    %2199 = vmatpush2.xpose.msra.mxu0 0.0
    %2200 = vmatprep.subr.mxu0 0.0
    %2201 = vmatpush2.xpose.msra.mxu0 0.0
    %2202 = vmatprep.subr.mxu0 0.0
    %2203 = vmatpush2.xpose.msra.mxu0 0.0
    %2204 = vmatprep.subr.mxu0 0.0
    %2205 = vmatpush2.xpose.msra.mxu0 0.0
    %2206 = vmatprep.subr.mxu0 0.0
    %2207 = vmatpush2.xpose.msra.mxu0 0.0
    %2208 = vmatprep.subr.mxu0 0.0
    %2209 = vmatpush2.xpose.msra.mxu0 0.0
    %2210 = vmatprep.subr.mxu0 0.0
    %2211 = vmatpush2.xpose.msra.mxu0 0.0
    %2212 = vmatprep.subr.mxu0 0.0
    %2213 = vmatpush2.xpose.msra.mxu0 0.0
    %2214 = vmatprep.subr.mxu0 0.0
    %2215 = vmatpush2.xpose.msra.mxu0 0.0
    %2216 = vmatprep.mubr.f32.mxu0 0.0
    %2217 = vmatmul.mubr.f32.gmra.mxu0 %v54
    %v2218 = vpop.f32.mrf.mxu0
    %v2219 = vadd.f32 0.0, %v2218
    %v2220 = vpop.f32.mrf.mxu0
    %2221 = vmatprep.mubr.f32.mxu0 0.0
    %2222 = vmatmul.mubr.f32.gmra.mxu0 %v57
    %v2223 = vpop.f32.mrf.mxu0
    %v2224 = vadd.f32 0.0, %v2223
    %v2225 = vpop.f32.mrf.mxu0
    %2226 = vdwg.mxu0
    %s2227 = scalar_lea.vmem %s5, 8
    %v2228 = vld [vmem:[%s2227] sm:$0xff]
    %s2229 = scalar_lea.vmem %s6, 8
    %v2230 = vld [vmem:[%s2229] sm:$0xff]
    %2232 = vset.pattern.permute.xlu0 0
    %2233 = vperm.xlu0 %2232, %v2230
    %v2234 = vpop.permute.xlu0 %2233
    %v2237 = vsel %vm690, %v2228, 0
    %v2240 = vsel %vm690, %v1673, 0
    %v2243 = vsel %vm690, %v1678, 0
    %2245 = vmatprep.subr.mxu0 0.0
    %2246 = vmatpush1.xpose.msra.mxu0 0.0
    %2247 = vmatprep.subr.mxu0 0.0
    %2248 = vmatpush1.xpose.msra.mxu0 0.0
    %2249 = vmatprep.subr.mxu0 0.0
    %2250 = vmatpush1.xpose.msra.mxu0 0.0
    %2251 = vmatprep.subr.mxu0 0.0
    %2252 = vmatpush1.xpose.msra.mxu0 0.0
    %2253 = vmatprep.subr.mxu0 0.0
    %2254 = vmatpush1.xpose.msra.mxu0 0.0
    %2255 = vmatprep.subr.mxu0 0.0
    %2256 = vmatpush1.xpose.msra.mxu0 0.0
    %2257 = vmatprep.subr.mxu0 0.0
    %2258 = vmatpush1.xpose.msra.mxu0 0.0
    %2259 = vmatprep.subr.mxu0 0.0
    %2260 = vmatpush1.xpose.msra.mxu0 0.0
    %2261 = vmatprep.subr.mxu0 0.0
    %2262 = vmatpush1.xpose.msra.mxu0 0.0
    %2263 = vmatprep.subr.mxu0 0.0
    %2264 = vmatpush1.xpose.msra.mxu0 0.0
    %2265 = vmatprep.subr.mxu0 0.0
    %2266 = vmatpush1.xpose.msra.mxu0 0.0
    %2267 = vmatprep.subr.mxu0 0.0
    %2268 = vmatpush1.xpose.msra.mxu0 0.0
    %2269 = vmatprep.subr.mxu0 0.0
    %2270 = vmatpush1.xpose.msra.mxu0 0.0
    %2271 = vmatprep.subr.mxu0 0.0
    %2272 = vmatpush1.xpose.msra.mxu0 0.0
    %2273 = vmatprep.subr.mxu0 0.0
    %2274 = vmatpush1.xpose.msra.mxu0 %v2243
    %2275 = vmatprep.subr.mxu0 0.0
    %2276 = vmatpush1.xpose.msra.mxu0 %v2240
    %2277 = vmatprep.subr.mxu0 0.0
    %2278 = vmatpush2.xpose.msra.mxu0 0.0
    %2279 = vmatprep.subr.mxu0 0.0
    %2280 = vmatpush2.xpose.msra.mxu0 0.0
    %2281 = vmatprep.subr.mxu0 0.0
    %2282 = vmatpush2.xpose.msra.mxu0 0.0
    %2283 = vmatprep.subr.mxu0 0.0
    %2284 = vmatpush2.xpose.msra.mxu0 0.0
    %2285 = vmatprep.subr.mxu0 0.0
    %2286 = vmatpush2.xpose.msra.mxu0 0.0
    %2287 = vmatprep.subr.mxu0 0.0
    %2288 = vmatpush2.xpose.msra.mxu0 0.0
    %2289 = vmatprep.subr.mxu0 0.0
    %2290 = vmatpush2.xpose.msra.mxu0 0.0
    %2291 = vmatprep.subr.mxu0 0.0
    %2292 = vmatpush2.xpose.msra.mxu0 0.0
    %2293 = vmatprep.subr.mxu0 0.0
    %2294 = vmatpush2.xpose.msra.mxu0 0.0
    %2295 = vmatprep.subr.mxu0 0.0
    %2296 = vmatpush2.xpose.msra.mxu0 0.0
    %2297 = vmatprep.subr.mxu0 0.0
    %2298 = vmatpush2.xpose.msra.mxu0 0.0
    %2299 = vmatprep.subr.mxu0 0.0
    %2300 = vmatpush2.xpose.msra.mxu0 0.0
    %2301 = vmatprep.subr.mxu0 0.0
    %2302 = vmatpush2.xpose.msra.mxu0 0.0
    %2303 = vmatprep.subr.mxu0 0.0
    %2304 = vmatpush2.xpose.msra.mxu0 0.0
    %2305 = vmatprep.subr.mxu0 0.0
    %2306 = vmatpush2.xpose.msra.mxu0 0.0
    %2307 = vmatprep.subr.mxu0 0.0
    %2308 = vmatpush2.xpose.msra.mxu0 0.0
    %2309 = vmatprep.mubr.f32.mxu0 0.0
    %2310 = vmatmul.mubr.f32.gmra.mxu0 %v2237
    %v2311 = vpop.f32.mrf.mxu0
    %v2312 = vadd.f32 %v2234, %v2311
    %v2313 = vpop.f32.mrf.mxu0
    %2314 = vdwg.mxu0
    %v2316 = vsel %vm690, %v1751, 0
    %v2319 = vsel %vm690, %v1756, 0
    %2321 = vmatprep.subr.mxu0 0.0
    %2322 = vmatpush1.xpose.msra.mxu0 0.0
    %2323 = vmatprep.subr.mxu0 0.0
    %2324 = vmatpush1.xpose.msra.mxu0 0.0
    %2325 = vmatprep.subr.mxu0 0.0
    %2326 = vmatpush1.xpose.msra.mxu0 0.0
    %2327 = vmatprep.subr.mxu0 0.0
    %2328 = vmatpush1.xpose.msra.mxu0 0.0
    %2329 = vmatprep.subr.mxu0 0.0
    %2330 = vmatpush1.xpose.msra.mxu0 0.0
    %2331 = vmatprep.subr.mxu0 0.0
    %2332 = vmatpush1.xpose.msra.mxu0 0.0
    %2333 = vmatprep.subr.mxu0 0.0
    %2334 = vmatpush1.xpose.msra.mxu0 0.0
    %2335 = vmatprep.subr.mxu0 0.0
    %2336 = vmatpush1.xpose.msra.mxu0 0.0
    %2337 = vmatprep.subr.mxu0 0.0
    %2338 = vmatpush1.xpose.msra.mxu0 0.0
    %2339 = vmatprep.subr.mxu0 0.0
    %2340 = vmatpush1.xpose.msra.mxu0 0.0
    %2341 = vmatprep.subr.mxu0 0.0
    %2342 = vmatpush1.xpose.msra.mxu0 0.0
    %2343 = vmatprep.subr.mxu0 0.0
    %2344 = vmatpush1.xpose.msra.mxu0 0.0
    %2345 = vmatprep.subr.mxu0 0.0
    %2346 = vmatpush1.xpose.msra.mxu0 0.0
    %2347 = vmatprep.subr.mxu0 0.0
    %2348 = vmatpush1.xpose.msra.mxu0 0.0
    %2349 = vmatprep.subr.mxu0 0.0
    %2350 = vmatpush1.xpose.msra.mxu0 %v2319
    %2351 = vmatprep.subr.mxu0 0.0
    %2352 = vmatpush1.xpose.msra.mxu0 %v2316
    %2353 = vmatprep.subr.mxu0 0.0
    %2354 = vmatpush2.xpose.msra.mxu0 0.0
    %2355 = vmatprep.subr.mxu0 0.0
    %2356 = vmatpush2.xpose.msra.mxu0 0.0
    %2357 = vmatprep.subr.mxu0 0.0
    %2358 = vmatpush2.xpose.msra.mxu0 0.0
    %2359 = vmatprep.subr.mxu0 0.0
    %2360 = vmatpush2.xpose.msra.mxu0 0.0
    %2361 = vmatprep.subr.mxu0 0.0
    %2362 = vmatpush2.xpose.msra.mxu0 0.0
    %2363 = vmatprep.subr.mxu0 0.0
    %2364 = vmatpush2.xpose.msra.mxu0 0.0
    %2365 = vmatprep.subr.mxu0 0.0
    %2366 = vmatpush2.xpose.msra.mxu0 0.0
    %2367 = vmatprep.subr.mxu0 0.0
    %2368 = vmatpush2.xpose.msra.mxu0 0.0
    %2369 = vmatprep.subr.mxu0 0.0
    %2370 = vmatpush2.xpose.msra.mxu0 0.0
    %2371 = vmatprep.subr.mxu0 0.0
    %2372 = vmatpush2.xpose.msra.mxu0 0.0
    %2373 = vmatprep.subr.mxu0 0.0
    %2374 = vmatpush2.xpose.msra.mxu0 0.0
    %2375 = vmatprep.subr.mxu0 0.0
    %2376 = vmatpush2.xpose.msra.mxu0 0.0
    %2377 = vmatprep.subr.mxu0 0.0
    %2378 = vmatpush2.xpose.msra.mxu0 0.0
    %2379 = vmatprep.subr.mxu0 0.0
    %2380 = vmatpush2.xpose.msra.mxu0 0.0
    %2381 = vmatprep.subr.mxu0 0.0
    %2382 = vmatpush2.xpose.msra.mxu0 0.0
    %2383 = vmatprep.subr.mxu0 0.0
    %2384 = vmatpush2.xpose.msra.mxu0 0.0
    %2385 = vmatprep.mubr.f32.mxu0 0.0
    %2386 = vmatmul.mubr.f32.gmra.mxu0 %v2237
    %v2387 = vpop.f32.mrf.mxu0
    %v2388 = vadd.f32 %v2234, %v2387
    %v2389 = vpop.f32.mrf.mxu0
    %2390 = vdwg.mxu0
    %v2392 = vsel %vm690, %v1829, 0
    %v2395 = vsel %vm690, %v1834, 0
    %2397 = vmatprep.subr.mxu0 0.0
    %2398 = vmatpush1.xpose.msra.mxu0 0.0
    %2399 = vmatprep.subr.mxu0 0.0
    %2400 = vmatpush1.xpose.msra.mxu0 0.0
    %2401 = vmatprep.subr.mxu0 0.0
    %2402 = vmatpush1.xpose.msra.mxu0 0.0
    %2403 = vmatprep.subr.mxu0 0.0
    %2404 = vmatpush1.xpose.msra.mxu0 0.0
    %2405 = vmatprep.subr.mxu0 0.0
    %2406 = vmatpush1.xpose.msra.mxu0 0.0
    %2407 = vmatprep.subr.mxu0 0.0
    %2408 = vmatpush1.xpose.msra.mxu0 0.0
    %2409 = vmatprep.subr.mxu0 0.0
    %2410 = vmatpush1.xpose.msra.mxu0 0.0
    %2411 = vmatprep.subr.mxu0 0.0
    %2412 = vmatpush1.xpose.msra.mxu0 0.0
    %2413 = vmatprep.subr.mxu0 0.0
    %2414 = vmatpush1.xpose.msra.mxu0 0.0
    %2415 = vmatprep.subr.mxu0 0.0
    %2416 = vmatpush1.xpose.msra.mxu0 0.0
    %2417 = vmatprep.subr.mxu0 0.0
    %2418 = vmatpush1.xpose.msra.mxu0 0.0
    %2419 = vmatprep.subr.mxu0 0.0
    %2420 = vmatpush1.xpose.msra.mxu0 0.0
    %2421 = vmatprep.subr.mxu0 0.0
    %2422 = vmatpush1.xpose.msra.mxu0 0.0
    %2423 = vmatprep.subr.mxu0 0.0
    %2424 = vmatpush1.xpose.msra.mxu0 0.0
    %2425 = vmatprep.subr.mxu0 0.0
    %2426 = vmatpush1.xpose.msra.mxu0 %v2395
    %2427 = vmatprep.subr.mxu0 0.0
    %2428 = vmatpush1.xpose.msra.mxu0 %v2392
    %2429 = vmatprep.subr.mxu0 0.0
    %2430 = vmatpush2.xpose.msra.mxu0 0.0
    %2431 = vmatprep.subr.mxu0 0.0
    %2432 = vmatpush2.xpose.msra.mxu0 0.0
    %2433 = vmatprep.subr.mxu0 0.0
    %2434 = vmatpush2.xpose.msra.mxu0 0.0
    %2435 = vmatprep.subr.mxu0 0.0
    %2436 = vmatpush2.xpose.msra.mxu0 0.0
    %2437 = vmatprep.subr.mxu0 0.0
    %2438 = vmatpush2.xpose.msra.mxu0 0.0
    %2439 = vmatprep.subr.mxu0 0.0
    %2440 = vmatpush2.xpose.msra.mxu0 0.0
    %2441 = vmatprep.subr.mxu0 0.0
    %2442 = vmatpush2.xpose.msra.mxu0 0.0
    %2443 = vmatprep.subr.mxu0 0.0
    %2444 = vmatpush2.xpose.msra.mxu0 0.0
    %2445 = vmatprep.subr.mxu0 0.0
    %2446 = vmatpush2.xpose.msra.mxu0 0.0
    %2447 = vmatprep.subr.mxu0 0.0
    %2448 = vmatpush2.xpose.msra.mxu0 0.0
    %2449 = vmatprep.subr.mxu0 0.0
    %2450 = vmatpush2.xpose.msra.mxu0 0.0
    %2451 = vmatprep.subr.mxu0 0.0
    %2452 = vmatpush2.xpose.msra.mxu0 0.0
    %2453 = vmatprep.subr.mxu0 0.0
    %2454 = vmatpush2.xpose.msra.mxu0 0.0
    %2455 = vmatprep.subr.mxu0 0.0
    %2456 = vmatpush2.xpose.msra.mxu0 0.0
    %2457 = vmatprep.subr.mxu0 0.0
    %2458 = vmatpush2.xpose.msra.mxu0 0.0
    %2459 = vmatprep.subr.mxu0 0.0
    %2460 = vmatpush2.xpose.msra.mxu0 0.0
    %2461 = vmatprep.mubr.f32.mxu0 0.0
    %2462 = vmatmul.mubr.f32.gmra.mxu0 %v2237
    %v2463 = vpop.f32.mrf.mxu0
    %v2464 = vadd.f32 %v2234, %v2463
    %v2465 = vpop.f32.mrf.mxu0
    %2466 = vdwg.mxu0
    %v2468 = vsel %vm690, %v1907, 0
    %v2471 = vsel %vm690, %v1912, 0
    %2473 = vmatprep.subr.mxu0 0.0
    %2474 = vmatpush1.xpose.msra.mxu0 0.0
    %2475 = vmatprep.subr.mxu0 0.0
    %2476 = vmatpush1.xpose.msra.mxu0 0.0
    %2477 = vmatprep.subr.mxu0 0.0
    %2478 = vmatpush1.xpose.msra.mxu0 0.0
    %2479 = vmatprep.subr.mxu0 0.0
    %2480 = vmatpush1.xpose.msra.mxu0 0.0
    %2481 = vmatprep.subr.mxu0 0.0
    %2482 = vmatpush1.xpose.msra.mxu0 0.0
    %2483 = vmatprep.subr.mxu0 0.0
    %2484 = vmatpush1.xpose.msra.mxu0 0.0
    %2485 = vmatprep.subr.mxu0 0.0
    %2486 = vmatpush1.xpose.msra.mxu0 0.0
    %2487 = vmatprep.subr.mxu0 0.0
    %2488 = vmatpush1.xpose.msra.mxu0 0.0
    %2489 = vmatprep.subr.mxu0 0.0
    %2490 = vmatpush1.xpose.msra.mxu0 0.0
    %2491 = vmatprep.subr.mxu0 0.0
    %2492 = vmatpush1.xpose.msra.mxu0 0.0
    %2493 = vmatprep.subr.mxu0 0.0
    %2494 = vmatpush1.xpose.msra.mxu0 0.0
    %2495 = vmatprep.subr.mxu0 0.0
    %2496 = vmatpush1.xpose.msra.mxu0 0.0
    %2497 = vmatprep.subr.mxu0 0.0
    %2498 = vmatpush1.xpose.msra.mxu0 0.0
    %2499 = vmatprep.subr.mxu0 0.0
    %2500 = vmatpush1.xpose.msra.mxu0 0.0
    %2501 = vmatprep.subr.mxu0 0.0
    %2502 = vmatpush1.xpose.msra.mxu0 %v2471
    %2503 = vmatprep.subr.mxu0 0.0
    %2504 = vmatpush1.xpose.msra.mxu0 %v2468
    %2505 = vmatprep.subr.mxu0 0.0
    %2506 = vmatpush2.xpose.msra.mxu0 0.0
    %2507 = vmatprep.subr.mxu0 0.0
    %2508 = vmatpush2.xpose.msra.mxu0 0.0
    %2509 = vmatprep.subr.mxu0 0.0
    %2510 = vmatpush2.xpose.msra.mxu0 0.0
    %2511 = vmatprep.subr.mxu0 0.0
    %2512 = vmatpush2.xpose.msra.mxu0 0.0
    %2513 = vmatprep.subr.mxu0 0.0
    %2514 = vmatpush2.xpose.msra.mxu0 0.0
    %2515 = vmatprep.subr.mxu0 0.0
    %2516 = vmatpush2.xpose.msra.mxu0 0.0
    %2517 = vmatprep.subr.mxu0 0.0
    %2518 = vmatpush2.xpose.msra.mxu0 0.0
    %2519 = vmatprep.subr.mxu0 0.0
    %2520 = vmatpush2.xpose.msra.mxu0 0.0
    %2521 = vmatprep.subr.mxu0 0.0
    %2522 = vmatpush2.xpose.msra.mxu0 0.0
    %2523 = vmatprep.subr.mxu0 0.0
    %2524 = vmatpush2.xpose.msra.mxu0 0.0
    %2525 = vmatprep.subr.mxu0 0.0
    %2526 = vmatpush2.xpose.msra.mxu0 0.0
    %2527 = vmatprep.subr.mxu0 0.0
    %2528 = vmatpush2.xpose.msra.mxu0 0.0
    %2529 = vmatprep.subr.mxu0 0.0
    %2530 = vmatpush2.xpose.msra.mxu0 0.0
    %2531 = vmatprep.subr.mxu0 0.0
    %2532 = vmatpush2.xpose.msra.mxu0 0.0
    %2533 = vmatprep.subr.mxu0 0.0
    %2534 = vmatpush2.xpose.msra.mxu0 0.0
    %2535 = vmatprep.subr.mxu0 0.0
    %2536 = vmatpush2.xpose.msra.mxu0 0.0
    %2537 = vmatprep.mubr.f32.mxu0 0.0
    %2538 = vmatmul.mubr.f32.gmra.mxu0 %v2237
    %v2539 = vpop.f32.mrf.mxu0
    %v2540 = vadd.f32 %v2234, %v2539
    %v2541 = vpop.f32.mrf.mxu0
    %2542 = vdwg.mxu0
    %v2544 = vsel %vm690, %v1985, 0
    %v2547 = vsel %vm690, %v1990, 0
    %2549 = vmatprep.subr.mxu0 0.0
    %2550 = vmatpush1.xpose.msra.mxu0 0.0
    %2551 = vmatprep.subr.mxu0 0.0
    %2552 = vmatpush1.xpose.msra.mxu0 0.0
    %2553 = vmatprep.subr.mxu0 0.0
    %2554 = vmatpush1.xpose.msra.mxu0 0.0
    %2555 = vmatprep.subr.mxu0 0.0
    %2556 = vmatpush1.xpose.msra.mxu0 0.0
    %2557 = vmatprep.subr.mxu0 0.0
    %2558 = vmatpush1.xpose.msra.mxu0 0.0
    %2559 = vmatprep.subr.mxu0 0.0
    %2560 = vmatpush1.xpose.msra.mxu0 0.0
    %2561 = vmatprep.subr.mxu0 0.0
    %2562 = vmatpush1.xpose.msra.mxu0 0.0
    %2563 = vmatprep.subr.mxu0 0.0
    %2564 = vmatpush1.xpose.msra.mxu0 0.0
    %2565 = vmatprep.subr.mxu0 0.0
    %2566 = vmatpush1.xpose.msra.mxu0 0.0
    %2567 = vmatprep.subr.mxu0 0.0
    %2568 = vmatpush1.xpose.msra.mxu0 0.0
    %2569 = vmatprep.subr.mxu0 0.0
    %2570 = vmatpush1.xpose.msra.mxu0 0.0
    %2571 = vmatprep.subr.mxu0 0.0
    %2572 = vmatpush1.xpose.msra.mxu0 0.0
    %2573 = vmatprep.subr.mxu0 0.0
    %2574 = vmatpush1.xpose.msra.mxu0 0.0
    %2575 = vmatprep.subr.mxu0 0.0
    %2576 = vmatpush1.xpose.msra.mxu0 0.0
    %2577 = vmatprep.subr.mxu0 0.0
    %2578 = vmatpush1.xpose.msra.mxu0 %v2547
    %2579 = vmatprep.subr.mxu0 0.0
    %2580 = vmatpush1.xpose.msra.mxu0 %v2544
    %2581 = vmatprep.subr.mxu0 0.0
    %2582 = vmatpush2.xpose.msra.mxu0 0.0
    %2583 = vmatprep.subr.mxu0 0.0
    %2584 = vmatpush2.xpose.msra.mxu0 0.0
    %2585 = vmatprep.subr.mxu0 0.0
    %2586 = vmatpush2.xpose.msra.mxu0 0.0
    %2587 = vmatprep.subr.mxu0 0.0
    %2588 = vmatpush2.xpose.msra.mxu0 0.0
    %2589 = vmatprep.subr.mxu0 0.0
    %2590 = vmatpush2.xpose.msra.mxu0 0.0
    %2591 = vmatprep.subr.mxu0 0.0
    %2592 = vmatpush2.xpose.msra.mxu0 0.0
    %2593 = vmatprep.subr.mxu0 0.0
    %2594 = vmatpush2.xpose.msra.mxu0 0.0
    %2595 = vmatprep.subr.mxu0 0.0
    %2596 = vmatpush2.xpose.msra.mxu0 0.0
    %2597 = vmatprep.subr.mxu0 0.0
    %2598 = vmatpush2.xpose.msra.mxu0 0.0
    %2599 = vmatprep.subr.mxu0 0.0
    %2600 = vmatpush2.xpose.msra.mxu0 0.0
    %2601 = vmatprep.subr.mxu0 0.0
    %2602 = vmatpush2.xpose.msra.mxu0 0.0
    %2603 = vmatprep.subr.mxu0 0.0
    %2604 = vmatpush2.xpose.msra.mxu0 0.0
    %2605 = vmatprep.subr.mxu0 0.0
    %2606 = vmatpush2.xpose.msra.mxu0 0.0
    %2607 = vmatprep.subr.mxu0 0.0
    %2608 = vmatpush2.xpose.msra.mxu0 0.0
    %2609 = vmatprep.subr.mxu0 0.0
    %2610 = vmatpush2.xpose.msra.mxu0 0.0
    %2611 = vmatprep.subr.mxu0 0.0
    %2612 = vmatpush2.xpose.msra.mxu0 0.0
    %2613 = vmatprep.mubr.f32.mxu0 0.0
    %2614 = vmatmul.mubr.f32.gmra.mxu0 %v2237
    %v2615 = vpop.f32.mrf.mxu0
    %v2616 = vadd.f32 %v2234, %v2615
    %v2617 = vpop.f32.mrf.mxu0
    %2618 = vdwg.mxu0
    %v2620 = vsel %vm690, %v2063, 0
    %v2623 = vsel %vm690, %v2068, 0
    %2625 = vmatprep.subr.mxu0 0.0
    %2626 = vmatpush1.xpose.msra.mxu0 0.0
    %2627 = vmatprep.subr.mxu0 0.0
    %2628 = vmatpush1.xpose.msra.mxu0 0.0
    %2629 = vmatprep.subr.mxu0 0.0
    %2630 = vmatpush1.xpose.msra.mxu0 0.0
    %2631 = vmatprep.subr.mxu0 0.0
    %2632 = vmatpush1.xpose.msra.mxu0 0.0
    %2633 = vmatprep.subr.mxu0 0.0
    %2634 = vmatpush1.xpose.msra.mxu0 0.0
    %2635 = vmatprep.subr.mxu0 0.0
    %2636 = vmatpush1.xpose.msra.mxu0 0.0
    %2637 = vmatprep.subr.mxu0 0.0
    %2638 = vmatpush1.xpose.msra.mxu0 0.0
    %2639 = vmatprep.subr.mxu0 0.0
    %2640 = vmatpush1.xpose.msra.mxu0 0.0
    %2641 = vmatprep.subr.mxu0 0.0
    %2642 = vmatpush1.xpose.msra.mxu0 0.0
    %2643 = vmatprep.subr.mxu0 0.0
    %2644 = vmatpush1.xpose.msra.mxu0 0.0
    %2645 = vmatprep.subr.mxu0 0.0
    %2646 = vmatpush1.xpose.msra.mxu0 0.0
    %2647 = vmatprep.subr.mxu0 0.0
    %2648 = vmatpush1.xpose.msra.mxu0 0.0
    %2649 = vmatprep.subr.mxu0 0.0
    %2650 = vmatpush1.xpose.msra.mxu0 0.0
    %2651 = vmatprep.subr.mxu0 0.0
    %2652 = vmatpush1.xpose.msra.mxu0 0.0
    %2653 = vmatprep.subr.mxu0 0.0
    %2654 = vmatpush1.xpose.msra.mxu0 %v2623
    %2655 = vmatprep.subr.mxu0 0.0
    %2656 = vmatpush1.xpose.msra.mxu0 %v2620
    %2657 = vmatprep.subr.mxu0 0.0
    %2658 = vmatpush2.xpose.msra.mxu0 0.0
    %2659 = vmatprep.subr.mxu0 0.0
    %2660 = vmatpush2.xpose.msra.mxu0 0.0
    %2661 = vmatprep.subr.mxu0 0.0
    %2662 = vmatpush2.xpose.msra.mxu0 0.0
    %2663 = vmatprep.subr.mxu0 0.0
    %2664 = vmatpush2.xpose.msra.mxu0 0.0
    %2665 = vmatprep.subr.mxu0 0.0
    %2666 = vmatpush2.xpose.msra.mxu0 0.0
    %2667 = vmatprep.subr.mxu0 0.0
    %2668 = vmatpush2.xpose.msra.mxu0 0.0
    %2669 = vmatprep.subr.mxu0 0.0
    %2670 = vmatpush2.xpose.msra.mxu0 0.0
    %2671 = vmatprep.subr.mxu0 0.0
    %2672 = vmatpush2.xpose.msra.mxu0 0.0
    %2673 = vmatprep.subr.mxu0 0.0
    %2674 = vmatpush2.xpose.msra.mxu0 0.0
    %2675 = vmatprep.subr.mxu0 0.0
    %2676 = vmatpush2.xpose.msra.mxu0 0.0
    %2677 = vmatprep.subr.mxu0 0.0
    %2678 = vmatpush2.xpose.msra.mxu0 0.0
    %2679 = vmatprep.subr.mxu0 0.0
    %2680 = vmatpush2.xpose.msra.mxu0 0.0
    %2681 = vmatprep.subr.mxu0 0.0
    %2682 = vmatpush2.xpose.msra.mxu0 0.0
    %2683 = vmatprep.subr.mxu0 0.0
    %2684 = vmatpush2.xpose.msra.mxu0 0.0
    %2685 = vmatprep.subr.mxu0 0.0
    %2686 = vmatpush2.xpose.msra.mxu0 0.0
    %2687 = vmatprep.subr.mxu0 0.0
    %2688 = vmatpush2.xpose.msra.mxu0 0.0
    %2689 = vmatprep.mubr.f32.mxu0 0.0
    %2690 = vmatmul.mubr.f32.gmra.mxu0 %v2237
    %v2691 = vpop.f32.mrf.mxu0
    %v2692 = vadd.f32 %v2234, %v2691
    %v2693 = vpop.f32.mrf.mxu0
    %2694 = vdwg.mxu0
    %v2696 = vsel %vm690, %v2141, 0
    %v2699 = vsel %vm690, %v2146, 0
    %2701 = vmatprep.subr.mxu0 0.0
    %2702 = vmatpush1.xpose.msra.mxu0 0.0
    %2703 = vmatprep.subr.mxu0 0.0
    %2704 = vmatpush1.xpose.msra.mxu0 0.0
    %2705 = vmatprep.subr.mxu0 0.0
    %2706 = vmatpush1.xpose.msra.mxu0 0.0
    %2707 = vmatprep.subr.mxu0 0.0
    %2708 = vmatpush1.xpose.msra.mxu0 0.0
    %2709 = vmatprep.subr.mxu0 0.0
    %2710 = vmatpush1.xpose.msra.mxu0 0.0
    %2711 = vmatprep.subr.mxu0 0.0
    %2712 = vmatpush1.xpose.msra.mxu0 0.0
    %2713 = vmatprep.subr.mxu0 0.0
    %2714 = vmatpush1.xpose.msra.mxu0 0.0
    %2715 = vmatprep.subr.mxu0 0.0
    %2716 = vmatpush1.xpose.msra.mxu0 0.0
    %2717 = vmatprep.subr.mxu0 0.0
    %2718 = vmatpush1.xpose.msra.mxu0 0.0
    %2719 = vmatprep.subr.mxu0 0.0
    %2720 = vmatpush1.xpose.msra.mxu0 0.0
    %2721 = vmatprep.subr.mxu0 0.0
    %2722 = vmatpush1.xpose.msra.mxu0 0.0
    %2723 = vmatprep.subr.mxu0 0.0
    %2724 = vmatpush1.xpose.msra.mxu0 0.0
    %2725 = vmatprep.subr.mxu0 0.0
    %2726 = vmatpush1.xpose.msra.mxu0 0.0
    %2727 = vmatprep.subr.mxu0 0.0
    %2728 = vmatpush1.xpose.msra.mxu0 0.0
    %2729 = vmatprep.subr.mxu0 0.0
    %2730 = vmatpush1.xpose.msra.mxu0 %v2699
    %2731 = vmatprep.subr.mxu0 0.0
    %2732 = vmatpush1.xpose.msra.mxu0 %v2696
    %2733 = vmatprep.subr.mxu0 0.0
    %2734 = vmatpush2.xpose.msra.mxu0 0.0
    %2735 = vmatprep.subr.mxu0 0.0
    %2736 = vmatpush2.xpose.msra.mxu0 0.0
    %2737 = vmatprep.subr.mxu0 0.0
    %2738 = vmatpush2.xpose.msra.mxu0 0.0
    %2739 = vmatprep.subr.mxu0 0.0
    %2740 = vmatpush2.xpose.msra.mxu0 0.0
    %2741 = vmatprep.subr.mxu0 0.0
    %2742 = vmatpush2.xpose.msra.mxu0 0.0
    %2743 = vmatprep.subr.mxu0 0.0
    %2744 = vmatpush2.xpose.msra.mxu0 0.0
    %2745 = vmatprep.subr.mxu0 0.0
    %2746 = vmatpush2.xpose.msra.mxu0 0.0
    %2747 = vmatprep.subr.mxu0 0.0
    %2748 = vmatpush2.xpose.msra.mxu0 0.0
    %2749 = vmatprep.subr.mxu0 0.0
    %2750 = vmatpush2.xpose.msra.mxu0 0.0
    %2751 = vmatprep.subr.mxu0 0.0
    %2752 = vmatpush2.xpose.msra.mxu0 0.0
    %2753 = vmatprep.subr.mxu0 0.0
    %2754 = vmatpush2.xpose.msra.mxu0 0.0
    %2755 = vmatprep.subr.mxu0 0.0
    %2756 = vmatpush2.xpose.msra.mxu0 0.0
    %2757 = vmatprep.subr.mxu0 0.0
    %2758 = vmatpush2.xpose.msra.mxu0 0.0
    %2759 = vmatprep.subr.mxu0 0.0
    %2760 = vmatpush2.xpose.msra.mxu0 0.0
    %2761 = vmatprep.subr.mxu0 0.0
    %2762 = vmatpush2.xpose.msra.mxu0 0.0
    %2763 = vmatprep.subr.mxu0 0.0
    %2764 = vmatpush2.xpose.msra.mxu0 0.0
    %2765 = vmatprep.mubr.f32.mxu0 0.0
    %2766 = vmatmul.mubr.f32.gmra.mxu0 %v2237
    %v2767 = vpop.f32.mrf.mxu0
    %v2768 = vadd.f32 %v2234, %v2767
    %v2769 = vpop.f32.mrf.mxu0
    %2770 = vdwg.mxu0
    %v2772 = vsel %vm690, %v2219, 0
    %v2775 = vsel %vm690, %v2224, 0
    %2777 = vmatprep.subr.mxu0 0.0
    %2778 = vmatpush1.xpose.msra.mxu0 0.0
    %2779 = vmatprep.subr.mxu0 0.0
    %2780 = vmatpush1.xpose.msra.mxu0 0.0
    %2781 = vmatprep.subr.mxu0 0.0
    %2782 = vmatpush1.xpose.msra.mxu0 0.0
    %2783 = vmatprep.subr.mxu0 0.0
    %2784 = vmatpush1.xpose.msra.mxu0 0.0
    %2785 = vmatprep.subr.mxu0 0.0
    %2786 = vmatpush1.xpose.msra.mxu0 0.0
    %2787 = vmatprep.subr.mxu0 0.0
    %2788 = vmatpush1.xpose.msra.mxu0 0.0
    %2789 = vmatprep.subr.mxu0 0.0
    %2790 = vmatpush1.xpose.msra.mxu0 0.0
    %2791 = vmatprep.subr.mxu0 0.0
    %2792 = vmatpush1.xpose.msra.mxu0 0.0
    %2793 = vmatprep.subr.mxu0 0.0
    %2794 = vmatpush1.xpose.msra.mxu0 0.0
    %2795 = vmatprep.subr.mxu0 0.0
    %2796 = vmatpush1.xpose.msra.mxu0 0.0
    %2797 = vmatprep.subr.mxu0 0.0
    %2798 = vmatpush1.xpose.msra.mxu0 0.0
    %2799 = vmatprep.subr.mxu0 0.0
    %2800 = vmatpush1.xpose.msra.mxu0 0.0
    %2801 = vmatprep.subr.mxu0 0.0
    %2802 = vmatpush1.xpose.msra.mxu0 0.0
    %2803 = vmatprep.subr.mxu0 0.0
    %2804 = vmatpush1.xpose.msra.mxu0 0.0
    %2805 = vmatprep.subr.mxu0 0.0
    %2806 = vmatpush1.xpose.msra.mxu0 %v2775
    %2807 = vmatprep.subr.mxu0 0.0
    %2808 = vmatpush1.xpose.msra.mxu0 %v2772
    %2809 = vmatprep.subr.mxu0 0.0
    %2810 = vmatpush2.xpose.msra.mxu0 0.0
    %2811 = vmatprep.subr.mxu0 0.0
    %2812 = vmatpush2.xpose.msra.mxu0 0.0
    %2813 = vmatprep.subr.mxu0 0.0
    %2814 = vmatpush2.xpose.msra.mxu0 0.0
    %2815 = vmatprep.subr.mxu0 0.0
    %2816 = vmatpush2.xpose.msra.mxu0 0.0
    %2817 = vmatprep.subr.mxu0 0.0
    %2818 = vmatpush2.xpose.msra.mxu0 0.0
    %2819 = vmatprep.subr.mxu0 0.0
    %2820 = vmatpush2.xpose.msra.mxu0 0.0
    %2821 = vmatprep.subr.mxu0 0.0
    %2822 = vmatpush2.xpose.msra.mxu0 0.0
    %2823 = vmatprep.subr.mxu0 0.0
    %2824 = vmatpush2.xpose.msra.mxu0 0.0
    %2825 = vmatprep.subr.mxu0 0.0
    %2826 = vmatpush2.xpose.msra.mxu0 0.0
    %2827 = vmatprep.subr.mxu0 0.0
    %2828 = vmatpush2.xpose.msra.mxu0 0.0
    %2829 = vmatprep.subr.mxu0 0.0
    %2830 = vmatpush2.xpose.msra.mxu0 0.0
    %2831 = vmatprep.subr.mxu0 0.0
    %2832 = vmatpush2.xpose.msra.mxu0 0.0
    %2833 = vmatprep.subr.mxu0 0.0
    %2834 = vmatpush2.xpose.msra.mxu0 0.0
    %2835 = vmatprep.subr.mxu0 0.0
    %2836 = vmatpush2.xpose.msra.mxu0 0.0
    %2837 = vmatprep.subr.mxu0 0.0
    %2838 = vmatpush2.xpose.msra.mxu0 0.0
    %2839 = vmatprep.subr.mxu0 0.0
    %2840 = vmatpush2.xpose.msra.mxu0 0.0
    %2841 = vmatprep.mubr.f32.mxu0 0.0
    %2842 = vmatmul.mubr.f32.gmra.mxu0 %v2237
    %v2843 = vpop.f32.mrf.mxu0
    %v2844 = vadd.f32 %v2234, %v2843
    %v2845 = vpop.f32.mrf.mxu0
    %2846 = vdwg.mxu0
    %2847 = vst.msk [vmem:[#allocation2] sm:$0xff] %vm1302, %v2312
    %2848 = vst.msk [vmem:[#allocation2 + $0x8] sm:$0xff] %vm1302, %v2388
    %2849 = vst.msk [vmem:[#allocation2 + $0x10] sm:$0xff] %vm1302, %v2464
    %2850 = vst.msk [vmem:[#allocation2 + $0x18] sm:$0xff] %vm1302, %v2540
    %2851 = vst.msk [vmem:[#allocation2 + $0x20] sm:$0xff] %vm1302, %v2616
    %2852 = vst.msk [vmem:[#allocation2 + $0x28] sm:$0xff] %vm1302, %v2692
    %2853 = vst.msk [vmem:[#allocation2 + $0x30] sm:$0xff] %vm1302, %v2768
    %2854 = vst.msk [vmem:[#allocation2 + $0x38] sm:$0xff] %vm1302, %v2844
    %v2855 = vld [vmem:[#allocation2] sm:$0x1]
    %v2856 = vld [vmem:[#allocation2 + $0x8] sm:$0x1]
    %v2857 = vld [vmem:[#allocation2 + $0x10] sm:$0x1]
    %v2858 = vld [vmem:[#allocation2 + $0x18] sm:$0x1]
    %v2859 = vld [vmem:[#allocation2 + $0x20] sm:$0x1]
    %v2860 = vld [vmem:[#allocation2 + $0x28] sm:$0x1]
    %v2861 = vld [vmem:[#allocation2 + $0x30] sm:$0x1]
    %v2862 = vld [vmem:[#allocation2 + $0x38] sm:$0x1]
    %v2871 = vrot.slane %v2856, 7
    %v2872 = vsel %vm1328, %v2871, %v2855
    %v2873 = vrot.slane %v2857, 6
    %v2874 = vsel %vm1331, %v2873, %v2872
    %v2875 = vrot.slane %v2858, 5
    %v2876 = vsel %vm1334, %v2875, %v2874
    %v2877 = vrot.slane %v2859, 4
    %v2878 = vsel %vm1337, %v2877, %v2876
    %v2879 = vrot.slane %v2860, 3
    %v2880 = vsel %vm1340, %v2879, %v2878
    %v2881 = vrot.slane %v2861, 2
    %v2882 = vsel %vm1343, %v2881, %v2880
    %v2883 = vrot.slane %v2862, 1
    %v2884 = vsel %vm1346, %v2883, %v2882
    %2886 = vst.msk [vmem:[#allocation3 + $0x8] sm:$0xff] %vm1302, %v2884
    %v2887 = vld [vmem:[#allocation2 + $0x1] sm:$0x1]
    %v2888 = vld [vmem:[#allocation2 + $0x9] sm:$0x1]
    %v2889 = vld [vmem:[#allocation2 + $0x11] sm:$0x1]
    %v2890 = vld [vmem:[#allocation2 + $0x19] sm:$0x1]
    %v2891 = vld [vmem:[#allocation2 + $0x21] sm:$0x1]
    %v2892 = vld [vmem:[#allocation2 + $0x29] sm:$0x1]
    %v2893 = vld [vmem:[#allocation2 + $0x31] sm:$0x1]
    %v2894 = vld [vmem:[#allocation2 + $0x39] sm:$0x1]
    %v2903 = vrot.slane %v2888, 7
    %v2904 = vsel %vm1328, %v2903, %v2887
    %v2905 = vrot.slane %v2889, 6
    %v2906 = vsel %vm1331, %v2905, %v2904
    %v2907 = vrot.slane %v2890, 5
    %v2908 = vsel %vm1334, %v2907, %v2906
    %v2909 = vrot.slane %v2891, 4
    %v2910 = vsel %vm1337, %v2909, %v2908
    %v2911 = vrot.slane %v2892, 3
    %v2912 = vsel %vm1340, %v2911, %v2910
    %v2913 = vrot.slane %v2893, 2
    %v2914 = vsel %vm1343, %v2913, %v2912
    %v2915 = vrot.slane %v2894, 1
    %v2916 = vsel %vm1346, %v2915, %v2914
    %2917 = vrot.lane.b32.xlu0 %v2916, 16
    %v2918 = vpop.permute.xlu0 %2917
    %2920 = vst.msk [vmem:[#allocation3 + $0x8] sm:$0xff] %vm1383, %v2918
    %v2921 = vld [vmem:[#allocation2 + $0x2] sm:$0x1]
    %v2922 = vld [vmem:[#allocation2 + $0xa] sm:$0x1]
    %v2923 = vld [vmem:[#allocation2 + $0x12] sm:$0x1]
    %v2924 = vld [vmem:[#allocation2 + $0x1a] sm:$0x1]
    %v2925 = vld [vmem:[#allocation2 + $0x22] sm:$0x1]
    %v2926 = vld [vmem:[#allocation2 + $0x2a] sm:$0x1]
    %v2927 = vld [vmem:[#allocation2 + $0x32] sm:$0x1]
    %v2928 = vld [vmem:[#allocation2 + $0x3a] sm:$0x1]
    %v2937 = vrot.slane %v2922, 7
    %v2938 = vsel %vm1328, %v2937, %v2921
    %v2939 = vrot.slane %v2923, 6
    %v2940 = vsel %vm1331, %v2939, %v2938
    %v2941 = vrot.slane %v2924, 5
    %v2942 = vsel %vm1334, %v2941, %v2940
    %v2943 = vrot.slane %v2925, 4
    %v2944 = vsel %vm1337, %v2943, %v2942
    %v2945 = vrot.slane %v2926, 3
    %v2946 = vsel %vm1340, %v2945, %v2944
    %v2947 = vrot.slane %v2927, 2
    %v2948 = vsel %vm1343, %v2947, %v2946
    %v2949 = vrot.slane %v2928, 1
    %v2950 = vsel %vm1346, %v2949, %v2948
    %2951 = vrot.lane.b32.xlu0 %v2950, 32
    %v2952 = vpop.permute.xlu0 %2951
    %2954 = vst.msk [vmem:[#allocation3 + $0x8] sm:$0xff] %vm1418, %v2952
    %v2955 = vld [vmem:[#allocation2 + $0x3] sm:$0x1]
    %v2956 = vld [vmem:[#allocation2 + $0xb] sm:$0x1]
    %v2957 = vld [vmem:[#allocation2 + $0x13] sm:$0x1]
    %v2958 = vld [vmem:[#allocation2 + $0x1b] sm:$0x1]
    %v2959 = vld [vmem:[#allocation2 + $0x23] sm:$0x1]
    %v2960 = vld [vmem:[#allocation2 + $0x2b] sm:$0x1]
    %v2961 = vld [vmem:[#allocation2 + $0x33] sm:$0x1]
    %v2962 = vld [vmem:[#allocation2 + $0x3b] sm:$0x1]
    %v2971 = vrot.slane %v2956, 7
    %v2972 = vsel %vm1328, %v2971, %v2955
    %v2973 = vrot.slane %v2957, 6
    %v2974 = vsel %vm1331, %v2973, %v2972
    %v2975 = vrot.slane %v2958, 5
    %v2976 = vsel %vm1334, %v2975, %v2974
    %v2977 = vrot.slane %v2959, 4
    %v2978 = vsel %vm1337, %v2977, %v2976
    %v2979 = vrot.slane %v2960, 3
    %v2980 = vsel %vm1340, %v2979, %v2978
    %v2981 = vrot.slane %v2961, 2
    %v2982 = vsel %vm1343, %v2981, %v2980
    %v2983 = vrot.slane %v2962, 1
    %v2984 = vsel %vm1346, %v2983, %v2982
    %2985 = vrot.lane.b32.xlu0 %v2984, 48
    %v2986 = vpop.permute.xlu0 %2985
    %2988 = vst.msk [vmem:[#allocation3 + $0x8] sm:$0xff] %vm1453, %v2986
    %v2989 = vld [vmem:[#allocation2 + $0x4] sm:$0x1]
    %v2990 = vld [vmem:[#allocation2 + $0xc] sm:$0x1]
    %v2991 = vld [vmem:[#allocation2 + $0x14] sm:$0x1]
    %v2992 = vld [vmem:[#allocation2 + $0x1c] sm:$0x1]
    %v2993 = vld [vmem:[#allocation2 + $0x24] sm:$0x1]
    %v2994 = vld [vmem:[#allocation2 + $0x2c] sm:$0x1]
    %v2995 = vld [vmem:[#allocation2 + $0x34] sm:$0x1]
    %v2996 = vld [vmem:[#allocation2 + $0x3c] sm:$0x1]
    %v3005 = vrot.slane %v2990, 7
    %v3006 = vsel %vm1328, %v3005, %v2989
    %v3007 = vrot.slane %v2991, 6
    %v3008 = vsel %vm1331, %v3007, %v3006
    %v3009 = vrot.slane %v2992, 5
    %v3010 = vsel %vm1334, %v3009, %v3008
    %v3011 = vrot.slane %v2993, 4
    %v3012 = vsel %vm1337, %v3011, %v3010
    %v3013 = vrot.slane %v2994, 3
    %v3014 = vsel %vm1340, %v3013, %v3012
    %v3015 = vrot.slane %v2995, 2
    %v3016 = vsel %vm1343, %v3015, %v3014
    %v3017 = vrot.slane %v2996, 1
    %v3018 = vsel %vm1346, %v3017, %v3016
    %3019 = vrot.lane.b32.xlu0 %v3018, 64
    %v3020 = vpop.permute.xlu0 %3019
    %3022 = vst.msk [vmem:[#allocation3 + $0x8] sm:$0xff] %vm1488, %v3020
    %v3023 = vld [vmem:[#allocation2 + $0x5] sm:$0x1]
    %v3024 = vld [vmem:[#allocation2 + $0xd] sm:$0x1]
    %v3025 = vld [vmem:[#allocation2 + $0x15] sm:$0x1]
    %v3026 = vld [vmem:[#allocation2 + $0x1d] sm:$0x1]
    %v3027 = vld [vmem:[#allocation2 + $0x25] sm:$0x1]
    %v3028 = vld [vmem:[#allocation2 + $0x2d] sm:$0x1]
    %v3029 = vld [vmem:[#allocation2 + $0x35] sm:$0x1]
    %v3030 = vld [vmem:[#allocation2 + $0x3d] sm:$0x1]
    %v3039 = vrot.slane %v3024, 7
    %v3040 = vsel %vm1328, %v3039, %v3023
    %v3041 = vrot.slane %v3025, 6
    %v3042 = vsel %vm1331, %v3041, %v3040
    %v3043 = vrot.slane %v3026, 5
    %v3044 = vsel %vm1334, %v3043, %v3042
    %v3045 = vrot.slane %v3027, 4
    %v3046 = vsel %vm1337, %v3045, %v3044
    %v3047 = vrot.slane %v3028, 3
    %v3048 = vsel %vm1340, %v3047, %v3046
    %v3049 = vrot.slane %v3029, 2
    %v3050 = vsel %vm1343, %v3049, %v3048
    %v3051 = vrot.slane %v3030, 1
    %v3052 = vsel %vm1346, %v3051, %v3050
    %3053 = vrot.lane.b32.xlu0 %v3052, 80
    %v3054 = vpop.permute.xlu0 %3053
    %3056 = vst.msk [vmem:[#allocation3 + $0x8] sm:$0xff] %vm1523, %v3054
    %v3057 = vld [vmem:[#allocation2 + $0x6] sm:$0x1]
    %v3058 = vld [vmem:[#allocation2 + $0xe] sm:$0x1]
    %v3059 = vld [vmem:[#allocation2 + $0x16] sm:$0x1]
    %v3060 = vld [vmem:[#allocation2 + $0x1e] sm:$0x1]
    %v3061 = vld [vmem:[#allocation2 + $0x26] sm:$0x1]
    %v3062 = vld [vmem:[#allocation2 + $0x2e] sm:$0x1]
    %v3063 = vld [vmem:[#allocation2 + $0x36] sm:$0x1]
    %v3064 = vld [vmem:[#allocation2 + $0x3e] sm:$0x1]
    %v3073 = vrot.slane %v3058, 7
    %v3074 = vsel %vm1328, %v3073, %v3057
    %v3075 = vrot.slane %v3059, 6
    %v3076 = vsel %vm1331, %v3075, %v3074
    %v3077 = vrot.slane %v3060, 5
    %v3078 = vsel %vm1334, %v3077, %v3076
    %v3079 = vrot.slane %v3061, 4
    %v3080 = vsel %vm1337, %v3079, %v3078
    %v3081 = vrot.slane %v3062, 3
    %v3082 = vsel %vm1340, %v3081, %v3080
    %v3083 = vrot.slane %v3063, 2
    %v3084 = vsel %vm1343, %v3083, %v3082
    %v3085 = vrot.slane %v3064, 1
    %v3086 = vsel %vm1346, %v3085, %v3084
    %3087 = vrot.lane.b32.xlu0 %v3086, 96
    %v3088 = vpop.permute.xlu0 %3087
    %3090 = vst.msk [vmem:[#allocation3 + $0x8] sm:$0xff] %vm1558, %v3088
    %v3091 = vld [vmem:[#allocation2 + $0x7] sm:$0x1]
    %v3092 = vld [vmem:[#allocation2 + $0xf] sm:$0x1]
    %v3093 = vld [vmem:[#allocation2 + $0x17] sm:$0x1]
    %v3094 = vld [vmem:[#allocation2 + $0x1f] sm:$0x1]
    %v3095 = vld [vmem:[#allocation2 + $0x27] sm:$0x1]
    %v3096 = vld [vmem:[#allocation2 + $0x2f] sm:$0x1]
    %v3097 = vld [vmem:[#allocation2 + $0x37] sm:$0x1]
    %v3098 = vld [vmem:[#allocation2 + $0x3f] sm:$0x1]
    %v3107 = vrot.slane %v3092, 7
    %v3108 = vsel %vm1328, %v3107, %v3091
    %v3109 = vrot.slane %v3093, 6
    %v3110 = vsel %vm1331, %v3109, %v3108
    %v3111 = vrot.slane %v3094, 5
    %v3112 = vsel %vm1334, %v3111, %v3110
    %v3113 = vrot.slane %v3095, 4
    %v3114 = vsel %vm1337, %v3113, %v3112
    %v3115 = vrot.slane %v3096, 3
    %v3116 = vsel %vm1340, %v3115, %v3114
    %v3117 = vrot.slane %v3097, 2
    %v3118 = vsel %vm1343, %v3117, %v3116
    %v3119 = vrot.slane %v3098, 1
    %v3120 = vsel %vm1346, %v3119, %v3118
    %3121 = vrot.lane.b32.xlu0 %v3120, 112
    %v3122 = vpop.permute.xlu0 %3121
    %3124 = vst.msk [vmem:[#allocation3 + $0x8] sm:$0xff] %vm1593, %v3122
    %v3125 = vld [vmem:[%s2] sm:$0xff]
    %v3126 = vld [vmem:[%s2 + $0x8] sm:$0xff]
    %v3127 = vld [vmem:[%s2 + $0x10] sm:$0xff]
    %v3128 = vld [vmem:[%s2 + $0x18] sm:$0xff]
    %v3129 = vld [vmem:[%s2 + $0x20] sm:$0xff]
    %v3130 = vld [vmem:[%s2 + $0x28] sm:$0xff]
    %v3131 = vld [vmem:[%s2 + $0x30] sm:$0xff]
    %v3132 = vld [vmem:[%s2 + $0x38] sm:$0xff]
    %v3134 = vsel %vm52, %v3125, 0
    %3136 = vmatprep.subr.mxu0 0.0
    %3137 = vmatpush1.xpose.msra.mxu0 0.0
    %3138 = vmatprep.subr.mxu0 0.0
    %3139 = vmatpush1.xpose.msra.mxu0 0.0
    %3140 = vmatprep.subr.mxu0 0.0
    %3141 = vmatpush1.xpose.msra.mxu0 0.0
    %3142 = vmatprep.subr.mxu0 0.0
    %3143 = vmatpush1.xpose.msra.mxu0 0.0
    %3144 = vmatprep.subr.mxu0 0.0
    %3145 = vmatpush1.xpose.msra.mxu0 0.0
    %3146 = vmatprep.subr.mxu0 0.0
    %3147 = vmatpush1.xpose.msra.mxu0 0.0
    %3148 = vmatprep.subr.mxu0 0.0
    %3149 = vmatpush1.xpose.msra.mxu0 0.0
    %3150 = vmatprep.subr.mxu0 0.0
    %3151 = vmatpush1.xpose.msra.mxu0 0.0
    %3152 = vmatprep.subr.mxu0 0.0
    %3153 = vmatpush1.xpose.msra.mxu0 0.0
    %3154 = vmatprep.subr.mxu0 0.0
    %3155 = vmatpush1.xpose.msra.mxu0 0.0
    %3156 = vmatprep.subr.mxu0 0.0
    %3157 = vmatpush1.xpose.msra.mxu0 0.0
    %3158 = vmatprep.subr.mxu0 0.0
    %3159 = vmatpush1.xpose.msra.mxu0 0.0
    %3160 = vmatprep.subr.mxu0 0.0
    %3161 = vmatpush1.xpose.msra.mxu0 0.0
    %3162 = vmatprep.subr.mxu0 0.0
    %3163 = vmatpush1.xpose.msra.mxu0 0.0
    %3164 = vmatprep.subr.mxu0 0.0
    %3165 = vmatpush1.xpose.msra.mxu0 0.0
    %3166 = vmatprep.subr.mxu0 0.0
    %3167 = vmatpush1.xpose.msra.mxu0 %v3134
    %3168 = vmatprep.subr.mxu0 0.0
    %3169 = vmatpush2.xpose.msra.mxu0 0.0
    %3170 = vmatprep.subr.mxu0 0.0
    %3171 = vmatpush2.xpose.msra.mxu0 0.0
    %3172 = vmatprep.subr.mxu0 0.0
    %3173 = vmatpush2.xpose.msra.mxu0 0.0
    %3174 = vmatprep.subr.mxu0 0.0
    %3175 = vmatpush2.xpose.msra.mxu0 0.0
    %3176 = vmatprep.subr.mxu0 0.0
    %3177 = vmatpush2.xpose.msra.mxu0 0.0
    %3178 = vmatprep.subr.mxu0 0.0
    %3179 = vmatpush2.xpose.msra.mxu0 0.0
    %3180 = vmatprep.subr.mxu0 0.0
    %3181 = vmatpush2.xpose.msra.mxu0 0.0
    %3182 = vmatprep.subr.mxu0 0.0
    %3183 = vmatpush2.xpose.msra.mxu0 0.0
    %3184 = vmatprep.subr.mxu0 0.0
    %3185 = vmatpush2.xpose.msra.mxu0 0.0
    %3186 = vmatprep.subr.mxu0 0.0
    %3187 = vmatpush2.xpose.msra.mxu0 0.0
    %3188 = vmatprep.subr.mxu0 0.0
    %3189 = vmatpush2.xpose.msra.mxu0 0.0
    %3190 = vmatprep.subr.mxu0 0.0
    %3191 = vmatpush2.xpose.msra.mxu0 0.0
    %3192 = vmatprep.subr.mxu0 0.0
    %3193 = vmatpush2.xpose.msra.mxu0 0.0
    %3194 = vmatprep.subr.mxu0 0.0
    %3195 = vmatpush2.xpose.msra.mxu0 0.0
    %3196 = vmatprep.subr.mxu0 0.0
    %3197 = vmatpush2.xpose.msra.mxu0 0.0
    %3198 = vmatprep.subr.mxu0 0.0
    %3199 = vmatpush2.xpose.msra.mxu0 0.0
    %3200 = vmatprep.mubr.f32.mxu0 0.0
    %3201 = vmatmul.mubr.f32.gmra.mxu0 %v54
    %v3202 = vpop.f32.mrf.mxu0
    %v3203 = vadd.f32 0.0, %v3202
    %v3204 = vpop.f32.mrf.mxu0
    %3205 = vmatprep.mubr.f32.mxu0 0.0
    %3206 = vmatmul.mubr.f32.gmra.mxu0 %v57
    %v3207 = vpop.f32.mrf.mxu0
    %v3208 = vadd.f32 0.0, %v3207
    %v3209 = vpop.f32.mrf.mxu0
    %3210 = vdwg.mxu0
    %v3212 = vsel %vm52, %v3126, 0
    %3214 = vmatprep.subr.mxu0 0.0
    %3215 = vmatpush1.xpose.msra.mxu0 0.0
    %3216 = vmatprep.subr.mxu0 0.0
    %3217 = vmatpush1.xpose.msra.mxu0 0.0
    %3218 = vmatprep.subr.mxu0 0.0
    %3219 = vmatpush1.xpose.msra.mxu0 0.0
    %3220 = vmatprep.subr.mxu0 0.0
    %3221 = vmatpush1.xpose.msra.mxu0 0.0
    %3222 = vmatprep.subr.mxu0 0.0
    %3223 = vmatpush1.xpose.msra.mxu0 0.0
    %3224 = vmatprep.subr.mxu0 0.0
    %3225 = vmatpush1.xpose.msra.mxu0 0.0
    %3226 = vmatprep.subr.mxu0 0.0
    %3227 = vmatpush1.xpose.msra.mxu0 0.0
    %3228 = vmatprep.subr.mxu0 0.0
    %3229 = vmatpush1.xpose.msra.mxu0 0.0
    %3230 = vmatprep.subr.mxu0 0.0
    %3231 = vmatpush1.xpose.msra.mxu0 0.0
    %3232 = vmatprep.subr.mxu0 0.0
    %3233 = vmatpush1.xpose.msra.mxu0 0.0
    %3234 = vmatprep.subr.mxu0 0.0
    %3235 = vmatpush1.xpose.msra.mxu0 0.0
    %3236 = vmatprep.subr.mxu0 0.0
    %3237 = vmatpush1.xpose.msra.mxu0 0.0
    %3238 = vmatprep.subr.mxu0 0.0
    %3239 = vmatpush1.xpose.msra.mxu0 0.0
    %3240 = vmatprep.subr.mxu0 0.0
    %3241 = vmatpush1.xpose.msra.mxu0 0.0
    %3242 = vmatprep.subr.mxu0 0.0
    %3243 = vmatpush1.xpose.msra.mxu0 0.0
    %3244 = vmatprep.subr.mxu0 0.0
    %3245 = vmatpush1.xpose.msra.mxu0 %v3212
    %3246 = vmatprep.subr.mxu0 0.0
    %3247 = vmatpush2.xpose.msra.mxu0 0.0
    %3248 = vmatprep.subr.mxu0 0.0
    %3249 = vmatpush2.xpose.msra.mxu0 0.0
    %3250 = vmatprep.subr.mxu0 0.0
    %3251 = vmatpush2.xpose.msra.mxu0 0.0
    %3252 = vmatprep.subr.mxu0 0.0
    %3253 = vmatpush2.xpose.msra.mxu0 0.0
    %3254 = vmatprep.subr.mxu0 0.0
    %3255 = vmatpush2.xpose.msra.mxu0 0.0
    %3256 = vmatprep.subr.mxu0 0.0
    %3257 = vmatpush2.xpose.msra.mxu0 0.0
    %3258 = vmatprep.subr.mxu0 0.0
    %3259 = vmatpush2.xpose.msra.mxu0 0.0
    %3260 = vmatprep.subr.mxu0 0.0
    %3261 = vmatpush2.xpose.msra.mxu0 0.0
    %3262 = vmatprep.subr.mxu0 0.0
    %3263 = vmatpush2.xpose.msra.mxu0 0.0
    %3264 = vmatprep.subr.mxu0 0.0
    %3265 = vmatpush2.xpose.msra.mxu0 0.0
    %3266 = vmatprep.subr.mxu0 0.0
    %3267 = vmatpush2.xpose.msra.mxu0 0.0
    %3268 = vmatprep.subr.mxu0 0.0
    %3269 = vmatpush2.xpose.msra.mxu0 0.0
    %3270 = vmatprep.subr.mxu0 0.0
    %3271 = vmatpush2.xpose.msra.mxu0 0.0
    %3272 = vmatprep.subr.mxu0 0.0
    %3273 = vmatpush2.xpose.msra.mxu0 0.0
    %3274 = vmatprep.subr.mxu0 0.0
    %3275 = vmatpush2.xpose.msra.mxu0 0.0
    %3276 = vmatprep.subr.mxu0 0.0
    %3277 = vmatpush2.xpose.msra.mxu0 0.0
    %3278 = vmatprep.mubr.f32.mxu0 0.0
    %3279 = vmatmul.mubr.f32.gmra.mxu0 %v54
    %v3280 = vpop.f32.mrf.mxu0
    %v3281 = vadd.f32 0.0, %v3280
    %v3282 = vpop.f32.mrf.mxu0
    %3283 = vmatprep.mubr.f32.mxu0 0.0
    %3284 = vmatmul.mubr.f32.gmra.mxu0 %v57
    %v3285 = vpop.f32.mrf.mxu0
    %v3286 = vadd.f32 0.0, %v3285
    %v3287 = vpop.f32.mrf.mxu0
    %3288 = vdwg.mxu0
    %v3290 = vsel %vm52, %v3127, 0
    %3292 = vmatprep.subr.mxu0 0.0
    %3293 = vmatpush1.xpose.msra.mxu0 0.0
    %3294 = vmatprep.subr.mxu0 0.0
    %3295 = vmatpush1.xpose.msra.mxu0 0.0
    %3296 = vmatprep.subr.mxu0 0.0
    %3297 = vmatpush1.xpose.msra.mxu0 0.0
    %3298 = vmatprep.subr.mxu0 0.0
    %3299 = vmatpush1.xpose.msra.mxu0 0.0
    %3300 = vmatprep.subr.mxu0 0.0
    %3301 = vmatpush1.xpose.msra.mxu0 0.0
    %3302 = vmatprep.subr.mxu0 0.0
    %3303 = vmatpush1.xpose.msra.mxu0 0.0
    %3304 = vmatprep.subr.mxu0 0.0
    %3305 = vmatpush1.xpose.msra.mxu0 0.0
    %3306 = vmatprep.subr.mxu0 0.0
    %3307 = vmatpush1.xpose.msra.mxu0 0.0
    %3308 = vmatprep.subr.mxu0 0.0
    %3309 = vmatpush1.xpose.msra.mxu0 0.0
    %3310 = vmatprep.subr.mxu0 0.0
    %3311 = vmatpush1.xpose.msra.mxu0 0.0
    %3312 = vmatprep.subr.mxu0 0.0
    %3313 = vmatpush1.xpose.msra.mxu0 0.0
    %3314 = vmatprep.subr.mxu0 0.0
    %3315 = vmatpush1.xpose.msra.mxu0 0.0
    %3316 = vmatprep.subr.mxu0 0.0
    %3317 = vmatpush1.xpose.msra.mxu0 0.0
    %3318 = vmatprep.subr.mxu0 0.0
    %3319 = vmatpush1.xpose.msra.mxu0 0.0
    %3320 = vmatprep.subr.mxu0 0.0
    %3321 = vmatpush1.xpose.msra.mxu0 0.0
    %3322 = vmatprep.subr.mxu0 0.0
    %3323 = vmatpush1.xpose.msra.mxu0 %v3290
    %3324 = vmatprep.subr.mxu0 0.0
    %3325 = vmatpush2.xpose.msra.mxu0 0.0
    %3326 = vmatprep.subr.mxu0 0.0
    %3327 = vmatpush2.xpose.msra.mxu0 0.0
    %3328 = vmatprep.subr.mxu0 0.0
    %3329 = vmatpush2.xpose.msra.mxu0 0.0
    %3330 = vmatprep.subr.mxu0 0.0
    %3331 = vmatpush2.xpose.msra.mxu0 0.0
    %3332 = vmatprep.subr.mxu0 0.0
    %3333 = vmatpush2.xpose.msra.mxu0 0.0
    %3334 = vmatprep.subr.mxu0 0.0
    %3335 = vmatpush2.xpose.msra.mxu0 0.0
    %3336 = vmatprep.subr.mxu0 0.0
    %3337 = vmatpush2.xpose.msra.mxu0 0.0
    %3338 = vmatprep.subr.mxu0 0.0
    %3339 = vmatpush2.xpose.msra.mxu0 0.0
    %3340 = vmatprep.subr.mxu0 0.0
    %3341 = vmatpush2.xpose.msra.mxu0 0.0
    %3342 = vmatprep.subr.mxu0 0.0
    %3343 = vmatpush2.xpose.msra.mxu0 0.0
    %3344 = vmatprep.subr.mxu0 0.0
    %3345 = vmatpush2.xpose.msra.mxu0 0.0
    %3346 = vmatprep.subr.mxu0 0.0
    %3347 = vmatpush2.xpose.msra.mxu0 0.0
    %3348 = vmatprep.subr.mxu0 0.0
    %3349 = vmatpush2.xpose.msra.mxu0 0.0
    %3350 = vmatprep.subr.mxu0 0.0
    %3351 = vmatpush2.xpose.msra.mxu0 0.0
    %3352 = vmatprep.subr.mxu0 0.0
    %3353 = vmatpush2.xpose.msra.mxu0 0.0
    %3354 = vmatprep.subr.mxu0 0.0
    %3355 = vmatpush2.xpose.msra.mxu0 0.0
    %3356 = vmatprep.mubr.f32.mxu0 0.0
    %3357 = vmatmul.mubr.f32.gmra.mxu0 %v54
    %v3358 = vpop.f32.mrf.mxu0
    %v3359 = vadd.f32 0.0, %v3358
    %v3360 = vpop.f32.mrf.mxu0
    %3361 = vmatprep.mubr.f32.mxu0 0.0
    %3362 = vmatmul.mubr.f32.gmra.mxu0 %v57
    %v3363 = vpop.f32.mrf.mxu0
    %v3364 = vadd.f32 0.0, %v3363
    %v3365 = vpop.f32.mrf.mxu0
    %3366 = vdwg.mxu0
    %v3368 = vsel %vm52, %v3128, 0
    %3370 = vmatprep.subr.mxu0 0.0
    %3371 = vmatpush1.xpose.msra.mxu0 0.0
    %3372 = vmatprep.subr.mxu0 0.0
    %3373 = vmatpush1.xpose.msra.mxu0 0.0
    %3374 = vmatprep.subr.mxu0 0.0
    %3375 = vmatpush1.xpose.msra.mxu0 0.0
    %3376 = vmatprep.subr.mxu0 0.0
    %3377 = vmatpush1.xpose.msra.mxu0 0.0
    %3378 = vmatprep.subr.mxu0 0.0
    %3379 = vmatpush1.xpose.msra.mxu0 0.0
    %3380 = vmatprep.subr.mxu0 0.0
    %3381 = vmatpush1.xpose.msra.mxu0 0.0
    %3382 = vmatprep.subr.mxu0 0.0
    %3383 = vmatpush1.xpose.msra.mxu0 0.0
    %3384 = vmatprep.subr.mxu0 0.0
    %3385 = vmatpush1.xpose.msra.mxu0 0.0
    %3386 = vmatprep.subr.mxu0 0.0
    %3387 = vmatpush1.xpose.msra.mxu0 0.0
    %3388 = vmatprep.subr.mxu0 0.0
    %3389 = vmatpush1.xpose.msra.mxu0 0.0
    %3390 = vmatprep.subr.mxu0 0.0
    %3391 = vmatpush1.xpose.msra.mxu0 0.0
    %3392 = vmatprep.subr.mxu0 0.0
    %3393 = vmatpush1.xpose.msra.mxu0 0.0
    %3394 = vmatprep.subr.mxu0 0.0
    %3395 = vmatpush1.xpose.msra.mxu0 0.0
    %3396 = vmatprep.subr.mxu0 0.0
    %3397 = vmatpush1.xpose.msra.mxu0 0.0
    %3398 = vmatprep.subr.mxu0 0.0
    %3399 = vmatpush1.xpose.msra.mxu0 0.0
    %3400 = vmatprep.subr.mxu0 0.0
    %3401 = vmatpush1.xpose.msra.mxu0 %v3368
    %3402 = vmatprep.subr.mxu0 0.0
    %3403 = vmatpush2.xpose.msra.mxu0 0.0
    %3404 = vmatprep.subr.mxu0 0.0
    %3405 = vmatpush2.xpose.msra.mxu0 0.0
    %3406 = vmatprep.subr.mxu0 0.0
    %3407 = vmatpush2.xpose.msra.mxu0 0.0
    %3408 = vmatprep.subr.mxu0 0.0
    %3409 = vmatpush2.xpose.msra.mxu0 0.0
    %3410 = vmatprep.subr.mxu0 0.0
    %3411 = vmatpush2.xpose.msra.mxu0 0.0
    %3412 = vmatprep.subr.mxu0 0.0
    %3413 = vmatpush2.xpose.msra.mxu0 0.0
    %3414 = vmatprep.subr.mxu0 0.0
    %3415 = vmatpush2.xpose.msra.mxu0 0.0
    %3416 = vmatprep.subr.mxu0 0.0
    %3417 = vmatpush2.xpose.msra.mxu0 0.0
    %3418 = vmatprep.subr.mxu0 0.0
    %3419 = vmatpush2.xpose.msra.mxu0 0.0
    %3420 = vmatprep.subr.mxu0 0.0
    %3421 = vmatpush2.xpose.msra.mxu0 0.0
    %3422 = vmatprep.subr.mxu0 0.0
    %3423 = vmatpush2.xpose.msra.mxu0 0.0
    %3424 = vmatprep.subr.mxu0 0.0
    %3425 = vmatpush2.xpose.msra.mxu0 0.0
    %3426 = vmatprep.subr.mxu0 0.0
    %3427 = vmatpush2.xpose.msra.mxu0 0.0
    %3428 = vmatprep.subr.mxu0 0.0
    %3429 = vmatpush2.xpose.msra.mxu0 0.0
    %3430 = vmatprep.subr.mxu0 0.0
    %3431 = vmatpush2.xpose.msra.mxu0 0.0
    %3432 = vmatprep.subr.mxu0 0.0
    %3433 = vmatpush2.xpose.msra.mxu0 0.0
    %3434 = vmatprep.mubr.f32.mxu0 0.0
    %3435 = vmatmul.mubr.f32.gmra.mxu0 %v54
    %v3436 = vpop.f32.mrf.mxu0
    %v3437 = vadd.f32 0.0, %v3436
    %v3438 = vpop.f32.mrf.mxu0
    %3439 = vmatprep.mubr.f32.mxu0 0.0
    %3440 = vmatmul.mubr.f32.gmra.mxu0 %v57
    %v3441 = vpop.f32.mrf.mxu0
    %v3442 = vadd.f32 0.0, %v3441
    %v3443 = vpop.f32.mrf.mxu0
    %3444 = vdwg.mxu0
    %v3446 = vsel %vm52, %v3129, 0
    %3448 = vmatprep.subr.mxu0 0.0
    %3449 = vmatpush1.xpose.msra.mxu0 0.0
    %3450 = vmatprep.subr.mxu0 0.0
    %3451 = vmatpush1.xpose.msra.mxu0 0.0
    %3452 = vmatprep.subr.mxu0 0.0
    %3453 = vmatpush1.xpose.msra.mxu0 0.0
    %3454 = vmatprep.subr.mxu0 0.0
    %3455 = vmatpush1.xpose.msra.mxu0 0.0
    %3456 = vmatprep.subr.mxu0 0.0
    %3457 = vmatpush1.xpose.msra.mxu0 0.0
    %3458 = vmatprep.subr.mxu0 0.0
    %3459 = vmatpush1.xpose.msra.mxu0 0.0
    %3460 = vmatprep.subr.mxu0 0.0
    %3461 = vmatpush1.xpose.msra.mxu0 0.0
    %3462 = vmatprep.subr.mxu0 0.0
    %3463 = vmatpush1.xpose.msra.mxu0 0.0
    %3464 = vmatprep.subr.mxu0 0.0
    %3465 = vmatpush1.xpose.msra.mxu0 0.0
    %3466 = vmatprep.subr.mxu0 0.0
    %3467 = vmatpush1.xpose.msra.mxu0 0.0
    %3468 = vmatprep.subr.mxu0 0.0
    %3469 = vmatpush1.xpose.msra.mxu0 0.0
    %3470 = vmatprep.subr.mxu0 0.0
    %3471 = vmatpush1.xpose.msra.mxu0 0.0
    %3472 = vmatprep.subr.mxu0 0.0
    %3473 = vmatpush1.xpose.msra.mxu0 0.0
    %3474 = vmatprep.subr.mxu0 0.0
    %3475 = vmatpush1.xpose.msra.mxu0 0.0
    %3476 = vmatprep.subr.mxu0 0.0
    %3477 = vmatpush1.xpose.msra.mxu0 0.0
    %3478 = vmatprep.subr.mxu0 0.0
    %3479 = vmatpush1.xpose.msra.mxu0 %v3446
    %3480 = vmatprep.subr.mxu0 0.0
    %3481 = vmatpush2.xpose.msra.mxu0 0.0
    %3482 = vmatprep.subr.mxu0 0.0
    %3483 = vmatpush2.xpose.msra.mxu0 0.0
    %3484 = vmatprep.subr.mxu0 0.0
    %3485 = vmatpush2.xpose.msra.mxu0 0.0
    %3486 = vmatprep.subr.mxu0 0.0
    %3487 = vmatpush2.xpose.msra.mxu0 0.0
    %3488 = vmatprep.subr.mxu0 0.0
    %3489 = vmatpush2.xpose.msra.mxu0 0.0
    %3490 = vmatprep.subr.mxu0 0.0
    %3491 = vmatpush2.xpose.msra.mxu0 0.0
    %3492 = vmatprep.subr.mxu0 0.0
    %3493 = vmatpush2.xpose.msra.mxu0 0.0
    %3494 = vmatprep.subr.mxu0 0.0
    %3495 = vmatpush2.xpose.msra.mxu0 0.0
    %3496 = vmatprep.subr.mxu0 0.0
    %3497 = vmatpush2.xpose.msra.mxu0 0.0
    %3498 = vmatprep.subr.mxu0 0.0
    %3499 = vmatpush2.xpose.msra.mxu0 0.0
    %3500 = vmatprep.subr.mxu0 0.0
    %3501 = vmatpush2.xpose.msra.mxu0 0.0
    %3502 = vmatprep.subr.mxu0 0.0
    %3503 = vmatpush2.xpose.msra.mxu0 0.0
    %3504 = vmatprep.subr.mxu0 0.0
    %3505 = vmatpush2.xpose.msra.mxu0 0.0
    %3506 = vmatprep.subr.mxu0 0.0
    %3507 = vmatpush2.xpose.msra.mxu0 0.0
    %3508 = vmatprep.subr.mxu0 0.0
    %3509 = vmatpush2.xpose.msra.mxu0 0.0
    %3510 = vmatprep.subr.mxu0 0.0
    %3511 = vmatpush2.xpose.msra.mxu0 0.0
    %3512 = vmatprep.mubr.f32.mxu0 0.0
    %3513 = vmatmul.mubr.f32.gmra.mxu0 %v54
    %v3514 = vpop.f32.mrf.mxu0
    %v3515 = vadd.f32 0.0, %v3514
    %v3516 = vpop.f32.mrf.mxu0
    %3517 = vmatprep.mubr.f32.mxu0 0.0
    %3518 = vmatmul.mubr.f32.gmra.mxu0 %v57
    %v3519 = vpop.f32.mrf.mxu0
    %v3520 = vadd.f32 0.0, %v3519
    %v3521 = vpop.f32.mrf.mxu0
    %3522 = vdwg.mxu0
    %v3524 = vsel %vm52, %v3130, 0
    %3526 = vmatprep.subr.mxu0 0.0
    %3527 = vmatpush1.xpose.msra.mxu0 0.0
    %3528 = vmatprep.subr.mxu0 0.0
    %3529 = vmatpush1.xpose.msra.mxu0 0.0
    %3530 = vmatprep.subr.mxu0 0.0
    %3531 = vmatpush1.xpose.msra.mxu0 0.0
    %3532 = vmatprep.subr.mxu0 0.0
    %3533 = vmatpush1.xpose.msra.mxu0 0.0
    %3534 = vmatprep.subr.mxu0 0.0
    %3535 = vmatpush1.xpose.msra.mxu0 0.0
    %3536 = vmatprep.subr.mxu0 0.0
    %3537 = vmatpush1.xpose.msra.mxu0 0.0
    %3538 = vmatprep.subr.mxu0 0.0
    %3539 = vmatpush1.xpose.msra.mxu0 0.0
    %3540 = vmatprep.subr.mxu0 0.0
    %3541 = vmatpush1.xpose.msra.mxu0 0.0
    %3542 = vmatprep.subr.mxu0 0.0
    %3543 = vmatpush1.xpose.msra.mxu0 0.0
    %3544 = vmatprep.subr.mxu0 0.0
    %3545 = vmatpush1.xpose.msra.mxu0 0.0
    %3546 = vmatprep.subr.mxu0 0.0
    %3547 = vmatpush1.xpose.msra.mxu0 0.0
    %3548 = vmatprep.subr.mxu0 0.0
    %3549 = vmatpush1.xpose.msra.mxu0 0.0
    %3550 = vmatprep.subr.mxu0 0.0
    %3551 = vmatpush1.xpose.msra.mxu0 0.0
    %3552 = vmatprep.subr.mxu0 0.0
    %3553 = vmatpush1.xpose.msra.mxu0 0.0
    %3554 = vmatprep.subr.mxu0 0.0
    %3555 = vmatpush1.xpose.msra.mxu0 0.0
    %3556 = vmatprep.subr.mxu0 0.0
    %3557 = vmatpush1.xpose.msra.mxu0 %v3524
    %3558 = vmatprep.subr.mxu0 0.0
    %3559 = vmatpush2.xpose.msra.mxu0 0.0
    %3560 = vmatprep.subr.mxu0 0.0
    %3561 = vmatpush2.xpose.msra.mxu0 0.0
    %3562 = vmatprep.subr.mxu0 0.0
    %3563 = vmatpush2.xpose.msra.mxu0 0.0
    %3564 = vmatprep.subr.mxu0 0.0
    %3565 = vmatpush2.xpose.msra.mxu0 0.0
    %3566 = vmatprep.subr.mxu0 0.0
    %3567 = vmatpush2.xpose.msra.mxu0 0.0
    %3568 = vmatprep.subr.mxu0 0.0
    %3569 = vmatpush2.xpose.msra.mxu0 0.0
    %3570 = vmatprep.subr.mxu0 0.0
    %3571 = vmatpush2.xpose.msra.mxu0 0.0
    %3572 = vmatprep.subr.mxu0 0.0
    %3573 = vmatpush2.xpose.msra.mxu0 0.0
    %3574 = vmatprep.subr.mxu0 0.0
    %3575 = vmatpush2.xpose.msra.mxu0 0.0
    %3576 = vmatprep.subr.mxu0 0.0
    %3577 = vmatpush2.xpose.msra.mxu0 0.0
    %3578 = vmatprep.subr.mxu0 0.0
    %3579 = vmatpush2.xpose.msra.mxu0 0.0
    %3580 = vmatprep.subr.mxu0 0.0
    %3581 = vmatpush2.xpose.msra.mxu0 0.0
    %3582 = vmatprep.subr.mxu0 0.0
    %3583 = vmatpush2.xpose.msra.mxu0 0.0
    %3584 = vmatprep.subr.mxu0 0.0
    %3585 = vmatpush2.xpose.msra.mxu0 0.0
    %3586 = vmatprep.subr.mxu0 0.0
    %3587 = vmatpush2.xpose.msra.mxu0 0.0
    %3588 = vmatprep.subr.mxu0 0.0
    %3589 = vmatpush2.xpose.msra.mxu0 0.0
    %3590 = vmatprep.mubr.f32.mxu0 0.0
    %3591 = vmatmul.mubr.f32.gmra.mxu0 %v54
    %v3592 = vpop.f32.mrf.mxu0
    %v3593 = vadd.f32 0.0, %v3592
    %v3594 = vpop.f32.mrf.mxu0
    %3595 = vmatprep.mubr.f32.mxu0 0.0
    %3596 = vmatmul.mubr.f32.gmra.mxu0 %v57
    %v3597 = vpop.f32.mrf.mxu0
    %v3598 = vadd.f32 0.0, %v3597
    %v3599 = vpop.f32.mrf.mxu0
    %3600 = vdwg.mxu0
    %v3602 = vsel %vm52, %v3131, 0
    %3604 = vmatprep.subr.mxu0 0.0
    %3605 = vmatpush1.xpose.msra.mxu0 0.0
    %3606 = vmatprep.subr.mxu0 0.0
    %3607 = vmatpush1.xpose.msra.mxu0 0.0
    %3608 = vmatprep.subr.mxu0 0.0
    %3609 = vmatpush1.xpose.msra.mxu0 0.0
    %3610 = vmatprep.subr.mxu0 0.0
    %3611 = vmatpush1.xpose.msra.mxu0 0.0
    %3612 = vmatprep.subr.mxu0 0.0
    %3613 = vmatpush1.xpose.msra.mxu0 0.0
    %3614 = vmatprep.subr.mxu0 0.0
    %3615 = vmatpush1.xpose.msra.mxu0 0.0
    %3616 = vmatprep.subr.mxu0 0.0
    %3617 = vmatpush1.xpose.msra.mxu0 0.0
    %3618 = vmatprep.subr.mxu0 0.0
    %3619 = vmatpush1.xpose.msra.mxu0 0.0
    %3620 = vmatprep.subr.mxu0 0.0
    %3621 = vmatpush1.xpose.msra.mxu0 0.0
    %3622 = vmatprep.subr.mxu0 0.0
    %3623 = vmatpush1.xpose.msra.mxu0 0.0
    %3624 = vmatprep.subr.mxu0 0.0
    %3625 = vmatpush1.xpose.msra.mxu0 0.0
    %3626 = vmatprep.subr.mxu0 0.0
    %3627 = vmatpush1.xpose.msra.mxu0 0.0
    %3628 = vmatprep.subr.mxu0 0.0
    %3629 = vmatpush1.xpose.msra.mxu0 0.0
    %3630 = vmatprep.subr.mxu0 0.0
    %3631 = vmatpush1.xpose.msra.mxu0 0.0
    %3632 = vmatprep.subr.mxu0 0.0
    %3633 = vmatpush1.xpose.msra.mxu0 0.0
    %3634 = vmatprep.subr.mxu0 0.0
    %3635 = vmatpush1.xpose.msra.mxu0 %v3602
    %3636 = vmatprep.subr.mxu0 0.0
    %3637 = vmatpush2.xpose.msra.mxu0 0.0
    %3638 = vmatprep.subr.mxu0 0.0
    %3639 = vmatpush2.xpose.msra.mxu0 0.0
    %3640 = vmatprep.subr.mxu0 0.0
    %3641 = vmatpush2.xpose.msra.mxu0 0.0
    %3642 = vmatprep.subr.mxu0 0.0
    %3643 = vmatpush2.xpose.msra.mxu0 0.0
    %3644 = vmatprep.subr.mxu0 0.0
    %3645 = vmatpush2.xpose.msra.mxu0 0.0
    %3646 = vmatprep.subr.mxu0 0.0
    %3647 = vmatpush2.xpose.msra.mxu0 0.0
    %3648 = vmatprep.subr.mxu0 0.0
    %3649 = vmatpush2.xpose.msra.mxu0 0.0
    %3650 = vmatprep.subr.mxu0 0.0
    %3651 = vmatpush2.xpose.msra.mxu0 0.0
    %3652 = vmatprep.subr.mxu0 0.0
    %3653 = vmatpush2.xpose.msra.mxu0 0.0
    %3654 = vmatprep.subr.mxu0 0.0
    %3655 = vmatpush2.xpose.msra.mxu0 0.0
    %3656 = vmatprep.subr.mxu0 0.0
    %3657 = vmatpush2.xpose.msra.mxu0 0.0
    %3658 = vmatprep.subr.mxu0 0.0
    %3659 = vmatpush2.xpose.msra.mxu0 0.0
    %3660 = vmatprep.subr.mxu0 0.0
    %3661 = vmatpush2.xpose.msra.mxu0 0.0
    %3662 = vmatprep.subr.mxu0 0.0
    %3663 = vmatpush2.xpose.msra.mxu0 0.0
    %3664 = vmatprep.subr.mxu0 0.0
    %3665 = vmatpush2.xpose.msra.mxu0 0.0
    %3666 = vmatprep.subr.mxu0 0.0
    %3667 = vmatpush2.xpose.msra.mxu0 0.0
    %3668 = vmatprep.mubr.f32.mxu0 0.0
    %3669 = vmatmul.mubr.f32.gmra.mxu0 %v54
    %v3670 = vpop.f32.mrf.mxu0
    %v3671 = vadd.f32 0.0, %v3670
    %v3672 = vpop.f32.mrf.mxu0
    %3673 = vmatprep.mubr.f32.mxu0 0.0
    %3674 = vmatmul.mubr.f32.gmra.mxu0 %v57
    %v3675 = vpop.f32.mrf.mxu0
    %v3676 = vadd.f32 0.0, %v3675
    %v3677 = vpop.f32.mrf.mxu0
    %3678 = vdwg.mxu0
    %v3680 = vsel %vm52, %v3132, 0
    %3682 = vmatprep.subr.mxu0 0.0
    %3683 = vmatpush1.xpose.msra.mxu0 0.0
    %3684 = vmatprep.subr.mxu0 0.0
    %3685 = vmatpush1.xpose.msra.mxu0 0.0
    %3686 = vmatprep.subr.mxu0 0.0
    %3687 = vmatpush1.xpose.msra.mxu0 0.0
    %3688 = vmatprep.subr.mxu0 0.0
    %3689 = vmatpush1.xpose.msra.mxu0 0.0
    %3690 = vmatprep.subr.mxu0 0.0
    %3691 = vmatpush1.xpose.msra.mxu0 0.0
    %3692 = vmatprep.subr.mxu0 0.0
    %3693 = vmatpush1.xpose.msra.mxu0 0.0
    %3694 = vmatprep.subr.mxu0 0.0
    %3695 = vmatpush1.xpose.msra.mxu0 0.0
    %3696 = vmatprep.subr.mxu0 0.0
    %3697 = vmatpush1.xpose.msra.mxu0 0.0
    %3698 = vmatprep.subr.mxu0 0.0
    %3699 = vmatpush1.xpose.msra.mxu0 0.0
    %3700 = vmatprep.subr.mxu0 0.0
    %3701 = vmatpush1.xpose.msra.mxu0 0.0
    %3702 = vmatprep.subr.mxu0 0.0
    %3703 = vmatpush1.xpose.msra.mxu0 0.0
    %3704 = vmatprep.subr.mxu0 0.0
    %3705 = vmatpush1.xpose.msra.mxu0 0.0
    %3706 = vmatprep.subr.mxu0 0.0
    %3707 = vmatpush1.xpose.msra.mxu0 0.0
    %3708 = vmatprep.subr.mxu0 0.0
    %3709 = vmatpush1.xpose.msra.mxu0 0.0
    %3710 = vmatprep.subr.mxu0 0.0
    %3711 = vmatpush1.xpose.msra.mxu0 0.0
    %3712 = vmatprep.subr.mxu0 0.0
    %3713 = vmatpush1.xpose.msra.mxu0 %v3680
    %3714 = vmatprep.subr.mxu0 0.0
    %3715 = vmatpush2.xpose.msra.mxu0 0.0
    %3716 = vmatprep.subr.mxu0 0.0
    %3717 = vmatpush2.xpose.msra.mxu0 0.0
    %3718 = vmatprep.subr.mxu0 0.0
    %3719 = vmatpush2.xpose.msra.mxu0 0.0
    %3720 = vmatprep.subr.mxu0 0.0
    %3721 = vmatpush2.xpose.msra.mxu0 0.0
    %3722 = vmatprep.subr.mxu0 0.0
    %3723 = vmatpush2.xpose.msra.mxu0 0.0
    %3724 = vmatprep.subr.mxu0 0.0
    %3725 = vmatpush2.xpose.msra.mxu0 0.0
    %3726 = vmatprep.subr.mxu0 0.0
    %3727 = vmatpush2.xpose.msra.mxu0 0.0
    %3728 = vmatprep.subr.mxu0 0.0
    %3729 = vmatpush2.xpose.msra.mxu0 0.0
    %3730 = vmatprep.subr.mxu0 0.0
    %3731 = vmatpush2.xpose.msra.mxu0 0.0
    %3732 = vmatprep.subr.mxu0 0.0
    %3733 = vmatpush2.xpose.msra.mxu0 0.0
    %3734 = vmatprep.subr.mxu0 0.0
    %3735 = vmatpush2.xpose.msra.mxu0 0.0
    %3736 = vmatprep.subr.mxu0 0.0
    %3737 = vmatpush2.xpose.msra.mxu0 0.0
    %3738 = vmatprep.subr.mxu0 0.0
    %3739 = vmatpush2.xpose.msra.mxu0 0.0
    %3740 = vmatprep.subr.mxu0 0.0
    %3741 = vmatpush2.xpose.msra.mxu0 0.0
    %3742 = vmatprep.subr.mxu0 0.0
    %3743 = vmatpush2.xpose.msra.mxu0 0.0
    %3744 = vmatprep.subr.mxu0 0.0
    %3745 = vmatpush2.xpose.msra.mxu0 0.0
    %3746 = vmatprep.mubr.f32.mxu0 0.0
    %3747 = vmatmul.mubr.f32.gmra.mxu0 %v54
    %v3748 = vpop.f32.mrf.mxu0
    %v3749 = vadd.f32 0.0, %v3748
    %v3750 = vpop.f32.mrf.mxu0
    %3751 = vmatprep.mubr.f32.mxu0 0.0
    %3752 = vmatmul.mubr.f32.gmra.mxu0 %v57
    %v3753 = vpop.f32.mrf.mxu0
    %v3754 = vadd.f32 0.0, %v3753
    %v3755 = vpop.f32.mrf.mxu0
    %3756 = vdwg.mxu0
    %s3757 = scalar_lea.vmem %s5, 16
    %v3758 = vld [vmem:[%s3757] sm:$0xff]
    %s3759 = scalar_lea.vmem %s6, 16
    %v3760 = vld [vmem:[%s3759] sm:$0xff]
    %3762 = vset.pattern.permute.xlu0 0
    %3763 = vperm.xlu0 %3762, %v3760
    %v3764 = vpop.permute.xlu0 %3763
    %v3767 = vsel %vm690, %v3758, 0
    %v3770 = vsel %vm690, %v3203, 0
    %v3773 = vsel %vm690, %v3208, 0
    %3775 = vmatprep.subr.mxu0 0.0
    %3776 = vmatpush1.xpose.msra.mxu0 0.0
    %3777 = vmatprep.subr.mxu0 0.0
    %3778 = vmatpush1.xpose.msra.mxu0 0.0
    %3779 = vmatprep.subr.mxu0 0.0
    %3780 = vmatpush1.xpose.msra.mxu0 0.0
    %3781 = vmatprep.subr.mxu0 0.0
    %3782 = vmatpush1.xpose.msra.mxu0 0.0
    %3783 = vmatprep.subr.mxu0 0.0
    %3784 = vmatpush1.xpose.msra.mxu0 0.0
    %3785 = vmatprep.subr.mxu0 0.0
    %3786 = vmatpush1.xpose.msra.mxu0 0.0
    %3787 = vmatprep.subr.mxu0 0.0
    %3788 = vmatpush1.xpose.msra.mxu0 0.0
    %3789 = vmatprep.subr.mxu0 0.0
    %3790 = vmatpush1.xpose.msra.mxu0 0.0
    %3791 = vmatprep.subr.mxu0 0.0
    %3792 = vmatpush1.xpose.msra.mxu0 0.0
    %3793 = vmatprep.subr.mxu0 0.0
    %3794 = vmatpush1.xpose.msra.mxu0 0.0
    %3795 = vmatprep.subr.mxu0 0.0
    %3796 = vmatpush1.xpose.msra.mxu0 0.0
    %3797 = vmatprep.subr.mxu0 0.0
    %3798 = vmatpush1.xpose.msra.mxu0 0.0
    %3799 = vmatprep.subr.mxu0 0.0
    %3800 = vmatpush1.xpose.msra.mxu0 0.0
    %3801 = vmatprep.subr.mxu0 0.0
    %3802 = vmatpush1.xpose.msra.mxu0 0.0
    %3803 = vmatprep.subr.mxu0 0.0
    %3804 = vmatpush1.xpose.msra.mxu0 %v3773
    %3805 = vmatprep.subr.mxu0 0.0
    %3806 = vmatpush1.xpose.msra.mxu0 %v3770
    %3807 = vmatprep.subr.mxu0 0.0
    %3808 = vmatpush2.xpose.msra.mxu0 0.0
    %3809 = vmatprep.subr.mxu0 0.0
    %3810 = vmatpush2.xpose.msra.mxu0 0.0
    %3811 = vmatprep.subr.mxu0 0.0
    %3812 = vmatpush2.xpose.msra.mxu0 0.0
    %3813 = vmatprep.subr.mxu0 0.0
    %3814 = vmatpush2.xpose.msra.mxu0 0.0
    %3815 = vmatprep.subr.mxu0 0.0
    %3816 = vmatpush2.xpose.msra.mxu0 0.0
    %3817 = vmatprep.subr.mxu0 0.0
    %3818 = vmatpush2.xpose.msra.mxu0 0.0
    %3819 = vmatprep.subr.mxu0 0.0
    %3820 = vmatpush2.xpose.msra.mxu0 0.0
    %3821 = vmatprep.subr.mxu0 0.0
    %3822 = vmatpush2.xpose.msra.mxu0 0.0
    %3823 = vmatprep.subr.mxu0 0.0
    %3824 = vmatpush2.xpose.msra.mxu0 0.0
    %3825 = vmatprep.subr.mxu0 0.0
    %3826 = vmatpush2.xpose.msra.mxu0 0.0
    %3827 = vmatprep.subr.mxu0 0.0
    %3828 = vmatpush2.xpose.msra.mxu0 0.0
    %3829 = vmatprep.subr.mxu0 0.0
    %3830 = vmatpush2.xpose.msra.mxu0 0.0
    %3831 = vmatprep.subr.mxu0 0.0
    %3832 = vmatpush2.xpose.msra.mxu0 0.0
    %3833 = vmatprep.subr.mxu0 0.0
    %3834 = vmatpush2.xpose.msra.mxu0 0.0
    %3835 = vmatprep.subr.mxu0 0.0
    %3836 = vmatpush2.xpose.msra.mxu0 0.0
    %3837 = vmatprep.subr.mxu0 0.0
    %3838 = vmatpush2.xpose.msra.mxu0 0.0
    %3839 = vmatprep.mubr.f32.mxu0 0.0
    %3840 = vmatmul.mubr.f32.gmra.mxu0 %v3767
    %v3841 = vpop.f32.mrf.mxu0
    %v3842 = vadd.f32 %v3764, %v3841
    %v3843 = vpop.f32.mrf.mxu0
    %3844 = vdwg.mxu0
    %v3846 = vsel %vm690, %v3281, 0
    %v3849 = vsel %vm690, %v3286, 0
    %3851 = vmatprep.subr.mxu0 0.0
    %3852 = vmatpush1.xpose.msra.mxu0 0.0
    %3853 = vmatprep.subr.mxu0 0.0
    %3854 = vmatpush1.xpose.msra.mxu0 0.0
    %3855 = vmatprep.subr.mxu0 0.0
    %3856 = vmatpush1.xpose.msra.mxu0 0.0
    %3857 = vmatprep.subr.mxu0 0.0
    %3858 = vmatpush1.xpose.msra.mxu0 0.0
    %3859 = vmatprep.subr.mxu0 0.0
    %3860 = vmatpush1.xpose.msra.mxu0 0.0
    %3861 = vmatprep.subr.mxu0 0.0
    %3862 = vmatpush1.xpose.msra.mxu0 0.0
    %3863 = vmatprep.subr.mxu0 0.0
    %3864 = vmatpush1.xpose.msra.mxu0 0.0
    %3865 = vmatprep.subr.mxu0 0.0
    %3866 = vmatpush1.xpose.msra.mxu0 0.0
    %3867 = vmatprep.subr.mxu0 0.0
    %3868 = vmatpush1.xpose.msra.mxu0 0.0
    %3869 = vmatprep.subr.mxu0 0.0
    %3870 = vmatpush1.xpose.msra.mxu0 0.0
    %3871 = vmatprep.subr.mxu0 0.0
    %3872 = vmatpush1.xpose.msra.mxu0 0.0
    %3873 = vmatprep.subr.mxu0 0.0
    %3874 = vmatpush1.xpose.msra.mxu0 0.0
    %3875 = vmatprep.subr.mxu0 0.0
    %3876 = vmatpush1.xpose.msra.mxu0 0.0
    %3877 = vmatprep.subr.mxu0 0.0
    %3878 = vmatpush1.xpose.msra.mxu0 0.0
    %3879 = vmatprep.subr.mxu0 0.0
    %3880 = vmatpush1.xpose.msra.mxu0 %v3849
    %3881 = vmatprep.subr.mxu0 0.0
    %3882 = vmatpush1.xpose.msra.mxu0 %v3846
    %3883 = vmatprep.subr.mxu0 0.0
    %3884 = vmatpush2.xpose.msra.mxu0 0.0
    %3885 = vmatprep.subr.mxu0 0.0
    %3886 = vmatpush2.xpose.msra.mxu0 0.0
    %3887 = vmatprep.subr.mxu0 0.0
    %3888 = vmatpush2.xpose.msra.mxu0 0.0
    %3889 = vmatprep.subr.mxu0 0.0
    %3890 = vmatpush2.xpose.msra.mxu0 0.0
    %3891 = vmatprep.subr.mxu0 0.0
    %3892 = vmatpush2.xpose.msra.mxu0 0.0
    %3893 = vmatprep.subr.mxu0 0.0
    %3894 = vmatpush2.xpose.msra.mxu0 0.0
    %3895 = vmatprep.subr.mxu0 0.0
    %3896 = vmatpush2.xpose.msra.mxu0 0.0
    %3897 = vmatprep.subr.mxu0 0.0
    %3898 = vmatpush2.xpose.msra.mxu0 0.0
    %3899 = vmatprep.subr.mxu0 0.0
    %3900 = vmatpush2.xpose.msra.mxu0 0.0
    %3901 = vmatprep.subr.mxu0 0.0
    %3902 = vmatpush2.xpose.msra.mxu0 0.0
    %3903 = vmatprep.subr.mxu0 0.0
    %3904 = vmatpush2.xpose.msra.mxu0 0.0
    %3905 = vmatprep.subr.mxu0 0.0
    %3906 = vmatpush2.xpose.msra.mxu0 0.0
    %3907 = vmatprep.subr.mxu0 0.0
    %3908 = vmatpush2.xpose.msra.mxu0 0.0
    %3909 = vmatprep.subr.mxu0 0.0
    %3910 = vmatpush2.xpose.msra.mxu0 0.0
    %3911 = vmatprep.subr.mxu0 0.0
    %3912 = vmatpush2.xpose.msra.mxu0 0.0
    %3913 = vmatprep.subr.mxu0 0.0
    %3914 = vmatpush2.xpose.msra.mxu0 0.0
    %3915 = vmatprep.mubr.f32.mxu0 0.0
    %3916 = vmatmul.mubr.f32.gmra.mxu0 %v3767
    %v3917 = vpop.f32.mrf.mxu0
    %v3918 = vadd.f32 %v3764, %v3917
    %v3919 = vpop.f32.mrf.mxu0
    %3920 = vdwg.mxu0
    %v3922 = vsel %vm690, %v3359, 0
    %v3925 = vsel %vm690, %v3364, 0
    %3927 = vmatprep.subr.mxu0 0.0
    %3928 = vmatpush1.xpose.msra.mxu0 0.0
    %3929 = vmatprep.subr.mxu0 0.0
    %3930 = vmatpush1.xpose.msra.mxu0 0.0
    %3931 = vmatprep.subr.mxu0 0.0
    %3932 = vmatpush1.xpose.msra.mxu0 0.0
    %3933 = vmatprep.subr.mxu0 0.0
    %3934 = vmatpush1.xpose.msra.mxu0 0.0
    %3935 = vmatprep.subr.mxu0 0.0
    %3936 = vmatpush1.xpose.msra.mxu0 0.0
    %3937 = vmatprep.subr.mxu0 0.0
    %3938 = vmatpush1.xpose.msra.mxu0 0.0
    %3939 = vmatprep.subr.mxu0 0.0
    %3940 = vmatpush1.xpose.msra.mxu0 0.0
    %3941 = vmatprep.subr.mxu0 0.0
    %3942 = vmatpush1.xpose.msra.mxu0 0.0
    %3943 = vmatprep.subr.mxu0 0.0
    %3944 = vmatpush1.xpose.msra.mxu0 0.0
    %3945 = vmatprep.subr.mxu0 0.0
    %3946 = vmatpush1.xpose.msra.mxu0 0.0
    %3947 = vmatprep.subr.mxu0 0.0
    %3948 = vmatpush1.xpose.msra.mxu0 0.0
    %3949 = vmatprep.subr.mxu0 0.0
    %3950 = vmatpush1.xpose.msra.mxu0 0.0
    %3951 = vmatprep.subr.mxu0 0.0
    %3952 = vmatpush1.xpose.msra.mxu0 0.0
    %3953 = vmatprep.subr.mxu0 0.0
    %3954 = vmatpush1.xpose.msra.mxu0 0.0
    %3955 = vmatprep.subr.mxu0 0.0
    %3956 = vmatpush1.xpose.msra.mxu0 %v3925
    %3957 = vmatprep.subr.mxu0 0.0
    %3958 = vmatpush1.xpose.msra.mxu0 %v3922
    %3959 = vmatprep.subr.mxu0 0.0
    %3960 = vmatpush2.xpose.msra.mxu0 0.0
    %3961 = vmatprep.subr.mxu0 0.0
    %3962 = vmatpush2.xpose.msra.mxu0 0.0
    %3963 = vmatprep.subr.mxu0 0.0
    %3964 = vmatpush2.xpose.msra.mxu0 0.0
    %3965 = vmatprep.subr.mxu0 0.0
    %3966 = vmatpush2.xpose.msra.mxu0 0.0
    %3967 = vmatprep.subr.mxu0 0.0
    %3968 = vmatpush2.xpose.msra.mxu0 0.0
    %3969 = vmatprep.subr.mxu0 0.0
    %3970 = vmatpush2.xpose.msra.mxu0 0.0
    %3971 = vmatprep.subr.mxu0 0.0
    %3972 = vmatpush2.xpose.msra.mxu0 0.0
    %3973 = vmatprep.subr.mxu0 0.0
    %3974 = vmatpush2.xpose.msra.mxu0 0.0
    %3975 = vmatprep.subr.mxu0 0.0
    %3976 = vmatpush2.xpose.msra.mxu0 0.0
    %3977 = vmatprep.subr.mxu0 0.0
    %3978 = vmatpush2.xpose.msra.mxu0 0.0
    %3979 = vmatprep.subr.mxu0 0.0
    %3980 = vmatpush2.xpose.msra.mxu0 0.0
    %3981 = vmatprep.subr.mxu0 0.0
    %3982 = vmatpush2.xpose.msra.mxu0 0.0
    %3983 = vmatprep.subr.mxu0 0.0
    %3984 = vmatpush2.xpose.msra.mxu0 0.0
    %3985 = vmatprep.subr.mxu0 0.0
    %3986 = vmatpush2.xpose.msra.mxu0 0.0
    %3987 = vmatprep.subr.mxu0 0.0
    %3988 = vmatpush2.xpose.msra.mxu0 0.0
    %3989 = vmatprep.subr.mxu0 0.0
    %3990 = vmatpush2.xpose.msra.mxu0 0.0
    %3991 = vmatprep.mubr.f32.mxu0 0.0
    %3992 = vmatmul.mubr.f32.gmra.mxu0 %v3767
    %v3993 = vpop.f32.mrf.mxu0
    %v3994 = vadd.f32 %v3764, %v3993
    %v3995 = vpop.f32.mrf.mxu0
    %3996 = vdwg.mxu0
    %v3998 = vsel %vm690, %v3437, 0
    %v4001 = vsel %vm690, %v3442, 0
    %4003 = vmatprep.subr.mxu0 0.0
    %4004 = vmatpush1.xpose.msra.mxu0 0.0
    %4005 = vmatprep.subr.mxu0 0.0
    %4006 = vmatpush1.xpose.msra.mxu0 0.0
    %4007 = vmatprep.subr.mxu0 0.0
    %4008 = vmatpush1.xpose.msra.mxu0 0.0
    %4009 = vmatprep.subr.mxu0 0.0
    %4010 = vmatpush1.xpose.msra.mxu0 0.0
    %4011 = vmatprep.subr.mxu0 0.0
    %4012 = vmatpush1.xpose.msra.mxu0 0.0
    %4013 = vmatprep.subr.mxu0 0.0
    %4014 = vmatpush1.xpose.msra.mxu0 0.0
    %4015 = vmatprep.subr.mxu0 0.0
    %4016 = vmatpush1.xpose.msra.mxu0 0.0
    %4017 = vmatprep.subr.mxu0 0.0
    %4018 = vmatpush1.xpose.msra.mxu0 0.0
    %4019 = vmatprep.subr.mxu0 0.0
    %4020 = vmatpush1.xpose.msra.mxu0 0.0
    %4021 = vmatprep.subr.mxu0 0.0
    %4022 = vmatpush1.xpose.msra.mxu0 0.0
    %4023 = vmatprep.subr.mxu0 0.0
    %4024 = vmatpush1.xpose.msra.mxu0 0.0
    %4025 = vmatprep.subr.mxu0 0.0
    %4026 = vmatpush1.xpose.msra.mxu0 0.0
    %4027 = vmatprep.subr.mxu0 0.0
    %4028 = vmatpush1.xpose.msra.mxu0 0.0
    %4029 = vmatprep.subr.mxu0 0.0
    %4030 = vmatpush1.xpose.msra.mxu0 0.0
    %4031 = vmatprep.subr.mxu0 0.0
    %4032 = vmatpush1.xpose.msra.mxu0 %v4001
    %4033 = vmatprep.subr.mxu0 0.0
    %4034 = vmatpush1.xpose.msra.mxu0 %v3998
    %4035 = vmatprep.subr.mxu0 0.0
    %4036 = vmatpush2.xpose.msra.mxu0 0.0
    %4037 = vmatprep.subr.mxu0 0.0
    %4038 = vmatpush2.xpose.msra.mxu0 0.0
    %4039 = vmatprep.subr.mxu0 0.0
    %4040 = vmatpush2.xpose.msra.mxu0 0.0
    %4041 = vmatprep.subr.mxu0 0.0
    %4042 = vmatpush2.xpose.msra.mxu0 0.0
    %4043 = vmatprep.subr.mxu0 0.0
    %4044 = vmatpush2.xpose.msra.mxu0 0.0
    %4045 = vmatprep.subr.mxu0 0.0
    %4046 = vmatpush2.xpose.msra.mxu0 0.0
    %4047 = vmatprep.subr.mxu0 0.0
    %4048 = vmatpush2.xpose.msra.mxu0 0.0
    %4049 = vmatprep.subr.mxu0 0.0
    %4050 = vmatpush2.xpose.msra.mxu0 0.0
    %4051 = vmatprep.subr.mxu0 0.0
    %4052 = vmatpush2.xpose.msra.mxu0 0.0
    %4053 = vmatprep.subr.mxu0 0.0
    %4054 = vmatpush2.xpose.msra.mxu0 0.0
    %4055 = vmatprep.subr.mxu0 0.0
    %4056 = vmatpush2.xpose.msra.mxu0 0.0
    %4057 = vmatprep.subr.mxu0 0.0
    %4058 = vmatpush2.xpose.msra.mxu0 0.0
    %4059 = vmatprep.subr.mxu0 0.0
    %4060 = vmatpush2.xpose.msra.mxu0 0.0
    %4061 = vmatprep.subr.mxu0 0.0
    %4062 = vmatpush2.xpose.msra.mxu0 0.0
    %4063 = vmatprep.subr.mxu0 0.0
    %4064 = vmatpush2.xpose.msra.mxu0 0.0
    %4065 = vmatprep.subr.mxu0 0.0
    %4066 = vmatpush2.xpose.msra.mxu0 0.0
    %4067 = vmatprep.mubr.f32.mxu0 0.0
    %4068 = vmatmul.mubr.f32.gmra.mxu0 %v3767
    %v4069 = vpop.f32.mrf.mxu0
    %v4070 = vadd.f32 %v3764, %v4069
    %v4071 = vpop.f32.mrf.mxu0
    %4072 = vdwg.mxu0
    %v4074 = vsel %vm690, %v3515, 0
    %v4077 = vsel %vm690, %v3520, 0
    %4079 = vmatprep.subr.mxu0 0.0
    %4080 = vmatpush1.xpose.msra.mxu0 0.0
    %4081 = vmatprep.subr.mxu0 0.0
    %4082 = vmatpush1.xpose.msra.mxu0 0.0
    %4083 = vmatprep.subr.mxu0 0.0
    %4084 = vmatpush1.xpose.msra.mxu0 0.0
    %4085 = vmatprep.subr.mxu0 0.0
    %4086 = vmatpush1.xpose.msra.mxu0 0.0
    %4087 = vmatprep.subr.mxu0 0.0
    %4088 = vmatpush1.xpose.msra.mxu0 0.0
    %4089 = vmatprep.subr.mxu0 0.0
    %4090 = vmatpush1.xpose.msra.mxu0 0.0
    %4091 = vmatprep.subr.mxu0 0.0
    %4092 = vmatpush1.xpose.msra.mxu0 0.0
    %4093 = vmatprep.subr.mxu0 0.0
    %4094 = vmatpush1.xpose.msra.mxu0 0.0
    %4095 = vmatprep.subr.mxu0 0.0
    %4096 = vmatpush1.xpose.msra.mxu0 0.0
    %4097 = vmatprep.subr.mxu0 0.0
    %4098 = vmatpush1.xpose.msra.mxu0 0.0
    %4099 = vmatprep.subr.mxu0 0.0
    %4100 = vmatpush1.xpose.msra.mxu0 0.0
    %4101 = vmatprep.subr.mxu0 0.0
    %4102 = vmatpush1.xpose.msra.mxu0 0.0
    %4103 = vmatprep.subr.mxu0 0.0
    %4104 = vmatpush1.xpose.msra.mxu0 0.0
    %4105 = vmatprep.subr.mxu0 0.0
    %4106 = vmatpush1.xpose.msra.mxu0 0.0
    %4107 = vmatprep.subr.mxu0 0.0
    %4108 = vmatpush1.xpose.msra.mxu0 %v4077
    %4109 = vmatprep.subr.mxu0 0.0
    %4110 = vmatpush1.xpose.msra.mxu0 %v4074
    %4111 = vmatprep.subr.mxu0 0.0
    %4112 = vmatpush2.xpose.msra.mxu0 0.0
    %4113 = vmatprep.subr.mxu0 0.0
    %4114 = vmatpush2.xpose.msra.mxu0 0.0
    %4115 = vmatprep.subr.mxu0 0.0
    %4116 = vmatpush2.xpose.msra.mxu0 0.0
    %4117 = vmatprep.subr.mxu0 0.0
    %4118 = vmatpush2.xpose.msra.mxu0 0.0
    %4119 = vmatprep.subr.mxu0 0.0
    %4120 = vmatpush2.xpose.msra.mxu0 0.0
    %4121 = vmatprep.subr.mxu0 0.0
    %4122 = vmatpush2.xpose.msra.mxu0 0.0
    %4123 = vmatprep.subr.mxu0 0.0
    %4124 = vmatpush2.xpose.msra.mxu0 0.0
    %4125 = vmatprep.subr.mxu0 0.0
    %4126 = vmatpush2.xpose.msra.mxu0 0.0
    %4127 = vmatprep.subr.mxu0 0.0
    %4128 = vmatpush2.xpose.msra.mxu0 0.0
    %4129 = vmatprep.subr.mxu0 0.0
    %4130 = vmatpush2.xpose.msra.mxu0 0.0
    %4131 = vmatprep.subr.mxu0 0.0
    %4132 = vmatpush2.xpose.msra.mxu0 0.0
    %4133 = vmatprep.subr.mxu0 0.0
    %4134 = vmatpush2.xpose.msra.mxu0 0.0
    %4135 = vmatprep.subr.mxu0 0.0
    %4136 = vmatpush2.xpose.msra.mxu0 0.0
    %4137 = vmatprep.subr.mxu0 0.0
    %4138 = vmatpush2.xpose.msra.mxu0 0.0
    %4139 = vmatprep.subr.mxu0 0.0
    %4140 = vmatpush2.xpose.msra.mxu0 0.0
    %4141 = vmatprep.subr.mxu0 0.0
    %4142 = vmatpush2.xpose.msra.mxu0 0.0
    %4143 = vmatprep.mubr.f32.mxu0 0.0
    %4144 = vmatmul.mubr.f32.gmra.mxu0 %v3767
    %v4145 = vpop.f32.mrf.mxu0
    %v4146 = vadd.f32 %v3764, %v4145
    %v4147 = vpop.f32.mrf.mxu0
    %4148 = vdwg.mxu0
    %v4150 = vsel %vm690, %v3593, 0
    %v4153 = vsel %vm690, %v3598, 0
    %4155 = vmatprep.subr.mxu0 0.0
    %4156 = vmatpush1.xpose.msra.mxu0 0.0
    %4157 = vmatprep.subr.mxu0 0.0
    %4158 = vmatpush1.xpose.msra.mxu0 0.0
    %4159 = vmatprep.subr.mxu0 0.0
    %4160 = vmatpush1.xpose.msra.mxu0 0.0
    %4161 = vmatprep.subr.mxu0 0.0
    %4162 = vmatpush1.xpose.msra.mxu0 0.0
    %4163 = vmatprep.subr.mxu0 0.0
    %4164 = vmatpush1.xpose.msra.mxu0 0.0
    %4165 = vmatprep.subr.mxu0 0.0
    %4166 = vmatpush1.xpose.msra.mxu0 0.0
    %4167 = vmatprep.subr.mxu0 0.0
    %4168 = vmatpush1.xpose.msra.mxu0 0.0
    %4169 = vmatprep.subr.mxu0 0.0
    %4170 = vmatpush1.xpose.msra.mxu0 0.0
    %4171 = vmatprep.subr.mxu0 0.0
    %4172 = vmatpush1.xpose.msra.mxu0 0.0
    %4173 = vmatprep.subr.mxu0 0.0
    %4174 = vmatpush1.xpose.msra.mxu0 0.0
    %4175 = vmatprep.subr.mxu0 0.0
    %4176 = vmatpush1.xpose.msra.mxu0 0.0
    %4177 = vmatprep.subr.mxu0 0.0
    %4178 = vmatpush1.xpose.msra.mxu0 0.0
    %4179 = vmatprep.subr.mxu0 0.0
    %4180 = vmatpush1.xpose.msra.mxu0 0.0
    %4181 = vmatprep.subr.mxu0 0.0
    %4182 = vmatpush1.xpose.msra.mxu0 0.0
    %4183 = vmatprep.subr.mxu0 0.0
    %4184 = vmatpush1.xpose.msra.mxu0 %v4153
    %4185 = vmatprep.subr.mxu0 0.0
    %4186 = vmatpush1.xpose.msra.mxu0 %v4150
    %4187 = vmatprep.subr.mxu0 0.0
    %4188 = vmatpush2.xpose.msra.mxu0 0.0
    %4189 = vmatprep.subr.mxu0 0.0
    %4190 = vmatpush2.xpose.msra.mxu0 0.0
    %4191 = vmatprep.subr.mxu0 0.0
    %4192 = vmatpush2.xpose.msra.mxu0 0.0
    %4193 = vmatprep.subr.mxu0 0.0
    %4194 = vmatpush2.xpose.msra.mxu0 0.0
    %4195 = vmatprep.subr.mxu0 0.0
    %4196 = vmatpush2.xpose.msra.mxu0 0.0
    %4197 = vmatprep.subr.mxu0 0.0
    %4198 = vmatpush2.xpose.msra.mxu0 0.0
    %4199 = vmatprep.subr.mxu0 0.0
    %4200 = vmatpush2.xpose.msra.mxu0 0.0
    %4201 = vmatprep.subr.mxu0 0.0
    %4202 = vmatpush2.xpose.msra.mxu0 0.0
    %4203 = vmatprep.subr.mxu0 0.0
    %4204 = vmatpush2.xpose.msra.mxu0 0.0
    %4205 = vmatprep.subr.mxu0 0.0
    %4206 = vmatpush2.xpose.msra.mxu0 0.0
    %4207 = vmatprep.subr.mxu0 0.0
    %4208 = vmatpush2.xpose.msra.mxu0 0.0
    %4209 = vmatprep.subr.mxu0 0.0
    %4210 = vmatpush2.xpose.msra.mxu0 0.0
    %4211 = vmatprep.subr.mxu0 0.0
    %4212 = vmatpush2.xpose.msra.mxu0 0.0
    %4213 = vmatprep.subr.mxu0 0.0
    %4214 = vmatpush2.xpose.msra.mxu0 0.0
    %4215 = vmatprep.subr.mxu0 0.0
    %4216 = vmatpush2.xpose.msra.mxu0 0.0
    %4217 = vmatprep.subr.mxu0 0.0
    %4218 = vmatpush2.xpose.msra.mxu0 0.0
    %4219 = vmatprep.mubr.f32.mxu0 0.0
    %4220 = vmatmul.mubr.f32.gmra.mxu0 %v3767
    %v4221 = vpop.f32.mrf.mxu0
    %v4222 = vadd.f32 %v3764, %v4221
    %v4223 = vpop.f32.mrf.mxu0
    %4224 = vdwg.mxu0
    %v4226 = vsel %vm690, %v3671, 0
    %v4229 = vsel %vm690, %v3676, 0
    %4231 = vmatprep.subr.mxu0 0.0
    %4232 = vmatpush1.xpose.msra.mxu0 0.0
    %4233 = vmatprep.subr.mxu0 0.0
    %4234 = vmatpush1.xpose.msra.mxu0 0.0
    %4235 = vmatprep.subr.mxu0 0.0
    %4236 = vmatpush1.xpose.msra.mxu0 0.0
    %4237 = vmatprep.subr.mxu0 0.0
    %4238 = vmatpush1.xpose.msra.mxu0 0.0
    %4239 = vmatprep.subr.mxu0 0.0
    %4240 = vmatpush1.xpose.msra.mxu0 0.0
    %4241 = vmatprep.subr.mxu0 0.0
    %4242 = vmatpush1.xpose.msra.mxu0 0.0
    %4243 = vmatprep.subr.mxu0 0.0
    %4244 = vmatpush1.xpose.msra.mxu0 0.0
    %4245 = vmatprep.subr.mxu0 0.0
    %4246 = vmatpush1.xpose.msra.mxu0 0.0
    %4247 = vmatprep.subr.mxu0 0.0
    %4248 = vmatpush1.xpose.msra.mxu0 0.0
    %4249 = vmatprep.subr.mxu0 0.0
    %4250 = vmatpush1.xpose.msra.mxu0 0.0
    %4251 = vmatprep.subr.mxu0 0.0
    %4252 = vmatpush1.xpose.msra.mxu0 0.0
    %4253 = vmatprep.subr.mxu0 0.0
    %4254 = vmatpush1.xpose.msra.mxu0 0.0
    %4255 = vmatprep.subr.mxu0 0.0
    %4256 = vmatpush1.xpose.msra.mxu0 0.0
    %4257 = vmatprep.subr.mxu0 0.0
    %4258 = vmatpush1.xpose.msra.mxu0 0.0
    %4259 = vmatprep.subr.mxu0 0.0
    %4260 = vmatpush1.xpose.msra.mxu0 %v4229
    %4261 = vmatprep.subr.mxu0 0.0
    %4262 = vmatpush1.xpose.msra.mxu0 %v4226
    %4263 = vmatprep.subr.mxu0 0.0
    %4264 = vmatpush2.xpose.msra.mxu0 0.0
    %4265 = vmatprep.subr.mxu0 0.0
    %4266 = vmatpush2.xpose.msra.mxu0 0.0
    %4267 = vmatprep.subr.mxu0 0.0
    %4268 = vmatpush2.xpose.msra.mxu0 0.0
    %4269 = vmatprep.subr.mxu0 0.0
    %4270 = vmatpush2.xpose.msra.mxu0 0.0
    %4271 = vmatprep.subr.mxu0 0.0
    %4272 = vmatpush2.xpose.msra.mxu0 0.0
    %4273 = vmatprep.subr.mxu0 0.0
    %4274 = vmatpush2.xpose.msra.mxu0 0.0
    %4275 = vmatprep.subr.mxu0 0.0
    %4276 = vmatpush2.xpose.msra.mxu0 0.0
    %4277 = vmatprep.subr.mxu0 0.0
    %4278 = vmatpush2.xpose.msra.mxu0 0.0
    %4279 = vmatprep.subr.mxu0 0.0
    %4280 = vmatpush2.xpose.msra.mxu0 0.0
    %4281 = vmatprep.subr.mxu0 0.0
    %4282 = vmatpush2.xpose.msra.mxu0 0.0
    %4283 = vmatprep.subr.mxu0 0.0
    %4284 = vmatpush2.xpose.msra.mxu0 0.0
    %4285 = vmatprep.subr.mxu0 0.0
    %4286 = vmatpush2.xpose.msra.mxu0 0.0
    %4287 = vmatprep.subr.mxu0 0.0
    %4288 = vmatpush2.xpose.msra.mxu0 0.0
    %4289 = vmatprep.subr.mxu0 0.0
    %4290 = vmatpush2.xpose.msra.mxu0 0.0
    %4291 = vmatprep.subr.mxu0 0.0
    %4292 = vmatpush2.xpose.msra.mxu0 0.0
    %4293 = vmatprep.subr.mxu0 0.0
    %4294 = vmatpush2.xpose.msra.mxu0 0.0
    %4295 = vmatprep.mubr.f32.mxu0 0.0
    %4296 = vmatmul.mubr.f32.gmra.mxu0 %v3767
    %v4297 = vpop.f32.mrf.mxu0
    %v4298 = vadd.f32 %v3764, %v4297
    %v4299 = vpop.f32.mrf.mxu0
    %4300 = vdwg.mxu0
    %v4302 = vsel %vm690, %v3749, 0
    %v4305 = vsel %vm690, %v3754, 0
    %4307 = vmatprep.subr.mxu0 0.0
    %4308 = vmatpush1.xpose.msra.mxu0 0.0
    %4309 = vmatprep.subr.mxu0 0.0
    %4310 = vmatpush1.xpose.msra.mxu0 0.0
    %4311 = vmatprep.subr.mxu0 0.0
    %4312 = vmatpush1.xpose.msra.mxu0 0.0
    %4313 = vmatprep.subr.mxu0 0.0
    %4314 = vmatpush1.xpose.msra.mxu0 0.0
    %4315 = vmatprep.subr.mxu0 0.0
    %4316 = vmatpush1.xpose.msra.mxu0 0.0
    %4317 = vmatprep.subr.mxu0 0.0
    %4318 = vmatpush1.xpose.msra.mxu0 0.0
    %4319 = vmatprep.subr.mxu0 0.0
    %4320 = vmatpush1.xpose.msra.mxu0 0.0
    %4321 = vmatprep.subr.mxu0 0.0
    %4322 = vmatpush1.xpose.msra.mxu0 0.0
    %4323 = vmatprep.subr.mxu0 0.0
    %4324 = vmatpush1.xpose.msra.mxu0 0.0
    %4325 = vmatprep.subr.mxu0 0.0
    %4326 = vmatpush1.xpose.msra.mxu0 0.0
    %4327 = vmatprep.subr.mxu0 0.0
    %4328 = vmatpush1.xpose.msra.mxu0 0.0
    %4329 = vmatprep.subr.mxu0 0.0
    %4330 = vmatpush1.xpose.msra.mxu0 0.0
    %4331 = vmatprep.subr.mxu0 0.0
    %4332 = vmatpush1.xpose.msra.mxu0 0.0
    %4333 = vmatprep.subr.mxu0 0.0
    %4334 = vmatpush1.xpose.msra.mxu0 0.0
    %4335 = vmatprep.subr.mxu0 0.0
    %4336 = vmatpush1.xpose.msra.mxu0 %v4305
    %4337 = vmatprep.subr.mxu0 0.0
    %4338 = vmatpush1.xpose.msra.mxu0 %v4302
    %4339 = vmatprep.subr.mxu0 0.0
    %4340 = vmatpush2.xpose.msra.mxu0 0.0
    %4341 = vmatprep.subr.mxu0 0.0
    %4342 = vmatpush2.xpose.msra.mxu0 0.0
    %4343 = vmatprep.subr.mxu0 0.0
    %4344 = vmatpush2.xpose.msra.mxu0 0.0
    %4345 = vmatprep.subr.mxu0 0.0
    %4346 = vmatpush2.xpose.msra.mxu0 0.0
    %4347 = vmatprep.subr.mxu0 0.0
    %4348 = vmatpush2.xpose.msra.mxu0 0.0
    %4349 = vmatprep.subr.mxu0 0.0
    %4350 = vmatpush2.xpose.msra.mxu0 0.0
    %4351 = vmatprep.subr.mxu0 0.0
    %4352 = vmatpush2.xpose.msra.mxu0 0.0
    %4353 = vmatprep.subr.mxu0 0.0
    %4354 = vmatpush2.xpose.msra.mxu0 0.0
    %4355 = vmatprep.subr.mxu0 0.0
    %4356 = vmatpush2.xpose.msra.mxu0 0.0
    %4357 = vmatprep.subr.mxu0 0.0
    %4358 = vmatpush2.xpose.msra.mxu0 0.0
    %4359 = vmatprep.subr.mxu0 0.0
    %4360 = vmatpush2.xpose.msra.mxu0 0.0
    %4361 = vmatprep.subr.mxu0 0.0
    %4362 = vmatpush2.xpose.msra.mxu0 0.0
    %4363 = vmatprep.subr.mxu0 0.0
    %4364 = vmatpush2.xpose.msra.mxu0 0.0
    %4365 = vmatprep.subr.mxu0 0.0
    %4366 = vmatpush2.xpose.msra.mxu0 0.0
    %4367 = vmatprep.subr.mxu0 0.0
    %4368 = vmatpush2.xpose.msra.mxu0 0.0
    %4369 = vmatprep.subr.mxu0 0.0
    %4370 = vmatpush2.xpose.msra.mxu0 0.0
    %4371 = vmatprep.mubr.f32.mxu0 0.0
    %4372 = vmatmul.mubr.f32.gmra.mxu0 %v3767
    %v4373 = vpop.f32.mrf.mxu0
    %v4374 = vadd.f32 %v3764, %v4373
    %v4375 = vpop.f32.mrf.mxu0
    %4376 = vdwg.mxu0
    %4377 = vst.msk [vmem:[#allocation2] sm:$0xff] %vm1302, %v3842
    %4378 = vst.msk [vmem:[#allocation2 + $0x8] sm:$0xff] %vm1302, %v3918
    %4379 = vst.msk [vmem:[#allocation2 + $0x10] sm:$0xff] %vm1302, %v3994
    %4380 = vst.msk [vmem:[#allocation2 + $0x18] sm:$0xff] %vm1302, %v4070
    %4381 = vst.msk [vmem:[#allocation2 + $0x20] sm:$0xff] %vm1302, %v4146
    %4382 = vst.msk [vmem:[#allocation2 + $0x28] sm:$0xff] %vm1302, %v4222
    %4383 = vst.msk [vmem:[#allocation2 + $0x30] sm:$0xff] %vm1302, %v4298
    %4384 = vst.msk [vmem:[#allocation2 + $0x38] sm:$0xff] %vm1302, %v4374
    %v4385 = vld [vmem:[#allocation2] sm:$0x1]
    %v4386 = vld [vmem:[#allocation2 + $0x8] sm:$0x1]
    %v4387 = vld [vmem:[#allocation2 + $0x10] sm:$0x1]
    %v4388 = vld [vmem:[#allocation2 + $0x18] sm:$0x1]
    %v4389 = vld [vmem:[#allocation2 + $0x20] sm:$0x1]
    %v4390 = vld [vmem:[#allocation2 + $0x28] sm:$0x1]
    %v4391 = vld [vmem:[#allocation2 + $0x30] sm:$0x1]
    %v4392 = vld [vmem:[#allocation2 + $0x38] sm:$0x1]
    %v4401 = vrot.slane %v4386, 7
    %v4402 = vsel %vm1328, %v4401, %v4385
    %v4403 = vrot.slane %v4387, 6
    %v4404 = vsel %vm1331, %v4403, %v4402
    %v4405 = vrot.slane %v4388, 5
    %v4406 = vsel %vm1334, %v4405, %v4404
    %v4407 = vrot.slane %v4389, 4
    %v4408 = vsel %vm1337, %v4407, %v4406
    %v4409 = vrot.slane %v4390, 3
    %v4410 = vsel %vm1340, %v4409, %v4408
    %v4411 = vrot.slane %v4391, 2
    %v4412 = vsel %vm1343, %v4411, %v4410
    %v4413 = vrot.slane %v4392, 1
    %v4414 = vsel %vm1346, %v4413, %v4412
    %4416 = vst.msk [vmem:[#allocation3 + $0x10] sm:$0xff] %vm1302, %v4414
    %v4417 = vld [vmem:[#allocation2 + $0x1] sm:$0x1]
    %v4418 = vld [vmem:[#allocation2 + $0x9] sm:$0x1]
    %v4419 = vld [vmem:[#allocation2 + $0x11] sm:$0x1]
    %v4420 = vld [vmem:[#allocation2 + $0x19] sm:$0x1]
    %v4421 = vld [vmem:[#allocation2 + $0x21] sm:$0x1]
    %v4422 = vld [vmem:[#allocation2 + $0x29] sm:$0x1]
    %v4423 = vld [vmem:[#allocation2 + $0x31] sm:$0x1]
    %v4424 = vld [vmem:[#allocation2 + $0x39] sm:$0x1]
    %v4433 = vrot.slane %v4418, 7
    %v4434 = vsel %vm1328, %v4433, %v4417
    %v4435 = vrot.slane %v4419, 6
    %v4436 = vsel %vm1331, %v4435, %v4434
    %v4437 = vrot.slane %v4420, 5
    %v4438 = vsel %vm1334, %v4437, %v4436
    %v4439 = vrot.slane %v4421, 4
    %v4440 = vsel %vm1337, %v4439, %v4438
    %v4441 = vrot.slane %v4422, 3
    %v4442 = vsel %vm1340, %v4441, %v4440
    %v4443 = vrot.slane %v4423, 2
    %v4444 = vsel %vm1343, %v4443, %v4442
    %v4445 = vrot.slane %v4424, 1
    %v4446 = vsel %vm1346, %v4445, %v4444
    %4447 = vrot.lane.b32.xlu0 %v4446, 16
    %v4448 = vpop.permute.xlu0 %4447
    %4450 = vst.msk [vmem:[#allocation3 + $0x10] sm:$0xff] %vm1383, %v4448
    %v4451 = vld [vmem:[#allocation2 + $0x2] sm:$0x1]
    %v4452 = vld [vmem:[#allocation2 + $0xa] sm:$0x1]
    %v4453 = vld [vmem:[#allocation2 + $0x12] sm:$0x1]
    %v4454 = vld [vmem:[#allocation2 + $0x1a] sm:$0x1]
    %v4455 = vld [vmem:[#allocation2 + $0x22] sm:$0x1]
    %v4456 = vld [vmem:[#allocation2 + $0x2a] sm:$0x1]
    %v4457 = vld [vmem:[#allocation2 + $0x32] sm:$0x1]
    %v4458 = vld [vmem:[#allocation2 + $0x3a] sm:$0x1]
    %v4467 = vrot.slane %v4452, 7
    %v4468 = vsel %vm1328, %v4467, %v4451
    %v4469 = vrot.slane %v4453, 6
    %v4470 = vsel %vm1331, %v4469, %v4468
    %v4471 = vrot.slane %v4454, 5
    %v4472 = vsel %vm1334, %v4471, %v4470
    %v4473 = vrot.slane %v4455, 4
    %v4474 = vsel %vm1337, %v4473, %v4472
    %v4475 = vrot.slane %v4456, 3
    %v4476 = vsel %vm1340, %v4475, %v4474
    %v4477 = vrot.slane %v4457, 2
    %v4478 = vsel %vm1343, %v4477, %v4476
    %v4479 = vrot.slane %v4458, 1
    %v4480 = vsel %vm1346, %v4479, %v4478
    %4481 = vrot.lane.b32.xlu0 %v4480, 32
    %v4482 = vpop.permute.xlu0 %4481
    %4484 = vst.msk [vmem:[#allocation3 + $0x10] sm:$0xff] %vm1418, %v4482
    %v4485 = vld [vmem:[#allocation2 + $0x3] sm:$0x1]
    %v4486 = vld [vmem:[#allocation2 + $0xb] sm:$0x1]
    %v4487 = vld [vmem:[#allocation2 + $0x13] sm:$0x1]
    %v4488 = vld [vmem:[#allocation2 + $0x1b] sm:$0x1]
    %v4489 = vld [vmem:[#allocation2 + $0x23] sm:$0x1]
    %v4490 = vld [vmem:[#allocation2 + $0x2b] sm:$0x1]
    %v4491 = vld [vmem:[#allocation2 + $0x33] sm:$0x1]
    %v4492 = vld [vmem:[#allocation2 + $0x3b] sm:$0x1]
    %v4501 = vrot.slane %v4486, 7
    %v4502 = vsel %vm1328, %v4501, %v4485
    %v4503 = vrot.slane %v4487, 6
    %v4504 = vsel %vm1331, %v4503, %v4502
    %v4505 = vrot.slane %v4488, 5
    %v4506 = vsel %vm1334, %v4505, %v4504
    %v4507 = vrot.slane %v4489, 4
    %v4508 = vsel %vm1337, %v4507, %v4506
    %v4509 = vrot.slane %v4490, 3
    %v4510 = vsel %vm1340, %v4509, %v4508
    %v4511 = vrot.slane %v4491, 2
    %v4512 = vsel %vm1343, %v4511, %v4510
    %v4513 = vrot.slane %v4492, 1
    %v4514 = vsel %vm1346, %v4513, %v4512
    %4515 = vrot.lane.b32.xlu0 %v4514, 48
    %v4516 = vpop.permute.xlu0 %4515
    %4518 = vst.msk [vmem:[#allocation3 + $0x10] sm:$0xff] %vm1453, %v4516
    %v4519 = vld [vmem:[#allocation2 + $0x4] sm:$0x1]
    %v4520 = vld [vmem:[#allocation2 + $0xc] sm:$0x1]
    %v4521 = vld [vmem:[#allocation2 + $0x14] sm:$0x1]
    %v4522 = vld [vmem:[#allocation2 + $0x1c] sm:$0x1]
    %v4523 = vld [vmem:[#allocation2 + $0x24] sm:$0x1]
    %v4524 = vld [vmem:[#allocation2 + $0x2c] sm:$0x1]
    %v4525 = vld [vmem:[#allocation2 + $0x34] sm:$0x1]
    %v4526 = vld [vmem:[#allocation2 + $0x3c] sm:$0x1]
    %v4535 = vrot.slane %v4520, 7
    %v4536 = vsel %vm1328, %v4535, %v4519
    %v4537 = vrot.slane %v4521, 6
    %v4538 = vsel %vm1331, %v4537, %v4536
    %v4539 = vrot.slane %v4522, 5
    %v4540 = vsel %vm1334, %v4539, %v4538
    %v4541 = vrot.slane %v4523, 4
    %v4542 = vsel %vm1337, %v4541, %v4540
    %v4543 = vrot.slane %v4524, 3
    %v4544 = vsel %vm1340, %v4543, %v4542
    %v4545 = vrot.slane %v4525, 2
    %v4546 = vsel %vm1343, %v4545, %v4544
    %v4547 = vrot.slane %v4526, 1
    %v4548 = vsel %vm1346, %v4547, %v4546
    %4549 = vrot.lane.b32.xlu0 %v4548, 64
    %v4550 = vpop.permute.xlu0 %4549
    %4552 = vst.msk [vmem:[#allocation3 + $0x10] sm:$0xff] %vm1488, %v4550
    %v4553 = vld [vmem:[#allocation2 + $0x5] sm:$0x1]
    %v4554 = vld [vmem:[#allocation2 + $0xd] sm:$0x1]
    %v4555 = vld [vmem:[#allocation2 + $0x15] sm:$0x1]
    %v4556 = vld [vmem:[#allocation2 + $0x1d] sm:$0x1]
    %v4557 = vld [vmem:[#allocation2 + $0x25] sm:$0x1]
    %v4558 = vld [vmem:[#allocation2 + $0x2d] sm:$0x1]
    %v4559 = vld [vmem:[#allocation2 + $0x35] sm:$0x1]
    %v4560 = vld [vmem:[#allocation2 + $0x3d] sm:$0x1]
    %v4569 = vrot.slane %v4554, 7
    %v4570 = vsel %vm1328, %v4569, %v4553
    %v4571 = vrot.slane %v4555, 6
    %v4572 = vsel %vm1331, %v4571, %v4570
    %v4573 = vrot.slane %v4556, 5
    %v4574 = vsel %vm1334, %v4573, %v4572
    %v4575 = vrot.slane %v4557, 4
    %v4576 = vsel %vm1337, %v4575, %v4574
    %v4577 = vrot.slane %v4558, 3
    %v4578 = vsel %vm1340, %v4577, %v4576
    %v4579 = vrot.slane %v4559, 2
    %v4580 = vsel %vm1343, %v4579, %v4578
    %v4581 = vrot.slane %v4560, 1
    %v4582 = vsel %vm1346, %v4581, %v4580
    %4583 = vrot.lane.b32.xlu0 %v4582, 80
    %v4584 = vpop.permute.xlu0 %4583
    %4586 = vst.msk [vmem:[#allocation3 + $0x10] sm:$0xff] %vm1523, %v4584
    %v4587 = vld [vmem:[#allocation2 + $0x6] sm:$0x1]
    %v4588 = vld [vmem:[#allocation2 + $0xe] sm:$0x1]
    %v4589 = vld [vmem:[#allocation2 + $0x16] sm:$0x1]
    %v4590 = vld [vmem:[#allocation2 + $0x1e] sm:$0x1]
    %v4591 = vld [vmem:[#allocation2 + $0x26] sm:$0x1]
    %v4592 = vld [vmem:[#allocation2 + $0x2e] sm:$0x1]
    %v4593 = vld [vmem:[#allocation2 + $0x36] sm:$0x1]
    %v4594 = vld [vmem:[#allocation2 + $0x3e] sm:$0x1]
    %v4603 = vrot.slane %v4588, 7
    %v4604 = vsel %vm1328, %v4603, %v4587
    %v4605 = vrot.slane %v4589, 6
    %v4606 = vsel %vm1331, %v4605, %v4604
    %v4607 = vrot.slane %v4590, 5
    %v4608 = vsel %vm1334, %v4607, %v4606
    %v4609 = vrot.slane %v4591, 4
    %v4610 = vsel %vm1337, %v4609, %v4608
    %v4611 = vrot.slane %v4592, 3
    %v4612 = vsel %vm1340, %v4611, %v4610
    %v4613 = vrot.slane %v4593, 2
    %v4614 = vsel %vm1343, %v4613, %v4612
    %v4615 = vrot.slane %v4594, 1
    %v4616 = vsel %vm1346, %v4615, %v4614
    %4617 = vrot.lane.b32.xlu0 %v4616, 96
    %v4618 = vpop.permute.xlu0 %4617
    %4620 = vst.msk [vmem:[#allocation3 + $0x10] sm:$0xff] %vm1558, %v4618
    %v4621 = vld [vmem:[#allocation2 + $0x7] sm:$0x1]
    %v4622 = vld [vmem:[#allocation2 + $0xf] sm:$0x1]
    %v4623 = vld [vmem:[#allocation2 + $0x17] sm:$0x1]
    %v4624 = vld [vmem:[#allocation2 + $0x1f] sm:$0x1]
    %v4625 = vld [vmem:[#allocation2 + $0x27] sm:$0x1]
    %v4626 = vld [vmem:[#allocation2 + $0x2f] sm:$0x1]
    %v4627 = vld [vmem:[#allocation2 + $0x37] sm:$0x1]
    %v4628 = vld [vmem:[#allocation2 + $0x3f] sm:$0x1]
    %v4637 = vrot.slane %v4622, 7
    %v4638 = vsel %vm1328, %v4637, %v4621
    %v4639 = vrot.slane %v4623, 6
    %v4640 = vsel %vm1331, %v4639, %v4638
    %v4641 = vrot.slane %v4624, 5
    %v4642 = vsel %vm1334, %v4641, %v4640
    %v4643 = vrot.slane %v4625, 4
    %v4644 = vsel %vm1337, %v4643, %v4642
    %v4645 = vrot.slane %v4626, 3
    %v4646 = vsel %vm1340, %v4645, %v4644
    %v4647 = vrot.slane %v4627, 2
    %v4648 = vsel %vm1343, %v4647, %v4646
    %v4649 = vrot.slane %v4628, 1
    %v4650 = vsel %vm1346, %v4649, %v4648
    %4651 = vrot.lane.b32.xlu0 %v4650, 112
    %v4652 = vpop.permute.xlu0 %4651
    %4654 = vst.msk [vmem:[#allocation3 + $0x10] sm:$0xff] %vm1593, %v4652
    %v4655 = vld [vmem:[%s3] sm:$0xff]
    %v4656 = vld [vmem:[%s3 + $0x8] sm:$0xff]
    %v4657 = vld [vmem:[%s3 + $0x10] sm:$0xff]
    %v4658 = vld [vmem:[%s3 + $0x18] sm:$0xff]
    %v4659 = vld [vmem:[%s3 + $0x20] sm:$0xff]
    %v4660 = vld [vmem:[%s3 + $0x28] sm:$0xff]
    %v4661 = vld [vmem:[%s3 + $0x30] sm:$0xff]
    %v4662 = vld [vmem:[%s3 + $0x38] sm:$0xff]
    %v4664 = vsel %vm52, %v4655, 0
    %4666 = vmatprep.subr.mxu0 0.0
    %4667 = vmatpush1.xpose.msra.mxu0 0.0
    %4668 = vmatprep.subr.mxu0 0.0
    %4669 = vmatpush1.xpose.msra.mxu0 0.0
    %4670 = vmatprep.subr.mxu0 0.0
    %4671 = vmatpush1.xpose.msra.mxu0 0.0
    %4672 = vmatprep.subr.mxu0 0.0
    %4673 = vmatpush1.xpose.msra.mxu0 0.0
    %4674 = vmatprep.subr.mxu0 0.0
    %4675 = vmatpush1.xpose.msra.mxu0 0.0
    %4676 = vmatprep.subr.mxu0 0.0
    %4677 = vmatpush1.xpose.msra.mxu0 0.0
    %4678 = vmatprep.subr.mxu0 0.0
    %4679 = vmatpush1.xpose.msra.mxu0 0.0
    %4680 = vmatprep.subr.mxu0 0.0
    %4681 = vmatpush1.xpose.msra.mxu0 0.0
    %4682 = vmatprep.subr.mxu0 0.0
    %4683 = vmatpush1.xpose.msra.mxu0 0.0
    %4684 = vmatprep.subr.mxu0 0.0
    %4685 = vmatpush1.xpose.msra.mxu0 0.0
    %4686 = vmatprep.subr.mxu0 0.0
    %4687 = vmatpush1.xpose.msra.mxu0 0.0
    %4688 = vmatprep.subr.mxu0 0.0
    %4689 = vmatpush1.xpose.msra.mxu0 0.0
    %4690 = vmatprep.subr.mxu0 0.0
    %4691 = vmatpush1.xpose.msra.mxu0 0.0
    %4692 = vmatprep.subr.mxu0 0.0
    %4693 = vmatpush1.xpose.msra.mxu0 0.0
    %4694 = vmatprep.subr.mxu0 0.0
    %4695 = vmatpush1.xpose.msra.mxu0 0.0
    %4696 = vmatprep.subr.mxu0 0.0
    %4697 = vmatpush1.xpose.msra.mxu0 %v4664
    %4698 = vmatprep.subr.mxu0 0.0
    %4699 = vmatpush2.xpose.msra.mxu0 0.0
    %4700 = vmatprep.subr.mxu0 0.0
    %4701 = vmatpush2.xpose.msra.mxu0 0.0
    %4702 = vmatprep.subr.mxu0 0.0
    %4703 = vmatpush2.xpose.msra.mxu0 0.0
    %4704 = vmatprep.subr.mxu0 0.0
    %4705 = vmatpush2.xpose.msra.mxu0 0.0
    %4706 = vmatprep.subr.mxu0 0.0
    %4707 = vmatpush2.xpose.msra.mxu0 0.0
    %4708 = vmatprep.subr.mxu0 0.0
    %4709 = vmatpush2.xpose.msra.mxu0 0.0
    %4710 = vmatprep.subr.mxu0 0.0
    %4711 = vmatpush2.xpose.msra.mxu0 0.0
    %4712 = vmatprep.subr.mxu0 0.0
    %4713 = vmatpush2.xpose.msra.mxu0 0.0
    %4714 = vmatprep.subr.mxu0 0.0
    %4715 = vmatpush2.xpose.msra.mxu0 0.0
    %4716 = vmatprep.subr.mxu0 0.0
    %4717 = vmatpush2.xpose.msra.mxu0 0.0
    %4718 = vmatprep.subr.mxu0 0.0
    %4719 = vmatpush2.xpose.msra.mxu0 0.0
    %4720 = vmatprep.subr.mxu0 0.0
    %4721 = vmatpush2.xpose.msra.mxu0 0.0
    %4722 = vmatprep.subr.mxu0 0.0
    %4723 = vmatpush2.xpose.msra.mxu0 0.0
    %4724 = vmatprep.subr.mxu0 0.0
    %4725 = vmatpush2.xpose.msra.mxu0 0.0
    %4726 = vmatprep.subr.mxu0 0.0
    %4727 = vmatpush2.xpose.msra.mxu0 0.0
    %4728 = vmatprep.subr.mxu0 0.0
    %4729 = vmatpush2.xpose.msra.mxu0 0.0
    %4730 = vmatprep.mubr.f32.mxu0 0.0
    %4731 = vmatmul.mubr.f32.gmra.mxu0 %v54
    %v4732 = vpop.f32.mrf.mxu0
    %v4733 = vadd.f32 0.0, %v4732
    %v4734 = vpop.f32.mrf.mxu0
    %4735 = vmatprep.mubr.f32.mxu0 0.0
    %4736 = vmatmul.mubr.f32.gmra.mxu0 %v57
    %v4737 = vpop.f32.mrf.mxu0
    %v4738 = vadd.f32 0.0, %v4737
    %v4739 = vpop.f32.mrf.mxu0
    %4740 = vdwg.mxu0
    %v4742 = vsel %vm52, %v4656, 0
    %4744 = vmatprep.subr.mxu0 0.0
    %4745 = vmatpush1.xpose.msra.mxu0 0.0
    %4746 = vmatprep.subr.mxu0 0.0
    %4747 = vmatpush1.xpose.msra.mxu0 0.0
    %4748 = vmatprep.subr.mxu0 0.0
    %4749 = vmatpush1.xpose.msra.mxu0 0.0
    %4750 = vmatprep.subr.mxu0 0.0
    %4751 = vmatpush1.xpose.msra.mxu0 0.0
    %4752 = vmatprep.subr.mxu0 0.0
    %4753 = vmatpush1.xpose.msra.mxu0 0.0
    %4754 = vmatprep.subr.mxu0 0.0
    %4755 = vmatpush1.xpose.msra.mxu0 0.0
    %4756 = vmatprep.subr.mxu0 0.0
    %4757 = vmatpush1.xpose.msra.mxu0 0.0
    %4758 = vmatprep.subr.mxu0 0.0
    %4759 = vmatpush1.xpose.msra.mxu0 0.0
    %4760 = vmatprep.subr.mxu0 0.0
    %4761 = vmatpush1.xpose.msra.mxu0 0.0
    %4762 = vmatprep.subr.mxu0 0.0
    %4763 = vmatpush1.xpose.msra.mxu0 0.0
    %4764 = vmatprep.subr.mxu0 0.0
    %4765 = vmatpush1.xpose.msra.mxu0 0.0
    %4766 = vmatprep.subr.mxu0 0.0
    %4767 = vmatpush1.xpose.msra.mxu0 0.0
    %4768 = vmatprep.subr.mxu0 0.0
    %4769 = vmatpush1.xpose.msra.mxu0 0.0
    %4770 = vmatprep.subr.mxu0 0.0
    %4771 = vmatpush1.xpose.msra.mxu0 0.0
    %4772 = vmatprep.subr.mxu0 0.0
    %4773 = vmatpush1.xpose.msra.mxu0 0.0
    %4774 = vmatprep.subr.mxu0 0.0
    %4775 = vmatpush1.xpose.msra.mxu0 %v4742
    %4776 = vmatprep.subr.mxu0 0.0
    %4777 = vmatpush2.xpose.msra.mxu0 0.0
    %4778 = vmatprep.subr.mxu0 0.0
    %4779 = vmatpush2.xpose.msra.mxu0 0.0
    %4780 = vmatprep.subr.mxu0 0.0
    %4781 = vmatpush2.xpose.msra.mxu0 0.0
    %4782 = vmatprep.subr.mxu0 0.0
    %4783 = vmatpush2.xpose.msra.mxu0 0.0
    %4784 = vmatprep.subr.mxu0 0.0
    %4785 = vmatpush2.xpose.msra.mxu0 0.0
    %4786 = vmatprep.subr.mxu0 0.0
    %4787 = vmatpush2.xpose.msra.mxu0 0.0
    %4788 = vmatprep.subr.mxu0 0.0
    %4789 = vmatpush2.xpose.msra.mxu0 0.0
    %4790 = vmatprep.subr.mxu0 0.0
    %4791 = vmatpush2.xpose.msra.mxu0 0.0
    %4792 = vmatprep.subr.mxu0 0.0
    %4793 = vmatpush2.xpose.msra.mxu0 0.0
    %4794 = vmatprep.subr.mxu0 0.0
    %4795 = vmatpush2.xpose.msra.mxu0 0.0
    %4796 = vmatprep.subr.mxu0 0.0
    %4797 = vmatpush2.xpose.msra.mxu0 0.0
    %4798 = vmatprep.subr.mxu0 0.0
    %4799 = vmatpush2.xpose.msra.mxu0 0.0
    %4800 = vmatprep.subr.mxu0 0.0
    %4801 = vmatpush2.xpose.msra.mxu0 0.0
    %4802 = vmatprep.subr.mxu0 0.0
    %4803 = vmatpush2.xpose.msra.mxu0 0.0
    %4804 = vmatprep.subr.mxu0 0.0
    %4805 = vmatpush2.xpose.msra.mxu0 0.0
    %4806 = vmatprep.subr.mxu0 0.0
    %4807 = vmatpush2.xpose.msra.mxu0 0.0
    %4808 = vmatprep.mubr.f32.mxu0 0.0
    %4809 = vmatmul.mubr.f32.gmra.mxu0 %v54
    %v4810 = vpop.f32.mrf.mxu0
    %v4811 = vadd.f32 0.0, %v4810
    %v4812 = vpop.f32.mrf.mxu0
    %4813 = vmatprep.mubr.f32.mxu0 0.0
    %4814 = vmatmul.mubr.f32.gmra.mxu0 %v57
    %v4815 = vpop.f32.mrf.mxu0
    %v4816 = vadd.f32 0.0, %v4815
    %v4817 = vpop.f32.mrf.mxu0
    %4818 = vdwg.mxu0
    %v4820 = vsel %vm52, %v4657, 0
    %4822 = vmatprep.subr.mxu0 0.0
    %4823 = vmatpush1.xpose.msra.mxu0 0.0
    %4824 = vmatprep.subr.mxu0 0.0
    %4825 = vmatpush1.xpose.msra.mxu0 0.0
    %4826 = vmatprep.subr.mxu0 0.0
    %4827 = vmatpush1.xpose.msra.mxu0 0.0
    %4828 = vmatprep.subr.mxu0 0.0
    %4829 = vmatpush1.xpose.msra.mxu0 0.0
    %4830 = vmatprep.subr.mxu0 0.0
    %4831 = vmatpush1.xpose.msra.mxu0 0.0
    %4832 = vmatprep.subr.mxu0 0.0
    %4833 = vmatpush1.xpose.msra.mxu0 0.0
    %4834 = vmatprep.subr.mxu0 0.0
    %4835 = vmatpush1.xpose.msra.mxu0 0.0
    %4836 = vmatprep.subr.mxu0 0.0
    %4837 = vmatpush1.xpose.msra.mxu0 0.0
    %4838 = vmatprep.subr.mxu0 0.0
    %4839 = vmatpush1.xpose.msra.mxu0 0.0
    %4840 = vmatprep.subr.mxu0 0.0
    %4841 = vmatpush1.xpose.msra.mxu0 0.0
    %4842 = vmatprep.subr.mxu0 0.0
    %4843 = vmatpush1.xpose.msra.mxu0 0.0
    %4844 = vmatprep.subr.mxu0 0.0
    %4845 = vmatpush1.xpose.msra.mxu0 0.0
    %4846 = vmatprep.subr.mxu0 0.0
    %4847 = vmatpush1.xpose.msra.mxu0 0.0
    %4848 = vmatprep.subr.mxu0 0.0
    %4849 = vmatpush1.xpose.msra.mxu0 0.0
    %4850 = vmatprep.subr.mxu0 0.0
    %4851 = vmatpush1.xpose.msra.mxu0 0.0
    %4852 = vmatprep.subr.mxu0 0.0
    %4853 = vmatpush1.xpose.msra.mxu0 %v4820
    %4854 = vmatprep.subr.mxu0 0.0
    %4855 = vmatpush2.xpose.msra.mxu0 0.0
    %4856 = vmatprep.subr.mxu0 0.0
    %4857 = vmatpush2.xpose.msra.mxu0 0.0
    %4858 = vmatprep.subr.mxu0 0.0
    %4859 = vmatpush2.xpose.msra.mxu0 0.0
    %4860 = vmatprep.subr.mxu0 0.0
    %4861 = vmatpush2.xpose.msra.mxu0 0.0
    %4862 = vmatprep.subr.mxu0 0.0
    %4863 = vmatpush2.xpose.msra.mxu0 0.0
    %4864 = vmatprep.subr.mxu0 0.0
    %4865 = vmatpush2.xpose.msra.mxu0 0.0
    %4866 = vmatprep.subr.mxu0 0.0
    %4867 = vmatpush2.xpose.msra.mxu0 0.0
    %4868 = vmatprep.subr.mxu0 0.0
    %4869 = vmatpush2.xpose.msra.mxu0 0.0
    %4870 = vmatprep.subr.mxu0 0.0
    %4871 = vmatpush2.xpose.msra.mxu0 0.0
    %4872 = vmatprep.subr.mxu0 0.0
    %4873 = vmatpush2.xpose.msra.mxu0 0.0
    %4874 = vmatprep.subr.mxu0 0.0
    %4875 = vmatpush2.xpose.msra.mxu0 0.0
    %4876 = vmatprep.subr.mxu0 0.0
    %4877 = vmatpush2.xpose.msra.mxu0 0.0
    %4878 = vmatprep.subr.mxu0 0.0
    %4879 = vmatpush2.xpose.msra.mxu0 0.0
    %4880 = vmatprep.subr.mxu0 0.0
    %4881 = vmatpush2.xpose.msra.mxu0 0.0
    %4882 = vmatprep.subr.mxu0 0.0
    %4883 = vmatpush2.xpose.msra.mxu0 0.0
    %4884 = vmatprep.subr.mxu0 0.0
    %4885 = vmatpush2.xpose.msra.mxu0 0.0
    %4886 = vmatprep.mubr.f32.mxu0 0.0
    %4887 = vmatmul.mubr.f32.gmra.mxu0 %v54
    %v4888 = vpop.f32.mrf.mxu0
    %v4889 = vadd.f32 0.0, %v4888
    %v4890 = vpop.f32.mrf.mxu0
    %4891 = vmatprep.mubr.f32.mxu0 0.0
    %4892 = vmatmul.mubr.f32.gmra.mxu0 %v57
    %v4893 = vpop.f32.mrf.mxu0
    %v4894 = vadd.f32 0.0, %v4893
    %v4895 = vpop.f32.mrf.mxu0
    %4896 = vdwg.mxu0
    %v4898 = vsel %vm52, %v4658, 0
    %4900 = vmatprep.subr.mxu0 0.0
    %4901 = vmatpush1.xpose.msra.mxu0 0.0
    %4902 = vmatprep.subr.mxu0 0.0
    %4903 = vmatpush1.xpose.msra.mxu0 0.0
    %4904 = vmatprep.subr.mxu0 0.0
    %4905 = vmatpush1.xpose.msra.mxu0 0.0
    %4906 = vmatprep.subr.mxu0 0.0
    %4907 = vmatpush1.xpose.msra.mxu0 0.0
    %4908 = vmatprep.subr.mxu0 0.0
    %4909 = vmatpush1.xpose.msra.mxu0 0.0
    %4910 = vmatprep.subr.mxu0 0.0
    %4911 = vmatpush1.xpose.msra.mxu0 0.0
    %4912 = vmatprep.subr.mxu0 0.0
    %4913 = vmatpush1.xpose.msra.mxu0 0.0
    %4914 = vmatprep.subr.mxu0 0.0
    %4915 = vmatpush1.xpose.msra.mxu0 0.0
    %4916 = vmatprep.subr.mxu0 0.0
    %4917 = vmatpush1.xpose.msra.mxu0 0.0
    %4918 = vmatprep.subr.mxu0 0.0
    %4919 = vmatpush1.xpose.msra.mxu0 0.0
    %4920 = vmatprep.subr.mxu0 0.0
    %4921 = vmatpush1.xpose.msra.mxu0 0.0
    %4922 = vmatprep.subr.mxu0 0.0
    %4923 = vmatpush1.xpose.msra.mxu0 0.0
    %4924 = vmatprep.subr.mxu0 0.0
    %4925 = vmatpush1.xpose.msra.mxu0 0.0
    %4926 = vmatprep.subr.mxu0 0.0
    %4927 = vmatpush1.xpose.msra.mxu0 0.0
    %4928 = vmatprep.subr.mxu0 0.0
    %4929 = vmatpush1.xpose.msra.mxu0 0.0
    %4930 = vmatprep.subr.mxu0 0.0
    %4931 = vmatpush1.xpose.msra.mxu0 %v4898
    %4932 = vmatprep.subr.mxu0 0.0
    %4933 = vmatpush2.xpose.msra.mxu0 0.0
    %4934 = vmatprep.subr.mxu0 0.0
    %4935 = vmatpush2.xpose.msra.mxu0 0.0
    %4936 = vmatprep.subr.mxu0 0.0
    %4937 = vmatpush2.xpose.msra.mxu0 0.0
    %4938 = vmatprep.subr.mxu0 0.0
    %4939 = vmatpush2.xpose.msra.mxu0 0.0
    %4940 = vmatprep.subr.mxu0 0.0
    %4941 = vmatpush2.xpose.msra.mxu0 0.0
    %4942 = vmatprep.subr.mxu0 0.0
    %4943 = vmatpush2.xpose.msra.mxu0 0.0
    %4944 = vmatprep.subr.mxu0 0.0
    %4945 = vmatpush2.xpose.msra.mxu0 0.0
    %4946 = vmatprep.subr.mxu0 0.0
    %4947 = vmatpush2.xpose.msra.mxu0 0.0
    %4948 = vmatprep.subr.mxu0 0.0
    %4949 = vmatpush2.xpose.msra.mxu0 0.0
    %4950 = vmatprep.subr.mxu0 0.0
    %4951 = vmatpush2.xpose.msra.mxu0 0.0
    %4952 = vmatprep.subr.mxu0 0.0
    %4953 = vmatpush2.xpose.msra.mxu0 0.0
    %4954 = vmatprep.subr.mxu0 0.0
    %4955 = vmatpush2.xpose.msra.mxu0 0.0
    %4956 = vmatprep.subr.mxu0 0.0
    %4957 = vmatpush2.xpose.msra.mxu0 0.0
    %4958 = vmatprep.subr.mxu0 0.0
    %4959 = vmatpush2.xpose.msra.mxu0 0.0
    %4960 = vmatprep.subr.mxu0 0.0
    %4961 = vmatpush2.xpose.msra.mxu0 0.0
    %4962 = vmatprep.subr.mxu0 0.0
    %4963 = vmatpush2.xpose.msra.mxu0 0.0
    %4964 = vmatprep.mubr.f32.mxu0 0.0
    %4965 = vmatmul.mubr.f32.gmra.mxu0 %v54
    %v4966 = vpop.f32.mrf.mxu0
    %v4967 = vadd.f32 0.0, %v4966
    %v4968 = vpop.f32.mrf.mxu0
    %4969 = vmatprep.mubr.f32.mxu0 0.0
    %4970 = vmatmul.mubr.f32.gmra.mxu0 %v57
    %v4971 = vpop.f32.mrf.mxu0
    %v4972 = vadd.f32 0.0, %v4971
    %v4973 = vpop.f32.mrf.mxu0
    %4974 = vdwg.mxu0
    %v4976 = vsel %vm52, %v4659, 0
    %4978 = vmatprep.subr.mxu0 0.0
    %4979 = vmatpush1.xpose.msra.mxu0 0.0
    %4980 = vmatprep.subr.mxu0 0.0
    %4981 = vmatpush1.xpose.msra.mxu0 0.0
    %4982 = vmatprep.subr.mxu0 0.0
    %4983 = vmatpush1.xpose.msra.mxu0 0.0
    %4984 = vmatprep.subr.mxu0 0.0
    %4985 = vmatpush1.xpose.msra.mxu0 0.0
    %4986 = vmatprep.subr.mxu0 0.0
    %4987 = vmatpush1.xpose.msra.mxu0 0.0
    %4988 = vmatprep.subr.mxu0 0.0
    %4989 = vmatpush1.xpose.msra.mxu0 0.0
    %4990 = vmatprep.subr.mxu0 0.0
    %4991 = vmatpush1.xpose.msra.mxu0 0.0
    %4992 = vmatprep.subr.mxu0 0.0
    %4993 = vmatpush1.xpose.msra.mxu0 0.0
    %4994 = vmatprep.subr.mxu0 0.0
    %4995 = vmatpush1.xpose.msra.mxu0 0.0
    %4996 = vmatprep.subr.mxu0 0.0
    %4997 = vmatpush1.xpose.msra.mxu0 0.0
    %4998 = vmatprep.subr.mxu0 0.0
    %4999 = vmatpush1.xpose.msra.mxu0 0.0
    %5000 = vmatprep.subr.mxu0 0.0
    %5001 = vmatpush1.xpose.msra.mxu0 0.0
    %5002 = vmatprep.subr.mxu0 0.0
    %5003 = vmatpush1.xpose.msra.mxu0 0.0
    %5004 = vmatprep.subr.mxu0 0.0
    %5005 = vmatpush1.xpose.msra.mxu0 0.0
    %5006 = vmatprep.subr.mxu0 0.0
    %5007 = vmatpush1.xpose.msra.mxu0 0.0
    %5008 = vmatprep.subr.mxu0 0.0
    %5009 = vmatpush1.xpose.msra.mxu0 %v4976
    %5010 = vmatprep.subr.mxu0 0.0
    %5011 = vmatpush2.xpose.msra.mxu0 0.0
    %5012 = vmatprep.subr.mxu0 0.0
    %5013 = vmatpush2.xpose.msra.mxu0 0.0
    %5014 = vmatprep.subr.mxu0 0.0
    %5015 = vmatpush2.xpose.msra.mxu0 0.0
    %5016 = vmatprep.subr.mxu0 0.0
    %5017 = vmatpush2.xpose.msra.mxu0 0.0
    %5018 = vmatprep.subr.mxu0 0.0
    %5019 = vmatpush2.xpose.msra.mxu0 0.0
    %5020 = vmatprep.subr.mxu0 0.0
    %5021 = vmatpush2.xpose.msra.mxu0 0.0
    %5022 = vmatprep.subr.mxu0 0.0
    %5023 = vmatpush2.xpose.msra.mxu0 0.0
    %5024 = vmatprep.subr.mxu0 0.0
    %5025 = vmatpush2.xpose.msra.mxu0 0.0
    %5026 = vmatprep.subr.mxu0 0.0
    %5027 = vmatpush2.xpose.msra.mxu0 0.0
    %5028 = vmatprep.subr.mxu0 0.0
    %5029 = vmatpush2.xpose.msra.mxu0 0.0
    %5030 = vmatprep.subr.mxu0 0.0
    %5031 = vmatpush2.xpose.msra.mxu0 0.0
    %5032 = vmatprep.subr.mxu0 0.0
    %5033 = vmatpush2.xpose.msra.mxu0 0.0
    %5034 = vmatprep.subr.mxu0 0.0
    %5035 = vmatpush2.xpose.msra.mxu0 0.0
    %5036 = vmatprep.subr.mxu0 0.0
    %5037 = vmatpush2.xpose.msra.mxu0 0.0
    %5038 = vmatprep.subr.mxu0 0.0
    %5039 = vmatpush2.xpose.msra.mxu0 0.0
    %5040 = vmatprep.subr.mxu0 0.0
    %5041 = vmatpush2.xpose.msra.mxu0 0.0
    %5042 = vmatprep.mubr.f32.mxu0 0.0
    %5043 = vmatmul.mubr.f32.gmra.mxu0 %v54
    %v5044 = vpop.f32.mrf.mxu0
    %v5045 = vadd.f32 0.0, %v5044
    %v5046 = vpop.f32.mrf.mxu0
    %5047 = vmatprep.mubr.f32.mxu0 0.0
    %5048 = vmatmul.mubr.f32.gmra.mxu0 %v57
    %v5049 = vpop.f32.mrf.mxu0
    %v5050 = vadd.f32 0.0, %v5049
    %v5051 = vpop.f32.mrf.mxu0
    %5052 = vdwg.mxu0
    %v5054 = vsel %vm52, %v4660, 0
    %5056 = vmatprep.subr.mxu0 0.0
    %5057 = vmatpush1.xpose.msra.mxu0 0.0
    %5058 = vmatprep.subr.mxu0 0.0
    %5059 = vmatpush1.xpose.msra.mxu0 0.0
    %5060 = vmatprep.subr.mxu0 0.0
    %5061 = vmatpush1.xpose.msra.mxu0 0.0
    %5062 = vmatprep.subr.mxu0 0.0
    %5063 = vmatpush1.xpose.msra.mxu0 0.0
    %5064 = vmatprep.subr.mxu0 0.0
    %5065 = vmatpush1.xpose.msra.mxu0 0.0
    %5066 = vmatprep.subr.mxu0 0.0
    %5067 = vmatpush1.xpose.msra.mxu0 0.0
    %5068 = vmatprep.subr.mxu0 0.0
    %5069 = vmatpush1.xpose.msra.mxu0 0.0
    %5070 = vmatprep.subr.mxu0 0.0
    %5071 = vmatpush1.xpose.msra.mxu0 0.0
    %5072 = vmatprep.subr.mxu0 0.0
    %5073 = vmatpush1.xpose.msra.mxu0 0.0
    %5074 = vmatprep.subr.mxu0 0.0
    %5075 = vmatpush1.xpose.msra.mxu0 0.0
    %5076 = vmatprep.subr.mxu0 0.0
    %5077 = vmatpush1.xpose.msra.mxu0 0.0
    %5078 = vmatprep.subr.mxu0 0.0
    %5079 = vmatpush1.xpose.msra.mxu0 0.0
    %5080 = vmatprep.subr.mxu0 0.0
    %5081 = vmatpush1.xpose.msra.mxu0 0.0
    %5082 = vmatprep.subr.mxu0 0.0
    %5083 = vmatpush1.xpose.msra.mxu0 0.0
    %5084 = vmatprep.subr.mxu0 0.0
    %5085 = vmatpush1.xpose.msra.mxu0 0.0
    %5086 = vmatprep.subr.mxu0 0.0
    %5087 = vmatpush1.xpose.msra.mxu0 %v5054
    %5088 = vmatprep.subr.mxu0 0.0
    %5089 = vmatpush2.xpose.msra.mxu0 0.0
    %5090 = vmatprep.subr.mxu0 0.0
    %5091 = vmatpush2.xpose.msra.mxu0 0.0
    %5092 = vmatprep.subr.mxu0 0.0
    %5093 = vmatpush2.xpose.msra.mxu0 0.0
    %5094 = vmatprep.subr.mxu0 0.0
    %5095 = vmatpush2.xpose.msra.mxu0 0.0
    %5096 = vmatprep.subr.mxu0 0.0
    %5097 = vmatpush2.xpose.msra.mxu0 0.0
    %5098 = vmatprep.subr.mxu0 0.0
    %5099 = vmatpush2.xpose.msra.mxu0 0.0
    %5100 = vmatprep.subr.mxu0 0.0
    %5101 = vmatpush2.xpose.msra.mxu0 0.0
    %5102 = vmatprep.subr.mxu0 0.0
    %5103 = vmatpush2.xpose.msra.mxu0 0.0
    %5104 = vmatprep.subr.mxu0 0.0
    %5105 = vmatpush2.xpose.msra.mxu0 0.0
    %5106 = vmatprep.subr.mxu0 0.0
    %5107 = vmatpush2.xpose.msra.mxu0 0.0
    %5108 = vmatprep.subr.mxu0 0.0
    %5109 = vmatpush2.xpose.msra.mxu0 0.0
    %5110 = vmatprep.subr.mxu0 0.0
    %5111 = vmatpush2.xpose.msra.mxu0 0.0
    %5112 = vmatprep.subr.mxu0 0.0
    %5113 = vmatpush2.xpose.msra.mxu0 0.0
    %5114 = vmatprep.subr.mxu0 0.0
    %5115 = vmatpush2.xpose.msra.mxu0 0.0
    %5116 = vmatprep.subr.mxu0 0.0
    %5117 = vmatpush2.xpose.msra.mxu0 0.0
    %5118 = vmatprep.subr.mxu0 0.0
    %5119 = vmatpush2.xpose.msra.mxu0 0.0
    %5120 = vmatprep.mubr.f32.mxu0 0.0
    %5121 = vmatmul.mubr.f32.gmra.mxu0 %v54
    %v5122 = vpop.f32.mrf.mxu0
    %v5123 = vadd.f32 0.0, %v5122
    %v5124 = vpop.f32.mrf.mxu0
    %5125 = vmatprep.mubr.f32.mxu0 0.0
    %5126 = vmatmul.mubr.f32.gmra.mxu0 %v57
    %v5127 = vpop.f32.mrf.mxu0
    %v5128 = vadd.f32 0.0, %v5127
    %v5129 = vpop.f32.mrf.mxu0
    %5130 = vdwg.mxu0
    %v5132 = vsel %vm52, %v4661, 0
    %5134 = vmatprep.subr.mxu0 0.0
    %5135 = vmatpush1.xpose.msra.mxu0 0.0
    %5136 = vmatprep.subr.mxu0 0.0
    %5137 = vmatpush1.xpose.msra.mxu0 0.0
    %5138 = vmatprep.subr.mxu0 0.0
    %5139 = vmatpush1.xpose.msra.mxu0 0.0
    %5140 = vmatprep.subr.mxu0 0.0
    %5141 = vmatpush1.xpose.msra.mxu0 0.0
    %5142 = vmatprep.subr.mxu0 0.0
    %5143 = vmatpush1.xpose.msra.mxu0 0.0
    %5144 = vmatprep.subr.mxu0 0.0
    %5145 = vmatpush1.xpose.msra.mxu0 0.0
    %5146 = vmatprep.subr.mxu0 0.0
    %5147 = vmatpush1.xpose.msra.mxu0 0.0
    %5148 = vmatprep.subr.mxu0 0.0
    %5149 = vmatpush1.xpose.msra.mxu0 0.0
    %5150 = vmatprep.subr.mxu0 0.0
    %5151 = vmatpush1.xpose.msra.mxu0 0.0
    %5152 = vmatprep.subr.mxu0 0.0
    %5153 = vmatpush1.xpose.msra.mxu0 0.0
    %5154 = vmatprep.subr.mxu0 0.0
    %5155 = vmatpush1.xpose.msra.mxu0 0.0
    %5156 = vmatprep.subr.mxu0 0.0
    %5157 = vmatpush1.xpose.msra.mxu0 0.0
    %5158 = vmatprep.subr.mxu0 0.0
    %5159 = vmatpush1.xpose.msra.mxu0 0.0
    %5160 = vmatprep.subr.mxu0 0.0
    %5161 = vmatpush1.xpose.msra.mxu0 0.0
    %5162 = vmatprep.subr.mxu0 0.0
    %5163 = vmatpush1.xpose.msra.mxu0 0.0
    %5164 = vmatprep.subr.mxu0 0.0
    %5165 = vmatpush1.xpose.msra.mxu0 %v5132
    %5166 = vmatprep.subr.mxu0 0.0
    %5167 = vmatpush2.xpose.msra.mxu0 0.0
    %5168 = vmatprep.subr.mxu0 0.0
    %5169 = vmatpush2.xpose.msra.mxu0 0.0
    %5170 = vmatprep.subr.mxu0 0.0
    %5171 = vmatpush2.xpose.msra.mxu0 0.0
    %5172 = vmatprep.subr.mxu0 0.0
    %5173 = vmatpush2.xpose.msra.mxu0 0.0
    %5174 = vmatprep.subr.mxu0 0.0
    %5175 = vmatpush2.xpose.msra.mxu0 0.0
    %5176 = vmatprep.subr.mxu0 0.0
    %5177 = vmatpush2.xpose.msra.mxu0 0.0
    %5178 = vmatprep.subr.mxu0 0.0
    %5179 = vmatpush2.xpose.msra.mxu0 0.0
    %5180 = vmatprep.subr.mxu0 0.0
    %5181 = vmatpush2.xpose.msra.mxu0 0.0
    %5182 = vmatprep.subr.mxu0 0.0
    %5183 = vmatpush2.xpose.msra.mxu0 0.0
    %5184 = vmatprep.subr.mxu0 0.0
    %5185 = vmatpush2.xpose.msra.mxu0 0.0
    %5186 = vmatprep.subr.mxu0 0.0
    %5187 = vmatpush2.xpose.msra.mxu0 0.0
    %5188 = vmatprep.subr.mxu0 0.0
    %5189 = vmatpush2.xpose.msra.mxu0 0.0
    %5190 = vmatprep.subr.mxu0 0.0
    %5191 = vmatpush2.xpose.msra.mxu0 0.0
    %5192 = vmatprep.subr.mxu0 0.0
    %5193 = vmatpush2.xpose.msra.mxu0 0.0
    %5194 = vmatprep.subr.mxu0 0.0
    %5195 = vmatpush2.xpose.msra.mxu0 0.0
    %5196 = vmatprep.subr.mxu0 0.0
    %5197 = vmatpush2.xpose.msra.mxu0 0.0
    %5198 = vmatprep.mubr.f32.mxu0 0.0
    %5199 = vmatmul.mubr.f32.gmra.mxu0 %v54
    %v5200 = vpop.f32.mrf.mxu0
    %v5201 = vadd.f32 0.0, %v5200
    %v5202 = vpop.f32.mrf.mxu0
    %5203 = vmatprep.mubr.f32.mxu0 0.0
    %5204 = vmatmul.mubr.f32.gmra.mxu0 %v57
    %v5205 = vpop.f32.mrf.mxu0
    %v5206 = vadd.f32 0.0, %v5205
    %v5207 = vpop.f32.mrf.mxu0
    %5208 = vdwg.mxu0
    %v5210 = vsel %vm52, %v4662, 0
    %5212 = vmatprep.subr.mxu0 0.0
    %5213 = vmatpush1.xpose.msra.mxu0 0.0
    %5214 = vmatprep.subr.mxu0 0.0
    %5215 = vmatpush1.xpose.msra.mxu0 0.0
    %5216 = vmatprep.subr.mxu0 0.0
    %5217 = vmatpush1.xpose.msra.mxu0 0.0
    %5218 = vmatprep.subr.mxu0 0.0
    %5219 = vmatpush1.xpose.msra.mxu0 0.0
    %5220 = vmatprep.subr.mxu0 0.0
    %5221 = vmatpush1.xpose.msra.mxu0 0.0
    %5222 = vmatprep.subr.mxu0 0.0
    %5223 = vmatpush1.xpose.msra.mxu0 0.0
    %5224 = vmatprep.subr.mxu0 0.0
    %5225 = vmatpush1.xpose.msra.mxu0 0.0
    %5226 = vmatprep.subr.mxu0 0.0
    %5227 = vmatpush1.xpose.msra.mxu0 0.0
    %5228 = vmatprep.subr.mxu0 0.0
    %5229 = vmatpush1.xpose.msra.mxu0 0.0
    %5230 = vmatprep.subr.mxu0 0.0
    %5231 = vmatpush1.xpose.msra.mxu0 0.0
    %5232 = vmatprep.subr.mxu0 0.0
    %5233 = vmatpush1.xpose.msra.mxu0 0.0
    %5234 = vmatprep.subr.mxu0 0.0
    %5235 = vmatpush1.xpose.msra.mxu0 0.0
    %5236 = vmatprep.subr.mxu0 0.0
    %5237 = vmatpush1.xpose.msra.mxu0 0.0
    %5238 = vmatprep.subr.mxu0 0.0
    %5239 = vmatpush1.xpose.msra.mxu0 0.0
    %5240 = vmatprep.subr.mxu0 0.0
    %5241 = vmatpush1.xpose.msra.mxu0 0.0
    %5242 = vmatprep.subr.mxu0 0.0
    %5243 = vmatpush1.xpose.msra.mxu0 %v5210
    %5244 = vmatprep.subr.mxu0 0.0
    %5245 = vmatpush2.xpose.msra.mxu0 0.0
    %5246 = vmatprep.subr.mxu0 0.0
    %5247 = vmatpush2.xpose.msra.mxu0 0.0
    %5248 = vmatprep.subr.mxu0 0.0
    %5249 = vmatpush2.xpose.msra.mxu0 0.0
    %5250 = vmatprep.subr.mxu0 0.0
    %5251 = vmatpush2.xpose.msra.mxu0 0.0
    %5252 = vmatprep.subr.mxu0 0.0
    %5253 = vmatpush2.xpose.msra.mxu0 0.0
    %5254 = vmatprep.subr.mxu0 0.0
    %5255 = vmatpush2.xpose.msra.mxu0 0.0
    %5256 = vmatprep.subr.mxu0 0.0
    %5257 = vmatpush2.xpose.msra.mxu0 0.0
    %5258 = vmatprep.subr.mxu0 0.0
    %5259 = vmatpush2.xpose.msra.mxu0 0.0
    %5260 = vmatprep.subr.mxu0 0.0
    %5261 = vmatpush2.xpose.msra.mxu0 0.0
    %5262 = vmatprep.subr.mxu0 0.0
    %5263 = vmatpush2.xpose.msra.mxu0 0.0
    %5264 = vmatprep.subr.mxu0 0.0
    %5265 = vmatpush2.xpose.msra.mxu0 0.0
    %5266 = vmatprep.subr.mxu0 0.0
    %5267 = vmatpush2.xpose.msra.mxu0 0.0
    %5268 = vmatprep.subr.mxu0 0.0
    %5269 = vmatpush2.xpose.msra.mxu0 0.0
    %5270 = vmatprep.subr.mxu0 0.0
    %5271 = vmatpush2.xpose.msra.mxu0 0.0
    %5272 = vmatprep.subr.mxu0 0.0
    %5273 = vmatpush2.xpose.msra.mxu0 0.0
    %5274 = vmatprep.subr.mxu0 0.0
    %5275 = vmatpush2.xpose.msra.mxu0 0.0
    %5276 = vmatprep.mubr.f32.mxu0 0.0
    %5277 = vmatmul.mubr.f32.gmra.mxu0 %v54
    %v5278 = vpop.f32.mrf.mxu0
    %v5279 = vadd.f32 0.0, %v5278
    %v5280 = vpop.f32.mrf.mxu0
    %5281 = vmatprep.mubr.f32.mxu0 0.0
    %5282 = vmatmul.mubr.f32.gmra.mxu0 %v57
    %v5283 = vpop.f32.mrf.mxu0
    %v5284 = vadd.f32 0.0, %v5283
    %v5285 = vpop.f32.mrf.mxu0
    %5286 = vdwg.mxu0
    %s5287 = scalar_lea.vmem %s5, 24
    %v5288 = vld [vmem:[%s5287] sm:$0xff]
    %s5289 = scalar_lea.vmem %s6, 24
    %v5290 = vld [vmem:[%s5289] sm:$0xff]
    %5292 = vset.pattern.permute.xlu0 0
    %5293 = vperm.xlu0 %5292, %v5290
    %v5294 = vpop.permute.xlu0 %5293
    %v5297 = vsel %vm690, %v5288, 0
    %v5300 = vsel %vm690, %v4733, 0
    %v5303 = vsel %vm690, %v4738, 0
    %5305 = vmatprep.subr.mxu0 0.0
    %5306 = vmatpush1.xpose.msra.mxu0 0.0
    %5307 = vmatprep.subr.mxu0 0.0
    %5308 = vmatpush1.xpose.msra.mxu0 0.0
    %5309 = vmatprep.subr.mxu0 0.0
    %5310 = vmatpush1.xpose.msra.mxu0 0.0
    %5311 = vmatprep.subr.mxu0 0.0
    %5312 = vmatpush1.xpose.msra.mxu0 0.0
    %5313 = vmatprep.subr.mxu0 0.0
    %5314 = vmatpush1.xpose.msra.mxu0 0.0
    %5315 = vmatprep.subr.mxu0 0.0
    %5316 = vmatpush1.xpose.msra.mxu0 0.0
    %5317 = vmatprep.subr.mxu0 0.0
    %5318 = vmatpush1.xpose.msra.mxu0 0.0
    %5319 = vmatprep.subr.mxu0 0.0
    %5320 = vmatpush1.xpose.msra.mxu0 0.0
    %5321 = vmatprep.subr.mxu0 0.0
    %5322 = vmatpush1.xpose.msra.mxu0 0.0
    %5323 = vmatprep.subr.mxu0 0.0
    %5324 = vmatpush1.xpose.msra.mxu0 0.0
    %5325 = vmatprep.subr.mxu0 0.0
    %5326 = vmatpush1.xpose.msra.mxu0 0.0
    %5327 = vmatprep.subr.mxu0 0.0
    %5328 = vmatpush1.xpose.msra.mxu0 0.0
    %5329 = vmatprep.subr.mxu0 0.0
    %5330 = vmatpush1.xpose.msra.mxu0 0.0
    %5331 = vmatprep.subr.mxu0 0.0
    %5332 = vmatpush1.xpose.msra.mxu0 0.0
    %5333 = vmatprep.subr.mxu0 0.0
    %5334 = vmatpush1.xpose.msra.mxu0 %v5303
    %5335 = vmatprep.subr.mxu0 0.0
    %5336 = vmatpush1.xpose.msra.mxu0 %v5300
    %5337 = vmatprep.subr.mxu0 0.0
    %5338 = vmatpush2.xpose.msra.mxu0 0.0
    %5339 = vmatprep.subr.mxu0 0.0
    %5340 = vmatpush2.xpose.msra.mxu0 0.0
    %5341 = vmatprep.subr.mxu0 0.0
    %5342 = vmatpush2.xpose.msra.mxu0 0.0
    %5343 = vmatprep.subr.mxu0 0.0
    %5344 = vmatpush2.xpose.msra.mxu0 0.0
    %5345 = vmatprep.subr.mxu0 0.0
    %5346 = vmatpush2.xpose.msra.mxu0 0.0
    %5347 = vmatprep.subr.mxu0 0.0
    %5348 = vmatpush2.xpose.msra.mxu0 0.0
    %5349 = vmatprep.subr.mxu0 0.0
    %5350 = vmatpush2.xpose.msra.mxu0 0.0
    %5351 = vmatprep.subr.mxu0 0.0
    %5352 = vmatpush2.xpose.msra.mxu0 0.0
    %5353 = vmatprep.subr.mxu0 0.0
    %5354 = vmatpush2.xpose.msra.mxu0 0.0
    %5355 = vmatprep.subr.mxu0 0.0
    %5356 = vmatpush2.xpose.msra.mxu0 0.0
    %5357 = vmatprep.subr.mxu0 0.0
    %5358 = vmatpush2.xpose.msra.mxu0 0.0
    %5359 = vmatprep.subr.mxu0 0.0
    %5360 = vmatpush2.xpose.msra.mxu0 0.0
    %5361 = vmatprep.subr.mxu0 0.0
    %5362 = vmatpush2.xpose.msra.mxu0 0.0
    %5363 = vmatprep.subr.mxu0 0.0
    %5364 = vmatpush2.xpose.msra.mxu0 0.0
    %5365 = vmatprep.subr.mxu0 0.0
    %5366 = vmatpush2.xpose.msra.mxu0 0.0
    %5367 = vmatprep.subr.mxu0 0.0
    %5368 = vmatpush2.xpose.msra.mxu0 0.0
    %5369 = vmatprep.mubr.f32.mxu0 0.0
    %5370 = vmatmul.mubr.f32.gmra.mxu0 %v5297
    %v5371 = vpop.f32.mrf.mxu0
    %v5372 = vadd.f32 %v5294, %v5371
    %v5373 = vpop.f32.mrf.mxu0
    %5374 = vdwg.mxu0
    %v5376 = vsel %vm690, %v4811, 0
    %v5379 = vsel %vm690, %v4816, 0
    %5381 = vmatprep.subr.mxu0 0.0
    %5382 = vmatpush1.xpose.msra.mxu0 0.0
    %5383 = vmatprep.subr.mxu0 0.0
    %5384 = vmatpush1.xpose.msra.mxu0 0.0
    %5385 = vmatprep.subr.mxu0 0.0
    %5386 = vmatpush1.xpose.msra.mxu0 0.0
    %5387 = vmatprep.subr.mxu0 0.0
    %5388 = vmatpush1.xpose.msra.mxu0 0.0
    %5389 = vmatprep.subr.mxu0 0.0
    %5390 = vmatpush1.xpose.msra.mxu0 0.0
    %5391 = vmatprep.subr.mxu0 0.0
    %5392 = vmatpush1.xpose.msra.mxu0 0.0
    %5393 = vmatprep.subr.mxu0 0.0
    %5394 = vmatpush1.xpose.msra.mxu0 0.0
    %5395 = vmatprep.subr.mxu0 0.0
    %5396 = vmatpush1.xpose.msra.mxu0 0.0
    %5397 = vmatprep.subr.mxu0 0.0
    %5398 = vmatpush1.xpose.msra.mxu0 0.0
    %5399 = vmatprep.subr.mxu0 0.0
    %5400 = vmatpush1.xpose.msra.mxu0 0.0
    %5401 = vmatprep.subr.mxu0 0.0
    %5402 = vmatpush1.xpose.msra.mxu0 0.0
    %5403 = vmatprep.subr.mxu0 0.0
    %5404 = vmatpush1.xpose.msra.mxu0 0.0
    %5405 = vmatprep.subr.mxu0 0.0
    %5406 = vmatpush1.xpose.msra.mxu0 0.0
    %5407 = vmatprep.subr.mxu0 0.0
    %5408 = vmatpush1.xpose.msra.mxu0 0.0
    %5409 = vmatprep.subr.mxu0 0.0
    %5410 = vmatpush1.xpose.msra.mxu0 %v5379
    %5411 = vmatprep.subr.mxu0 0.0
    %5412 = vmatpush1.xpose.msra.mxu0 %v5376
    %5413 = vmatprep.subr.mxu0 0.0
    %5414 = vmatpush2.xpose.msra.mxu0 0.0
    %5415 = vmatprep.subr.mxu0 0.0
    %5416 = vmatpush2.xpose.msra.mxu0 0.0
    %5417 = vmatprep.subr.mxu0 0.0
    %5418 = vmatpush2.xpose.msra.mxu0 0.0
    %5419 = vmatprep.subr.mxu0 0.0
    %5420 = vmatpush2.xpose.msra.mxu0 0.0
    %5421 = vmatprep.subr.mxu0 0.0
    %5422 = vmatpush2.xpose.msra.mxu0 0.0
    %5423 = vmatprep.subr.mxu0 0.0
    %5424 = vmatpush2.xpose.msra.mxu0 0.0
    %5425 = vmatprep.subr.mxu0 0.0
    %5426 = vmatpush2.xpose.msra.mxu0 0.0
    %5427 = vmatprep.subr.mxu0 0.0
    %5428 = vmatpush2.xpose.msra.mxu0 0.0
    %5429 = vmatprep.subr.mxu0 0.0
    %5430 = vmatpush2.xpose.msra.mxu0 0.0
    %5431 = vmatprep.subr.mxu0 0.0
    %5432 = vmatpush2.xpose.msra.mxu0 0.0
    %5433 = vmatprep.subr.mxu0 0.0
    %5434 = vmatpush2.xpose.msra.mxu0 0.0
    %5435 = vmatprep.subr.mxu0 0.0
    %5436 = vmatpush2.xpose.msra.mxu0 0.0
    %5437 = vmatprep.subr.mxu0 0.0
    %5438 = vmatpush2.xpose.msra.mxu0 0.0
    %5439 = vmatprep.subr.mxu0 0.0
    %5440 = vmatpush2.xpose.msra.mxu0 0.0
    %5441 = vmatprep.subr.mxu0 0.0
    %5442 = vmatpush2.xpose.msra.mxu0 0.0
    %5443 = vmatprep.subr.mxu0 0.0
    %5444 = vmatpush2.xpose.msra.mxu0 0.0
    %5445 = vmatprep.mubr.f32.mxu0 0.0
    %5446 = vmatmul.mubr.f32.gmra.mxu0 %v5297
    %v5447 = vpop.f32.mrf.mxu0
    %v5448 = vadd.f32 %v5294, %v5447
    %v5449 = vpop.f32.mrf.mxu0
    %5450 = vdwg.mxu0
    %v5452 = vsel %vm690, %v4889, 0
    %v5455 = vsel %vm690, %v4894, 0
    %5457 = vmatprep.subr.mxu0 0.0
    %5458 = vmatpush1.xpose.msra.mxu0 0.0
    %5459 = vmatprep.subr.mxu0 0.0
    %5460 = vmatpush1.xpose.msra.mxu0 0.0
    %5461 = vmatprep.subr.mxu0 0.0
    %5462 = vmatpush1.xpose.msra.mxu0 0.0
    %5463 = vmatprep.subr.mxu0 0.0
    %5464 = vmatpush1.xpose.msra.mxu0 0.0
    %5465 = vmatprep.subr.mxu0 0.0
    %5466 = vmatpush1.xpose.msra.mxu0 0.0
    %5467 = vmatprep.subr.mxu0 0.0
    %5468 = vmatpush1.xpose.msra.mxu0 0.0
    %5469 = vmatprep.subr.mxu0 0.0
    %5470 = vmatpush1.xpose.msra.mxu0 0.0
    %5471 = vmatprep.subr.mxu0 0.0
    %5472 = vmatpush1.xpose.msra.mxu0 0.0
    %5473 = vmatprep.subr.mxu0 0.0
    %5474 = vmatpush1.xpose.msra.mxu0 0.0
    %5475 = vmatprep.subr.mxu0 0.0
    %5476 = vmatpush1.xpose.msra.mxu0 0.0
    %5477 = vmatprep.subr.mxu0 0.0
    %5478 = vmatpush1.xpose.msra.mxu0 0.0
    %5479 = vmatprep.subr.mxu0 0.0
    %5480 = vmatpush1.xpose.msra.mxu0 0.0
    %5481 = vmatprep.subr.mxu0 0.0
    %5482 = vmatpush1.xpose.msra.mxu0 0.0
    %5483 = vmatprep.subr.mxu0 0.0
    %5484 = vmatpush1.xpose.msra.mxu0 0.0
    %5485 = vmatprep.subr.mxu0 0.0
    %5486 = vmatpush1.xpose.msra.mxu0 %v5455
    %5487 = vmatprep.subr.mxu0 0.0
    %5488 = vmatpush1.xpose.msra.mxu0 %v5452
    %5489 = vmatprep.subr.mxu0 0.0
    %5490 = vmatpush2.xpose.msra.mxu0 0.0
    %5491 = vmatprep.subr.mxu0 0.0
    %5492 = vmatpush2.xpose.msra.mxu0 0.0
    %5493 = vmatprep.subr.mxu0 0.0
    %5494 = vmatpush2.xpose.msra.mxu0 0.0
    %5495 = vmatprep.subr.mxu0 0.0
    %5496 = vmatpush2.xpose.msra.mxu0 0.0
    %5497 = vmatprep.subr.mxu0 0.0
    %5498 = vmatpush2.xpose.msra.mxu0 0.0
    %5499 = vmatprep.subr.mxu0 0.0
    %5500 = vmatpush2.xpose.msra.mxu0 0.0
    %5501 = vmatprep.subr.mxu0 0.0
    %5502 = vmatpush2.xpose.msra.mxu0 0.0
    %5503 = vmatprep.subr.mxu0 0.0
    %5504 = vmatpush2.xpose.msra.mxu0 0.0
    %5505 = vmatprep.subr.mxu0 0.0
    %5506 = vmatpush2.xpose.msra.mxu0 0.0
    %5507 = vmatprep.subr.mxu0 0.0
    %5508 = vmatpush2.xpose.msra.mxu0 0.0
    %5509 = vmatprep.subr.mxu0 0.0
    %5510 = vmatpush2.xpose.msra.mxu0 0.0
    %5511 = vmatprep.subr.mxu0 0.0
    %5512 = vmatpush2.xpose.msra.mxu0 0.0
    %5513 = vmatprep.subr.mxu0 0.0
    %5514 = vmatpush2.xpose.msra.mxu0 0.0
    %5515 = vmatprep.subr.mxu0 0.0
    %5516 = vmatpush2.xpose.msra.mxu0 0.0
    %5517 = vmatprep.subr.mxu0 0.0
    %5518 = vmatpush2.xpose.msra.mxu0 0.0
    %5519 = vmatprep.subr.mxu0 0.0
    %5520 = vmatpush2.xpose.msra.mxu0 0.0
    %5521 = vmatprep.mubr.f32.mxu0 0.0
    %5522 = vmatmul.mubr.f32.gmra.mxu0 %v5297
    %v5523 = vpop.f32.mrf.mxu0
    %v5524 = vadd.f32 %v5294, %v5523
    %v5525 = vpop.f32.mrf.mxu0
    %5526 = vdwg.mxu0
    %v5528 = vsel %vm690, %v4967, 0
    %v5531 = vsel %vm690, %v4972, 0
    %5533 = vmatprep.subr.mxu0 0.0
    %5534 = vmatpush1.xpose.msra.mxu0 0.0
    %5535 = vmatprep.subr.mxu0 0.0
    %5536 = vmatpush1.xpose.msra.mxu0 0.0
    %5537 = vmatprep.subr.mxu0 0.0
    %5538 = vmatpush1.xpose.msra.mxu0 0.0
    %5539 = vmatprep.subr.mxu0 0.0
    %5540 = vmatpush1.xpose.msra.mxu0 0.0
    %5541 = vmatprep.subr.mxu0 0.0
    %5542 = vmatpush1.xpose.msra.mxu0 0.0
    %5543 = vmatprep.subr.mxu0 0.0
    %5544 = vmatpush1.xpose.msra.mxu0 0.0
    %5545 = vmatprep.subr.mxu0 0.0
    %5546 = vmatpush1.xpose.msra.mxu0 0.0
    %5547 = vmatprep.subr.mxu0 0.0
    %5548 = vmatpush1.xpose.msra.mxu0 0.0
    %5549 = vmatprep.subr.mxu0 0.0
    %5550 = vmatpush1.xpose.msra.mxu0 0.0
    %5551 = vmatprep.subr.mxu0 0.0
    %5552 = vmatpush1.xpose.msra.mxu0 0.0
    %5553 = vmatprep.subr.mxu0 0.0
    %5554 = vmatpush1.xpose.msra.mxu0 0.0
    %5555 = vmatprep.subr.mxu0 0.0
    %5556 = vmatpush1.xpose.msra.mxu0 0.0
    %5557 = vmatprep.subr.mxu0 0.0
    %5558 = vmatpush1.xpose.msra.mxu0 0.0
    %5559 = vmatprep.subr.mxu0 0.0
    %5560 = vmatpush1.xpose.msra.mxu0 0.0
    %5561 = vmatprep.subr.mxu0 0.0
    %5562 = vmatpush1.xpose.msra.mxu0 %v5531
    %5563 = vmatprep.subr.mxu0 0.0
    %5564 = vmatpush1.xpose.msra.mxu0 %v5528
    %5565 = vmatprep.subr.mxu0 0.0
    %5566 = vmatpush2.xpose.msra.mxu0 0.0
    %5567 = vmatprep.subr.mxu0 0.0
    %5568 = vmatpush2.xpose.msra.mxu0 0.0
    %5569 = vmatprep.subr.mxu0 0.0
    %5570 = vmatpush2.xpose.msra.mxu0 0.0
    %5571 = vmatprep.subr.mxu0 0.0
    %5572 = vmatpush2.xpose.msra.mxu0 0.0
    %5573 = vmatprep.subr.mxu0 0.0
    %5574 = vmatpush2.xpose.msra.mxu0 0.0
    %5575 = vmatprep.subr.mxu0 0.0
    %5576 = vmatpush2.xpose.msra.mxu0 0.0
    %5577 = vmatprep.subr.mxu0 0.0
    %5578 = vmatpush2.xpose.msra.mxu0 0.0
    %5579 = vmatprep.subr.mxu0 0.0
    %5580 = vmatpush2.xpose.msra.mxu0 0.0
    %5581 = vmatprep.subr.mxu0 0.0
    %5582 = vmatpush2.xpose.msra.mxu0 0.0
    %5583 = vmatprep.subr.mxu0 0.0
    %5584 = vmatpush2.xpose.msra.mxu0 0.0
    %5585 = vmatprep.subr.mxu0 0.0
    %5586 = vmatpush2.xpose.msra.mxu0 0.0
    %5587 = vmatprep.subr.mxu0 0.0
    %5588 = vmatpush2.xpose.msra.mxu0 0.0
    %5589 = vmatprep.subr.mxu0 0.0
    %5590 = vmatpush2.xpose.msra.mxu0 0.0
    %5591 = vmatprep.subr.mxu0 0.0
    %5592 = vmatpush2.xpose.msra.mxu0 0.0
    %5593 = vmatprep.subr.mxu0 0.0
    %5594 = vmatpush2.xpose.msra.mxu0 0.0
    %5595 = vmatprep.subr.mxu0 0.0
    %5596 = vmatpush2.xpose.msra.mxu0 0.0
    %5597 = vmatprep.mubr.f32.mxu0 0.0
    %5598 = vmatmul.mubr.f32.gmra.mxu0 %v5297
    %v5599 = vpop.f32.mrf.mxu0
    %v5600 = vadd.f32 %v5294, %v5599
    %v5601 = vpop.f32.mrf.mxu0
    %5602 = vdwg.mxu0
    %v5604 = vsel %vm690, %v5045, 0
    %v5607 = vsel %vm690, %v5050, 0
    %5609 = vmatprep.subr.mxu0 0.0
    %5610 = vmatpush1.xpose.msra.mxu0 0.0
    %5611 = vmatprep.subr.mxu0 0.0
    %5612 = vmatpush1.xpose.msra.mxu0 0.0
    %5613 = vmatprep.subr.mxu0 0.0
    %5614 = vmatpush1.xpose.msra.mxu0 0.0
    %5615 = vmatprep.subr.mxu0 0.0
    %5616 = vmatpush1.xpose.msra.mxu0 0.0
    %5617 = vmatprep.subr.mxu0 0.0
    %5618 = vmatpush1.xpose.msra.mxu0 0.0
    %5619 = vmatprep.subr.mxu0 0.0
    %5620 = vmatpush1.xpose.msra.mxu0 0.0
    %5621 = vmatprep.subr.mxu0 0.0
    %5622 = vmatpush1.xpose.msra.mxu0 0.0
    %5623 = vmatprep.subr.mxu0 0.0
    %5624 = vmatpush1.xpose.msra.mxu0 0.0
    %5625 = vmatprep.subr.mxu0 0.0
    %5626 = vmatpush1.xpose.msra.mxu0 0.0
    %5627 = vmatprep.subr.mxu0 0.0
    %5628 = vmatpush1.xpose.msra.mxu0 0.0
    %5629 = vmatprep.subr.mxu0 0.0
    %5630 = vmatpush1.xpose.msra.mxu0 0.0
    %5631 = vmatprep.subr.mxu0 0.0
    %5632 = vmatpush1.xpose.msra.mxu0 0.0
    %5633 = vmatprep.subr.mxu0 0.0
    %5634 = vmatpush1.xpose.msra.mxu0 0.0
    %5635 = vmatprep.subr.mxu0 0.0
    %5636 = vmatpush1.xpose.msra.mxu0 0.0
    %5637 = vmatprep.subr.mxu0 0.0
    %5638 = vmatpush1.xpose.msra.mxu0 %v5607
    %5639 = vmatprep.subr.mxu0 0.0
    %5640 = vmatpush1.xpose.msra.mxu0 %v5604
    %5641 = vmatprep.subr.mxu0 0.0
    %5642 = vmatpush2.xpose.msra.mxu0 0.0
    %5643 = vmatprep.subr.mxu0 0.0
    %5644 = vmatpush2.xpose.msra.mxu0 0.0
    %5645 = vmatprep.subr.mxu0 0.0
    %5646 = vmatpush2.xpose.msra.mxu0 0.0
    %5647 = vmatprep.subr.mxu0 0.0
    %5648 = vmatpush2.xpose.msra.mxu0 0.0
    %5649 = vmatprep.subr.mxu0 0.0
    %5650 = vmatpush2.xpose.msra.mxu0 0.0
    %5651 = vmatprep.subr.mxu0 0.0
    %5652 = vmatpush2.xpose.msra.mxu0 0.0
    %5653 = vmatprep.subr.mxu0 0.0
    %5654 = vmatpush2.xpose.msra.mxu0 0.0
    %5655 = vmatprep.subr.mxu0 0.0
    %5656 = vmatpush2.xpose.msra.mxu0 0.0
    %5657 = vmatprep.subr.mxu0 0.0
    %5658 = vmatpush2.xpose.msra.mxu0 0.0
    %5659 = vmatprep.subr.mxu0 0.0
    %5660 = vmatpush2.xpose.msra.mxu0 0.0
    %5661 = vmatprep.subr.mxu0 0.0
    %5662 = vmatpush2.xpose.msra.mxu0 0.0
    %5663 = vmatprep.subr.mxu0 0.0
    %5664 = vmatpush2.xpose.msra.mxu0 0.0
    %5665 = vmatprep.subr.mxu0 0.0
    %5666 = vmatpush2.xpose.msra.mxu0 0.0
    %5667 = vmatprep.subr.mxu0 0.0
    %5668 = vmatpush2.xpose.msra.mxu0 0.0
    %5669 = vmatprep.subr.mxu0 0.0
    %5670 = vmatpush2.xpose.msra.mxu0 0.0
    %5671 = vmatprep.subr.mxu0 0.0
    %5672 = vmatpush2.xpose.msra.mxu0 0.0
    %5673 = vmatprep.mubr.f32.mxu0 0.0
    %5674 = vmatmul.mubr.f32.gmra.mxu0 %v5297
    %v5675 = vpop.f32.mrf.mxu0
    %v5676 = vadd.f32 %v5294, %v5675
    %v5677 = vpop.f32.mrf.mxu0
    %5678 = vdwg.mxu0
    %v5680 = vsel %vm690, %v5123, 0
    %v5683 = vsel %vm690, %v5128, 0
    %5685 = vmatprep.subr.mxu0 0.0
    %5686 = vmatpush1.xpose.msra.mxu0 0.0
    %5687 = vmatprep.subr.mxu0 0.0
    %5688 = vmatpush1.xpose.msra.mxu0 0.0
    %5689 = vmatprep.subr.mxu0 0.0
    %5690 = vmatpush1.xpose.msra.mxu0 0.0
    %5691 = vmatprep.subr.mxu0 0.0
    %5692 = vmatpush1.xpose.msra.mxu0 0.0
    %5693 = vmatprep.subr.mxu0 0.0
    %5694 = vmatpush1.xpose.msra.mxu0 0.0
    %5695 = vmatprep.subr.mxu0 0.0
    %5696 = vmatpush1.xpose.msra.mxu0 0.0
    %5697 = vmatprep.subr.mxu0 0.0
    %5698 = vmatpush1.xpose.msra.mxu0 0.0
    %5699 = vmatprep.subr.mxu0 0.0
    %5700 = vmatpush1.xpose.msra.mxu0 0.0
    %5701 = vmatprep.subr.mxu0 0.0
    %5702 = vmatpush1.xpose.msra.mxu0 0.0
    %5703 = vmatprep.subr.mxu0 0.0
    %5704 = vmatpush1.xpose.msra.mxu0 0.0
    %5705 = vmatprep.subr.mxu0 0.0
    %5706 = vmatpush1.xpose.msra.mxu0 0.0
    %5707 = vmatprep.subr.mxu0 0.0
    %5708 = vmatpush1.xpose.msra.mxu0 0.0
    %5709 = vmatprep.subr.mxu0 0.0
    %5710 = vmatpush1.xpose.msra.mxu0 0.0
    %5711 = vmatprep.subr.mxu0 0.0
    %5712 = vmatpush1.xpose.msra.mxu0 0.0
    %5713 = vmatprep.subr.mxu0 0.0
    %5714 = vmatpush1.xpose.msra.mxu0 %v5683
    %5715 = vmatprep.subr.mxu0 0.0
    %5716 = vmatpush1.xpose.msra.mxu0 %v5680
    %5717 = vmatprep.subr.mxu0 0.0
    %5718 = vmatpush2.xpose.msra.mxu0 0.0
    %5719 = vmatprep.subr.mxu0 0.0
    %5720 = vmatpush2.xpose.msra.mxu0 0.0
    %5721 = vmatprep.subr.mxu0 0.0
    %5722 = vmatpush2.xpose.msra.mxu0 0.0
    %5723 = vmatprep.subr.mxu0 0.0
    %5724 = vmatpush2.xpose.msra.mxu0 0.0
    %5725 = vmatprep.subr.mxu0 0.0
    %5726 = vmatpush2.xpose.msra.mxu0 0.0
    %5727 = vmatprep.subr.mxu0 0.0
    %5728 = vmatpush2.xpose.msra.mxu0 0.0
    %5729 = vmatprep.subr.mxu0 0.0
    %5730 = vmatpush2.xpose.msra.mxu0 0.0
    %5731 = vmatprep.subr.mxu0 0.0
    %5732 = vmatpush2.xpose.msra.mxu0 0.0
    %5733 = vmatprep.subr.mxu0 0.0
    %5734 = vmatpush2.xpose.msra.mxu0 0.0
    %5735 = vmatprep.subr.mxu0 0.0
    %5736 = vmatpush2.xpose.msra.mxu0 0.0
    %5737 = vmatprep.subr.mxu0 0.0
    %5738 = vmatpush2.xpose.msra.mxu0 0.0
    %5739 = vmatprep.subr.mxu0 0.0
    %5740 = vmatpush2.xpose.msra.mxu0 0.0
    %5741 = vmatprep.subr.mxu0 0.0
    %5742 = vmatpush2.xpose.msra.mxu0 0.0
    %5743 = vmatprep.subr.mxu0 0.0
    %5744 = vmatpush2.xpose.msra.mxu0 0.0
    %5745 = vmatprep.subr.mxu0 0.0
    %5746 = vmatpush2.xpose.msra.mxu0 0.0
    %5747 = vmatprep.subr.mxu0 0.0
    %5748 = vmatpush2.xpose.msra.mxu0 0.0
    %5749 = vmatprep.mubr.f32.mxu0 0.0
    %5750 = vmatmul.mubr.f32.gmra.mxu0 %v5297
    %v5751 = vpop.f32.mrf.mxu0
    %v5752 = vadd.f32 %v5294, %v5751
    %v5753 = vpop.f32.mrf.mxu0
    %5754 = vdwg.mxu0
    %v5756 = vsel %vm690, %v5201, 0
    %v5759 = vsel %vm690, %v5206, 0
    %5761 = vmatprep.subr.mxu0 0.0
    %5762 = vmatpush1.xpose.msra.mxu0 0.0
    %5763 = vmatprep.subr.mxu0 0.0
    %5764 = vmatpush1.xpose.msra.mxu0 0.0
    %5765 = vmatprep.subr.mxu0 0.0
    %5766 = vmatpush1.xpose.msra.mxu0 0.0
    %5767 = vmatprep.subr.mxu0 0.0
    %5768 = vmatpush1.xpose.msra.mxu0 0.0
    %5769 = vmatprep.subr.mxu0 0.0
    %5770 = vmatpush1.xpose.msra.mxu0 0.0
    %5771 = vmatprep.subr.mxu0 0.0
    %5772 = vmatpush1.xpose.msra.mxu0 0.0
    %5773 = vmatprep.subr.mxu0 0.0
    %5774 = vmatpush1.xpose.msra.mxu0 0.0
    %5775 = vmatprep.subr.mxu0 0.0
    %5776 = vmatpush1.xpose.msra.mxu0 0.0
    %5777 = vmatprep.subr.mxu0 0.0
    %5778 = vmatpush1.xpose.msra.mxu0 0.0
    %5779 = vmatprep.subr.mxu0 0.0
    %5780 = vmatpush1.xpose.msra.mxu0 0.0
    %5781 = vmatprep.subr.mxu0 0.0
    %5782 = vmatpush1.xpose.msra.mxu0 0.0
    %5783 = vmatprep.subr.mxu0 0.0
    %5784 = vmatpush1.xpose.msra.mxu0 0.0
    %5785 = vmatprep.subr.mxu0 0.0
    %5786 = vmatpush1.xpose.msra.mxu0 0.0
    %5787 = vmatprep.subr.mxu0 0.0
    %5788 = vmatpush1.xpose.msra.mxu0 0.0
    %5789 = vmatprep.subr.mxu0 0.0
    %5790 = vmatpush1.xpose.msra.mxu0 %v5759
    %5791 = vmatprep.subr.mxu0 0.0
    %5792 = vmatpush1.xpose.msra.mxu0 %v5756
    %5793 = vmatprep.subr.mxu0 0.0
    %5794 = vmatpush2.xpose.msra.mxu0 0.0
    %5795 = vmatprep.subr.mxu0 0.0
    %5796 = vmatpush2.xpose.msra.mxu0 0.0
    %5797 = vmatprep.subr.mxu0 0.0
    %5798 = vmatpush2.xpose.msra.mxu0 0.0
    %5799 = vmatprep.subr.mxu0 0.0
    %5800 = vmatpush2.xpose.msra.mxu0 0.0
    %5801 = vmatprep.subr.mxu0 0.0
    %5802 = vmatpush2.xpose.msra.mxu0 0.0
    %5803 = vmatprep.subr.mxu0 0.0
    %5804 = vmatpush2.xpose.msra.mxu0 0.0
    %5805 = vmatprep.subr.mxu0 0.0
    %5806 = vmatpush2.xpose.msra.mxu0 0.0
    %5807 = vmatprep.subr.mxu0 0.0
    %5808 = vmatpush2.xpose.msra.mxu0 0.0
    %5809 = vmatprep.subr.mxu0 0.0
    %5810 = vmatpush2.xpose.msra.mxu0 0.0
    %5811 = vmatprep.subr.mxu0 0.0
    %5812 = vmatpush2.xpose.msra.mxu0 0.0
    %5813 = vmatprep.subr.mxu0 0.0
    %5814 = vmatpush2.xpose.msra.mxu0 0.0
    %5815 = vmatprep.subr.mxu0 0.0
    %5816 = vmatpush2.xpose.msra.mxu0 0.0
    %5817 = vmatprep.subr.mxu0 0.0
    %5818 = vmatpush2.xpose.msra.mxu0 0.0
    %5819 = vmatprep.subr.mxu0 0.0
    %5820 = vmatpush2.xpose.msra.mxu0 0.0
    %5821 = vmatprep.subr.mxu0 0.0
    %5822 = vmatpush2.xpose.msra.mxu0 0.0
    %5823 = vmatprep.subr.mxu0 0.0
    %5824 = vmatpush2.xpose.msra.mxu0 0.0
    %5825 = vmatprep.mubr.f32.mxu0 0.0
    %5826 = vmatmul.mubr.f32.gmra.mxu0 %v5297
    %v5827 = vpop.f32.mrf.mxu0
    %v5828 = vadd.f32 %v5294, %v5827
    %v5829 = vpop.f32.mrf.mxu0
    %5830 = vdwg.mxu0
    %v5832 = vsel %vm690, %v5279, 0
    %v5835 = vsel %vm690, %v5284, 0
    %5837 = vmatprep.subr.mxu0 0.0
    %5838 = vmatpush1.xpose.msra.mxu0 0.0
    %5839 = vmatprep.subr.mxu0 0.0
    %5840 = vmatpush1.xpose.msra.mxu0 0.0
    %5841 = vmatprep.subr.mxu0 0.0
    %5842 = vmatpush1.xpose.msra.mxu0 0.0
    %5843 = vmatprep.subr.mxu0 0.0
    %5844 = vmatpush1.xpose.msra.mxu0 0.0
    %5845 = vmatprep.subr.mxu0 0.0
    %5846 = vmatpush1.xpose.msra.mxu0 0.0
    %5847 = vmatprep.subr.mxu0 0.0
    %5848 = vmatpush1.xpose.msra.mxu0 0.0
    %5849 = vmatprep.subr.mxu0 0.0
    %5850 = vmatpush1.xpose.msra.mxu0 0.0
    %5851 = vmatprep.subr.mxu0 0.0
    %5852 = vmatpush1.xpose.msra.mxu0 0.0
    %5853 = vmatprep.subr.mxu0 0.0
    %5854 = vmatpush1.xpose.msra.mxu0 0.0
    %5855 = vmatprep.subr.mxu0 0.0
    %5856 = vmatpush1.xpose.msra.mxu0 0.0
    %5857 = vmatprep.subr.mxu0 0.0
    %5858 = vmatpush1.xpose.msra.mxu0 0.0
    %5859 = vmatprep.subr.mxu0 0.0
    %5860 = vmatpush1.xpose.msra.mxu0 0.0
    %5861 = vmatprep.subr.mxu0 0.0
    %5862 = vmatpush1.xpose.msra.mxu0 0.0
    %5863 = vmatprep.subr.mxu0 0.0
    %5864 = vmatpush1.xpose.msra.mxu0 0.0
    %5865 = vmatprep.subr.mxu0 0.0
    %5866 = vmatpush1.xpose.msra.mxu0 %v5835
    %5867 = vmatprep.subr.mxu0 0.0
    %5868 = vmatpush1.xpose.msra.mxu0 %v5832
    %5869 = vmatprep.subr.mxu0 0.0
    %5870 = vmatpush2.xpose.msra.mxu0 0.0
    %5871 = vmatprep.subr.mxu0 0.0
    %5872 = vmatpush2.xpose.msra.mxu0 0.0
    %5873 = vmatprep.subr.mxu0 0.0
    %5874 = vmatpush2.xpose.msra.mxu0 0.0
    %5875 = vmatprep.subr.mxu0 0.0
    %5876 = vmatpush2.xpose.msra.mxu0 0.0
    %5877 = vmatprep.subr.mxu0 0.0
    %5878 = vmatpush2.xpose.msra.mxu0 0.0
    %5879 = vmatprep.subr.mxu0 0.0
    %5880 = vmatpush2.xpose.msra.mxu0 0.0
    %5881 = vmatprep.subr.mxu0 0.0
    %5882 = vmatpush2.xpose.msra.mxu0 0.0
    %5883 = vmatprep.subr.mxu0 0.0
    %5884 = vmatpush2.xpose.msra.mxu0 0.0
    %5885 = vmatprep.subr.mxu0 0.0
    %5886 = vmatpush2.xpose.msra.mxu0 0.0
    %5887 = vmatprep.subr.mxu0 0.0
    %5888 = vmatpush2.xpose.msra.mxu0 0.0
    %5889 = vmatprep.subr.mxu0 0.0
    %5890 = vmatpush2.xpose.msra.mxu0 0.0
    %5891 = vmatprep.subr.mxu0 0.0
    %5892 = vmatpush2.xpose.msra.mxu0 0.0
    %5893 = vmatprep.subr.mxu0 0.0
    %5894 = vmatpush2.xpose.msra.mxu0 0.0
    %5895 = vmatprep.subr.mxu0 0.0
    %5896 = vmatpush2.xpose.msra.mxu0 0.0
    %5897 = vmatprep.subr.mxu0 0.0
    %5898 = vmatpush2.xpose.msra.mxu0 0.0
    %5899 = vmatprep.subr.mxu0 0.0
    %5900 = vmatpush2.xpose.msra.mxu0 0.0
    %5901 = vmatprep.mubr.f32.mxu0 0.0
    %5902 = vmatmul.mubr.f32.gmra.mxu0 %v5297
    %v5903 = vpop.f32.mrf.mxu0
    %v5904 = vadd.f32 %v5294, %v5903
    %v5905 = vpop.f32.mrf.mxu0
    %5906 = vdwg.mxu0
    %5907 = vst.msk [vmem:[#allocation2] sm:$0xff] %vm1302, %v5372
    %5908 = vst.msk [vmem:[#allocation2 + $0x8] sm:$0xff] %vm1302, %v5448
    %5909 = vst.msk [vmem:[#allocation2 + $0x10] sm:$0xff] %vm1302, %v5524
    %5910 = vst.msk [vmem:[#allocation2 + $0x18] sm:$0xff] %vm1302, %v5600
    %5911 = vst.msk [vmem:[#allocation2 + $0x20] sm:$0xff] %vm1302, %v5676
    %5912 = vst.msk [vmem:[#allocation2 + $0x28] sm:$0xff] %vm1302, %v5752
    %5913 = vst.msk [vmem:[#allocation2 + $0x30] sm:$0xff] %vm1302, %v5828
    %5914 = vst.msk [vmem:[#allocation2 + $0x38] sm:$0xff] %vm1302, %v5904
    %v5915 = vld [vmem:[#allocation2] sm:$0x1]
    %v5916 = vld [vmem:[#allocation2 + $0x8] sm:$0x1]
    %v5917 = vld [vmem:[#allocation2 + $0x10] sm:$0x1]
    %v5918 = vld [vmem:[#allocation2 + $0x18] sm:$0x1]
    %v5919 = vld [vmem:[#allocation2 + $0x20] sm:$0x1]
    %v5920 = vld [vmem:[#allocation2 + $0x28] sm:$0x1]
    %v5921 = vld [vmem:[#allocation2 + $0x30] sm:$0x1]
    %v5922 = vld [vmem:[#allocation2 + $0x38] sm:$0x1]
    %v5931 = vrot.slane %v5916, 7
    %v5932 = vsel %vm1328, %v5931, %v5915
    %v5933 = vrot.slane %v5917, 6
    %v5934 = vsel %vm1331, %v5933, %v5932
    %v5935 = vrot.slane %v5918, 5
    %v5936 = vsel %vm1334, %v5935, %v5934
    %v5937 = vrot.slane %v5919, 4
    %v5938 = vsel %vm1337, %v5937, %v5936
    %v5939 = vrot.slane %v5920, 3
    %v5940 = vsel %vm1340, %v5939, %v5938
    %v5941 = vrot.slane %v5921, 2
    %v5942 = vsel %vm1343, %v5941, %v5940
    %v5943 = vrot.slane %v5922, 1
    %v5944 = vsel %vm1346, %v5943, %v5942
    %5946 = vst.msk [vmem:[#allocation3 + $0x18] sm:$0xff] %vm1302, %v5944
    %v5947 = vld [vmem:[#allocation2 + $0x1] sm:$0x1]
    %v5948 = vld [vmem:[#allocation2 + $0x9] sm:$0x1]
    %v5949 = vld [vmem:[#allocation2 + $0x11] sm:$0x1]
    %v5950 = vld [vmem:[#allocation2 + $0x19] sm:$0x1]
    %v5951 = vld [vmem:[#allocation2 + $0x21] sm:$0x1]
    %v5952 = vld [vmem:[#allocation2 + $0x29] sm:$0x1]
    %v5953 = vld [vmem:[#allocation2 + $0x31] sm:$0x1]
    %v5954 = vld [vmem:[#allocation2 + $0x39] sm:$0x1]
    %v5963 = vrot.slane %v5948, 7
    %v5964 = vsel %vm1328, %v5963, %v5947
    %v5965 = vrot.slane %v5949, 6
    %v5966 = vsel %vm1331, %v5965, %v5964
    %v5967 = vrot.slane %v5950, 5
    %v5968 = vsel %vm1334, %v5967, %v5966
    %v5969 = vrot.slane %v5951, 4
    %v5970 = vsel %vm1337, %v5969, %v5968
    %v5971 = vrot.slane %v5952, 3
    %v5972 = vsel %vm1340, %v5971, %v5970
    %v5973 = vrot.slane %v5953, 2
    %v5974 = vsel %vm1343, %v5973, %v5972
    %v5975 = vrot.slane %v5954, 1
    %v5976 = vsel %vm1346, %v5975, %v5974
    %5977 = vrot.lane.b32.xlu0 %v5976, 16
    %v5978 = vpop.permute.xlu0 %5977
    %5980 = vst.msk [vmem:[#allocation3 + $0x18] sm:$0xff] %vm1383, %v5978
    %v5981 = vld [vmem:[#allocation2 + $0x2] sm:$0x1]
    %v5982 = vld [vmem:[#allocation2 + $0xa] sm:$0x1]
    %v5983 = vld [vmem:[#allocation2 + $0x12] sm:$0x1]
    %v5984 = vld [vmem:[#allocation2 + $0x1a] sm:$0x1]
    %v5985 = vld [vmem:[#allocation2 + $0x22] sm:$0x1]
    %v5986 = vld [vmem:[#allocation2 + $0x2a] sm:$0x1]
    %v5987 = vld [vmem:[#allocation2 + $0x32] sm:$0x1]
    %v5988 = vld [vmem:[#allocation2 + $0x3a] sm:$0x1]
    %v5997 = vrot.slane %v5982, 7
    %v5998 = vsel %vm1328, %v5997, %v5981
    %v5999 = vrot.slane %v5983, 6
    %v6000 = vsel %vm1331, %v5999, %v5998
    %v6001 = vrot.slane %v5984, 5
    %v6002 = vsel %vm1334, %v6001, %v6000
    %v6003 = vrot.slane %v5985, 4
    %v6004 = vsel %vm1337, %v6003, %v6002
    %v6005 = vrot.slane %v5986, 3
    %v6006 = vsel %vm1340, %v6005, %v6004
    %v6007 = vrot.slane %v5987, 2
    %v6008 = vsel %vm1343, %v6007, %v6006
    %v6009 = vrot.slane %v5988, 1
    %v6010 = vsel %vm1346, %v6009, %v6008
    %6011 = vrot.lane.b32.xlu0 %v6010, 32
    %v6012 = vpop.permute.xlu0 %6011
    %6014 = vst.msk [vmem:[#allocation3 + $0x18] sm:$0xff] %vm1418, %v6012
    %v6015 = vld [vmem:[#allocation2 + $0x3] sm:$0x1]
    %v6016 = vld [vmem:[#allocation2 + $0xb] sm:$0x1]
    %v6017 = vld [vmem:[#allocation2 + $0x13] sm:$0x1]
    %v6018 = vld [vmem:[#allocation2 + $0x1b] sm:$0x1]
    %v6019 = vld [vmem:[#allocation2 + $0x23] sm:$0x1]
    %v6020 = vld [vmem:[#allocation2 + $0x2b] sm:$0x1]
    %v6021 = vld [vmem:[#allocation2 + $0x33] sm:$0x1]
    %v6022 = vld [vmem:[#allocation2 + $0x3b] sm:$0x1]
    %v6031 = vrot.slane %v6016, 7
    %v6032 = vsel %vm1328, %v6031, %v6015
    %v6033 = vrot.slane %v6017, 6
    %v6034 = vsel %vm1331, %v6033, %v6032
    %v6035 = vrot.slane %v6018, 5
    %v6036 = vsel %vm1334, %v6035, %v6034
    %v6037 = vrot.slane %v6019, 4
    %v6038 = vsel %vm1337, %v6037, %v6036
    %v6039 = vrot.slane %v6020, 3
    %v6040 = vsel %vm1340, %v6039, %v6038
    %v6041 = vrot.slane %v6021, 2
    %v6042 = vsel %vm1343, %v6041, %v6040
    %v6043 = vrot.slane %v6022, 1
    %v6044 = vsel %vm1346, %v6043, %v6042
    %6045 = vrot.lane.b32.xlu0 %v6044, 48
    %v6046 = vpop.permute.xlu0 %6045
    %6048 = vst.msk [vmem:[#allocation3 + $0x18] sm:$0xff] %vm1453, %v6046
    %v6049 = vld [vmem:[#allocation2 + $0x4] sm:$0x1]
    %v6050 = vld [vmem:[#allocation2 + $0xc] sm:$0x1]
    %v6051 = vld [vmem:[#allocation2 + $0x14] sm:$0x1]
    %v6052 = vld [vmem:[#allocation2 + $0x1c] sm:$0x1]
    %v6053 = vld [vmem:[#allocation2 + $0x24] sm:$0x1]
    %v6054 = vld [vmem:[#allocation2 + $0x2c] sm:$0x1]
    %v6055 = vld [vmem:[#allocation2 + $0x34] sm:$0x1]
    %v6056 = vld [vmem:[#allocation2 + $0x3c] sm:$0x1]
    %v6065 = vrot.slane %v6050, 7
    %v6066 = vsel %vm1328, %v6065, %v6049
    %v6067 = vrot.slane %v6051, 6
    %v6068 = vsel %vm1331, %v6067, %v6066
    %v6069 = vrot.slane %v6052, 5
    %v6070 = vsel %vm1334, %v6069, %v6068
    %v6071 = vrot.slane %v6053, 4
    %v6072 = vsel %vm1337, %v6071, %v6070
    %v6073 = vrot.slane %v6054, 3
    %v6074 = vsel %vm1340, %v6073, %v6072
    %v6075 = vrot.slane %v6055, 2
    %v6076 = vsel %vm1343, %v6075, %v6074
    %v6077 = vrot.slane %v6056, 1
    %v6078 = vsel %vm1346, %v6077, %v6076
    %6079 = vrot.lane.b32.xlu0 %v6078, 64
    %v6080 = vpop.permute.xlu0 %6079
    %6082 = vst.msk [vmem:[#allocation3 + $0x18] sm:$0xff] %vm1488, %v6080
    %v6083 = vld [vmem:[#allocation2 + $0x5] sm:$0x1]
    %v6084 = vld [vmem:[#allocation2 + $0xd] sm:$0x1]
    %v6085 = vld [vmem:[#allocation2 + $0x15] sm:$0x1]
    %v6086 = vld [vmem:[#allocation2 + $0x1d] sm:$0x1]
    %v6087 = vld [vmem:[#allocation2 + $0x25] sm:$0x1]
    %v6088 = vld [vmem:[#allocation2 + $0x2d] sm:$0x1]
    %v6089 = vld [vmem:[#allocation2 + $0x35] sm:$0x1]
    %v6090 = vld [vmem:[#allocation2 + $0x3d] sm:$0x1]
    %v6099 = vrot.slane %v6084, 7
    %v6100 = vsel %vm1328, %v6099, %v6083
    %v6101 = vrot.slane %v6085, 6
    %v6102 = vsel %vm1331, %v6101, %v6100
    %v6103 = vrot.slane %v6086, 5
    %v6104 = vsel %vm1334, %v6103, %v6102
    %v6105 = vrot.slane %v6087, 4
    %v6106 = vsel %vm1337, %v6105, %v6104
    %v6107 = vrot.slane %v6088, 3
    %v6108 = vsel %vm1340, %v6107, %v6106
    %v6109 = vrot.slane %v6089, 2
    %v6110 = vsel %vm1343, %v6109, %v6108
    %v6111 = vrot.slane %v6090, 1
    %v6112 = vsel %vm1346, %v6111, %v6110
    %6113 = vrot.lane.b32.xlu0 %v6112, 80
    %v6114 = vpop.permute.xlu0 %6113
    %6116 = vst.msk [vmem:[#allocation3 + $0x18] sm:$0xff] %vm1523, %v6114
    %v6117 = vld [vmem:[#allocation2 + $0x6] sm:$0x1]
    %v6118 = vld [vmem:[#allocation2 + $0xe] sm:$0x1]
    %v6119 = vld [vmem:[#allocation2 + $0x16] sm:$0x1]
    %v6120 = vld [vmem:[#allocation2 + $0x1e] sm:$0x1]
    %v6121 = vld [vmem:[#allocation2 + $0x26] sm:$0x1]
    %v6122 = vld [vmem:[#allocation2 + $0x2e] sm:$0x1]
    %v6123 = vld [vmem:[#allocation2 + $0x36] sm:$0x1]
    %v6124 = vld [vmem:[#allocation2 + $0x3e] sm:$0x1]
    %v6133 = vrot.slane %v6118, 7
    %v6134 = vsel %vm1328, %v6133, %v6117
    %v6135 = vrot.slane %v6119, 6
    %v6136 = vsel %vm1331, %v6135, %v6134
    %v6137 = vrot.slane %v6120, 5
    %v6138 = vsel %vm1334, %v6137, %v6136
    %v6139 = vrot.slane %v6121, 4
    %v6140 = vsel %vm1337, %v6139, %v6138
    %v6141 = vrot.slane %v6122, 3
    %v6142 = vsel %vm1340, %v6141, %v6140
    %v6143 = vrot.slane %v6123, 2
    %v6144 = vsel %vm1343, %v6143, %v6142
    %v6145 = vrot.slane %v6124, 1
    %v6146 = vsel %vm1346, %v6145, %v6144
    %6147 = vrot.lane.b32.xlu0 %v6146, 96
    %v6148 = vpop.permute.xlu0 %6147
    %6150 = vst.msk [vmem:[#allocation3 + $0x18] sm:$0xff] %vm1558, %v6148
    %v6151 = vld [vmem:[#allocation2 + $0x7] sm:$0x1]
    %v6152 = vld [vmem:[#allocation2 + $0xf] sm:$0x1]
    %v6153 = vld [vmem:[#allocation2 + $0x17] sm:$0x1]
    %v6154 = vld [vmem:[#allocation2 + $0x1f] sm:$0x1]
    %v6155 = vld [vmem:[#allocation2 + $0x27] sm:$0x1]
    %v6156 = vld [vmem:[#allocation2 + $0x2f] sm:$0x1]
    %v6157 = vld [vmem:[#allocation2 + $0x37] sm:$0x1]
    %v6158 = vld [vmem:[#allocation2 + $0x3f] sm:$0x1]
    %v6167 = vrot.slane %v6152, 7
    %v6168 = vsel %vm1328, %v6167, %v6151
    %v6169 = vrot.slane %v6153, 6
    %v6170 = vsel %vm1331, %v6169, %v6168
    %v6171 = vrot.slane %v6154, 5
    %v6172 = vsel %vm1334, %v6171, %v6170
    %v6173 = vrot.slane %v6155, 4
    %v6174 = vsel %vm1337, %v6173, %v6172
    %v6175 = vrot.slane %v6156, 3
    %v6176 = vsel %vm1340, %v6175, %v6174
    %v6177 = vrot.slane %v6157, 2
    %v6178 = vsel %vm1343, %v6177, %v6176
    %v6179 = vrot.slane %v6158, 1
    %v6180 = vsel %vm1346, %v6179, %v6178
    %6181 = vrot.lane.b32.xlu0 %v6180, 112
    %v6182 = vpop.permute.xlu0 %6181
    %6184 = vst.msk [vmem:[#allocation3 + $0x18] sm:$0xff] %vm1593, %v6182
    %v6185 = vld [vmem:[#allocation3] sm:$0xff]
    %v6186 = vld [vmem:[#allocation3 + $0x8] sm:$0xff]
    %v6187 = vld [vmem:[#allocation3 + $0x10] sm:$0xff]
    %v6188 = vld [vmem:[#allocation3 + $0x18] sm:$0xff]
    %v6189 = vld [vmem:[%s7] sm:$0xff]
    %v6190 = vld [vmem:[%s7 + $0x8] sm:$0xff]
    %v6191 = vld [vmem:[%s7 + $0x10] sm:$0xff]
    %v6192 = vld [vmem:[%s7 + $0x18] sm:$0xff]
    %v6193 = vld [vmem:[%s7 + $0x20] sm:$0xff]
    %v6194 = vld [vmem:[%s7 + $0x28] sm:$0xff]
    %v6195 = vld [vmem:[%s7 + $0x30] sm:$0xff]
    %v6196 = vld [vmem:[%s7 + $0x38] sm:$0xff]
    %v6197 = vld [vmem:[%s7 + $0x40] sm:$0xff]
    %v6198 = vld [vmem:[%s7 + $0x48] sm:$0xff]
    %v6199 = vld [vmem:[%s7 + $0x50] sm:$0xff]
    %v6200 = vld [vmem:[%s7 + $0x58] sm:$0xff]
    %v6201 = vld [vmem:[%s7 + $0x60] sm:$0xff]
    %v6202 = vld [vmem:[%s7 + $0x68] sm:$0xff]
    %v6203 = vld [vmem:[%s7 + $0x70] sm:$0xff]
    %v6204 = vld [vmem:[%s7 + $0x78] sm:$0xff]
    %v6205 = vld [vmem:[%s8] sm:$0x1]
    %v6207 = vlaneseq
    %v6208 = vshrl.u32 %v6207, 7
    %v6209 = vsub.s32 0, %v6208
    %v6210 = vrot.slane %v6205, %v6209
    %6212 = vmatprep.subr.mxu0 0.0
    %6213 = vmatpush1.msra.mxu0 %v6204
    %6214 = vmatprep.subr.mxu0 0.0
    %6215 = vmatpush1.msra.mxu0 %v6203
    %6216 = vmatprep.subr.mxu0 0.0
    %6217 = vmatpush1.msra.mxu0 %v6202
    %6218 = vmatprep.subr.mxu0 0.0
    %6219 = vmatpush1.msra.mxu0 %v6201
    %6220 = vmatprep.subr.mxu0 0.0
    %6221 = vmatpush1.msra.mxu0 %v6200
    %6222 = vmatprep.subr.mxu0 0.0
    %6223 = vmatpush1.msra.mxu0 %v6199
    %6224 = vmatprep.subr.mxu0 0.0
    %6225 = vmatpush1.msra.mxu0 %v6198
    %6226 = vmatprep.subr.mxu0 0.0
    %6227 = vmatpush1.msra.mxu0 %v6197
    %6228 = vmatprep.subr.mxu0 0.0
    %6229 = vmatpush1.msra.mxu0 %v6196
    %6230 = vmatprep.subr.mxu0 0.0
    %6231 = vmatpush1.msra.mxu0 %v6195
    %6232 = vmatprep.subr.mxu0 0.0
    %6233 = vmatpush1.msra.mxu0 %v6194
    %6234 = vmatprep.subr.mxu0 0.0
    %6235 = vmatpush1.msra.mxu0 %v6193
    %6236 = vmatprep.subr.mxu0 0.0
    %6237 = vmatpush1.msra.mxu0 %v6192
    %6238 = vmatprep.subr.mxu0 0.0
    %6239 = vmatpush1.msra.mxu0 %v6191
    %6240 = vmatprep.subr.mxu0 0.0
    %6241 = vmatpush1.msra.mxu0 %v6190
    %6242 = vmatprep.subr.mxu0 0.0
    %6243 = vmatpush1.msra.mxu0 %v6189
    %6244 = vmatprep.subr.mxu0 0.0
    %6245 = vmatpush2.msra.mxu0 0.0
    %6246 = vmatprep.subr.mxu0 0.0
    %6247 = vmatpush2.msra.mxu0 0.0
    %6248 = vmatprep.subr.mxu0 0.0
    %6249 = vmatpush2.msra.mxu0 0.0
    %6250 = vmatprep.subr.mxu0 0.0
    %6251 = vmatpush2.msra.mxu0 0.0
    %6252 = vmatprep.subr.mxu0 0.0
    %6253 = vmatpush2.msra.mxu0 0.0
    %6254 = vmatprep.subr.mxu0 0.0
    %6255 = vmatpush2.msra.mxu0 0.0
    %6256 = vmatprep.subr.mxu0 0.0
    %6257 = vmatpush2.msra.mxu0 0.0
    %6258 = vmatprep.subr.mxu0 0.0
    %6259 = vmatpush2.msra.mxu0 0.0
    %6260 = vmatprep.subr.mxu0 0.0
    %6261 = vmatpush2.msra.mxu0 0.0
    %6262 = vmatprep.subr.mxu0 0.0
    %6263 = vmatpush2.msra.mxu0 0.0
    %6264 = vmatprep.subr.mxu0 0.0
    %6265 = vmatpush2.msra.mxu0 0.0
    %6266 = vmatprep.subr.mxu0 0.0
    %6267 = vmatpush2.msra.mxu0 0.0
    %6268 = vmatprep.subr.mxu0 0.0
    %6269 = vmatpush2.msra.mxu0 0.0
    %6270 = vmatprep.subr.mxu0 0.0
    %6271 = vmatpush2.msra.mxu0 0.0
    %6272 = vmatprep.subr.mxu0 0.0
    %6273 = vmatpush2.msra.mxu0 0.0
    %6274 = vmatprep.subr.mxu0 0.0
    %6275 = vmatpush2.msra.mxu0 0.0
    %6276 = vmatprep.mubr.f32.mxu0 0.0
    %6277 = vmatmul.mubr.f32.gmra.mxu0 %v6185
    %v6278 = vpop.f32.mrf.mxu0
    %v6279 = vadd.f32 %v6210, %v6278
    %v6280 = vpop.f32.mrf.mxu0
    %6281 = vmatprep.mubr.f32.mxu0 0.0
    %6282 = vmatmul.mubr.f32.gmra.mxu0 %v6186
    %v6283 = vpop.f32.mrf.mxu0
    %v6284 = vadd.f32 %v6210, %v6283
    %v6285 = vpop.f32.mrf.mxu0
    %6286 = vmatprep.mubr.f32.mxu0 0.0
    %6287 = vmatmul.mubr.f32.gmra.mxu0 %v6187
    %v6288 = vpop.f32.mrf.mxu0
    %v6289 = vadd.f32 %v6210, %v6288
    %v6290 = vpop.f32.mrf.mxu0
    %6291 = vmatprep.mubr.f32.mxu0 0.0
    %6292 = vmatmul.mubr.f32.gmra.mxu0 %v6188
    %v6293 = vpop.f32.mrf.mxu0
    %v6294 = vadd.f32 %v6210, %v6293
    %v6295 = vpop.f32.mrf.mxu0
    %6296 = vdwg.mxu0
    %v6297 = vld [vmem:[%s9] sm:$0x1]
    %v6298 = vld [vmem:[%s10] sm:$0x1]
    %v6299 = vld [vmem:[%s11] sm:$0xff]
    %v6300 = vld [vmem:[%s11 + $0x8] sm:$0xff]
    %v6301 = vld [vmem:[%s11 + $0x10] sm:$0xff]
    %v6302 = vld [vmem:[%s11 + $0x18] sm:$0xff]
    %v6303 = vld [vmem:[%s11 + $0x20] sm:$0xff]
    %v6304 = vld [vmem:[%s11 + $0x28] sm:$0xff]
    %v6305 = vld [vmem:[%s11 + $0x30] sm:$0xff]
    %v6306 = vld [vmem:[%s11 + $0x38] sm:$0xff]
    %v6307 = vld [vmem:[%s11 + $0x40] sm:$0xff]
    %v6308 = vld [vmem:[%s11 + $0x48] sm:$0xff]
    %v6309 = vld [vmem:[%s11 + $0x50] sm:$0xff]
    %v6310 = vld [vmem:[%s11 + $0x58] sm:$0xff]
    %v6311 = vld [vmem:[%s11 + $0x60] sm:$0xff]
    %v6312 = vld [vmem:[%s11 + $0x68] sm:$0xff]
    %v6313 = vld [vmem:[%s11 + $0x70] sm:$0xff]
    %v6314 = vld [vmem:[%s11 + $0x78] sm:$0xff]
    %v6315 = vrot.slane %v6279, 4
    %v6316 = vadd.f32 %v6279, %v6315
    %v6317 = vrot.slane %v6316, 2
    %v6318 = vadd.f32 %v6316, %v6317
    %v6319 = vrot.slane %v6318, 1
    %v6320 = vadd.f32 %v6318, %v6319
    %v6321 = vrcp.pop 8.0
    %v6322 = vmul.f32 %v6320, %v6321
    %v6323 = vsub.f32 %v6279, %v6322
    %v6324 = vmul.f32 %v6323, %v6323
    %v6325 = vrot.slane %v6324, 4
    %v6326 = vadd.f32 %v6324, %v6325
    %v6327 = vrot.slane %v6326, 2
    %v6328 = vadd.f32 %v6326, %v6327
    %v6329 = vrot.slane %v6328, 1
    %v6330 = vadd.f32 %v6328, %v6329
    %v6331 = vmul.f32 %v6330, %v6321
    %v6332 = vadd.f32 %v6331, 1e-05
    %v6333 = vrsqrt.pop %v6332
    %v6334 = vmul.f32 %v6323, %v6333
    %v6336 = vlaneseq
    %v6337 = vshrl.u32 %v6336, 7
    %v6338 = vsub.s32 0, %v6337
    %v6339 = vrot.slane %v6297, %v6338
    %v6341 = vmul.f32 %v6334, %v6339
    %v6343 = vlaneseq
    %v6344 = vshrl.u32 %v6343, 7
    %v6345 = vsub.s32 0, %v6344
    %v6346 = vrot.slane %v6298, %v6345
    %v6348 = vadd.f32 %v6341, %v6346
    %v6349 = vmax.f32 %v6348, 0.0
    %6350 = vmatprep.subr.mxu0 0.0
    %6351 = vmatpush1.msra.mxu0 %v6314
    %6352 = vmatprep.subr.mxu0 0.0
    %6353 = vmatpush1.msra.mxu0 %v6313
    %6354 = vmatprep.subr.mxu0 0.0
    %6355 = vmatpush1.msra.mxu0 %v6312
    %6356 = vmatprep.subr.mxu0 0.0
    %6357 = vmatpush1.msra.mxu0 %v6311
    %6358 = vmatprep.subr.mxu0 0.0
    %6359 = vmatpush1.msra.mxu0 %v6310
    %6360 = vmatprep.subr.mxu0 0.0
    %6361 = vmatpush1.msra.mxu0 %v6309
    %6362 = vmatprep.subr.mxu0 0.0
    %6363 = vmatpush1.msra.mxu0 %v6308
    %6364 = vmatprep.subr.mxu0 0.0
    %6365 = vmatpush1.msra.mxu0 %v6307
    %6366 = vmatprep.subr.mxu0 0.0
    %6367 = vmatpush1.msra.mxu0 %v6306
    %6368 = vmatprep.subr.mxu0 0.0
    %6369 = vmatpush1.msra.mxu0 %v6305
    %6370 = vmatprep.subr.mxu0 0.0
    %6371 = vmatpush1.msra.mxu0 %v6304
    %6372 = vmatprep.subr.mxu0 0.0
    %6373 = vmatpush1.msra.mxu0 %v6303
    %6374 = vmatprep.subr.mxu0 0.0
    %6375 = vmatpush1.msra.mxu0 %v6302
    %6376 = vmatprep.subr.mxu0 0.0
    %6377 = vmatpush1.msra.mxu0 %v6301
    %6378 = vmatprep.subr.mxu0 0.0
    %6379 = vmatpush1.msra.mxu0 %v6300
    %6380 = vmatprep.subr.mxu0 0.0
    %6381 = vmatpush1.msra.mxu0 %v6299
    %6382 = vmatprep.subr.mxu0 0.0
    %6383 = vmatpush2.msra.mxu0 0.0
    %6384 = vmatprep.subr.mxu0 0.0
    %6385 = vmatpush2.msra.mxu0 0.0
    %6386 = vmatprep.subr.mxu0 0.0
    %6387 = vmatpush2.msra.mxu0 0.0
    %6388 = vmatprep.subr.mxu0 0.0
    %6389 = vmatpush2.msra.mxu0 0.0
    %6390 = vmatprep.subr.mxu0 0.0
    %6391 = vmatpush2.msra.mxu0 0.0
    %6392 = vmatprep.subr.mxu0 0.0
    %6393 = vmatpush2.msra.mxu0 0.0
    %6394 = vmatprep.subr.mxu0 0.0
    %6395 = vmatpush2.msra.mxu0 0.0
    %6396 = vmatprep.subr.mxu0 0.0
    %6397 = vmatpush2.msra.mxu0 0.0
    %6398 = vmatprep.subr.mxu0 0.0
    %6399 = vmatpush2.msra.mxu0 0.0
    %6400 = vmatprep.subr.mxu0 0.0
    %6401 = vmatpush2.msra.mxu0 0.0
    %6402 = vmatprep.subr.mxu0 0.0
    %6403 = vmatpush2.msra.mxu0 0.0
    %6404 = vmatprep.subr.mxu0 0.0
    %6405 = vmatpush2.msra.mxu0 0.0
    %6406 = vmatprep.subr.mxu0 0.0
    %6407 = vmatpush2.msra.mxu0 0.0
    %6408 = vmatprep.subr.mxu0 0.0
    %6409 = vmatpush2.msra.mxu0 0.0
    %6410 = vmatprep.subr.mxu0 0.0
    %6411 = vmatpush2.msra.mxu0 0.0
    %6412 = vmatprep.subr.mxu0 0.0
    %6413 = vmatpush2.msra.mxu0 0.0
    %6414 = vmatprep.mubr.f32.mxu0 0.0
    %6415 = vmatmul.mubr.f32.gmra.mxu0 %v6349
    %v6416 = vpop.f32.mrf.mxu0
    %v6417 = vadd.f32 0.0, %v6416
    %v6418 = vpop.f32.mrf.mxu0
    %6419 = vdwg.mxu0
    %v6420 = vrot.slane %v6417, 4
    %v6421 = vadd.f32 %v6417, %v6420
    %v6422 = vrot.slane %v6421, 2
    %v6423 = vadd.f32 %v6421, %v6422
    %v6424 = vrot.slane %v6423, 1
    %v6425 = vadd.f32 %v6423, %v6424
    %v6426 = vmul.f32 %v6425, %v6321
    %v6427 = vsub.f32 %v6417, %v6426
    %v6428 = vrot.slane %v6284, 4
    %v6429 = vadd.f32 %v6284, %v6428
    %v6430 = vrot.slane %v6429, 2
    %v6431 = vadd.f32 %v6429, %v6430
    %v6432 = vrot.slane %v6431, 1
    %v6433 = vadd.f32 %v6431, %v6432
    %v6434 = vmul.f32 %v6433, %v6321
    %v6435 = vsub.f32 %v6284, %v6434
    %v6436 = vmul.f32 %v6435, %v6435
    %v6437 = vrot.slane %v6436, 4
    %v6438 = vadd.f32 %v6436, %v6437
    %v6439 = vrot.slane %v6438, 2
    %v6440 = vadd.f32 %v6438, %v6439
    %v6441 = vrot.slane %v6440, 1
    %v6442 = vadd.f32 %v6440, %v6441
    %v6443 = vmul.f32 %v6442, %v6321
    %v6444 = vadd.f32 %v6443, 1e-05
    %v6445 = vrsqrt.pop %v6444
    %v6446 = vmul.f32 %v6435, %v6445
    %v6447 = vmul.f32 %v6446, %v6339
    %v6448 = vadd.f32 %v6447, %v6346
    %v6449 = vmax.f32 %v6448, 0.0
    %6450 = vmatprep.subr.mxu0 0.0
    %6451 = vmatpush1.msra.mxu0 %v6314
    %6452 = vmatprep.subr.mxu0 0.0
    %6453 = vmatpush1.msra.mxu0 %v6313
    %6454 = vmatprep.subr.mxu0 0.0
    %6455 = vmatpush1.msra.mxu0 %v6312
    %6456 = vmatprep.subr.mxu0 0.0
    %6457 = vmatpush1.msra.mxu0 %v6311
    %6458 = vmatprep.subr.mxu0 0.0
    %6459 = vmatpush1.msra.mxu0 %v6310
    %6460 = vmatprep.subr.mxu0 0.0
    %6461 = vmatpush1.msra.mxu0 %v6309
    %6462 = vmatprep.subr.mxu0 0.0
    %6463 = vmatpush1.msra.mxu0 %v6308
    %6464 = vmatprep.subr.mxu0 0.0
    %6465 = vmatpush1.msra.mxu0 %v6307
    %6466 = vmatprep.subr.mxu0 0.0
    %6467 = vmatpush1.msra.mxu0 %v6306
    %6468 = vmatprep.subr.mxu0 0.0
    %6469 = vmatpush1.msra.mxu0 %v6305
    %6470 = vmatprep.subr.mxu0 0.0
    %6471 = vmatpush1.msra.mxu0 %v6304
    %6472 = vmatprep.subr.mxu0 0.0
    %6473 = vmatpush1.msra.mxu0 %v6303
    %6474 = vmatprep.subr.mxu0 0.0
    %6475 = vmatpush1.msra.mxu0 %v6302
    %6476 = vmatprep.subr.mxu0 0.0
    %6477 = vmatpush1.msra.mxu0 %v6301
    %6478 = vmatprep.subr.mxu0 0.0
    %6479 = vmatpush1.msra.mxu0 %v6300
    %6480 = vmatprep.subr.mxu0 0.0
    %6481 = vmatpush1.msra.mxu0 %v6299
    %6482 = vmatprep.subr.mxu0 0.0
    %6483 = vmatpush2.msra.mxu0 0.0
    %6484 = vmatprep.subr.mxu0 0.0
    %6485 = vmatpush2.msra.mxu0 0.0
    %6486 = vmatprep.subr.mxu0 0.0
    %6487 = vmatpush2.msra.mxu0 0.0
    %6488 = vmatprep.subr.mxu0 0.0
    %6489 = vmatpush2.msra.mxu0 0.0
    %6490 = vmatprep.subr.mxu0 0.0
    %6491 = vmatpush2.msra.mxu0 0.0
    %6492 = vmatprep.subr.mxu0 0.0
    %6493 = vmatpush2.msra.mxu0 0.0
    %6494 = vmatprep.subr.mxu0 0.0
    %6495 = vmatpush2.msra.mxu0 0.0
    %6496 = vmatprep.subr.mxu0 0.0
    %6497 = vmatpush2.msra.mxu0 0.0
    %6498 = vmatprep.subr.mxu0 0.0
    %6499 = vmatpush2.msra.mxu0 0.0
    %6500 = vmatprep.subr.mxu0 0.0
    %6501 = vmatpush2.msra.mxu0 0.0
    %6502 = vmatprep.subr.mxu0 0.0
    %6503 = vmatpush2.msra.mxu0 0.0
    %6504 = vmatprep.subr.mxu0 0.0
    %6505 = vmatpush2.msra.mxu0 0.0
    %6506 = vmatprep.subr.mxu0 0.0
    %6507 = vmatpush2.msra.mxu0 0.0
    %6508 = vmatprep.subr.mxu0 0.0
    %6509 = vmatpush2.msra.mxu0 0.0
    %6510 = vmatprep.subr.mxu0 0.0
    %6511 = vmatpush2.msra.mxu0 0.0
    %6512 = vmatprep.subr.mxu0 0.0
    %6513 = vmatpush2.msra.mxu0 0.0
    %6514 = vmatprep.mubr.f32.mxu0 0.0
    %6515 = vmatmul.mubr.f32.gmra.mxu0 %v6449
    %v6516 = vpop.f32.mrf.mxu0
    %v6517 = vadd.f32 0.0, %v6516
    %v6518 = vpop.f32.mrf.mxu0
    %6519 = vdwg.mxu0
    %v6520 = vrot.slane %v6517, 4
    %v6521 = vadd.f32 %v6517, %v6520
    %v6522 = vrot.slane %v6521, 2
    %v6523 = vadd.f32 %v6521, %v6522
    %v6524 = vrot.slane %v6523, 1
    %v6525 = vadd.f32 %v6523, %v6524
    %v6526 = vmul.f32 %v6525, %v6321
    %v6527 = vsub.f32 %v6517, %v6526
    %v6528 = vrot.slane %v6289, 4
    %v6529 = vadd.f32 %v6289, %v6528
    %v6530 = vrot.slane %v6529, 2
    %v6531 = vadd.f32 %v6529, %v6530
    %v6532 = vrot.slane %v6531, 1
    %v6533 = vadd.f32 %v6531, %v6532
    %v6534 = vmul.f32 %v6533, %v6321
    %v6535 = vsub.f32 %v6289, %v6534
    %v6536 = vmul.f32 %v6535, %v6535
    %v6537 = vrot.slane %v6536, 4
    %v6538 = vadd.f32 %v6536, %v6537
    %v6539 = vrot.slane %v6538, 2
    %v6540 = vadd.f32 %v6538, %v6539
    %v6541 = vrot.slane %v6540, 1
    %v6542 = vadd.f32 %v6540, %v6541
    %v6543 = vmul.f32 %v6542, %v6321
    %v6544 = vadd.f32 %v6543, 1e-05
    %v6545 = vrsqrt.pop %v6544
    %v6546 = vmul.f32 %v6535, %v6545
    %v6547 = vmul.f32 %v6546, %v6339
    %v6548 = vadd.f32 %v6547, %v6346
    %v6549 = vmax.f32 %v6548, 0.0
    %6550 = vmatprep.subr.mxu0 0.0
    %6551 = vmatpush1.msra.mxu0 %v6314
    %6552 = vmatprep.subr.mxu0 0.0
    %6553 = vmatpush1.msra.mxu0 %v6313
    %6554 = vmatprep.subr.mxu0 0.0
    %6555 = vmatpush1.msra.mxu0 %v6312
    %6556 = vmatprep.subr.mxu0 0.0
    %6557 = vmatpush1.msra.mxu0 %v6311
    %6558 = vmatprep.subr.mxu0 0.0
    %6559 = vmatpush1.msra.mxu0 %v6310
    %6560 = vmatprep.subr.mxu0 0.0
    %6561 = vmatpush1.msra.mxu0 %v6309
    %6562 = vmatprep.subr.mxu0 0.0
    %6563 = vmatpush1.msra.mxu0 %v6308
    %6564 = vmatprep.subr.mxu0 0.0
    %6565 = vmatpush1.msra.mxu0 %v6307
    %6566 = vmatprep.subr.mxu0 0.0
    %6567 = vmatpush1.msra.mxu0 %v6306
    %6568 = vmatprep.subr.mxu0 0.0
    %6569 = vmatpush1.msra.mxu0 %v6305
    %6570 = vmatprep.subr.mxu0 0.0
    %6571 = vmatpush1.msra.mxu0 %v6304
    %6572 = vmatprep.subr.mxu0 0.0
    %6573 = vmatpush1.msra.mxu0 %v6303
    %6574 = vmatprep.subr.mxu0 0.0
    %6575 = vmatpush1.msra.mxu0 %v6302
    %6576 = vmatprep.subr.mxu0 0.0
    %6577 = vmatpush1.msra.mxu0 %v6301
    %6578 = vmatprep.subr.mxu0 0.0
    %6579 = vmatpush1.msra.mxu0 %v6300
    %6580 = vmatprep.subr.mxu0 0.0
    %6581 = vmatpush1.msra.mxu0 %v6299
    %6582 = vmatprep.subr.mxu0 0.0
    %6583 = vmatpush2.msra.mxu0 0.0
    %6584 = vmatprep.subr.mxu0 0.0
    %6585 = vmatpush2.msra.mxu0 0.0
    %6586 = vmatprep.subr.mxu0 0.0
    %6587 = vmatpush2.msra.mxu0 0.0
    %6588 = vmatprep.subr.mxu0 0.0
    %6589 = vmatpush2.msra.mxu0 0.0
    %6590 = vmatprep.subr.mxu0 0.0
    %6591 = vmatpush2.msra.mxu0 0.0
    %6592 = vmatprep.subr.mxu0 0.0
    %6593 = vmatpush2.msra.mxu0 0.0
    %6594 = vmatprep.subr.mxu0 0.0
    %6595 = vmatpush2.msra.mxu0 0.0
    %6596 = vmatprep.subr.mxu0 0.0
    %6597 = vmatpush2.msra.mxu0 0.0
    %6598 = vmatprep.subr.mxu0 0.0
    %6599 = vmatpush2.msra.mxu0 0.0
    %6600 = vmatprep.subr.mxu0 0.0
    %6601 = vmatpush2.msra.mxu0 0.0
    %6602 = vmatprep.subr.mxu0 0.0
    %6603 = vmatpush2.msra.mxu0 0.0
    %6604 = vmatprep.subr.mxu0 0.0
    %6605 = vmatpush2.msra.mxu0 0.0
    %6606 = vmatprep.subr.mxu0 0.0
    %6607 = vmatpush2.msra.mxu0 0.0
    %6608 = vmatprep.subr.mxu0 0.0
    %6609 = vmatpush2.msra.mxu0 0.0
    %6610 = vmatprep.subr.mxu0 0.0
    %6611 = vmatpush2.msra.mxu0 0.0
    %6612 = vmatprep.subr.mxu0 0.0
    %6613 = vmatpush2.msra.mxu0 0.0
    %6614 = vmatprep.mubr.f32.mxu0 0.0
    %6615 = vmatmul.mubr.f32.gmra.mxu0 %v6549
    %v6616 = vpop.f32.mrf.mxu0
    %v6617 = vadd.f32 0.0, %v6616
    %v6618 = vpop.f32.mrf.mxu0
    %6619 = vdwg.mxu0
    %v6620 = vrot.slane %v6617, 4
    %v6621 = vadd.f32 %v6617, %v6620
    %v6622 = vrot.slane %v6621, 2
    %v6623 = vadd.f32 %v6621, %v6622
    %v6624 = vrot.slane %v6623, 1
    %v6625 = vadd.f32 %v6623, %v6624
    %v6626 = vmul.f32 %v6625, %v6321
    %v6627 = vsub.f32 %v6617, %v6626
    %v6628 = vrot.slane %v6294, 4
    %v6629 = vadd.f32 %v6294, %v6628
    %v6630 = vrot.slane %v6629, 2
    %v6631 = vadd.f32 %v6629, %v6630
    %v6632 = vrot.slane %v6631, 1
    %v6633 = vadd.f32 %v6631, %v6632
    %v6634 = vmul.f32 %v6633, %v6321
    %v6635 = vsub.f32 %v6294, %v6634
    %v6636 = vmul.f32 %v6635, %v6635
    %v6637 = vrot.slane %v6636, 4
    %v6638 = vadd.f32 %v6636, %v6637
    %v6639 = vrot.slane %v6638, 2
    %v6640 = vadd.f32 %v6638, %v6639
    %v6641 = vrot.slane %v6640, 1
    %v6642 = vadd.f32 %v6640, %v6641
    %v6643 = vmul.f32 %v6642, %v6321
    %v6644 = vadd.f32 %v6643, 1e-05
    %v6645 = vrsqrt.pop %v6644
    %v6646 = vmul.f32 %v6635, %v6645
    %v6647 = vmul.f32 %v6646, %v6339
    %v6648 = vadd.f32 %v6647, %v6346
    %v6649 = vmax.f32 %v6648, 0.0
    %6650 = vmatprep.subr.mxu0 0.0
    %6651 = vmatpush1.msra.mxu0 %v6314
    %6652 = vmatprep.subr.mxu0 0.0
    %6653 = vmatpush1.msra.mxu0 %v6313
    %6654 = vmatprep.subr.mxu0 0.0
    %6655 = vmatpush1.msra.mxu0 %v6312
    %6656 = vmatprep.subr.mxu0 0.0
    %6657 = vmatpush1.msra.mxu0 %v6311
    %6658 = vmatprep.subr.mxu0 0.0
    %6659 = vmatpush1.msra.mxu0 %v6310
    %6660 = vmatprep.subr.mxu0 0.0
    %6661 = vmatpush1.msra.mxu0 %v6309
    %6662 = vmatprep.subr.mxu0 0.0
    %6663 = vmatpush1.msra.mxu0 %v6308
    %6664 = vmatprep.subr.mxu0 0.0
    %6665 = vmatpush1.msra.mxu0 %v6307
    %6666 = vmatprep.subr.mxu0 0.0
    %6667 = vmatpush1.msra.mxu0 %v6306
    %6668 = vmatprep.subr.mxu0 0.0
    %6669 = vmatpush1.msra.mxu0 %v6305
    %6670 = vmatprep.subr.mxu0 0.0
    %6671 = vmatpush1.msra.mxu0 %v6304
    %6672 = vmatprep.subr.mxu0 0.0
    %6673 = vmatpush1.msra.mxu0 %v6303
    %6674 = vmatprep.subr.mxu0 0.0
    %6675 = vmatpush1.msra.mxu0 %v6302
    %6676 = vmatprep.subr.mxu0 0.0
    %6677 = vmatpush1.msra.mxu0 %v6301
    %6678 = vmatprep.subr.mxu0 0.0
    %6679 = vmatpush1.msra.mxu0 %v6300
    %6680 = vmatprep.subr.mxu0 0.0
    %6681 = vmatpush1.msra.mxu0 %v6299
    %6682 = vmatprep.subr.mxu0 0.0
    %6683 = vmatpush2.msra.mxu0 0.0
    %6684 = vmatprep.subr.mxu0 0.0
    %6685 = vmatpush2.msra.mxu0 0.0
    %6686 = vmatprep.subr.mxu0 0.0
    %6687 = vmatpush2.msra.mxu0 0.0
    %6688 = vmatprep.subr.mxu0 0.0
    %6689 = vmatpush2.msra.mxu0 0.0
    %6690 = vmatprep.subr.mxu0 0.0
    %6691 = vmatpush2.msra.mxu0 0.0
    %6692 = vmatprep.subr.mxu0 0.0
    %6693 = vmatpush2.msra.mxu0 0.0
    %6694 = vmatprep.subr.mxu0 0.0
    %6695 = vmatpush2.msra.mxu0 0.0
    %6696 = vmatprep.subr.mxu0 0.0
    %6697 = vmatpush2.msra.mxu0 0.0
    %6698 = vmatprep.subr.mxu0 0.0
    %6699 = vmatpush2.msra.mxu0 0.0
    %6700 = vmatprep.subr.mxu0 0.0
    %6701 = vmatpush2.msra.mxu0 0.0
    %6702 = vmatprep.subr.mxu0 0.0
    %6703 = vmatpush2.msra.mxu0 0.0
    %6704 = vmatprep.subr.mxu0 0.0
    %6705 = vmatpush2.msra.mxu0 0.0
    %6706 = vmatprep.subr.mxu0 0.0
    %6707 = vmatpush2.msra.mxu0 0.0
    %6708 = vmatprep.subr.mxu0 0.0
    %6709 = vmatpush2.msra.mxu0 0.0
    %6710 = vmatprep.subr.mxu0 0.0
    %6711 = vmatpush2.msra.mxu0 0.0
    %6712 = vmatprep.subr.mxu0 0.0
    %6713 = vmatpush2.msra.mxu0 0.0
    %6714 = vmatprep.mubr.f32.mxu0 0.0
    %6715 = vmatmul.mubr.f32.gmra.mxu0 %v6649
    %v6716 = vpop.f32.mrf.mxu0
    %v6717 = vadd.f32 0.0, %v6716
    %v6718 = vpop.f32.mrf.mxu0
    %6719 = vdwg.mxu0
    %v6720 = vrot.slane %v6717, 4
    %v6721 = vadd.f32 %v6717, %v6720
    %v6722 = vrot.slane %v6721, 2
    %v6723 = vadd.f32 %v6721, %v6722
    %v6724 = vrot.slane %v6723, 1
    %v6725 = vadd.f32 %v6723, %v6724
    %v6726 = vmul.f32 %v6725, %v6321
    %v6727 = vsub.f32 %v6717, %v6726
    %v6728 = vadd.f32 %v6427, %v6527
    %v6729 = vadd.f32 %v6728, %v6627
    %v6730 = vadd.f32 %v6729, %v6727
    %v6731 = vmul.f32 %v6730, 0.25
    %v6732 = vsub.f32 %v6427, %v6731
    %v6733 = vmul.f32 %v6732, %v6732
    %v6734 = vsub.f32 %v6527, %v6731
    %v6735 = vmul.f32 %v6734, %v6734
    %v6736 = vadd.f32 %v6733, %v6735
    %v6737 = vsub.f32 %v6627, %v6731
    %v6738 = vmul.f32 %v6737, %v6737
    %v6739 = vadd.f32 %v6736, %v6738
    %v6740 = vsub.f32 %v6727, %v6731
    %v6741 = vmul.f32 %v6740, %v6740
    %v6742 = vadd.f32 %v6739, %v6741
    %v6743 = vmul.f32 %v6742, 0.33333334
    %v6744 = vadd.f32 %v6743, 0.0001
    %v6745 = vrsqrt.pop %v6744
    %v6746 = vmul.f32 %v6744, %v6745
    %vm6747 = vcmp.eq.f32.partialorder %v6744, inf
    %v6748 = vsel %vm6747, %v6744, %v6746
    %vm6749 = vcmp.eq.f32.partialorder %v6744, 0.0
    %v6750 = vand.u32 %v6744, 2147483648
    %v6751 = vsel %vm6749, %v6750, %v6748
    %v6752 = vsub.f32 1.0, %v6751
    %v6753 = vmax.f32 %v6752, 0.0
    %6754 = vadd.xlane.f32.xlu0 %v6753
    %v6755 = vpop.xlane.xlu0 %6754
    %v6756 = vrot.slane %v6755, 4
    %v6757 = vadd.f32 %v6755, %v6756
    %v6758 = vrot.slane %v6757, 2
    %v6759 = vadd.f32 %v6757, %v6758
    %v6760 = vrot.slane %v6759, 1
    %v6761 = vadd.f32 %v6759, %v6760
    %s6762 = vtos %v6761
    %v6763 = vrcp.pop 1024.0
    %s6764 = vtos %v6763
    %s6765 = smul.f32 %s6762, %s6764
    %6766 = vmatprep.subr.mxu0 0.0
    %6767 = vmatpush1.xpose.msra.mxu0 0.0
    %6768 = vmatprep.subr.mxu0 0.0
    %6769 = vmatpush1.xpose.msra.mxu0 0.0
    %6770 = vmatprep.subr.mxu0 0.0
    %6771 = vmatpush1.xpose.msra.mxu0 0.0
    %6772 = vmatprep.subr.mxu0 0.0
    %6773 = vmatpush1.xpose.msra.mxu0 0.0
    %6774 = vmatprep.subr.mxu0 0.0
    %6775 = vmatpush1.xpose.msra.mxu0 0.0
    %6776 = vmatprep.subr.mxu0 0.0
    %6777 = vmatpush1.xpose.msra.mxu0 0.0
    %6778 = vmatprep.subr.mxu0 0.0
    %6779 = vmatpush1.xpose.msra.mxu0 0.0
    %6780 = vmatprep.subr.mxu0 0.0
    %6781 = vmatpush1.xpose.msra.mxu0 0.0
    %6782 = vmatprep.subr.mxu0 0.0
    %6783 = vmatpush1.xpose.msra.mxu0 0.0
    %6784 = vmatprep.subr.mxu0 0.0
    %6785 = vmatpush1.xpose.msra.mxu0 0.0
    %6786 = vmatprep.subr.mxu0 0.0
    %6787 = vmatpush1.xpose.msra.mxu0 0.0
    %6788 = vmatprep.subr.mxu0 0.0
    %6789 = vmatpush1.xpose.msra.mxu0 0.0
    %6790 = vmatprep.subr.mxu0 0.0
    %6791 = vmatpush1.xpose.msra.mxu0 0.0
    %6792 = vmatprep.subr.mxu0 0.0
    %6793 = vmatpush1.xpose.msra.mxu0 0.0
    %6794 = vmatprep.subr.mxu0 0.0
    %6795 = vmatpush1.xpose.msra.mxu0 0.0
    %6796 = vmatprep.subr.mxu0 0.0
    %6797 = vmatpush1.xpose.msra.mxu0 %v6427
    %6798 = vmatprep.subr.mxu0 0.0
    %6799 = vmatpush2.xpose.msra.mxu0 0.0
    %6800 = vmatprep.subr.mxu0 0.0
    %6801 = vmatpush2.xpose.msra.mxu0 0.0
    %6802 = vmatprep.subr.mxu0 0.0
    %6803 = vmatpush2.xpose.msra.mxu0 0.0
    %6804 = vmatprep.subr.mxu0 0.0
    %6805 = vmatpush2.xpose.msra.mxu0 0.0
    %6806 = vmatprep.subr.mxu0 0.0
    %6807 = vmatpush2.xpose.msra.mxu0 0.0
    %6808 = vmatprep.subr.mxu0 0.0
    %6809 = vmatpush2.xpose.msra.mxu0 0.0
    %6810 = vmatprep.subr.mxu0 0.0
    %6811 = vmatpush2.xpose.msra.mxu0 0.0
    %6812 = vmatprep.subr.mxu0 0.0
    %6813 = vmatpush2.xpose.msra.mxu0 0.0
    %6814 = vmatprep.subr.mxu0 0.0
    %6815 = vmatpush2.xpose.msra.mxu0 0.0
    %6816 = vmatprep.subr.mxu0 0.0
    %6817 = vmatpush2.xpose.msra.mxu0 0.0
    %6818 = vmatprep.subr.mxu0 0.0
    %6819 = vmatpush2.xpose.msra.mxu0 0.0
    %6820 = vmatprep.subr.mxu0 0.0
    %6821 = vmatpush2.xpose.msra.mxu0 0.0
    %6822 = vmatprep.subr.mxu0 0.0
    %6823 = vmatpush2.xpose.msra.mxu0 0.0
    %6824 = vmatprep.subr.mxu0 0.0
    %6825 = vmatpush2.xpose.msra.mxu0 0.0
    %6826 = vmatprep.subr.mxu0 0.0
    %6827 = vmatpush2.xpose.msra.mxu0 0.0
    %6828 = vmatprep.subr.mxu0 0.0
    %6829 = vmatpush2.xpose.msra.mxu0 0.0
    %6830 = vmatprep.mubr.f32.mxu0 0.0
    %6831 = vmatmul.mubr.f32.gmra.mxu0 %v6427
    %v6832 = vpop.f32.mrf.mxu0
    %v6833 = vadd.f32 0.0, %v6832
    %v6834 = vpop.f32.mrf.mxu0
    %6835 = vdwg.mxu0
    %6836 = vmatprep.subr.mxu0 0.0
    %6837 = vmatpush1.xpose.msra.mxu0 0.0
    %6838 = vmatprep.subr.mxu0 0.0
    %6839 = vmatpush1.xpose.msra.mxu0 0.0
    %6840 = vmatprep.subr.mxu0 0.0
    %6841 = vmatpush1.xpose.msra.mxu0 0.0
    %6842 = vmatprep.subr.mxu0 0.0
    %6843 = vmatpush1.xpose.msra.mxu0 0.0
    %6844 = vmatprep.subr.mxu0 0.0
    %6845 = vmatpush1.xpose.msra.mxu0 0.0
    %6846 = vmatprep.subr.mxu0 0.0
    %6847 = vmatpush1.xpose.msra.mxu0 0.0
    %6848 = vmatprep.subr.mxu0 0.0
    %6849 = vmatpush1.xpose.msra.mxu0 0.0
    %6850 = vmatprep.subr.mxu0 0.0
    %6851 = vmatpush1.xpose.msra.mxu0 0.0
    %6852 = vmatprep.subr.mxu0 0.0
    %6853 = vmatpush1.xpose.msra.mxu0 0.0
    %6854 = vmatprep.subr.mxu0 0.0
    %6855 = vmatpush1.xpose.msra.mxu0 0.0
    %6856 = vmatprep.subr.mxu0 0.0
    %6857 = vmatpush1.xpose.msra.mxu0 0.0
    %6858 = vmatprep.subr.mxu0 0.0
    %6859 = vmatpush1.xpose.msra.mxu0 0.0
    %6860 = vmatprep.subr.mxu0 0.0
    %6861 = vmatpush1.xpose.msra.mxu0 0.0
    %6862 = vmatprep.subr.mxu0 0.0
    %6863 = vmatpush1.xpose.msra.mxu0 0.0
    %6864 = vmatprep.subr.mxu0 0.0
    %6865 = vmatpush1.xpose.msra.mxu0 0.0
    %6866 = vmatprep.subr.mxu0 0.0
    %6867 = vmatpush1.xpose.msra.mxu0 %v6527
    %6868 = vmatprep.subr.mxu0 0.0
    %6869 = vmatpush2.xpose.msra.mxu0 0.0
    %6870 = vmatprep.subr.mxu0 0.0
    %6871 = vmatpush2.xpose.msra.mxu0 0.0
    %6872 = vmatprep.subr.mxu0 0.0
    %6873 = vmatpush2.xpose.msra.mxu0 0.0
    %6874 = vmatprep.subr.mxu0 0.0
    %6875 = vmatpush2.xpose.msra.mxu0 0.0
    %6876 = vmatprep.subr.mxu0 0.0
    %6877 = vmatpush2.xpose.msra.mxu0 0.0
    %6878 = vmatprep.subr.mxu0 0.0
    %6879 = vmatpush2.xpose.msra.mxu0 0.0
    %6880 = vmatprep.subr.mxu0 0.0
    %6881 = vmatpush2.xpose.msra.mxu0 0.0
    %6882 = vmatprep.subr.mxu0 0.0
    %6883 = vmatpush2.xpose.msra.mxu0 0.0
    %6884 = vmatprep.subr.mxu0 0.0
    %6885 = vmatpush2.xpose.msra.mxu0 0.0
    %6886 = vmatprep.subr.mxu0 0.0
    %6887 = vmatpush2.xpose.msra.mxu0 0.0
    %6888 = vmatprep.subr.mxu0 0.0
    %6889 = vmatpush2.xpose.msra.mxu0 0.0
    %6890 = vmatprep.subr.mxu0 0.0
    %6891 = vmatpush2.xpose.msra.mxu0 0.0
    %6892 = vmatprep.subr.mxu0 0.0
    %6893 = vmatpush2.xpose.msra.mxu0 0.0
    %6894 = vmatprep.subr.mxu0 0.0
    %6895 = vmatpush2.xpose.msra.mxu0 0.0
    %6896 = vmatprep.subr.mxu0 0.0
    %6897 = vmatpush2.xpose.msra.mxu0 0.0
    %6898 = vmatprep.subr.mxu0 0.0
    %6899 = vmatpush2.xpose.msra.mxu0 0.0
    %6900 = vmatprep.mubr.f32.mxu0 0.0
    %6901 = vmatmul.mubr.f32.gmra.mxu0 %v6527
    %v6902 = vpop.f32.mrf.mxu0
    %v6903 = vadd.f32 0.0, %v6902
    %v6904 = vpop.f32.mrf.mxu0
    %6905 = vdwg.mxu0
    %6906 = vmatprep.subr.mxu0 0.0
    %6907 = vmatpush1.xpose.msra.mxu0 0.0
    %6908 = vmatprep.subr.mxu0 0.0
    %6909 = vmatpush1.xpose.msra.mxu0 0.0
    %6910 = vmatprep.subr.mxu0 0.0
    %6911 = vmatpush1.xpose.msra.mxu0 0.0
    %6912 = vmatprep.subr.mxu0 0.0
    %6913 = vmatpush1.xpose.msra.mxu0 0.0
    %6914 = vmatprep.subr.mxu0 0.0
    %6915 = vmatpush1.xpose.msra.mxu0 0.0
    %6916 = vmatprep.subr.mxu0 0.0
    %6917 = vmatpush1.xpose.msra.mxu0 0.0
    %6918 = vmatprep.subr.mxu0 0.0
    %6919 = vmatpush1.xpose.msra.mxu0 0.0
    %6920 = vmatprep.subr.mxu0 0.0
    %6921 = vmatpush1.xpose.msra.mxu0 0.0
    %6922 = vmatprep.subr.mxu0 0.0
    %6923 = vmatpush1.xpose.msra.mxu0 0.0
    %6924 = vmatprep.subr.mxu0 0.0
    %6925 = vmatpush1.xpose.msra.mxu0 0.0
    %6926 = vmatprep.subr.mxu0 0.0
    %6927 = vmatpush1.xpose.msra.mxu0 0.0
    %6928 = vmatprep.subr.mxu0 0.0
    %6929 = vmatpush1.xpose.msra.mxu0 0.0
    %6930 = vmatprep.subr.mxu0 0.0
    %6931 = vmatpush1.xpose.msra.mxu0 0.0
    %6932 = vmatprep.subr.mxu0 0.0
    %6933 = vmatpush1.xpose.msra.mxu0 0.0
    %6934 = vmatprep.subr.mxu0 0.0
    %6935 = vmatpush1.xpose.msra.mxu0 0.0
    %6936 = vmatprep.subr.mxu0 0.0
    %6937 = vmatpush1.xpose.msra.mxu0 %v6627
    %6938 = vmatprep.subr.mxu0 0.0
    %6939 = vmatpush2.xpose.msra.mxu0 0.0
    %6940 = vmatprep.subr.mxu0 0.0
    %6941 = vmatpush2.xpose.msra.mxu0 0.0
    %6942 = vmatprep.subr.mxu0 0.0
    %6943 = vmatpush2.xpose.msra.mxu0 0.0
    %6944 = vmatprep.subr.mxu0 0.0
    %6945 = vmatpush2.xpose.msra.mxu0 0.0
    %6946 = vmatprep.subr.mxu0 0.0
    %6947 = vmatpush2.xpose.msra.mxu0 0.0
    %6948 = vmatprep.subr.mxu0 0.0
    %6949 = vmatpush2.xpose.msra.mxu0 0.0
    %6950 = vmatprep.subr.mxu0 0.0
    %6951 = vmatpush2.xpose.msra.mxu0 0.0
    %6952 = vmatprep.subr.mxu0 0.0
    %6953 = vmatpush2.xpose.msra.mxu0 0.0
    %6954 = vmatprep.subr.mxu0 0.0
    %6955 = vmatpush2.xpose.msra.mxu0 0.0
    %6956 = vmatprep.subr.mxu0 0.0
    %6957 = vmatpush2.xpose.msra.mxu0 0.0
    %6958 = vmatprep.subr.mxu0 0.0
    %6959 = vmatpush2.xpose.msra.mxu0 0.0
    %6960 = vmatprep.subr.mxu0 0.0
    %6961 = vmatpush2.xpose.msra.mxu0 0.0
    %6962 = vmatprep.subr.mxu0 0.0
    %6963 = vmatpush2.xpose.msra.mxu0 0.0
    %6964 = vmatprep.subr.mxu0 0.0
    %6965 = vmatpush2.xpose.msra.mxu0 0.0
    %6966 = vmatprep.subr.mxu0 0.0
    %6967 = vmatpush2.xpose.msra.mxu0 0.0
    %6968 = vmatprep.subr.mxu0 0.0
    %6969 = vmatpush2.xpose.msra.mxu0 0.0
    %6970 = vmatprep.mubr.f32.mxu0 0.0
    %6971 = vmatmul.mubr.f32.gmra.mxu0 %v6627
    %v6972 = vpop.f32.mrf.mxu0
    %v6973 = vadd.f32 0.0, %v6972
    %v6974 = vpop.f32.mrf.mxu0
    %6975 = vdwg.mxu0
    %6976 = vmatprep.subr.mxu0 0.0
    %6977 = vmatpush1.xpose.msra.mxu0 0.0
    %6978 = vmatprep.subr.mxu0 0.0
    %6979 = vmatpush1.xpose.msra.mxu0 0.0
    %6980 = vmatprep.subr.mxu0 0.0
    %6981 = vmatpush1.xpose.msra.mxu0 0.0
    %6982 = vmatprep.subr.mxu0 0.0
    %6983 = vmatpush1.xpose.msra.mxu0 0.0
    %6984 = vmatprep.subr.mxu0 0.0
    %6985 = vmatpush1.xpose.msra.mxu0 0.0
    %6986 = vmatprep.subr.mxu0 0.0
    %6987 = vmatpush1.xpose.msra.mxu0 0.0
    %6988 = vmatprep.subr.mxu0 0.0
    %6989 = vmatpush1.xpose.msra.mxu0 0.0
    %6990 = vmatprep.subr.mxu0 0.0
    %6991 = vmatpush1.xpose.msra.mxu0 0.0
    %6992 = vmatprep.subr.mxu0 0.0
    %6993 = vmatpush1.xpose.msra.mxu0 0.0
    %6994 = vmatprep.subr.mxu0 0.0
    %6995 = vmatpush1.xpose.msra.mxu0 0.0
    %6996 = vmatprep.subr.mxu0 0.0
    %6997 = vmatpush1.xpose.msra.mxu0 0.0
    %6998 = vmatprep.subr.mxu0 0.0
    %6999 = vmatpush1.xpose.msra.mxu0 0.0
    %7000 = vmatprep.subr.mxu0 0.0
    %7001 = vmatpush1.xpose.msra.mxu0 0.0
    %7002 = vmatprep.subr.mxu0 0.0
    %7003 = vmatpush1.xpose.msra.mxu0 0.0
    %7004 = vmatprep.subr.mxu0 0.0
    %7005 = vmatpush1.xpose.msra.mxu0 0.0
    %7006 = vmatprep.subr.mxu0 0.0
    %7007 = vmatpush1.xpose.msra.mxu0 %v6727
    %7008 = vmatprep.subr.mxu0 0.0
    %7009 = vmatpush2.xpose.msra.mxu0 0.0
    %7010 = vmatprep.subr.mxu0 0.0
    %7011 = vmatpush2.xpose.msra.mxu0 0.0
    %7012 = vmatprep.subr.mxu0 0.0
    %7013 = vmatpush2.xpose.msra.mxu0 0.0
    %7014 = vmatprep.subr.mxu0 0.0
    %7015 = vmatpush2.xpose.msra.mxu0 0.0
    %7016 = vmatprep.subr.mxu0 0.0
    %7017 = vmatpush2.xpose.msra.mxu0 0.0
    %7018 = vmatprep.subr.mxu0 0.0
    %7019 = vmatpush2.xpose.msra.mxu0 0.0
    %7020 = vmatprep.subr.mxu0 0.0
    %7021 = vmatpush2.xpose.msra.mxu0 0.0
    %7022 = vmatprep.subr.mxu0 0.0
    %7023 = vmatpush2.xpose.msra.mxu0 0.0
    %7024 = vmatprep.subr.mxu0 0.0
    %7025 = vmatpush2.xpose.msra.mxu0 0.0
    %7026 = vmatprep.subr.mxu0 0.0
    %7027 = vmatpush2.xpose.msra.mxu0 0.0
    %7028 = vmatprep.subr.mxu0 0.0
    %7029 = vmatpush2.xpose.msra.mxu0 0.0
    %7030 = vmatprep.subr.mxu0 0.0
    %7031 = vmatpush2.xpose.msra.mxu0 0.0
    %7032 = vmatprep.subr.mxu0 0.0
    %7033 = vmatpush2.xpose.msra.mxu0 0.0
    %7034 = vmatprep.subr.mxu0 0.0
    %7035 = vmatpush2.xpose.msra.mxu0 0.0
    %7036 = vmatprep.subr.mxu0 0.0
    %7037 = vmatpush2.xpose.msra.mxu0 0.0
    %7038 = vmatprep.subr.mxu0 0.0
    %7039 = vmatpush2.xpose.msra.mxu0 0.0
    %7040 = vmatprep.mubr.f32.mxu0 0.0
    %7041 = vmatmul.mubr.f32.gmra.mxu0 %v6727
    %v7042 = vpop.f32.mrf.mxu0
    %v7043 = vadd.f32 0.0, %v7042
    %v7044 = vpop.f32.mrf.mxu0
    %7045 = vdwg.mxu0
    %v7046 = vmul.f32 %v6833, %v6833
    %v7047 = vsel %vm690, %v7046, 0.0
    %7048 = vadd.xlane.f32.xlu0 %v7047
    %v7049 = vpop.xlane.xlu0 %7048
    %v7050 = vrot.slane %v7049, 4
    %v7051 = vadd.f32 %v7049, %v7050
    %v7052 = vrot.slane %v7051, 2
    %v7053 = vadd.f32 %v7051, %v7052
    %v7054 = vrot.slane %v7053, 1
    %v7055 = vadd.f32 %v7053, %v7054
    %s7056 = vtos %v7055
    %v7057 = vmul.f32 %v6903, %v6903
    %v7058 = vsel %vm690, %v7057, 0.0
    %7059 = vadd.xlane.f32.xlu0 %v7058
    %v7060 = vpop.xlane.xlu0 %7059
    %v7061 = vrot.slane %v7060, 4
    %v7062 = vadd.f32 %v7060, %v7061
    %v7063 = vrot.slane %v7062, 2
    %v7064 = vadd.f32 %v7062, %v7063
    %v7065 = vrot.slane %v7064, 1
    %v7066 = vadd.f32 %v7064, %v7065
    %s7067 = vtos %v7066
    %s7068 = sadd.f32 %s7056, %s7067
    %v7069 = vmul.f32 %v6973, %v6973
    %v7070 = vsel %vm690, %v7069, 0.0
    %7071 = vadd.xlane.f32.xlu0 %v7070
    %v7072 = vpop.xlane.xlu0 %7071
    %v7073 = vrot.slane %v7072, 4
    %v7074 = vadd.f32 %v7072, %v7073
    %v7075 = vrot.slane %v7074, 2
    %v7076 = vadd.f32 %v7074, %v7075
    %v7077 = vrot.slane %v7076, 1
    %v7078 = vadd.f32 %v7076, %v7077
    %s7079 = vtos %v7078
    %s7080 = sadd.f32 %s7068, %s7079
    %v7081 = vmul.f32 %v6903, %v7043
    %v7082 = vsel %vm690, %v7081, 0.0
    %7083 = vadd.xlane.f32.xlu0 %v7082
    %v7084 = vpop.xlane.xlu0 %7083
    %v7085 = vrot.slane %v7084, 4
    %v7086 = vadd.f32 %v7084, %v7085
    %v7087 = vrot.slane %v7086, 2
    %v7088 = vadd.f32 %v7086, %v7087
    %v7089 = vrot.slane %v7088, 1
    %v7090 = vadd.f32 %v7088, %v7089
    %s7091 = vtos %v7090
    %s7092 = sadd.f32 %s7080, %s7091
    %v7093 = vmul.f32 %v6427, %v6427
    %v7094 = vrot.slane %v7093, 4
    %v7095 = vadd.f32 %v7093, %v7094
    %v7096 = vrot.slane %v7095, 2
    %v7097 = vadd.f32 %v7095, %v7096
    %v7098 = vrot.slane %v7097, 1
    %v7099 = vadd.f32 %v7097, %v7098
    %v7100 = vmul.f32 %v6527, %v6527
    %v7101 = vrot.slane %v7100, 4
    %v7102 = vadd.f32 %v7100, %v7101
    %v7103 = vrot.slane %v7102, 2
    %v7104 = vadd.f32 %v7102, %v7103
    %v7105 = vrot.slane %v7104, 1
    %v7106 = vadd.f32 %v7104, %v7105
    %v7107 = vmul.f32 %v6627, %v6627
    %v7108 = vrot.slane %v7107, 4
    %v7109 = vadd.f32 %v7107, %v7108
    %v7110 = vrot.slane %v7109, 2
    %v7111 = vadd.f32 %v7109, %v7110
    %v7112 = vrot.slane %v7111, 1
    %v7113 = vadd.f32 %v7111, %v7112
    %v7114 = vmul.f32 %v6527, %v6727
    %v7115 = vrot.slane %v7114, 4
    %v7116 = vadd.f32 %v7114, %v7115
    %v7117 = vrot.slane %v7116, 2
    %v7118 = vadd.f32 %v7116, %v7117
    %v7119 = vrot.slane %v7118, 1
    %v7120 = vadd.f32 %v7118, %v7119
    %v7121 = vmul.f32 %v7099, %v7099
    %vm7122 = vcmask 1040384
    %v7123 = vsel %vm7122, %v7121, 0.0
    %7124 = vadd.xlane.f32.xlu0 %v7123
    %v7125 = vpop.xlane.xlu0 %7124
    %v7126 = vrot.slane %v7125, 4
    %v7127 = vadd.f32 %v7125, %v7126
    %v7128 = vrot.slane %v7127, 2
    %v7129 = vadd.f32 %v7127, %v7128
    %v7130 = vrot.slane %v7129, 1
    %v7131 = vadd.f32 %v7129, %v7130
    %s7132 = vtos %v7131
    %v7133 = vmul.f32 %v7106, %v7106
    %v7134 = vsel %vm7122, %v7133, 0.0
    %7135 = vadd.xlane.f32.xlu0 %v7134
    %v7136 = vpop.xlane.xlu0 %7135
    %v7137 = vrot.slane %v7136, 4
    %v7138 = vadd.f32 %v7136, %v7137
    %v7139 = vrot.slane %v7138, 2
    %v7140 = vadd.f32 %v7138, %v7139
    %v7141 = vrot.slane %v7140, 1
    %v7142 = vadd.f32 %v7140, %v7141
    %s7143 = vtos %v7142
    %s7144 = sadd.f32 %s7132, %s7143
    %v7145 = vmul.f32 %v7113, %v7113
    %v7146 = vsel %vm7122, %v7145, 0.0
    %7147 = vadd.xlane.f32.xlu0 %v7146
    %v7148 = vpop.xlane.xlu0 %7147
    %v7149 = vrot.slane %v7148, 4
    %v7150 = vadd.f32 %v7148, %v7149
    %v7151 = vrot.slane %v7150, 2
    %v7152 = vadd.f32 %v7150, %v7151
    %v7153 = vrot.slane %v7152, 1
    %v7154 = vadd.f32 %v7152, %v7153
    %s7155 = vtos %v7154
    %s7156 = sadd.f32 %s7144, %s7155
    %v7157 = vmul.f32 %v7120, %v7120
    %v7158 = vsel %vm7122, %v7157, 0.0
    %7159 = vadd.xlane.f32.xlu0 %v7158
    %v7160 = vpop.xlane.xlu0 %7159
    %v7161 = vrot.slane %v7160, 4
    %v7162 = vadd.f32 %v7160, %v7161
    %v7163 = vrot.slane %v7162, 2
    %v7164 = vadd.f32 %v7162, %v7163
    %v7165 = vrot.slane %v7164, 1
    %v7166 = vadd.f32 %v7164, %v7165
    %s7167 = vtos %v7166
    %s7168 = sadd.f32 %s7156, %s7167
    %s7169 = ssub.f32 %s7092, %s7168
    %s7170 = smul.f32 %s7169, 0.020408163
    %s7171 = smul.f32 %s7170, 0.0078125
    %s7172 = smul.f32 %s7171, 0.02
    %s7173 = sadd.f32 %s6765, %s7172
    %s7174 = scalar_lea.smem [#allocation4], 0
    %7175 = sst [smem:[%s7174]] %s7173
    // Predicated region
    $region50: #{vicreg_w_forward.1} parent=1 // pred_check
      _
    $region51: #{vicreg_w_forward.1} parent=1 // pred_check_branch
      %7177 = sbr.rel (0) target = $region53
    $region52: #{vicreg_w_forward.1} parent=1 // pred_region
      %s7179 = ssub.s32 16, 16
      %7180 = vsyncadd [#allocation5], %s7179
      %7183 = dma.smem_to_hbm [#allocation4], 16, %s12, [#allocation5]
    $region53: #{vicreg_w_forward.1} parent=1 // pred_fallthru
      _
    // Predicated region
    $region54: #{vicreg_w_forward.1} parent=1 // pred_check
      _
    $region55: #{vicreg_w_forward.1} parent=1 // pred_check_branch
      %7185 = sbr.rel (0) target = $region57
    $region56: #{vicreg_w_forward.1} parent=1 // pred_region
      %7186 = dma.done [#allocation5], 16
    $region57: #{vicreg_w_forward.1} parent=1 // pred_fallthru
      _
    %7187 = sfence
    %7188 = vsyncpa [#allocation5], 1

</llo_original>
